<compile_context>
chip_gen: v7x
topology: tpu7x:2x2x1
jax: 0.10.0
libtpu: 0.0.40
codegen_flags: <defaults>
</compile_context>

<pallas_src>
import functools

import jax
import jax.numpy as jnp
from jax.experimental import pallas as pl
from jax.experimental.pallas import tpu as pltpu

HP = 128       # lane-padded hidden size used for every layer inside the kernel
NGATES = 4     # PyTorch gate order: i, f, g, o
NLAYERS = 4    # encoder, encoder2, decoder, decoder2


# --------------------------------------------------------------------------
# Fused kernel
# --------------------------------------------------------------------------
def _fused_lstm_ae_kernel(x_ref, b_ref, w_hbm_ref, out_ref,
                          w_vmem, seq_a_ref, seq_b_ref, sem):
    """Runs all four LSTM layers back-to-back.

    x_ref:     (B, T, HP)              input, features zero-padded to 128 lanes (VMEM)
    b_ref:     (NLAYERS, 1, 4*HP) f32  combined biases b_ih + b_hh, lane-padded (VMEM)
    w_hbm_ref: (NLAYERS, 2, HP, 4*HP) bf16 packed [W_ih, W_hh] per layer (HBM / ANY)
    out_ref:   (B, PT, HP) f32         last PT hidden states of the last layer
    w_vmem:    (NLAYERS, 2, HP, 4*HP) bf16 VMEM landing buffers for the weights
    seq_a/b:   (B, T, HP) f32          ping-pong scratch for intermediate sequences
    sem:       DMA semaphores, one per layer
    """
    B, T, _ = x_ref.shape
    PT = out_ref.shape[1]

    def w_copy(layer):
        return pltpu.make_async_copy(w_hbm_ref.at[layer], w_vmem.at[layer],
                                     sem.at[layer])

    # Kick off every layer's weight DMA immediately; each layer waits on its
    # own semaphore right before it needs the weights, so layers 1..3 copy in
    # underneath layers 0..2's compute.
    for layer in range(NLAYERS):
        w_copy(layer).start()

    def lstm_cell(g, c_prev):
        # g: (B, 4*HP) f32 pre-activations; gate slices on 128-lane boundaries.
        i_g = jax.nn.sigmoid(g[:, 0 * HP:1 * HP])
        f_g = jax.nn.sigmoid(g[:, 1 * HP:2 * HP])
        g_g = jnp.tanh(g[:, 2 * HP:3 * HP])
        o_g = jax.nn.sigmoid(g[:, 3 * HP:4 * HP])
        c_new = f_g * c_prev + i_g * g_g
        h_new = o_g * jnp.tanh(c_new)
        return h_new, c_new

    def run_layer(layer, in_seq, out_seq_ref, t_store0):
        """in_seq: (B, T, HP) f32 value.  Stores h_t for t >= t_store0 into
        out_seq_ref[:, t - t_store0, :]."""
        w_copy(layer).wait()                      # weights for this layer are landed

        bias = b_ref[layer]                       # (1, 4*HP) f32

        # Hoisted, fused input projection for ALL timesteps: one
        # (B*T, HP) @ (HP, 4*HP) bf16 matmul with f32 accumulation + 1 bias add,
        # instead of a small matmul + bias broadcast inside every step.
        lhs = in_seq.reshape(B * T, HP).astype(jnp.bfloat16)
        xp = jnp.dot(lhs, w_vmem[layer, 0],
                     preferred_element_type=jnp.float32) + bias
        xp = xp.reshape(B, T, NGATES * HP)        # only 8 vregs; lives in registers

        # t = 0: h = c = 0, so the recurrent matmul vanishes.
        h, c = lstm_cell(xp[:, 0, :], jnp.zeros((B, HP), jnp.float32))
        if 0 >= t_store0:
            out_seq_ref[:, 0 - t_store0, :] = h

        # Fully unrolled recurrence (T is small & static).
        for t in range(1, T):
            # NOTE: w_vmem[layer, 1] is deliberately re-read every step; VMEM
            # loads are ~free and this keeps the 128 KB recurrent weight out of
            # a long live range (vreg-file spill hazard if hoisted).
            g = xp[:, t, :] + jnp.dot(h.astype(jnp.bfloat16), w_vmem[layer, 1],
                                      preferred_element_type=jnp.float32)
            h, c = lstm_cell(g, c)
            if t >= t_store0:
                out_seq_ref[:, t - t_store0, :] = h

    # encoder -> encoder2 -> (repeat_vector folded into layer-2 W_ih) ->
    # decoder -> decoder2 (only the last PT steps are emitted).
    run_layer(0, x_ref[...],     seq_a_ref, 0)
    run_layer(1, seq_a_ref[...], seq_b_ref, 0)
    run_layer(2, seq_b_ref[...], seq_a_ref, 0)
    run_layer(3, seq_a_ref[...], out_ref,   T - PT)


# --------------------------------------------------------------------------
# Parameter packing (done ONCE, outside the forward path)
# --------------------------------------------------------------------------
def _pack_layer(w_ih, w_hh, b_ih, b_hh, *, fold_replicated=0):
    """Pack PyTorch LSTM params into x@W form, lane/sublane padded to (HP, 4*HP).

    w_ih: (4H, I_torch), w_hh: (4H, H), b_ih/b_hh: (4H,)  gate order (i,f,g,o).
    If fold_replicated > 0, the last `fold_replicated` input columns of w_ih are
    ReplicationPad1d copies of feature (I_torch - fold_replicated - 1); their
    weights are folded into that feature's row so the pad is never materialized.

    Returns wih:(HP, 4*HP) bf16, whh:(HP, 4*HP) bf16, bias:(1, 4*HP) f32,
    all zero-padded so padded hidden units stay exactly 0.
    """
    h = w_hh.shape[1]
    i_torch = w_ih.shape[1]
    i_real = i_torch - fold_replicated

    wih_g = jnp.transpose(w_ih.reshape(NGATES, h, i_torch), (0, 2, 1))  # (4, I, H)
    whh_g = jnp.transpose(w_hh.reshape(NGATES, h, h), (0, 2, 1))        # (4, H, H)
    b_g = (b_ih + b_hh).reshape(NGATES, h)                              # (4, H)

    if fold_replicated > 0:
        extra = wih_g[:, i_real:, :].sum(axis=1)                        # (4, H)
        wih_g = wih_g[:, :i_real, :].at[:, i_real - 1, :].add(extra)

    wih_p = jnp.pad(wih_g, ((0, 0), (0, HP - i_real), (0, HP - h)))     # (4, HP, HP)
    whh_p = jnp.pad(whh_g, ((0, 0), (0, HP - h), (0, HP - h)))          # (4, HP, HP)
    b_p = jnp.pad(b_g, ((0, 0), (0, HP - h)))                           # (4, HP)

    wih = jnp.concatenate(list(wih_p), axis=1)        # (HP, 4*HP)
    whh = jnp.concatenate(list(whh_p), axis=1)        # (HP, 4*HP)
    bias = b_p.reshape(1, NGATES * HP)                # (1, 4*HP)
    # bf16 weights (zero padding is exact in bf16), f32 bias.
    return (wih.astype(jnp.bfloat16), whh.astype(jnp.bfloat16),
            bias.astype(jnp.float32))


def _check_pad_invariant(wih, whh, bias, h):
    """Padded hidden lanes stay exactly 0 through the recurrence iff every
    gate's padded wih/whh columns and padded bias entries are exactly zero
    (then padded preacts are 0 -> c stays 0 -> h = sigmoid(0)*tanh(0) = 0).
    Guarded here so future packing changes can't silently leak padding."""
    for g in range(NGATES):
        cols = slice(g * HP + h, (g + 1) * HP)
        assert not bool(jnp.any(wih[:, cols] != 0)), "wih padding nonzero"
        assert not bool(jnp.any(whh[:, cols] != 0)), "whh padding nonzero"
        assert not bool(jnp.any(bias[:, cols] != 0)), "bias padding nonzero"


def pack_autoencoder_params(torch_params, prediction_time):
    names = ("encoder", "encoder2", "decoder", "decoder2")
    layers = [
        _pack_layer(*torch_params["encoder"]),
        _pack_layer(*torch_params["encoder2"]),
        _pack_layer(*torch_params["decoder"], fold_replicated=prediction_time - 1),
        _pack_layer(*torch_params["decoder2"]),
    ]
    for name, (wih, whh, b) in zip(names, layers):
        _check_pad_invariant(wih, whh, b, torch_params[name][1].shape[1])

    # Stack weights per layer: (NLAYERS, 2, HP, 4*HP) bf16 (stays in HBM, DMA'd
    # per layer inside the kernel), biases: (NLAYERS, 1, 4*HP) f32 (tiny, VMEM).
    w_all = jnp.stack([jnp.stack([wih, whh]) for wih, whh, _ in layers])
    b_all = jnp.stack([b for _, _, b in layers])
    return w_all, b_all


def init_lstm_params(key, input_size, hidden_size):
    """Deterministic init matching PyTorch LSTM shapes: U(-1/sqrt(H), 1/sqrt(H))."""
    k = 1.0 / float(hidden_size) ** 0.5
    k0, k1, k2, k3 = jax.random.split(key, 4)
    w_ih = jax.random.uniform(k0, (4 * hidden_size, input_size), jnp.float32, -k, k)
    w_hh = jax.random.uniform(k1, (4 * hidden_size, hidden_size), jnp.float32, -k, k)
    b_ih = jax.random.uniform(k2, (4 * hidden_size,), jnp.float32, -k, k)
    b_hh = jax.random.uniform(k3, (4 * hidden_size,), jnp.float32, -k, k)
    return w_ih, w_hh, b_ih, b_hh


# --------------------------------------------------------------------------
# Forward (single pallas_call)
# --------------------------------------------------------------------------
def lstm_autoencoder_forward(x, packed_params, *, prediction_time, n_features):
    """Mirrors LSTMAutoencoder.forward. x: (B, T, n_features) float32."""
    B, T, F = x.shape
    w_all, b_all = packed_params

    # Pad input features to the full 128-lane tile so the first layer's hoisted
    # projection is whole-(8,128)-tile aligned (the extra wih rows are zero).
    x_p = jnp.pad(x.astype(jnp.float32), ((0, 0), (0, 0), (0, HP - F)))

    out = pl.pallas_call(
        _fused_lstm_ae_kernel,
        out_shape=jax.ShapeDtypeStruct((B, prediction_time, HP), jnp.float32),
        in_specs=[
            pl.BlockSpec(memory_space=pltpu.MemorySpace.VMEM),   # x (8 KB)
            pl.BlockSpec(memory_space=pltpu.MemorySpace.VMEM),   # biases (8 KB)
            pl.BlockSpec(memory_space=pl.ANY),                   # weights stay in HBM
        ],
        out_specs=pl.BlockSpec(memory_space=pltpu.MemorySpace.VMEM),
        scratch_shapes=[
            pltpu.VMEM((NLAYERS, 2, HP, NGATES * HP), jnp.bfloat16),  # weight buffers (1 MiB)
            pltpu.VMEM((B, T, HP), jnp.float32),                      # seq ping
            pltpu.VMEM((B, T, HP), jnp.float32),                      # seq pong
            pltpu.SemaphoreType.DMA((NLAYERS,)),                      # per-layer DMA sems
        ],
    )(x_p, b_all, w_all)

    # Real features live in lanes [:n_features]; time axis already trimmed
    # to the last prediction_time steps inside the kernel.
    return out[:, :, :n_features]


# --------------------------------------------------------------------------
# Pure-JAX reference (PyTorch semantics, unpadded f32) for validation
# --------------------------------------------------------------------------
def _lstm_layer_ref(x, w_ih, w_hh, b_ih, b_hh):
    B, T, _ = x.shape
    H = w_hh.shape[1]
    wih, whh, b = w_ih.T, w_hh.T, b_ih + b_hh
    h = jnp.zeros((B, H), jnp.float32)
    c = jnp.zeros((B, H), jnp.float32)
    outs = []
    for t in range(T):
        g = (jnp.dot(x[:, t, :], wih, precision="highest")
             + jnp.dot(h, whh, precision="highest") + b)
        i_g = jax.nn.sigmoid(g[:, :H])
        f_g = jax.nn.sigmoid(g[:, H:2 * H])
        g_g = jnp.tanh(g[:, 2 * H:3 * H])
        o_g = jax.nn.sigmoid(g[:, 3 * H:])
        c = f_g * c + i_g * g_g
        h = o_g * jnp.tanh(c)
        outs.append(h)
    return jnp.stack(outs, axis=1)


def _autoencoder_ref(x, torch_params, prediction_time):
    x = _lstm_layer_ref(x, *torch_params["encoder"])
    x = _lstm_layer_ref(x, *torch_params["encoder2"])
    if prediction_time > 1:
        pad = jnp.repeat(x[:, :, -1:], prediction_time - 1, axis=2)
        x = jnp.concatenate([x, pad], axis=2)
    x = _lstm_layer_ref(x, *torch_params["decoder"])
    x = _lstm_layer_ref(x, *torch_params["decoder2"])
    return x[:, -prediction_time:, :]


# --------------------------------------------------------------------------
if __name__ == "__main__":
    sequence_length = 8
    n_features = 4
    prediction_time = 4
    batch = 2

    key = jax.random.PRNGKey(0)
    k_x, k_e, k_e2, k_d, k_d2 = jax.random.split(key, 5)

    torch_params = {
        "encoder":  init_lstm_params(k_e,  n_features, 100),
        "encoder2": init_lstm_params(k_e2, 100, 50),
        "decoder":  init_lstm_params(k_d,  50 + prediction_time - 1, 100),
        "decoder2": init_lstm_params(k_d2, 100, n_features),
    }

    packed = pack_autoencoder_params(torch_params, prediction_time)

    x = jax.random.normal(k_x, (batch, sequence_length, n_features), jnp.float32)

    fwd = jax.jit(functools.partial(lstm_autoencoder_forward,
                                    prediction_time=prediction_time,
                                    n_features=n_features))
    out = jax.block_until_ready(fwd(x, packed))

    assert out.shape == (batch, prediction_time, n_features), out.shape
    assert bool(jnp.all(jnp.isfinite(out)))

    ref = _autoencoder_ref(x, torch_params, prediction_time)
    max_err = float(jnp.max(jnp.abs(out - ref)))
    # Tolerance absorbs the deliberate bf16 quantization of the matmul operands
    # (weights + LHS casts); observed error is O(1e-3..1e-2) at these scales,
    # while the reference runs fully in f32 at highest precision.
    assert max_err < 4e-2, f"mismatch vs reference: max abs err {max_err}"

    print("KERNEL_OK")
</pallas_src>

<mosaic_0001>
module attributes {stable_mosaic.version = 11 : i64} {
  func.func @_fused_lstm_ae_kernel(%arg0: memref<2x8x128xf32, #tpu.memory_space<vmem>>, %arg1: memref<4x1x512xf32, #tpu.memory_space<vmem>>, %arg2: memref<4x2x128x512xbf16, #tpu.memory_space<any>>, %arg3: memref<2x4x128xf32, #tpu.memory_space<vmem>>, %arg4: memref<4x2x128x512xbf16, #tpu.memory_space<vmem>>, %arg5: memref<2x8x128xf32, #tpu.memory_space<vmem>>, %arg6: memref<2x8x128xf32, #tpu.memory_space<vmem>>, %arg7: memref<4x!tpu.dma_semaphore, #tpu.memory_space<semaphore_mem>>) attributes {dimension_semantics = [], scalar_prefetch = 0 : i64, scratch_operands = 4 : i64, tpu.core_type = #tpu.core_type<tc>} {
    %c0_i32 = arith.constant 0 : i32
    %c0_i32_0 = arith.constant 0 : i32
    %c0_i32_1 = arith.constant 0 : i32
    %c0_i32_2 = arith.constant 0 : i32
    %c0_i32_3 = arith.constant 0 : i32
    %c0_i32_4 = arith.constant 0 : i32
    %0 = tpu.memref_slice %arg2[%c0_i32, %c0_i32_2, %c0_i32_3, %c0_i32_4] : memref<4x2x128x512xbf16, #tpu.memory_space<any>> -> memref<1x2x128x512xbf16, #tpu.memory_space<any>>
    %1 = tpu.memref_squeeze %0 : memref<1x2x128x512xbf16, #tpu.memory_space<any>> -> memref<2x128x512xbf16, #tpu.memory_space<any>>
    %c0_i32_5 = arith.constant 0 : i32
    %c0_i32_6 = arith.constant 0 : i32
    %c0_i32_7 = arith.constant 0 : i32
    %2 = tpu.memref_slice %arg4[%c0_i32_0, %c0_i32_5, %c0_i32_6, %c0_i32_7] : memref<4x2x128x512xbf16, #tpu.memory_space<vmem>> -> memref<1x2x128x512xbf16, #tpu.memory_space<vmem>>
    %3 = tpu.memref_squeeze %2 : memref<1x2x128x512xbf16, #tpu.memory_space<vmem>> -> memref<2x128x512xbf16, #tpu.memory_space<vmem>>
    %4 = tpu.memref_slice %arg7[%c0_i32_1] : memref<4x!tpu.dma_semaphore, #tpu.memory_space<semaphore_mem>> -> memref<1x!tpu.dma_semaphore, #tpu.memory_space<semaphore_mem>>
    %5 = tpu.memref_squeeze %4 : memref<1x!tpu.dma_semaphore, #tpu.memory_space<semaphore_mem>> -> memref<!tpu.dma_semaphore, #tpu.memory_space<semaphore_mem>>
    tpu.enqueue_dma source(%1 : memref<2x128x512xbf16, #tpu.memory_space<any>>) target(%3 : memref<2x128x512xbf16, #tpu.memory_space<vmem>>) target_semaphore(%5 : memref<!tpu.dma_semaphore, #tpu.memory_space<semaphore_mem>>)
    %c1_i32 = arith.constant 1 : i32
    %c1_i32_8 = arith.constant 1 : i32
    %c1_i32_9 = arith.constant 1 : i32
    %c0_i32_10 = arith.constant 0 : i32
    %c0_i32_11 = arith.constant 0 : i32
    %c0_i32_12 = arith.constant 0 : i32
    %6 = tpu.memref_slice %arg2[%c1_i32, %c0_i32_10, %c0_i32_11, %c0_i32_12] : memref<4x2x128x512xbf16, #tpu.memory_space<any>> -> memref<1x2x128x512xbf16, #tpu.memory_space<any>>
    %7 = tpu.memref_squeeze %6 : memref<1x2x128x512xbf16, #tpu.memory_space<any>> -> memref<2x128x512xbf16, #tpu.memory_space<any>>
    %c0_i32_13 = arith.constant 0 : i32
    %c0_i32_14 = arith.constant 0 : i32
    %c0_i32_15 = arith.constant 0 : i32
    %8 = tpu.memref_slice %arg4[%c1_i32_8, %c0_i32_13, %c0_i32_14, %c0_i32_15] : memref<4x2x128x512xbf16, #tpu.memory_space<vmem>> -> memref<1x2x128x512xbf16, #tpu.memory_space<vmem>>
    %9 = tpu.memref_squeeze %8 : memref<1x2x128x512xbf16, #tpu.memory_space<vmem>> -> memref<2x128x512xbf16, #tpu.memory_space<vmem>>
    %10 = tpu.memref_slice %arg7[%c1_i32_9] : memref<4x!tpu.dma_semaphore, #tpu.memory_space<semaphore_mem>> -> memref<1x!tpu.dma_semaphore, #tpu.memory_space<semaphore_mem>>
    %11 = tpu.memref_squeeze %10 : memref<1x!tpu.dma_semaphore, #tpu.memory_space<semaphore_mem>> -> memref<!tpu.dma_semaphore, #tpu.memory_space<semaphore_mem>>
    tpu.enqueue_dma source(%7 : memref<2x128x512xbf16, #tpu.memory_space<any>>) target(%9 : memref<2x128x512xbf16, #tpu.memory_space<vmem>>) target_semaphore(%11 : memref<!tpu.dma_semaphore, #tpu.memory_space<semaphore_mem>>)
    %c2_i32 = arith.constant 2 : i32
    %c2_i32_16 = arith.constant 2 : i32
    %c2_i32_17 = arith.constant 2 : i32
    %c0_i32_18 = arith.constant 0 : i32
    %c0_i32_19 = arith.constant 0 : i32
    %c0_i32_20 = arith.constant 0 : i32
    %12 = tpu.memref_slice %arg2[%c2_i32, %c0_i32_18, %c0_i32_19, %c0_i32_20] : memref<4x2x128x512xbf16, #tpu.memory_space<any>> -> memref<1x2x128x512xbf16, #tpu.memory_space<any>>
    %13 = tpu.memref_squeeze %12 : memref<1x2x128x512xbf16, #tpu.memory_space<any>> -> memref<2x128x512xbf16, #tpu.memory_space<any>>
    %c0_i32_21 = arith.constant 0 : i32
    %c0_i32_22 = arith.constant 0 : i32
    %c0_i32_23 = arith.constant 0 : i32
    %14 = tpu.memref_slice %arg4[%c2_i32_16, %c0_i32_21, %c0_i32_22, %c0_i32_23] : memref<4x2x128x512xbf16, #tpu.memory_space<vmem>> -> memref<1x2x128x512xbf16, #tpu.memory_space<vmem>>
    %15 = tpu.memref_squeeze %14 : memref<1x2x128x512xbf16, #tpu.memory_space<vmem>> -> memref<2x128x512xbf16, #tpu.memory_space<vmem>>
    %16 = tpu.memref_slice %arg7[%c2_i32_17] : memref<4x!tpu.dma_semaphore, #tpu.memory_space<semaphore_mem>> -> memref<1x!tpu.dma_semaphore, #tpu.memory_space<semaphore_mem>>
    %17 = tpu.memref_squeeze %16 : memref<1x!tpu.dma_semaphore, #tpu.memory_space<semaphore_mem>> -> memref<!tpu.dma_semaphore, #tpu.memory_space<semaphore_mem>>
    tpu.enqueue_dma source(%13 : memref<2x128x512xbf16, #tpu.memory_space<any>>) target(%15 : memref<2x128x512xbf16, #tpu.memory_space<vmem>>) target_semaphore(%17 : memref<!tpu.dma_semaphore, #tpu.memory_space<semaphore_mem>>)
    %c3_i32 = arith.constant 3 : i32
    %c3_i32_24 = arith.constant 3 : i32
    %c3_i32_25 = arith.constant 3 : i32
    %c0_i32_26 = arith.constant 0 : i32
    %c0_i32_27 = arith.constant 0 : i32
    %c0_i32_28 = arith.constant 0 : i32
    %18 = tpu.memref_slice %arg2[%c3_i32, %c0_i32_26, %c0_i32_27, %c0_i32_28] : memref<4x2x128x512xbf16, #tpu.memory_space<any>> -> memref<1x2x128x512xbf16, #tpu.memory_space<any>>
    %19 = tpu.memref_squeeze %18 : memref<1x2x128x512xbf16, #tpu.memory_space<any>> -> memref<2x128x512xbf16, #tpu.memory_space<any>>
    %c0_i32_29 = arith.constant 0 : i32
    %c0_i32_30 = arith.constant 0 : i32
    %c0_i32_31 = arith.constant 0 : i32
    %20 = tpu.memref_slice %arg4[%c3_i32_24, %c0_i32_29, %c0_i32_30, %c0_i32_31] : memref<4x2x128x512xbf16, #tpu.memory_space<vmem>> -> memref<1x2x128x512xbf16, #tpu.memory_space<vmem>>
    %21 = tpu.memref_squeeze %20 : memref<1x2x128x512xbf16, #tpu.memory_space<vmem>> -> memref<2x128x512xbf16, #tpu.memory_space<vmem>>
    %22 = tpu.memref_slice %arg7[%c3_i32_25] : memref<4x!tpu.dma_semaphore, #tpu.memory_space<semaphore_mem>> -> memref<1x!tpu.dma_semaphore, #tpu.memory_space<semaphore_mem>>
    %23 = tpu.memref_squeeze %22 : memref<1x!tpu.dma_semaphore, #tpu.memory_space<semaphore_mem>> -> memref<!tpu.dma_semaphore, #tpu.memory_space<semaphore_mem>>
    tpu.enqueue_dma source(%19 : memref<2x128x512xbf16, #tpu.memory_space<any>>) target(%21 : memref<2x128x512xbf16, #tpu.memory_space<vmem>>) target_semaphore(%23 : memref<!tpu.dma_semaphore, #tpu.memory_space<semaphore_mem>>)
    %c0 = arith.constant 0 : index
    %c0_32 = arith.constant 0 : index
    %c0_33 = arith.constant 0 : index
    %24 = vector.load %arg0[%c0, %c0_32, %c0_33] : memref<2x8x128xf32, #tpu.memory_space<vmem>>, vector<2x8x128xf32>
    %c0_i32_34 = arith.constant 0 : i32
    %c0_i32_35 = arith.constant 0 : i32
    %c0_i32_36 = arith.constant 0 : i32
    %c0_i32_37 = arith.constant 0 : i32
    %c0_i32_38 = arith.constant 0 : i32
    %c0_i32_39 = arith.constant 0 : i32
    %25 = tpu.memref_slice %arg2[%c0_i32_34, %c0_i32_37, %c0_i32_38, %c0_i32_39] : memref<4x2x128x512xbf16, #tpu.memory_space<any>> -> memref<1x2x128x512xbf16, #tpu.memory_space<any>>
    %26 = tpu.memref_squeeze %25 : memref<1x2x128x512xbf16, #tpu.memory_space<any>> -> memref<2x128x512xbf16, #tpu.memory_space<any>>
    %c0_i32_40 = arith.constant 0 : i32
    %c0_i32_41 = arith.constant 0 : i32
    %c0_i32_42 = arith.constant 0 : i32
    %27 = tpu.memref_slice %arg4[%c0_i32_35, %c0_i32_40, %c0_i32_41, %c0_i32_42] : memref<4x2x128x512xbf16, #tpu.memory_space<vmem>> -> memref<1x2x128x512xbf16, #tpu.memory_space<vmem>>
    %28 = tpu.memref_squeeze %27 : memref<1x2x128x512xbf16, #tpu.memory_space<vmem>> -> memref<2x128x512xbf16, #tpu.memory_space<vmem>>
    %29 = tpu.memref_slice %arg7[%c0_i32_36] : memref<4x!tpu.dma_semaphore, #tpu.memory_space<semaphore_mem>> -> memref<1x!tpu.dma_semaphore, #tpu.memory_space<semaphore_mem>>
    %30 = tpu.memref_squeeze %29 : memref<1x!tpu.dma_semaphore, #tpu.memory_space<semaphore_mem>> -> memref<!tpu.dma_semaphore, #tpu.memory_space<semaphore_mem>>
    tpu.wait_dma2 semaphore(%30 : memref<!tpu.dma_semaphore, #tpu.memory_space<semaphore_mem>>) src(%26 : memref<2x128x512xbf16, #tpu.memory_space<any>>) dst(%28 : memref<2x128x512xbf16, #tpu.memory_space<vmem>>)
    %c0_43 = arith.constant 0 : index
    %c0_44 = arith.constant 0 : index
    %c0_45 = arith.constant 0 : index
    %31 = vector.load %arg1[%c0_43, %c0_44, %c0_45] : memref<4x1x512xf32, #tpu.memory_space<vmem>>, vector<1x1x512xf32>
    %32 = vector.shape_cast %31 : vector<1x1x512xf32> to vector<1x512xf32>
    %33 = vector.shape_cast %24 : vector<2x8x128xf32> to vector<16x128xf32>
    %34 = arith.truncf %33 : vector<16x128xf32> to vector<16x128xbf16>
    %c0_46 = arith.constant 0 : index
    %c0_47 = arith.constant 0 : index
    %c0_48 = arith.constant 0 : index
    %c0_49 = arith.constant 0 : index
    %35 = vector.load %arg4[%c0_46, %c0_47, %c0_48, %c0_49] : memref<4x2x128x512xbf16, #tpu.memory_space<vmem>>, vector<1x1x128x512xbf16>
    %36 = vector.shape_cast %35 : vector<1x1x128x512xbf16> to vector<128x512xbf16>
    %cst = arith.constant dense<0.000000e+00> : vector<16x512xf32>
    %37 = tpu.matmul %34, %36, %cst {dimension_numbers = #tpu.dot_dimension_numbers<[1], [0], [0], [1], [0, 0, 1, 1], [], []>} : vector<16x128xbf16>, vector<128x512xbf16>, vector<16x512xf32> -> vector<16x512xf32>
    %38 = vector.broadcast %32 : vector<1x512xf32> to vector<16x512xf32>
    %39 = arith.addf %37, %38 : vector<16x512xf32>
    %40 = vector.shape_cast %39 : vector<16x512xf32> to vector<2x8x512xf32>
    %41 = vector.extract_strided_slice %40 {offsets = [0, 0, 0], sizes = [2, 1, 512], strides = [1, 1, 1]} : vector<2x8x512xf32> to vector<2x1x512xf32>
    %42 = vector.shape_cast %41 : vector<2x1x512xf32> to vector<2x512xf32>
    %cst_50 = arith.constant 0.000000e+00 : f32
    %43 = vector.broadcast %cst_50 : f32 to vector<2x128xf32>
    %44 = vector.extract_strided_slice %42 {offsets = [0, 0], sizes = [2, 128], strides = [1, 1]} : vector<2x512xf32> to vector<2x128xf32>
    %45 = arith.negf %44 : vector<2x128xf32>
    %46 = math.exp %45 : vector<2x128xf32>
    %cst_51 = arith.constant 1.000000e+00 : f32
    %47 = vector.broadcast %cst_51 : f32 to vector<2x128xf32>
    %48 = arith.addf %47, %46 : vector<2x128xf32>
    %49 = arith.divf %47, %48 : vector<2x128xf32>
    %50 = vector.extract_strided_slice %42 {offsets = [0, 128], sizes = [2, 128], strides = [1, 1]} : vector<2x512xf32> to vector<2x128xf32>
    %51 = arith.negf %50 : vector<2x128xf32>
    %52 = math.exp %51 : vector<2x128xf32>
    %cst_52 = arith.constant 1.000000e+00 : f32
    %53 = vector.broadcast %cst_52 : f32 to vector<2x128xf32>
    %54 = arith.addf %53, %52 : vector<2x128xf32>
    %55 = arith.divf %53, %54 : vector<2x128xf32>
    %56 = vector.extract_strided_slice %42 {offsets = [0, 256], sizes = [2, 128], strides = [1, 1]} : vector<2x512xf32> to vector<2x128xf32>
    %57 = math.tanh %56 : vector<2x128xf32>
    %58 = vector.extract_strided_slice %42 {offsets = [0, 384], sizes = [2, 128], strides = [1, 1]} : vector<2x512xf32> to vector<2x128xf32>
    %59 = arith.negf %58 : vector<2x128xf32>
    %60 = math.exp %59 : vector<2x128xf32>
    %cst_53 = arith.constant 1.000000e+00 : f32
    %61 = vector.broadcast %cst_53 : f32 to vector<2x128xf32>
    %62 = arith.addf %61, %60 : vector<2x128xf32>
    %63 = arith.divf %61, %62 : vector<2x128xf32>
    %64 = arith.mulf %55, %43 : vector<2x128xf32>
    %65 = arith.mulf %49, %57 : vector<2x128xf32>
    %66 = arith.addf %64, %65 : vector<2x128xf32>
    %67 = math.tanh %66 : vector<2x128xf32>
    %68 = arith.mulf %63, %67 : vector<2x128xf32>
    %c0_54 = arith.constant 0 : index
    %c0_55 = arith.constant 0 : index
    %c0_56 = arith.constant 0 : index
    %69 = vector.load %arg5[%c0_54, %c0_55, %c0_56] : memref<2x8x128xf32, #tpu.memory_space<vmem>>, vector<2x1x128xf32>
    %70 = vector.shape_cast %69 : vector<2x1x128xf32> to vector<2x128xf32>
    %71 = vector.shape_cast %68 : vector<2x128xf32> to vector<2x1x128xf32>
    tpu.vector_store %arg5[%c0_54, %c0_55, %c0_56], %71 {strides = array<i32>} : memref<2x8x128xf32, #tpu.memory_space<vmem>>, vector<2x1x128xf32>,
    %72 = vector.extract_strided_slice %40 {offsets = [0, 1, 0], sizes = [2, 1, 512], strides = [1, 1, 1]} : vector<2x8x512xf32> to vector<2x1x512xf32>
    %73 = vector.shape_cast %72 : vector<2x1x512xf32> to vector<2x512xf32>
    %74 = arith.truncf %68 : vector<2x128xf32> to vector<2x128xbf16>
    %c0_57 = arith.constant 0 : index
    %c1 = arith.constant 1 : index
    %c0_58 = arith.constant 0 : index
    %c0_59 = arith.constant 0 : index
    %75 = vector.load %arg4[%c0_57, %c1, %c0_58, %c0_59] : memref<4x2x128x512xbf16, #tpu.memory_space<vmem>>, vector<1x1x128x512xbf16>
    %76 = vector.shape_cast %75 : vector<1x1x128x512xbf16> to vector<128x512xbf16>
    %cst_60 = arith.constant dense<0.000000e+00> : vector<2x512xf32>
    %77 = tpu.matmul %74, %76, %cst_60 {dimension_numbers = #tpu.dot_dimension_numbers<[1], [0], [0], [1], [0, 0, 1, 1], [], []>} : vector<2x128xbf16>, vector<128x512xbf16>, vector<2x512xf32> -> vector<2x512xf32>
    %78 = arith.addf %73, %77 : vector<2x512xf32>
    %79 = vector.extract_strided_slice %78 {offsets = [0, 0], sizes = [2, 128], strides = [1, 1]} : vector<2x512xf32> to vector<2x128xf32>
    %80 = arith.negf %79 : vector<2x128xf32>
    %81 = math.exp %80 : vector<2x128xf32>
    %cst_61 = arith.constant 1.000000e+00 : f32
    %82 = vector.broadcast %cst_61 : f32 to vector<2x128xf32>
    %83 = arith.addf %82, %81 : vector<2x128xf32>
    %84 = arith.divf %82, %83 : vector<2x128xf32>
    %85 = vector.extract_strided_slice %78 {offsets = [0, 128], sizes = [2, 128], strides = [1, 1]} : vector<2x512xf32> to vector<2x128xf32>
    %86 = arith.negf %85 : vector<2x128xf32>
    %87 = math.exp %86 : vector<2x128xf32>
    %cst_62 = arith.constant 1.000000e+00 : f32
    %88 = vector.broadcast %cst_62 : f32 to vector<2x128xf32>
    %89 = arith.addf %88, %87 : vector<2x128xf32>
    %90 = arith.divf %88, %89 : vector<2x128xf32>
    %91 = vector.extract_strided_slice %78 {offsets = [0, 256], sizes = [2, 128], strides = [1, 1]} : vector<2x512xf32> to vector<2x128xf32>
    %92 = math.tanh %91 : vector<2x128xf32>
    %93 = vector.extract_strided_slice %78 {offsets = [0, 384], sizes = [2, 128], strides = [1, 1]} : vector<2x512xf32> to vector<2x128xf32>
    %94 = arith.negf %93 : vector<2x128xf32>
    %95 = math.exp %94 : vector<2x128xf32>
    %cst_63 = arith.constant 1.000000e+00 : f32
    %96 = vector.broadcast %cst_63 : f32 to vector<2x128xf32>
    %97 = arith.addf %96, %95 : vector<2x128xf32>
    %98 = arith.divf %96, %97 : vector<2x128xf32>
    %99 = arith.mulf %90, %66 : vector<2x128xf32>
    %100 = arith.mulf %84, %92 : vector<2x128xf32>
    %101 = arith.addf %99, %100 : vector<2x128xf32>
    %102 = math.tanh %101 : vector<2x128xf32>
    %103 = arith.mulf %98, %102 : vector<2x128xf32>
    %c0_64 = arith.constant 0 : index
    %c1_65 = arith.constant 1 : index
    %c0_66 = arith.constant 0 : index
    %104 = vector.load %arg5[%c0_64, %c1_65, %c0_66] : memref<2x8x128xf32, #tpu.memory_space<vmem>>, vector<2x1x128xf32>
    %105 = vector.shape_cast %104 : vector<2x1x128xf32> to vector<2x128xf32>
    %106 = vector.shape_cast %103 : vector<2x128xf32> to vector<2x1x128xf32>
    tpu.vector_store %arg5[%c0_64, %c1_65, %c0_66], %106 {strides = array<i32>} : memref<2x8x128xf32, #tpu.memory_space<vmem>>, vector<2x1x128xf32>,
    %107 = vector.extract_strided_slice %40 {offsets = [0, 2, 0], sizes = [2, 1, 512], strides = [1, 1, 1]} : vector<2x8x512xf32> to vector<2x1x512xf32>
    %108 = vector.shape_cast %107 : vector<2x1x512xf32> to vector<2x512xf32>
    %109 = arith.truncf %103 : vector<2x128xf32> to vector<2x128xbf16>
    %c0_67 = arith.constant 0 : index
    %c1_68 = arith.constant 1 : index
    %c0_69 = arith.constant 0 : index
    %c0_70 = arith.constant 0 : index
    %110 = vector.load %arg4[%c0_67, %c1_68, %c0_69, %c0_70] : memref<4x2x128x512xbf16, #tpu.memory_space<vmem>>, vector<1x1x128x512xbf16>
    %111 = vector.shape_cast %110 : vector<1x1x128x512xbf16> to vector<128x512xbf16>
    %cst_71 = arith.constant dense<0.000000e+00> : vector<2x512xf32>
    %112 = tpu.matmul %109, %111, %cst_71 {dimension_numbers = #tpu.dot_dimension_numbers<[1], [0], [0], [1], [0, 0, 1, 1], [], []>} : vector<2x128xbf16>, vector<128x512xbf16>, vector<2x512xf32> -> vector<2x512xf32>
    %113 = arith.addf %108, %112 : vector<2x512xf32>
    %114 = vector.extract_strided_slice %113 {offsets = [0, 0], sizes = [2, 128], strides = [1, 1]} : vector<2x512xf32> to vector<2x128xf32>
    %115 = arith.negf %114 : vector<2x128xf32>
    %116 = math.exp %115 : vector<2x128xf32>
    %cst_72 = arith.constant 1.000000e+00 : f32
    %117 = vector.broadcast %cst_72 : f32 to vector<2x128xf32>
    %118 = arith.addf %117, %116 : vector<2x128xf32>
    %119 = arith.divf %117, %118 : vector<2x128xf32>
    %120 = vector.extract_strided_slice %113 {offsets = [0, 128], sizes = [2, 128], strides = [1, 1]} : vector<2x512xf32> to vector<2x128xf32>
    %121 = arith.negf %120 : vector<2x128xf32>
    %122 = math.exp %121 : vector<2x128xf32>
    %cst_73 = arith.constant 1.000000e+00 : f32
    %123 = vector.broadcast %cst_73 : f32 to vector<2x128xf32>
    %124 = arith.addf %123, %122 : vector<2x128xf32>
    %125 = arith.divf %123, %124 : vector<2x128xf32>
    %126 = vector.extract_strided_slice %113 {offsets = [0, 256], sizes = [2, 128], strides = [1, 1]} : vector<2x512xf32> to vector<2x128xf32>
    %127 = math.tanh %126 : vector<2x128xf32>
    %128 = vector.extract_strided_slice %113 {offsets = [0, 384], sizes = [2, 128], strides = [1, 1]} : vector<2x512xf32> to vector<2x128xf32>
    %129 = arith.negf %128 : vector<2x128xf32>
    %130 = math.exp %129 : vector<2x128xf32>
    %cst_74 = arith.constant 1.000000e+00 : f32
    %131 = vector.broadcast %cst_74 : f32 to vector<2x128xf32>
    %132 = arith.addf %131, %130 : vector<2x128xf32>
    %133 = arith.divf %131, %132 : vector<2x128xf32>
    %134 = arith.mulf %125, %101 : vector<2x128xf32>
    %135 = arith.mulf %119, %127 : vector<2x128xf32>
    %136 = arith.addf %134, %135 : vector<2x128xf32>
    %137 = math.tanh %136 : vector<2x128xf32>
    %138 = arith.mulf %133, %137 : vector<2x128xf32>
    %c0_75 = arith.constant 0 : index
    %c2 = arith.constant 2 : index
    %c0_76 = arith.constant 0 : index
    %139 = vector.load %arg5[%c0_75, %c2, %c0_76] : memref<2x8x128xf32, #tpu.memory_space<vmem>>, vector<2x1x128xf32>
    %140 = vector.shape_cast %139 : vector<2x1x128xf32> to vector<2x128xf32>
    %141 = vector.shape_cast %138 : vector<2x128xf32> to vector<2x1x128xf32>
    tpu.vector_store %arg5[%c0_75, %c2, %c0_76], %141 {strides = array<i32>} : memref<2x8x128xf32, #tpu.memory_space<vmem>>, vector<2x1x128xf32>,
    %142 = vector.extract_strided_slice %40 {offsets = [0, 3, 0], sizes = [2, 1, 512], strides = [1, 1, 1]} : vector<2x8x512xf32> to vector<2x1x512xf32>
    %143 = vector.shape_cast %142 : vector<2x1x512xf32> to vector<2x512xf32>
    %144 = arith.truncf %138 : vector<2x128xf32> to vector<2x128xbf16>
    %c0_77 = arith.constant 0 : index
    %c1_78 = arith.constant 1 : index
    %c0_79 = arith.constant 0 : index
    %c0_80 = arith.constant 0 : index
    %145 = vector.load %arg4[%c0_77, %c1_78, %c0_79, %c0_80] : memref<4x2x128x512xbf16, #tpu.memory_space<vmem>>, vector<1x1x128x512xbf16>
    %146 = vector.shape_cast %145 : vector<1x1x128x512xbf16> to vector<128x512xbf16>
    %cst_81 = arith.constant dense<0.000000e+00> : vector<2x512xf32>
    %147 = tpu.matmul %144, %146, %cst_81 {dimension_numbers = #tpu.dot_dimension_numbers<[1], [0], [0], [1], [0, 0, 1, 1], [], []>} : vector<2x128xbf16>, vector<128x512xbf16>, vector<2x512xf32> -> vector<2x512xf32>
    %148 = arith.addf %143, %147 : vector<2x512xf32>
    %149 = vector.extract_strided_slice %148 {offsets = [0, 0], sizes = [2, 128], strides = [1, 1]} : vector<2x512xf32> to vector<2x128xf32>
    %150 = arith.negf %149 : vector<2x128xf32>
    %151 = math.exp %150 : vector<2x128xf32>
    %cst_82 = arith.constant 1.000000e+00 : f32
    %152 = vector.broadcast %cst_82 : f32 to vector<2x128xf32>
    %153 = arith.addf %152, %151 : vector<2x128xf32>
    %154 = arith.divf %152, %153 : vector<2x128xf32>
    %155 = vector.extract_strided_slice %148 {offsets = [0, 128], sizes = [2, 128], strides = [1, 1]} : vector<2x512xf32> to vector<2x128xf32>
    %156 = arith.negf %155 : vector<2x128xf32>
    %157 = math.exp %156 : vector<2x128xf32>
    %cst_83 = arith.constant 1.000000e+00 : f32
    %158 = vector.broadcast %cst_83 : f32 to vector<2x128xf32>
    %159 = arith.addf %158, %157 : vector<2x128xf32>
    %160 = arith.divf %158, %159 : vector<2x128xf32>
    %161 = vector.extract_strided_slice %148 {offsets = [0, 256], sizes = [2, 128], strides = [1, 1]} : vector<2x512xf32> to vector<2x128xf32>
    %162 = math.tanh %161 : vector<2x128xf32>
    %163 = vector.extract_strided_slice %148 {offsets = [0, 384], sizes = [2, 128], strides = [1, 1]} : vector<2x512xf32> to vector<2x128xf32>
    %164 = arith.negf %163 : vector<2x128xf32>
    %165 = math.exp %164 : vector<2x128xf32>
    %cst_84 = arith.constant 1.000000e+00 : f32
    %166 = vector.broadcast %cst_84 : f32 to vector<2x128xf32>
    %167 = arith.addf %166, %165 : vector<2x128xf32>
    %168 = arith.divf %166, %167 : vector<2x128xf32>
    %169 = arith.mulf %160, %136 : vector<2x128xf32>
    %170 = arith.mulf %154, %162 : vector<2x128xf32>
    %171 = arith.addf %169, %170 : vector<2x128xf32>
    %172 = math.tanh %171 : vector<2x128xf32>
    %173 = arith.mulf %168, %172 : vector<2x128xf32>
    %c0_85 = arith.constant 0 : index
    %c3 = arith.constant 3 : index
    %c0_86 = arith.constant 0 : index
    %174 = vector.load %arg5[%c0_85, %c3, %c0_86] : memref<2x8x128xf32, #tpu.memory_space<vmem>>, vector<2x1x128xf32>
    %175 = vector.shape_cast %174 : vector<2x1x128xf32> to vector<2x128xf32>
    %176 = vector.shape_cast %173 : vector<2x128xf32> to vector<2x1x128xf32>
    tpu.vector_store %arg5[%c0_85, %c3, %c0_86], %176 {strides = array<i32>} : memref<2x8x128xf32, #tpu.memory_space<vmem>>, vector<2x1x128xf32>,
    %177 = vector.extract_strided_slice %40 {offsets = [0, 4, 0], sizes = [2, 1, 512], strides = [1, 1, 1]} : vector<2x8x512xf32> to vector<2x1x512xf32>
    %178 = vector.shape_cast %177 : vector<2x1x512xf32> to vector<2x512xf32>
    %179 = arith.truncf %173 : vector<2x128xf32> to vector<2x128xbf16>
    %c0_87 = arith.constant 0 : index
    %c1_88 = arith.constant 1 : index
    %c0_89 = arith.constant 0 : index
    %c0_90 = arith.constant 0 : index
    %180 = vector.load %arg4[%c0_87, %c1_88, %c0_89, %c0_90] : memref<4x2x128x512xbf16, #tpu.memory_space<vmem>>, vector<1x1x128x512xbf16>
    %181 = vector.shape_cast %180 : vector<1x1x128x512xbf16> to vector<128x512xbf16>
    %cst_91 = arith.constant dense<0.000000e+00> : vector<2x512xf32>
    %182 = tpu.matmul %179, %181, %cst_91 {dimension_numbers = #tpu.dot_dimension_numbers<[1], [0], [0], [1], [0, 0, 1, 1], [], []>} : vector<2x128xbf16>, vector<128x512xbf16>, vector<2x512xf32> -> vector<2x512xf32>
    %183 = arith.addf %178, %182 : vector<2x512xf32>
    %184 = vector.extract_strided_slice %183 {offsets = [0, 0], sizes = [2, 128], strides = [1, 1]} : vector<2x512xf32> to vector<2x128xf32>
    %185 = arith.negf %184 : vector<2x128xf32>
    %186 = math.exp %185 : vector<2x128xf32>
    %cst_92 = arith.constant 1.000000e+00 : f32
    %187 = vector.broadcast %cst_92 : f32 to vector<2x128xf32>
    %188 = arith.addf %187, %186 : vector<2x128xf32>
    %189 = arith.divf %187, %188 : vector<2x128xf32>
    %190 = vector.extract_strided_slice %183 {offsets = [0, 128], sizes = [2, 128], strides = [1, 1]} : vector<2x512xf32> to vector<2x128xf32>
    %191 = arith.negf %190 : vector<2x128xf32>
    %192 = math.exp %191 : vector<2x128xf32>
    %cst_93 = arith.constant 1.000000e+00 : f32
    %193 = vector.broadcast %cst_93 : f32 to vector<2x128xf32>
    %194 = arith.addf %193, %192 : vector<2x128xf32>
    %195 = arith.divf %193, %194 : vector<2x128xf32>
    %196 = vector.extract_strided_slice %183 {offsets = [0, 256], sizes = [2, 128], strides = [1, 1]} : vector<2x512xf32> to vector<2x128xf32>
    %197 = math.tanh %196 : vector<2x128xf32>
    %198 = vector.extract_strided_slice %183 {offsets = [0, 384], sizes = [2, 128], strides = [1, 1]} : vector<2x512xf32> to vector<2x128xf32>
    %199 = arith.negf %198 : vector<2x128xf32>
    %200 = math.exp %199 : vector<2x128xf32>
    %cst_94 = arith.constant 1.000000e+00 : f32
    %201 = vector.broadcast %cst_94 : f32 to vector<2x128xf32>
    %202 = arith.addf %201, %200 : vector<2x128xf32>
    %203 = arith.divf %201, %202 : vector<2x128xf32>
    %204 = arith.mulf %195, %171 : vector<2x128xf32>
    %205 = arith.mulf %189, %197 : vector<2x128xf32>
    %206 = arith.addf %204, %205 : vector<2x128xf32>
    %207 = math.tanh %206 : vector<2x128xf32>
    %208 = arith.mulf %203, %207 : vector<2x128xf32>
    %c0_95 = arith.constant 0 : index
    %c4 = arith.constant 4 : index
    %c0_96 = arith.constant 0 : index
    %209 = vector.load %arg5[%c0_95, %c4, %c0_96] : memref<2x8x128xf32, #tpu.memory_space<vmem>>, vector<2x1x128xf32>
    %210 = vector.shape_cast %209 : vector<2x1x128xf32> to vector<2x128xf32>
    %211 = vector.shape_cast %208 : vector<2x128xf32> to vector<2x1x128xf32>
    tpu.vector_store %arg5[%c0_95, %c4, %c0_96], %211 {strides = array<i32>} : memref<2x8x128xf32, #tpu.memory_space<vmem>>, vector<2x1x128xf32>,
    %212 = vector.extract_strided_slice %40 {offsets = [0, 5, 0], sizes = [2, 1, 512], strides = [1, 1, 1]} : vector<2x8x512xf32> to vector<2x1x512xf32>
    %213 = vector.shape_cast %212 : vector<2x1x512xf32> to vector<2x512xf32>
    %214 = arith.truncf %208 : vector<2x128xf32> to vector<2x128xbf16>
    %c0_97 = arith.constant 0 : index
    %c1_98 = arith.constant 1 : index
    %c0_99 = arith.constant 0 : index
    %c0_100 = arith.constant 0 : index
    %215 = vector.load %arg4[%c0_97, %c1_98, %c0_99, %c0_100] : memref<4x2x128x512xbf16, #tpu.memory_space<vmem>>, vector<1x1x128x512xbf16>
    %216 = vector.shape_cast %215 : vector<1x1x128x512xbf16> to vector<128x512xbf16>
    %cst_101 = arith.constant dense<0.000000e+00> : vector<2x512xf32>
    %217 = tpu.matmul %214, %216, %cst_101 {dimension_numbers = #tpu.dot_dimension_numbers<[1], [0], [0], [1], [0, 0, 1, 1], [], []>} : vector<2x128xbf16>, vector<128x512xbf16>, vector<2x512xf32> -> vector<2x512xf32>
    %218 = arith.addf %213, %217 : vector<2x512xf32>
    %219 = vector.extract_strided_slice %218 {offsets = [0, 0], sizes = [2, 128], strides = [1, 1]} : vector<2x512xf32> to vector<2x128xf32>
    %220 = arith.negf %219 : vector<2x128xf32>
    %221 = math.exp %220 : vector<2x128xf32>
    %cst_102 = arith.constant 1.000000e+00 : f32
    %222 = vector.broadcast %cst_102 : f32 to vector<2x128xf32>
    %223 = arith.addf %222, %221 : vector<2x128xf32>
    %224 = arith.divf %222, %223 : vector<2x128xf32>
    %225 = vector.extract_strided_slice %218 {offsets = [0, 128], sizes = [2, 128], strides = [1, 1]} : vector<2x512xf32> to vector<2x128xf32>
    %226 = arith.negf %225 : vector<2x128xf32>
    %227 = math.exp %226 : vector<2x128xf32>
    %cst_103 = arith.constant 1.000000e+00 : f32
    %228 = vector.broadcast %cst_103 : f32 to vector<2x128xf32>
    %229 = arith.addf %228, %227 : vector<2x128xf32>
    %230 = arith.divf %228, %229 : vector<2x128xf32>
    %231 = vector.extract_strided_slice %218 {offsets = [0, 256], sizes = [2, 128], strides = [1, 1]} : vector<2x512xf32> to vector<2x128xf32>
    %232 = math.tanh %231 : vector<2x128xf32>
    %233 = vector.extract_strided_slice %218 {offsets = [0, 384], sizes = [2, 128], strides = [1, 1]} : vector<2x512xf32> to vector<2x128xf32>
    %234 = arith.negf %233 : vector<2x128xf32>
    %235 = math.exp %234 : vector<2x128xf32>
    %cst_104 = arith.constant 1.000000e+00 : f32
    %236 = vector.broadcast %cst_104 : f32 to vector<2x128xf32>
    %237 = arith.addf %236, %235 : vector<2x128xf32>
    %238 = arith.divf %236, %237 : vector<2x128xf32>
    %239 = arith.mulf %230, %206 : vector<2x128xf32>
    %240 = arith.mulf %224, %232 : vector<2x128xf32>
    %241 = arith.addf %239, %240 : vector<2x128xf32>
    %242 = math.tanh %241 : vector<2x128xf32>
    %243 = arith.mulf %238, %242 : vector<2x128xf32>
    %c0_105 = arith.constant 0 : index
    %c5 = arith.constant 5 : index
    %c0_106 = arith.constant 0 : index
    %244 = vector.load %arg5[%c0_105, %c5, %c0_106] : memref<2x8x128xf32, #tpu.memory_space<vmem>>, vector<2x1x128xf32>
    %245 = vector.shape_cast %244 : vector<2x1x128xf32> to vector<2x128xf32>
    %246 = vector.shape_cast %243 : vector<2x128xf32> to vector<2x1x128xf32>
    tpu.vector_store %arg5[%c0_105, %c5, %c0_106], %246 {strides = array<i32>} : memref<2x8x128xf32, #tpu.memory_space<vmem>>, vector<2x1x128xf32>,
    %247 = vector.extract_strided_slice %40 {offsets = [0, 6, 0], sizes = [2, 1, 512], strides = [1, 1, 1]} : vector<2x8x512xf32> to vector<2x1x512xf32>
    %248 = vector.shape_cast %247 : vector<2x1x512xf32> to vector<2x512xf32>
    %249 = arith.truncf %243 : vector<2x128xf32> to vector<2x128xbf16>
    %c0_107 = arith.constant 0 : index
    %c1_108 = arith.constant 1 : index
    %c0_109 = arith.constant 0 : index
    %c0_110 = arith.constant 0 : index
    %250 = vector.load %arg4[%c0_107, %c1_108, %c0_109, %c0_110] : memref<4x2x128x512xbf16, #tpu.memory_space<vmem>>, vector<1x1x128x512xbf16>
    %251 = vector.shape_cast %250 : vector<1x1x128x512xbf16> to vector<128x512xbf16>
    %cst_111 = arith.constant dense<0.000000e+00> : vector<2x512xf32>
    %252 = tpu.matmul %249, %251, %cst_111 {dimension_numbers = #tpu.dot_dimension_numbers<[1], [0], [0], [1], [0, 0, 1, 1], [], []>} : vector<2x128xbf16>, vector<128x512xbf16>, vector<2x512xf32> -> vector<2x512xf32>
    %253 = arith.addf %248, %252 : vector<2x512xf32>
    %254 = vector.extract_strided_slice %253 {offsets = [0, 0], sizes = [2, 128], strides = [1, 1]} : vector<2x512xf32> to vector<2x128xf32>
    %255 = arith.negf %254 : vector<2x128xf32>
    %256 = math.exp %255 : vector<2x128xf32>
    %cst_112 = arith.constant 1.000000e+00 : f32
    %257 = vector.broadcast %cst_112 : f32 to vector<2x128xf32>
    %258 = arith.addf %257, %256 : vector<2x128xf32>
    %259 = arith.divf %257, %258 : vector<2x128xf32>
    %260 = vector.extract_strided_slice %253 {offsets = [0, 128], sizes = [2, 128], strides = [1, 1]} : vector<2x512xf32> to vector<2x128xf32>
    %261 = arith.negf %260 : vector<2x128xf32>
    %262 = math.exp %261 : vector<2x128xf32>
    %cst_113 = arith.constant 1.000000e+00 : f32
    %263 = vector.broadcast %cst_113 : f32 to vector<2x128xf32>
    %264 = arith.addf %263, %262 : vector<2x128xf32>
    %265 = arith.divf %263, %264 : vector<2x128xf32>
    %266 = vector.extract_strided_slice %253 {offsets = [0, 256], sizes = [2, 128], strides = [1, 1]} : vector<2x512xf32> to vector<2x128xf32>
    %267 = math.tanh %266 : vector<2x128xf32>
    %268 = vector.extract_strided_slice %253 {offsets = [0, 384], sizes = [2, 128], strides = [1, 1]} : vector<2x512xf32> to vector<2x128xf32>
    %269 = arith.negf %268 : vector<2x128xf32>
    %270 = math.exp %269 : vector<2x128xf32>
    %cst_114 = arith.constant 1.000000e+00 : f32
    %271 = vector.broadcast %cst_114 : f32 to vector<2x128xf32>
    %272 = arith.addf %271, %270 : vector<2x128xf32>
    %273 = arith.divf %271, %272 : vector<2x128xf32>
    %274 = arith.mulf %265, %241 : vector<2x128xf32>
    %275 = arith.mulf %259, %267 : vector<2x128xf32>
    %276 = arith.addf %274, %275 : vector<2x128xf32>
    %277 = math.tanh %276 : vector<2x128xf32>
    %278 = arith.mulf %273, %277 : vector<2x128xf32>
    %c0_115 = arith.constant 0 : index
    %c6 = arith.constant 6 : index
    %c0_116 = arith.constant 0 : index
    %279 = vector.load %arg5[%c0_115, %c6, %c0_116] : memref<2x8x128xf32, #tpu.memory_space<vmem>>, vector<2x1x128xf32>
    %280 = vector.shape_cast %279 : vector<2x1x128xf32> to vector<2x128xf32>
    %281 = vector.shape_cast %278 : vector<2x128xf32> to vector<2x1x128xf32>
    tpu.vector_store %arg5[%c0_115, %c6, %c0_116], %281 {strides = array<i32>} : memref<2x8x128xf32, #tpu.memory_space<vmem>>, vector<2x1x128xf32>,
    %282 = vector.extract_strided_slice %40 {offsets = [0, 7, 0], sizes = [2, 1, 512], strides = [1, 1, 1]} : vector<2x8x512xf32> to vector<2x1x512xf32>
    %283 = vector.shape_cast %282 : vector<2x1x512xf32> to vector<2x512xf32>
    %284 = arith.truncf %278 : vector<2x128xf32> to vector<2x128xbf16>
    %c0_117 = arith.constant 0 : index
    %c1_118 = arith.constant 1 : index
    %c0_119 = arith.constant 0 : index
    %c0_120 = arith.constant 0 : index
    %285 = vector.load %arg4[%c0_117, %c1_118, %c0_119, %c0_120] : memref<4x2x128x512xbf16, #tpu.memory_space<vmem>>, vector<1x1x128x512xbf16>
    %286 = vector.shape_cast %285 : vector<1x1x128x512xbf16> to vector<128x512xbf16>
    %cst_121 = arith.constant dense<0.000000e+00> : vector<2x512xf32>
    %287 = tpu.matmul %284, %286, %cst_121 {dimension_numbers = #tpu.dot_dimension_numbers<[1], [0], [0], [1], [0, 0, 1, 1], [], []>} : vector<2x128xbf16>, vector<128x512xbf16>, vector<2x512xf32> -> vector<2x512xf32>
    %288 = arith.addf %283, %287 : vector<2x512xf32>
    %289 = vector.extract_strided_slice %288 {offsets = [0, 0], sizes = [2, 128], strides = [1, 1]} : vector<2x512xf32> to vector<2x128xf32>
    %290 = arith.negf %289 : vector<2x128xf32>
    %291 = math.exp %290 : vector<2x128xf32>
    %cst_122 = arith.constant 1.000000e+00 : f32
    %292 = vector.broadcast %cst_122 : f32 to vector<2x128xf32>
    %293 = arith.addf %292, %291 : vector<2x128xf32>
    %294 = arith.divf %292, %293 : vector<2x128xf32>
    %295 = vector.extract_strided_slice %288 {offsets = [0, 128], sizes = [2, 128], strides = [1, 1]} : vector<2x512xf32> to vector<2x128xf32>
    %296 = arith.negf %295 : vector<2x128xf32>
    %297 = math.exp %296 : vector<2x128xf32>
    %cst_123 = arith.constant 1.000000e+00 : f32
    %298 = vector.broadcast %cst_123 : f32 to vector<2x128xf32>
    %299 = arith.addf %298, %297 : vector<2x128xf32>
    %300 = arith.divf %298, %299 : vector<2x128xf32>
    %301 = vector.extract_strided_slice %288 {offsets = [0, 256], sizes = [2, 128], strides = [1, 1]} : vector<2x512xf32> to vector<2x128xf32>
    %302 = math.tanh %301 : vector<2x128xf32>
    %303 = vector.extract_strided_slice %288 {offsets = [0, 384], sizes = [2, 128], strides = [1, 1]} : vector<2x512xf32> to vector<2x128xf32>
    %304 = arith.negf %303 : vector<2x128xf32>
    %305 = math.exp %304 : vector<2x128xf32>
    %cst_124 = arith.constant 1.000000e+00 : f32
    %306 = vector.broadcast %cst_124 : f32 to vector<2x128xf32>
    %307 = arith.addf %306, %305 : vector<2x128xf32>
    %308 = arith.divf %306, %307 : vector<2x128xf32>
    %309 = arith.mulf %300, %276 : vector<2x128xf32>
    %310 = arith.mulf %294, %302 : vector<2x128xf32>
    %311 = arith.addf %309, %310 : vector<2x128xf32>
    %312 = math.tanh %311 : vector<2x128xf32>
    %313 = arith.mulf %308, %312 : vector<2x128xf32>
    %c0_125 = arith.constant 0 : index
    %c7 = arith.constant 7 : index
    %c0_126 = arith.constant 0 : index
    %314 = vector.load %arg5[%c0_125, %c7, %c0_126] : memref<2x8x128xf32, #tpu.memory_space<vmem>>, vector<2x1x128xf32>
    %315 = vector.shape_cast %314 : vector<2x1x128xf32> to vector<2x128xf32>
    %316 = vector.shape_cast %313 : vector<2x128xf32> to vector<2x1x128xf32>
    tpu.vector_store %arg5[%c0_125, %c7, %c0_126], %316 {strides = array<i32>} : memref<2x8x128xf32, #tpu.memory_space<vmem>>, vector<2x1x128xf32>,
    %c0_127 = arith.constant 0 : index
    %c0_128 = arith.constant 0 : index
    %c0_129 = arith.constant 0 : index
    %317 = vector.load %arg5[%c0_127, %c0_128, %c0_129] : memref<2x8x128xf32, #tpu.memory_space<vmem>>, vector<2x8x128xf32>
    %c1_i32_130 = arith.constant 1 : i32
    %c1_i32_131 = arith.constant 1 : i32
    %c1_i32_132 = arith.constant 1 : i32
    %c0_i32_133 = arith.constant 0 : i32
    %c0_i32_134 = arith.constant 0 : i32
    %c0_i32_135 = arith.constant 0 : i32
    %318 = tpu.memref_slice %arg2[%c1_i32_130, %c0_i32_133, %c0_i32_134, %c0_i32_135] : memref<4x2x128x512xbf16, #tpu.memory_space<any>> -> memref<1x2x128x512xbf16, #tpu.memory_space<any>>
    %319 = tpu.memref_squeeze %318 : memref<1x2x128x512xbf16, #tpu.memory_space<any>> -> memref<2x128x512xbf16, #tpu.memory_space<any>>
    %c0_i32_136 = arith.constant 0 : i32
    %c0_i32_137 = arith.constant 0 : i32
    %c0_i32_138 = arith.constant 0 : i32
    %320 = tpu.memref_slice %arg4[%c1_i32_131, %c0_i32_136, %c0_i32_137, %c0_i32_138] : memref<4x2x128x512xbf16, #tpu.memory_space<vmem>> -> memref<1x2x128x512xbf16, #tpu.memory_space<vmem>>
    %321 = tpu.memref_squeeze %320 : memref<1x2x128x512xbf16, #tpu.memory_space<vmem>> -> memref<2x128x512xbf16, #tpu.memory_space<vmem>>
    %322 = tpu.memref_slice %arg7[%c1_i32_132] : memref<4x!tpu.dma_semaphore, #tpu.memory_space<semaphore_mem>> -> memref<1x!tpu.dma_semaphore, #tpu.memory_space<semaphore_mem>>
    %323 = tpu.memref_squeeze %322 : memref<1x!tpu.dma_semaphore, #tpu.memory_space<semaphore_mem>> -> memref<!tpu.dma_semaphore, #tpu.memory_space<semaphore_mem>>
    tpu.wait_dma2 semaphore(%323 : memref<!tpu.dma_semaphore, #tpu.memory_space<semaphore_mem>>) src(%319 : memref<2x128x512xbf16, #tpu.memory_space<any>>) dst(%321 : memref<2x128x512xbf16, #tpu.memory_space<vmem>>)
    %c1_139 = arith.constant 1 : index
    %c0_140 = arith.constant 0 : index
    %c0_141 = arith.constant 0 : index
    %324 = vector.load %arg1[%c1_139, %c0_140, %c0_141] : memref<4x1x512xf32, #tpu.memory_space<vmem>>, vector<1x1x512xf32>
    %325 = vector.shape_cast %324 : vector<1x1x512xf32> to vector<1x512xf32>
    %326 = vector.shape_cast %317 : vector<2x8x128xf32> to vector<16x128xf32>
    %327 = arith.truncf %326 : vector<16x128xf32> to vector<16x128xbf16>
    %c1_142 = arith.constant 1 : index
    %c0_143 = arith.constant 0 : index
    %c0_144 = arith.constant 0 : index
    %c0_145 = arith.constant 0 : index
    %328 = vector.load %arg4[%c1_142, %c0_143, %c0_144, %c0_145] : memref<4x2x128x512xbf16, #tpu.memory_space<vmem>>, vector<1x1x128x512xbf16>
    %329 = vector.shape_cast %328 : vector<1x1x128x512xbf16> to vector<128x512xbf16>
    %cst_146 = arith.constant dense<0.000000e+00> : vector<16x512xf32>
    %330 = tpu.matmul %327, %329, %cst_146 {dimension_numbers = #tpu.dot_dimension_numbers<[1], [0], [0], [1], [0, 0, 1, 1], [], []>} : vector<16x128xbf16>, vector<128x512xbf16>, vector<16x512xf32> -> vector<16x512xf32>
    %331 = vector.broadcast %325 : vector<1x512xf32> to vector<16x512xf32>
    %332 = arith.addf %330, %331 : vector<16x512xf32>
    %333 = vector.shape_cast %332 : vector<16x512xf32> to vector<2x8x512xf32>
    %334 = vector.extract_strided_slice %333 {offsets = [0, 0, 0], sizes = [2, 1, 512], strides = [1, 1, 1]} : vector<2x8x512xf32> to vector<2x1x512xf32>
    %335 = vector.shape_cast %334 : vector<2x1x512xf32> to vector<2x512xf32>
    %cst_147 = arith.constant 0.000000e+00 : f32
    %336 = vector.broadcast %cst_147 : f32 to vector<2x128xf32>
    %337 = vector.extract_strided_slice %335 {offsets = [0, 0], sizes = [2, 128], strides = [1, 1]} : vector<2x512xf32> to vector<2x128xf32>
    %338 = arith.negf %337 : vector<2x128xf32>
    %339 = math.exp %338 : vector<2x128xf32>
    %cst_148 = arith.constant 1.000000e+00 : f32
    %340 = vector.broadcast %cst_148 : f32 to vector<2x128xf32>
    %341 = arith.addf %340, %339 : vector<2x128xf32>
    %342 = arith.divf %340, %341 : vector<2x128xf32>
    %343 = vector.extract_strided_slice %335 {offsets = [0, 128], sizes = [2, 128], strides = [1, 1]} : vector<2x512xf32> to vector<2x128xf32>
    %344 = arith.negf %343 : vector<2x128xf32>
    %345 = math.exp %344 : vector<2x128xf32>
    %cst_149 = arith.constant 1.000000e+00 : f32
    %346 = vector.broadcast %cst_149 : f32 to vector<2x128xf32>
    %347 = arith.addf %346, %345 : vector<2x128xf32>
    %348 = arith.divf %346, %347 : vector<2x128xf32>
    %349 = vector.extract_strided_slice %335 {offsets = [0, 256], sizes = [2, 128], strides = [1, 1]} : vector<2x512xf32> to vector<2x128xf32>
    %350 = math.tanh %349 : vector<2x128xf32>
    %351 = vector.extract_strided_slice %335 {offsets = [0, 384], sizes = [2, 128], strides = [1, 1]} : vector<2x512xf32> to vector<2x128xf32>
    %352 = arith.negf %351 : vector<2x128xf32>
    %353 = math.exp %352 : vector<2x128xf32>
    %cst_150 = arith.constant 1.000000e+00 : f32
    %354 = vector.broadcast %cst_150 : f32 to vector<2x128xf32>
    %355 = arith.addf %354, %353 : vector<2x128xf32>
    %356 = arith.divf %354, %355 : vector<2x128xf32>
    %357 = arith.mulf %348, %336 : vector<2x128xf32>
    %358 = arith.mulf %342, %350 : vector<2x128xf32>
    %359 = arith.addf %357, %358 : vector<2x128xf32>
    %360 = math.tanh %359 : vector<2x128xf32>
    %361 = arith.mulf %356, %360 : vector<2x128xf32>
    %c0_151 = arith.constant 0 : index
    %c0_152 = arith.constant 0 : index
    %c0_153 = arith.constant 0 : index
    %362 = vector.load %arg6[%c0_151, %c0_152, %c0_153] : memref<2x8x128xf32, #tpu.memory_space<vmem>>, vector<2x1x128xf32>
    %363 = vector.shape_cast %362 : vector<2x1x128xf32> to vector<2x128xf32>
    %364 = vector.shape_cast %361 : vector<2x128xf32> to vector<2x1x128xf32>
    tpu.vector_store %arg6[%c0_151, %c0_152, %c0_153], %364 {strides = array<i32>} : memref<2x8x128xf32, #tpu.memory_space<vmem>>, vector<2x1x128xf32>,
    %365 = vector.extract_strided_slice %333 {offsets = [0, 1, 0], sizes = [2, 1, 512], strides = [1, 1, 1]} : vector<2x8x512xf32> to vector<2x1x512xf32>
    %366 = vector.shape_cast %365 : vector<2x1x512xf32> to vector<2x512xf32>
    %367 = arith.truncf %361 : vector<2x128xf32> to vector<2x128xbf16>
    %c1_154 = arith.constant 1 : index
    %c1_155 = arith.constant 1 : index
    %c0_156 = arith.constant 0 : index
    %c0_157 = arith.constant 0 : index
    %368 = vector.load %arg4[%c1_154, %c1_155, %c0_156, %c0_157] : memref<4x2x128x512xbf16, #tpu.memory_space<vmem>>, vector<1x1x128x512xbf16>
    %369 = vector.shape_cast %368 : vector<1x1x128x512xbf16> to vector<128x512xbf16>
    %cst_158 = arith.constant dense<0.000000e+00> : vector<2x512xf32>
    %370 = tpu.matmul %367, %369, %cst_158 {dimension_numbers = #tpu.dot_dimension_numbers<[1], [0], [0], [1], [0, 0, 1, 1], [], []>} : vector<2x128xbf16>, vector<128x512xbf16>, vector<2x512xf32> -> vector<2x512xf32>
    %371 = arith.addf %366, %370 : vector<2x512xf32>
    %372 = vector.extract_strided_slice %371 {offsets = [0, 0], sizes = [2, 128], strides = [1, 1]} : vector<2x512xf32> to vector<2x128xf32>
    %373 = arith.negf %372 : vector<2x128xf32>
    %374 = math.exp %373 : vector<2x128xf32>
    %cst_159 = arith.constant 1.000000e+00 : f32
    %375 = vector.broadcast %cst_159 : f32 to vector<2x128xf32>
    %376 = arith.addf %375, %374 : vector<2x128xf32>
    %377 = arith.divf %375, %376 : vector<2x128xf32>
    %378 = vector.extract_strided_slice %371 {offsets = [0, 128], sizes = [2, 128], strides = [1, 1]} : vector<2x512xf32> to vector<2x128xf32>
    %379 = arith.negf %378 : vector<2x128xf32>
    %380 = math.exp %379 : vector<2x128xf32>
    %cst_160 = arith.constant 1.000000e+00 : f32
    %381 = vector.broadcast %cst_160 : f32 to vector<2x128xf32>
    %382 = arith.addf %381, %380 : vector<2x128xf32>
    %383 = arith.divf %381, %382 : vector<2x128xf32>
    %384 = vector.extract_strided_slice %371 {offsets = [0, 256], sizes = [2, 128], strides = [1, 1]} : vector<2x512xf32> to vector<2x128xf32>
    %385 = math.tanh %384 : vector<2x128xf32>
    %386 = vector.extract_strided_slice %371 {offsets = [0, 384], sizes = [2, 128], strides = [1, 1]} : vector<2x512xf32> to vector<2x128xf32>
    %387 = arith.negf %386 : vector<2x128xf32>
    %388 = math.exp %387 : vector<2x128xf32>
    %cst_161 = arith.constant 1.000000e+00 : f32
    %389 = vector.broadcast %cst_161 : f32 to vector<2x128xf32>
    %390 = arith.addf %389, %388 : vector<2x128xf32>
    %391 = arith.divf %389, %390 : vector<2x128xf32>
    %392 = arith.mulf %383, %359 : vector<2x128xf32>
    %393 = arith.mulf %377, %385 : vector<2x128xf32>
    %394 = arith.addf %392, %393 : vector<2x128xf32>
    %395 = math.tanh %394 : vector<2x128xf32>
    %396 = arith.mulf %391, %395 : vector<2x128xf32>
    %c0_162 = arith.constant 0 : index
    %c1_163 = arith.constant 1 : index
    %c0_164 = arith.constant 0 : index
    %397 = vector.load %arg6[%c0_162, %c1_163, %c0_164] : memref<2x8x128xf32, #tpu.memory_space<vmem>>, vector<2x1x128xf32>
    %398 = vector.shape_cast %397 : vector<2x1x128xf32> to vector<2x128xf32>
    %399 = vector.shape_cast %396 : vector<2x128xf32> to vector<2x1x128xf32>
    tpu.vector_store %arg6[%c0_162, %c1_163, %c0_164], %399 {strides = array<i32>} : memref<2x8x128xf32, #tpu.memory_space<vmem>>, vector<2x1x128xf32>,
    %400 = vector.extract_strided_slice %333 {offsets = [0, 2, 0], sizes = [2, 1, 512], strides = [1, 1, 1]} : vector<2x8x512xf32> to vector<2x1x512xf32>
    %401 = vector.shape_cast %400 : vector<2x1x512xf32> to vector<2x512xf32>
    %402 = arith.truncf %396 : vector<2x128xf32> to vector<2x128xbf16>
    %c1_165 = arith.constant 1 : index
    %c1_166 = arith.constant 1 : index
    %c0_167 = arith.constant 0 : index
    %c0_168 = arith.constant 0 : index
    %403 = vector.load %arg4[%c1_165, %c1_166, %c0_167, %c0_168] : memref<4x2x128x512xbf16, #tpu.memory_space<vmem>>, vector<1x1x128x512xbf16>
    %404 = vector.shape_cast %403 : vector<1x1x128x512xbf16> to vector<128x512xbf16>
    %cst_169 = arith.constant dense<0.000000e+00> : vector<2x512xf32>
    %405 = tpu.matmul %402, %404, %cst_169 {dimension_numbers = #tpu.dot_dimension_numbers<[1], [0], [0], [1], [0, 0, 1, 1], [], []>} : vector<2x128xbf16>, vector<128x512xbf16>, vector<2x512xf32> -> vector<2x512xf32>
    %406 = arith.addf %401, %405 : vector<2x512xf32>
    %407 = vector.extract_strided_slice %406 {offsets = [0, 0], sizes = [2, 128], strides = [1, 1]} : vector<2x512xf32> to vector<2x128xf32>
    %408 = arith.negf %407 : vector<2x128xf32>
    %409 = math.exp %408 : vector<2x128xf32>
    %cst_170 = arith.constant 1.000000e+00 : f32
    %410 = vector.broadcast %cst_170 : f32 to vector<2x128xf32>
    %411 = arith.addf %410, %409 : vector<2x128xf32>
    %412 = arith.divf %410, %411 : vector<2x128xf32>
    %413 = vector.extract_strided_slice %406 {offsets = [0, 128], sizes = [2, 128], strides = [1, 1]} : vector<2x512xf32> to vector<2x128xf32>
    %414 = arith.negf %413 : vector<2x128xf32>
    %415 = math.exp %414 : vector<2x128xf32>
    %cst_171 = arith.constant 1.000000e+00 : f32
    %416 = vector.broadcast %cst_171 : f32 to vector<2x128xf32>
    %417 = arith.addf %416, %415 : vector<2x128xf32>
    %418 = arith.divf %416, %417 : vector<2x128xf32>
    %419 = vector.extract_strided_slice %406 {offsets = [0, 256], sizes = [2, 128], strides = [1, 1]} : vector<2x512xf32> to vector<2x128xf32>
    %420 = math.tanh %419 : vector<2x128xf32>
    %421 = vector.extract_strided_slice %406 {offsets = [0, 384], sizes = [2, 128], strides = [1, 1]} : vector<2x512xf32> to vector<2x128xf32>
    %422 = arith.negf %421 : vector<2x128xf32>
    %423 = math.exp %422 : vector<2x128xf32>
    %cst_172 = arith.constant 1.000000e+00 : f32
    %424 = vector.broadcast %cst_172 : f32 to vector<2x128xf32>
    %425 = arith.addf %424, %423 : vector<2x128xf32>
    %426 = arith.divf %424, %425 : vector<2x128xf32>
    %427 = arith.mulf %418, %394 : vector<2x128xf32>
    %428 = arith.mulf %412, %420 : vector<2x128xf32>
    %429 = arith.addf %427, %428 : vector<2x128xf32>
    %430 = math.tanh %429 : vector<2x128xf32>
    %431 = arith.mulf %426, %430 : vector<2x128xf32>
    %c0_173 = arith.constant 0 : index
    %c2_174 = arith.constant 2 : index
    %c0_175 = arith.constant 0 : index
    %432 = vector.load %arg6[%c0_173, %c2_174, %c0_175] : memref<2x8x128xf32, #tpu.memory_space<vmem>>, vector<2x1x128xf32>
    %433 = vector.shape_cast %432 : vector<2x1x128xf32> to vector<2x128xf32>
    %434 = vector.shape_cast %431 : vector<2x128xf32> to vector<2x1x128xf32>
    tpu.vector_store %arg6[%c0_173, %c2_174, %c0_175], %434 {strides = array<i32>} : memref<2x8x128xf32, #tpu.memory_space<vmem>>, vector<2x1x128xf32>,
    %435 = vector.extract_strided_slice %333 {offsets = [0, 3, 0], sizes = [2, 1, 512], strides = [1, 1, 1]} : vector<2x8x512xf32> to vector<2x1x512xf32>
    %436 = vector.shape_cast %435 : vector<2x1x512xf32> to vector<2x512xf32>
    %437 = arith.truncf %431 : vector<2x128xf32> to vector<2x128xbf16>
    %c1_176 = arith.constant 1 : index
    %c1_177 = arith.constant 1 : index
    %c0_178 = arith.constant 0 : index
    %c0_179 = arith.constant 0 : index
    %438 = vector.load %arg4[%c1_176, %c1_177, %c0_178, %c0_179] : memref<4x2x128x512xbf16, #tpu.memory_space<vmem>>, vector<1x1x128x512xbf16>
    %439 = vector.shape_cast %438 : vector<1x1x128x512xbf16> to vector<128x512xbf16>
    %cst_180 = arith.constant dense<0.000000e+00> : vector<2x512xf32>
    %440 = tpu.matmul %437, %439, %cst_180 {dimension_numbers = #tpu.dot_dimension_numbers<[1], [0], [0], [1], [0, 0, 1, 1], [], []>} : vector<2x128xbf16>, vector<128x512xbf16>, vector<2x512xf32> -> vector<2x512xf32>
    %441 = arith.addf %436, %440 : vector<2x512xf32>
    %442 = vector.extract_strided_slice %441 {offsets = [0, 0], sizes = [2, 128], strides = [1, 1]} : vector<2x512xf32> to vector<2x128xf32>
    %443 = arith.negf %442 : vector<2x128xf32>
    %444 = math.exp %443 : vector<2x128xf32>
    %cst_181 = arith.constant 1.000000e+00 : f32
    %445 = vector.broadcast %cst_181 : f32 to vector<2x128xf32>
    %446 = arith.addf %445, %444 : vector<2x128xf32>
    %447 = arith.divf %445, %446 : vector<2x128xf32>
    %448 = vector.extract_strided_slice %441 {offsets = [0, 128], sizes = [2, 128], strides = [1, 1]} : vector<2x512xf32> to vector<2x128xf32>
    %449 = arith.negf %448 : vector<2x128xf32>
    %450 = math.exp %449 : vector<2x128xf32>
    %cst_182 = arith.constant 1.000000e+00 : f32
    %451 = vector.broadcast %cst_182 : f32 to vector<2x128xf32>
    %452 = arith.addf %451, %450 : vector<2x128xf32>
    %453 = arith.divf %451, %452 : vector<2x128xf32>
    %454 = vector.extract_strided_slice %441 {offsets = [0, 256], sizes = [2, 128], strides = [1, 1]} : vector<2x512xf32> to vector<2x128xf32>
    %455 = math.tanh %454 : vector<2x128xf32>
    %456 = vector.extract_strided_slice %441 {offsets = [0, 384], sizes = [2, 128], strides = [1, 1]} : vector<2x512xf32> to vector<2x128xf32>
    %457 = arith.negf %456 : vector<2x128xf32>
    %458 = math.exp %457 : vector<2x128xf32>
    %cst_183 = arith.constant 1.000000e+00 : f32
    %459 = vector.broadcast %cst_183 : f32 to vector<2x128xf32>
    %460 = arith.addf %459, %458 : vector<2x128xf32>
    %461 = arith.divf %459, %460 : vector<2x128xf32>
    %462 = arith.mulf %453, %429 : vector<2x128xf32>
    %463 = arith.mulf %447, %455 : vector<2x128xf32>
    %464 = arith.addf %462, %463 : vector<2x128xf32>
    %465 = math.tanh %464 : vector<2x128xf32>
    %466 = arith.mulf %461, %465 : vector<2x128xf32>
    %c0_184 = arith.constant 0 : index
    %c3_185 = arith.constant 3 : index
    %c0_186 = arith.constant 0 : index
    %467 = vector.load %arg6[%c0_184, %c3_185, %c0_186] : memref<2x8x128xf32, #tpu.memory_space<vmem>>, vector<2x1x128xf32>
    %468 = vector.shape_cast %467 : vector<2x1x128xf32> to vector<2x128xf32>
    %469 = vector.shape_cast %466 : vector<2x128xf32> to vector<2x1x128xf32>
    tpu.vector_store %arg6[%c0_184, %c3_185, %c0_186], %469 {strides = array<i32>} : memref<2x8x128xf32, #tpu.memory_space<vmem>>, vector<2x1x128xf32>,
    %470 = vector.extract_strided_slice %333 {offsets = [0, 4, 0], sizes = [2, 1, 512], strides = [1, 1, 1]} : vector<2x8x512xf32> to vector<2x1x512xf32>
    %471 = vector.shape_cast %470 : vector<2x1x512xf32> to vector<2x512xf32>
    %472 = arith.truncf %466 : vector<2x128xf32> to vector<2x128xbf16>
    %c1_187 = arith.constant 1 : index
    %c1_188 = arith.constant 1 : index
    %c0_189 = arith.constant 0 : index
    %c0_190 = arith.constant 0 : index
    %473 = vector.load %arg4[%c1_187, %c1_188, %c0_189, %c0_190] : memref<4x2x128x512xbf16, #tpu.memory_space<vmem>>, vector<1x1x128x512xbf16>
    %474 = vector.shape_cast %473 : vector<1x1x128x512xbf16> to vector<128x512xbf16>
    %cst_191 = arith.constant dense<0.000000e+00> : vector<2x512xf32>
    %475 = tpu.matmul %472, %474, %cst_191 {dimension_numbers = #tpu.dot_dimension_numbers<[1], [0], [0], [1], [0, 0, 1, 1], [], []>} : vector<2x128xbf16>, vector<128x512xbf16>, vector<2x512xf32> -> vector<2x512xf32>
    %476 = arith.addf %471, %475 : vector<2x512xf32>
    %477 = vector.extract_strided_slice %476 {offsets = [0, 0], sizes = [2, 128], strides = [1, 1]} : vector<2x512xf32> to vector<2x128xf32>
    %478 = arith.negf %477 : vector<2x128xf32>
    %479 = math.exp %478 : vector<2x128xf32>
    %cst_192 = arith.constant 1.000000e+00 : f32
    %480 = vector.broadcast %cst_192 : f32 to vector<2x128xf32>
    %481 = arith.addf %480, %479 : vector<2x128xf32>
    %482 = arith.divf %480, %481 : vector<2x128xf32>
    %483 = vector.extract_strided_slice %476 {offsets = [0, 128], sizes = [2, 128], strides = [1, 1]} : vector<2x512xf32> to vector<2x128xf32>
    %484 = arith.negf %483 : vector<2x128xf32>
    %485 = math.exp %484 : vector<2x128xf32>
    %cst_193 = arith.constant 1.000000e+00 : f32
    %486 = vector.broadcast %cst_193 : f32 to vector<2x128xf32>
    %487 = arith.addf %486, %485 : vector<2x128xf32>
    %488 = arith.divf %486, %487 : vector<2x128xf32>
    %489 = vector.extract_strided_slice %476 {offsets = [0, 256], sizes = [2, 128], strides = [1, 1]} : vector<2x512xf32> to vector<2x128xf32>
    %490 = math.tanh %489 : vector<2x128xf32>
    %491 = vector.extract_strided_slice %476 {offsets = [0, 384], sizes = [2, 128], strides = [1, 1]} : vector<2x512xf32> to vector<2x128xf32>
    %492 = arith.negf %491 : vector<2x128xf32>
    %493 = math.exp %492 : vector<2x128xf32>
    %cst_194 = arith.constant 1.000000e+00 : f32
    %494 = vector.broadcast %cst_194 : f32 to vector<2x128xf32>
    %495 = arith.addf %494, %493 : vector<2x128xf32>
    %496 = arith.divf %494, %495 : vector<2x128xf32>
    %497 = arith.mulf %488, %464 : vector<2x128xf32>
    %498 = arith.mulf %482, %490 : vector<2x128xf32>
    %499 = arith.addf %497, %498 : vector<2x128xf32>
    %500 = math.tanh %499 : vector<2x128xf32>
    %501 = arith.mulf %496, %500 : vector<2x128xf32>
    %c0_195 = arith.constant 0 : index
    %c4_196 = arith.constant 4 : index
    %c0_197 = arith.constant 0 : index
    %502 = vector.load %arg6[%c0_195, %c4_196, %c0_197] : memref<2x8x128xf32, #tpu.memory_space<vmem>>, vector<2x1x128xf32>
    %503 = vector.shape_cast %502 : vector<2x1x128xf32> to vector<2x128xf32>
    %504 = vector.shape_cast %501 : vector<2x128xf32> to vector<2x1x128xf32>
    tpu.vector_store %arg6[%c0_195, %c4_196, %c0_197], %504 {strides = array<i32>} : memref<2x8x128xf32, #tpu.memory_space<vmem>>, vector<2x1x128xf32>,
    %505 = vector.extract_strided_slice %333 {offsets = [0, 5, 0], sizes = [2, 1, 512], strides = [1, 1, 1]} : vector<2x8x512xf32> to vector<2x1x512xf32>
    %506 = vector.shape_cast %505 : vector<2x1x512xf32> to vector<2x512xf32>
    %507 = arith.truncf %501 : vector<2x128xf32> to vector<2x128xbf16>
    %c1_198 = arith.constant 1 : index
    %c1_199 = arith.constant 1 : index
    %c0_200 = arith.constant 0 : index
    %c0_201 = arith.constant 0 : index
    %508 = vector.load %arg4[%c1_198, %c1_199, %c0_200, %c0_201] : memref<4x2x128x512xbf16, #tpu.memory_space<vmem>>, vector<1x1x128x512xbf16>
    %509 = vector.shape_cast %508 : vector<1x1x128x512xbf16> to vector<128x512xbf16>
    %cst_202 = arith.constant dense<0.000000e+00> : vector<2x512xf32>
    %510 = tpu.matmul %507, %509, %cst_202 {dimension_numbers = #tpu.dot_dimension_numbers<[1], [0], [0], [1], [0, 0, 1, 1], [], []>} : vector<2x128xbf16>, vector<128x512xbf16>, vector<2x512xf32> -> vector<2x512xf32>
    %511 = arith.addf %506, %510 : vector<2x512xf32>
    %512 = vector.extract_strided_slice %511 {offsets = [0, 0], sizes = [2, 128], strides = [1, 1]} : vector<2x512xf32> to vector<2x128xf32>
    %513 = arith.negf %512 : vector<2x128xf32>
    %514 = math.exp %513 : vector<2x128xf32>
    %cst_203 = arith.constant 1.000000e+00 : f32
    %515 = vector.broadcast %cst_203 : f32 to vector<2x128xf32>
    %516 = arith.addf %515, %514 : vector<2x128xf32>
    %517 = arith.divf %515, %516 : vector<2x128xf32>
    %518 = vector.extract_strided_slice %511 {offsets = [0, 128], sizes = [2, 128], strides = [1, 1]} : vector<2x512xf32> to vector<2x128xf32>
    %519 = arith.negf %518 : vector<2x128xf32>
    %520 = math.exp %519 : vector<2x128xf32>
    %cst_204 = arith.constant 1.000000e+00 : f32
    %521 = vector.broadcast %cst_204 : f32 to vector<2x128xf32>
    %522 = arith.addf %521, %520 : vector<2x128xf32>
    %523 = arith.divf %521, %522 : vector<2x128xf32>
    %524 = vector.extract_strided_slice %511 {offsets = [0, 256], sizes = [2, 128], strides = [1, 1]} : vector<2x512xf32> to vector<2x128xf32>
    %525 = math.tanh %524 : vector<2x128xf32>
    %526 = vector.extract_strided_slice %511 {offsets = [0, 384], sizes = [2, 128], strides = [1, 1]} : vector<2x512xf32> to vector<2x128xf32>
    %527 = arith.negf %526 : vector<2x128xf32>
    %528 = math.exp %527 : vector<2x128xf32>
    %cst_205 = arith.constant 1.000000e+00 : f32
    %529 = vector.broadcast %cst_205 : f32 to vector<2x128xf32>
    %530 = arith.addf %529, %528 : vector<2x128xf32>
    %531 = arith.divf %529, %530 : vector<2x128xf32>
    %532 = arith.mulf %523, %499 : vector<2x128xf32>
    %533 = arith.mulf %517, %525 : vector<2x128xf32>
    %534 = arith.addf %532, %533 : vector<2x128xf32>
    %535 = math.tanh %534 : vector<2x128xf32>
    %536 = arith.mulf %531, %535 : vector<2x128xf32>
    %c0_206 = arith.constant 0 : index
    %c5_207 = arith.constant 5 : index
    %c0_208 = arith.constant 0 : index
    %537 = vector.load %arg6[%c0_206, %c5_207, %c0_208] : memref<2x8x128xf32, #tpu.memory_space<vmem>>, vector<2x1x128xf32>
    %538 = vector.shape_cast %537 : vector<2x1x128xf32> to vector<2x128xf32>
    %539 = vector.shape_cast %536 : vector<2x128xf32> to vector<2x1x128xf32>
    tpu.vector_store %arg6[%c0_206, %c5_207, %c0_208], %539 {strides = array<i32>} : memref<2x8x128xf32, #tpu.memory_space<vmem>>, vector<2x1x128xf32>,
    %540 = vector.extract_strided_slice %333 {offsets = [0, 6, 0], sizes = [2, 1, 512], strides = [1, 1, 1]} : vector<2x8x512xf32> to vector<2x1x512xf32>
    %541 = vector.shape_cast %540 : vector<2x1x512xf32> to vector<2x512xf32>
    %542 = arith.truncf %536 : vector<2x128xf32> to vector<2x128xbf16>
    %c1_209 = arith.constant 1 : index
    %c1_210 = arith.constant 1 : index
    %c0_211 = arith.constant 0 : index
    %c0_212 = arith.constant 0 : index
    %543 = vector.load %arg4[%c1_209, %c1_210, %c0_211, %c0_212] : memref<4x2x128x512xbf16, #tpu.memory_space<vmem>>, vector<1x1x128x512xbf16>
    %544 = vector.shape_cast %543 : vector<1x1x128x512xbf16> to vector<128x512xbf16>
    %cst_213 = arith.constant dense<0.000000e+00> : vector<2x512xf32>
    %545 = tpu.matmul %542, %544, %cst_213 {dimension_numbers = #tpu.dot_dimension_numbers<[1], [0], [0], [1], [0, 0, 1, 1], [], []>} : vector<2x128xbf16>, vector<128x512xbf16>, vector<2x512xf32> -> vector<2x512xf32>
    %546 = arith.addf %541, %545 : vector<2x512xf32>
    %547 = vector.extract_strided_slice %546 {offsets = [0, 0], sizes = [2, 128], strides = [1, 1]} : vector<2x512xf32> to vector<2x128xf32>
    %548 = arith.negf %547 : vector<2x128xf32>
    %549 = math.exp %548 : vector<2x128xf32>
    %cst_214 = arith.constant 1.000000e+00 : f32
    %550 = vector.broadcast %cst_214 : f32 to vector<2x128xf32>
    %551 = arith.addf %550, %549 : vector<2x128xf32>
    %552 = arith.divf %550, %551 : vector<2x128xf32>
    %553 = vector.extract_strided_slice %546 {offsets = [0, 128], sizes = [2, 128], strides = [1, 1]} : vector<2x512xf32> to vector<2x128xf32>
    %554 = arith.negf %553 : vector<2x128xf32>
    %555 = math.exp %554 : vector<2x128xf32>
    %cst_215 = arith.constant 1.000000e+00 : f32
    %556 = vector.broadcast %cst_215 : f32 to vector<2x128xf32>
    %557 = arith.addf %556, %555 : vector<2x128xf32>
    %558 = arith.divf %556, %557 : vector<2x128xf32>
    %559 = vector.extract_strided_slice %546 {offsets = [0, 256], sizes = [2, 128], strides = [1, 1]} : vector<2x512xf32> to vector<2x128xf32>
    %560 = math.tanh %559 : vector<2x128xf32>
    %561 = vector.extract_strided_slice %546 {offsets = [0, 384], sizes = [2, 128], strides = [1, 1]} : vector<2x512xf32> to vector<2x128xf32>
    %562 = arith.negf %561 : vector<2x128xf32>
    %563 = math.exp %562 : vector<2x128xf32>
    %cst_216 = arith.constant 1.000000e+00 : f32
    %564 = vector.broadcast %cst_216 : f32 to vector<2x128xf32>
    %565 = arith.addf %564, %563 : vector<2x128xf32>
    %566 = arith.divf %564, %565 : vector<2x128xf32>
    %567 = arith.mulf %558, %534 : vector<2x128xf32>
    %568 = arith.mulf %552, %560 : vector<2x128xf32>
    %569 = arith.addf %567, %568 : vector<2x128xf32>
    %570 = math.tanh %569 : vector<2x128xf32>
    %571 = arith.mulf %566, %570 : vector<2x128xf32>
    %c0_217 = arith.constant 0 : index
    %c6_218 = arith.constant 6 : index
    %c0_219 = arith.constant 0 : index
    %572 = vector.load %arg6[%c0_217, %c6_218, %c0_219] : memref<2x8x128xf32, #tpu.memory_space<vmem>>, vector<2x1x128xf32>
    %573 = vector.shape_cast %572 : vector<2x1x128xf32> to vector<2x128xf32>
    %574 = vector.shape_cast %571 : vector<2x128xf32> to vector<2x1x128xf32>
    tpu.vector_store %arg6[%c0_217, %c6_218, %c0_219], %574 {strides = array<i32>} : memref<2x8x128xf32, #tpu.memory_space<vmem>>, vector<2x1x128xf32>,
    %575 = vector.extract_strided_slice %333 {offsets = [0, 7, 0], sizes = [2, 1, 512], strides = [1, 1, 1]} : vector<2x8x512xf32> to vector<2x1x512xf32>
    %576 = vector.shape_cast %575 : vector<2x1x512xf32> to vector<2x512xf32>
    %577 = arith.truncf %571 : vector<2x128xf32> to vector<2x128xbf16>
    %c1_220 = arith.constant 1 : index
    %c1_221 = arith.constant 1 : index
    %c0_222 = arith.constant 0 : index
    %c0_223 = arith.constant 0 : index
    %578 = vector.load %arg4[%c1_220, %c1_221, %c0_222, %c0_223] : memref<4x2x128x512xbf16, #tpu.memory_space<vmem>>, vector<1x1x128x512xbf16>
    %579 = vector.shape_cast %578 : vector<1x1x128x512xbf16> to vector<128x512xbf16>
    %cst_224 = arith.constant dense<0.000000e+00> : vector<2x512xf32>
    %580 = tpu.matmul %577, %579, %cst_224 {dimension_numbers = #tpu.dot_dimension_numbers<[1], [0], [0], [1], [0, 0, 1, 1], [], []>} : vector<2x128xbf16>, vector<128x512xbf16>, vector<2x512xf32> -> vector<2x512xf32>
    %581 = arith.addf %576, %580 : vector<2x512xf32>
    %582 = vector.extract_strided_slice %581 {offsets = [0, 0], sizes = [2, 128], strides = [1, 1]} : vector<2x512xf32> to vector<2x128xf32>
    %583 = arith.negf %582 : vector<2x128xf32>
    %584 = math.exp %583 : vector<2x128xf32>
    %cst_225 = arith.constant 1.000000e+00 : f32
    %585 = vector.broadcast %cst_225 : f32 to vector<2x128xf32>
    %586 = arith.addf %585, %584 : vector<2x128xf32>
    %587 = arith.divf %585, %586 : vector<2x128xf32>
    %588 = vector.extract_strided_slice %581 {offsets = [0, 128], sizes = [2, 128], strides = [1, 1]} : vector<2x512xf32> to vector<2x128xf32>
    %589 = arith.negf %588 : vector<2x128xf32>
    %590 = math.exp %589 : vector<2x128xf32>
    %cst_226 = arith.constant 1.000000e+00 : f32
    %591 = vector.broadcast %cst_226 : f32 to vector<2x128xf32>
    %592 = arith.addf %591, %590 : vector<2x128xf32>
    %593 = arith.divf %591, %592 : vector<2x128xf32>
    %594 = vector.extract_strided_slice %581 {offsets = [0, 256], sizes = [2, 128], strides = [1, 1]} : vector<2x512xf32> to vector<2x128xf32>
    %595 = math.tanh %594 : vector<2x128xf32>
    %596 = vector.extract_strided_slice %581 {offsets = [0, 384], sizes = [2, 128], strides = [1, 1]} : vector<2x512xf32> to vector<2x128xf32>
    %597 = arith.negf %596 : vector<2x128xf32>
    %598 = math.exp %597 : vector<2x128xf32>
    %cst_227 = arith.constant 1.000000e+00 : f32
    %599 = vector.broadcast %cst_227 : f32 to vector<2x128xf32>
    %600 = arith.addf %599, %598 : vector<2x128xf32>
    %601 = arith.divf %599, %600 : vector<2x128xf32>
    %602 = arith.mulf %593, %569 : vector<2x128xf32>
    %603 = arith.mulf %587, %595 : vector<2x128xf32>
    %604 = arith.addf %602, %603 : vector<2x128xf32>
    %605 = math.tanh %604 : vector<2x128xf32>
    %606 = arith.mulf %601, %605 : vector<2x128xf32>
    %c0_228 = arith.constant 0 : index
    %c7_229 = arith.constant 7 : index
    %c0_230 = arith.constant 0 : index
    %607 = vector.load %arg6[%c0_228, %c7_229, %c0_230] : memref<2x8x128xf32, #tpu.memory_space<vmem>>, vector<2x1x128xf32>
    %608 = vector.shape_cast %607 : vector<2x1x128xf32> to vector<2x128xf32>
    %609 = vector.shape_cast %606 : vector<2x128xf32> to vector<2x1x128xf32>
    tpu.vector_store %arg6[%c0_228, %c7_229, %c0_230], %609 {strides = array<i32>} : memref<2x8x128xf32, #tpu.memory_space<vmem>>, vector<2x1x128xf32>,
    %c0_231 = arith.constant 0 : index
    %c0_232 = arith.constant 0 : index
    %c0_233 = arith.constant 0 : index
    %610 = vector.load %arg6[%c0_231, %c0_232, %c0_233] : memref<2x8x128xf32, #tpu.memory_space<vmem>>, vector<2x8x128xf32>
    %c2_i32_234 = arith.constant 2 : i32
    %c2_i32_235 = arith.constant 2 : i32
    %c2_i32_236 = arith.constant 2 : i32
    %c0_i32_237 = arith.constant 0 : i32
    %c0_i32_238 = arith.constant 0 : i32
    %c0_i32_239 = arith.constant 0 : i32
    %611 = tpu.memref_slice %arg2[%c2_i32_234, %c0_i32_237, %c0_i32_238, %c0_i32_239] : memref<4x2x128x512xbf16, #tpu.memory_space<any>> -> memref<1x2x128x512xbf16, #tpu.memory_space<any>>
    %612 = tpu.memref_squeeze %611 : memref<1x2x128x512xbf16, #tpu.memory_space<any>> -> memref<2x128x512xbf16, #tpu.memory_space<any>>
    %c0_i32_240 = arith.constant 0 : i32
    %c0_i32_241 = arith.constant 0 : i32
    %c0_i32_242 = arith.constant 0 : i32
    %613 = tpu.memref_slice %arg4[%c2_i32_235, %c0_i32_240, %c0_i32_241, %c0_i32_242] : memref<4x2x128x512xbf16, #tpu.memory_space<vmem>> -> memref<1x2x128x512xbf16, #tpu.memory_space<vmem>>
    %614 = tpu.memref_squeeze %613 : memref<1x2x128x512xbf16, #tpu.memory_space<vmem>> -> memref<2x128x512xbf16, #tpu.memory_space<vmem>>
    %615 = tpu.memref_slice %arg7[%c2_i32_236] : memref<4x!tpu.dma_semaphore, #tpu.memory_space<semaphore_mem>> -> memref<1x!tpu.dma_semaphore, #tpu.memory_space<semaphore_mem>>
    %616 = tpu.memref_squeeze %615 : memref<1x!tpu.dma_semaphore, #tpu.memory_space<semaphore_mem>> -> memref<!tpu.dma_semaphore, #tpu.memory_space<semaphore_mem>>
    tpu.wait_dma2 semaphore(%616 : memref<!tpu.dma_semaphore, #tpu.memory_space<semaphore_mem>>) src(%612 : memref<2x128x512xbf16, #tpu.memory_space<any>>) dst(%614 : memref<2x128x512xbf16, #tpu.memory_space<vmem>>)
    %c2_243 = arith.constant 2 : index
    %c0_244 = arith.constant 0 : index
    %c0_245 = arith.constant 0 : index
    %617 = vector.load %arg1[%c2_243, %c0_244, %c0_245] : memref<4x1x512xf32, #tpu.memory_space<vmem>>, vector<1x1x512xf32>
    %618 = vector.shape_cast %617 : vector<1x1x512xf32> to vector<1x512xf32>
    %619 = vector.shape_cast %610 : vector<2x8x128xf32> to vector<16x128xf32>
    %620 = arith.truncf %619 : vector<16x128xf32> to vector<16x128xbf16>
    %c2_246 = arith.constant 2 : index
    %c0_247 = arith.constant 0 : index
    %c0_248 = arith.constant 0 : index
    %c0_249 = arith.constant 0 : index
    %621 = vector.load %arg4[%c2_246, %c0_247, %c0_248, %c0_249] : memref<4x2x128x512xbf16, #tpu.memory_space<vmem>>, vector<1x1x128x512xbf16>
    %622 = vector.shape_cast %621 : vector<1x1x128x512xbf16> to vector<128x512xbf16>
    %cst_250 = arith.constant dense<0.000000e+00> : vector<16x512xf32>
    %623 = tpu.matmul %620, %622, %cst_250 {dimension_numbers = #tpu.dot_dimension_numbers<[1], [0], [0], [1], [0, 0, 1, 1], [], []>} : vector<16x128xbf16>, vector<128x512xbf16>, vector<16x512xf32> -> vector<16x512xf32>
    %624 = vector.broadcast %618 : vector<1x512xf32> to vector<16x512xf32>
    %625 = arith.addf %623, %624 : vector<16x512xf32>
    %626 = vector.shape_cast %625 : vector<16x512xf32> to vector<2x8x512xf32>
    %627 = vector.extract_strided_slice %626 {offsets = [0, 0, 0], sizes = [2, 1, 512], strides = [1, 1, 1]} : vector<2x8x512xf32> to vector<2x1x512xf32>
    %628 = vector.shape_cast %627 : vector<2x1x512xf32> to vector<2x512xf32>
    %cst_251 = arith.constant 0.000000e+00 : f32
    %629 = vector.broadcast %cst_251 : f32 to vector<2x128xf32>
    %630 = vector.extract_strided_slice %628 {offsets = [0, 0], sizes = [2, 128], strides = [1, 1]} : vector<2x512xf32> to vector<2x128xf32>
    %631 = arith.negf %630 : vector<2x128xf32>
    %632 = math.exp %631 : vector<2x128xf32>
    %cst_252 = arith.constant 1.000000e+00 : f32
    %633 = vector.broadcast %cst_252 : f32 to vector<2x128xf32>
    %634 = arith.addf %633, %632 : vector<2x128xf32>
    %635 = arith.divf %633, %634 : vector<2x128xf32>
    %636 = vector.extract_strided_slice %628 {offsets = [0, 128], sizes = [2, 128], strides = [1, 1]} : vector<2x512xf32> to vector<2x128xf32>
    %637 = arith.negf %636 : vector<2x128xf32>
    %638 = math.exp %637 : vector<2x128xf32>
    %cst_253 = arith.constant 1.000000e+00 : f32
    %639 = vector.broadcast %cst_253 : f32 to vector<2x128xf32>
    %640 = arith.addf %639, %638 : vector<2x128xf32>
    %641 = arith.divf %639, %640 : vector<2x128xf32>
    %642 = vector.extract_strided_slice %628 {offsets = [0, 256], sizes = [2, 128], strides = [1, 1]} : vector<2x512xf32> to vector<2x128xf32>
    %643 = math.tanh %642 : vector<2x128xf32>
    %644 = vector.extract_strided_slice %628 {offsets = [0, 384], sizes = [2, 128], strides = [1, 1]} : vector<2x512xf32> to vector<2x128xf32>
    %645 = arith.negf %644 : vector<2x128xf32>
    %646 = math.exp %645 : vector<2x128xf32>
    %cst_254 = arith.constant 1.000000e+00 : f32
    %647 = vector.broadcast %cst_254 : f32 to vector<2x128xf32>
    %648 = arith.addf %647, %646 : vector<2x128xf32>
    %649 = arith.divf %647, %648 : vector<2x128xf32>
    %650 = arith.mulf %641, %629 : vector<2x128xf32>
    %651 = arith.mulf %635, %643 : vector<2x128xf32>
    %652 = arith.addf %650, %651 : vector<2x128xf32>
    %653 = math.tanh %652 : vector<2x128xf32>
    %654 = arith.mulf %649, %653 : vector<2x128xf32>
    %c0_255 = arith.constant 0 : index
    %c0_256 = arith.constant 0 : index
    %c0_257 = arith.constant 0 : index
    %655 = vector.load %arg5[%c0_255, %c0_256, %c0_257] : memref<2x8x128xf32, #tpu.memory_space<vmem>>, vector<2x1x128xf32>
    %656 = vector.shape_cast %655 : vector<2x1x128xf32> to vector<2x128xf32>
    %657 = vector.shape_cast %654 : vector<2x128xf32> to vector<2x1x128xf32>
    tpu.vector_store %arg5[%c0_255, %c0_256, %c0_257], %657 {strides = array<i32>} : memref<2x8x128xf32, #tpu.memory_space<vmem>>, vector<2x1x128xf32>,
    %658 = vector.extract_strided_slice %626 {offsets = [0, 1, 0], sizes = [2, 1, 512], strides = [1, 1, 1]} : vector<2x8x512xf32> to vector<2x1x512xf32>
    %659 = vector.shape_cast %658 : vector<2x1x512xf32> to vector<2x512xf32>
    %660 = arith.truncf %654 : vector<2x128xf32> to vector<2x128xbf16>
    %c2_258 = arith.constant 2 : index
    %c1_259 = arith.constant 1 : index
    %c0_260 = arith.constant 0 : index
    %c0_261 = arith.constant 0 : index
    %661 = vector.load %arg4[%c2_258, %c1_259, %c0_260, %c0_261] : memref<4x2x128x512xbf16, #tpu.memory_space<vmem>>, vector<1x1x128x512xbf16>
    %662 = vector.shape_cast %661 : vector<1x1x128x512xbf16> to vector<128x512xbf16>
    %cst_262 = arith.constant dense<0.000000e+00> : vector<2x512xf32>
    %663 = tpu.matmul %660, %662, %cst_262 {dimension_numbers = #tpu.dot_dimension_numbers<[1], [0], [0], [1], [0, 0, 1, 1], [], []>} : vector<2x128xbf16>, vector<128x512xbf16>, vector<2x512xf32> -> vector<2x512xf32>
    %664 = arith.addf %659, %663 : vector<2x512xf32>
    %665 = vector.extract_strided_slice %664 {offsets = [0, 0], sizes = [2, 128], strides = [1, 1]} : vector<2x512xf32> to vector<2x128xf32>
    %666 = arith.negf %665 : vector<2x128xf32>
    %667 = math.exp %666 : vector<2x128xf32>
    %cst_263 = arith.constant 1.000000e+00 : f32
    %668 = vector.broadcast %cst_263 : f32 to vector<2x128xf32>
    %669 = arith.addf %668, %667 : vector<2x128xf32>
    %670 = arith.divf %668, %669 : vector<2x128xf32>
    %671 = vector.extract_strided_slice %664 {offsets = [0, 128], sizes = [2, 128], strides = [1, 1]} : vector<2x512xf32> to vector<2x128xf32>
    %672 = arith.negf %671 : vector<2x128xf32>
    %673 = math.exp %672 : vector<2x128xf32>
    %cst_264 = arith.constant 1.000000e+00 : f32
    %674 = vector.broadcast %cst_264 : f32 to vector<2x128xf32>
    %675 = arith.addf %674, %673 : vector<2x128xf32>
    %676 = arith.divf %674, %675 : vector<2x128xf32>
    %677 = vector.extract_strided_slice %664 {offsets = [0, 256], sizes = [2, 128], strides = [1, 1]} : vector<2x512xf32> to vector<2x128xf32>
    %678 = math.tanh %677 : vector<2x128xf32>
    %679 = vector.extract_strided_slice %664 {offsets = [0, 384], sizes = [2, 128], strides = [1, 1]} : vector<2x512xf32> to vector<2x128xf32>
    %680 = arith.negf %679 : vector<2x128xf32>
    %681 = math.exp %680 : vector<2x128xf32>
    %cst_265 = arith.constant 1.000000e+00 : f32
    %682 = vector.broadcast %cst_265 : f32 to vector<2x128xf32>
    %683 = arith.addf %682, %681 : vector<2x128xf32>
    %684 = arith.divf %682, %683 : vector<2x128xf32>
    %685 = arith.mulf %676, %652 : vector<2x128xf32>
    %686 = arith.mulf %670, %678 : vector<2x128xf32>
    %687 = arith.addf %685, %686 : vector<2x128xf32>
    %688 = math.tanh %687 : vector<2x128xf32>
    %689 = arith.mulf %684, %688 : vector<2x128xf32>
    %c0_266 = arith.constant 0 : index
    %c1_267 = arith.constant 1 : index
    %c0_268 = arith.constant 0 : index
    %690 = vector.load %arg5[%c0_266, %c1_267, %c0_268] : memref<2x8x128xf32, #tpu.memory_space<vmem>>, vector<2x1x128xf32>
    %691 = vector.shape_cast %690 : vector<2x1x128xf32> to vector<2x128xf32>
    %692 = vector.shape_cast %689 : vector<2x128xf32> to vector<2x1x128xf32>
    tpu.vector_store %arg5[%c0_266, %c1_267, %c0_268], %692 {strides = array<i32>} : memref<2x8x128xf32, #tpu.memory_space<vmem>>, vector<2x1x128xf32>,
    %693 = vector.extract_strided_slice %626 {offsets = [0, 2, 0], sizes = [2, 1, 512], strides = [1, 1, 1]} : vector<2x8x512xf32> to vector<2x1x512xf32>
    %694 = vector.shape_cast %693 : vector<2x1x512xf32> to vector<2x512xf32>
    %695 = arith.truncf %689 : vector<2x128xf32> to vector<2x128xbf16>
    %c2_269 = arith.constant 2 : index
    %c1_270 = arith.constant 1 : index
    %c0_271 = arith.constant 0 : index
    %c0_272 = arith.constant 0 : index
    %696 = vector.load %arg4[%c2_269, %c1_270, %c0_271, %c0_272] : memref<4x2x128x512xbf16, #tpu.memory_space<vmem>>, vector<1x1x128x512xbf16>
    %697 = vector.shape_cast %696 : vector<1x1x128x512xbf16> to vector<128x512xbf16>
    %cst_273 = arith.constant dense<0.000000e+00> : vector<2x512xf32>
    %698 = tpu.matmul %695, %697, %cst_273 {dimension_numbers = #tpu.dot_dimension_numbers<[1], [0], [0], [1], [0, 0, 1, 1], [], []>} : vector<2x128xbf16>, vector<128x512xbf16>, vector<2x512xf32> -> vector<2x512xf32>
    %699 = arith.addf %694, %698 : vector<2x512xf32>
    %700 = vector.extract_strided_slice %699 {offsets = [0, 0], sizes = [2, 128], strides = [1, 1]} : vector<2x512xf32> to vector<2x128xf32>
    %701 = arith.negf %700 : vector<2x128xf32>
    %702 = math.exp %701 : vector<2x128xf32>
    %cst_274 = arith.constant 1.000000e+00 : f32
    %703 = vector.broadcast %cst_274 : f32 to vector<2x128xf32>
    %704 = arith.addf %703, %702 : vector<2x128xf32>
    %705 = arith.divf %703, %704 : vector<2x128xf32>
    %706 = vector.extract_strided_slice %699 {offsets = [0, 128], sizes = [2, 128], strides = [1, 1]} : vector<2x512xf32> to vector<2x128xf32>
    %707 = arith.negf %706 : vector<2x128xf32>
    %708 = math.exp %707 : vector<2x128xf32>
    %cst_275 = arith.constant 1.000000e+00 : f32
    %709 = vector.broadcast %cst_275 : f32 to vector<2x128xf32>
    %710 = arith.addf %709, %708 : vector<2x128xf32>
    %711 = arith.divf %709, %710 : vector<2x128xf32>
    %712 = vector.extract_strided_slice %699 {offsets = [0, 256], sizes = [2, 128], strides = [1, 1]} : vector<2x512xf32> to vector<2x128xf32>
    %713 = math.tanh %712 : vector<2x128xf32>
    %714 = vector.extract_strided_slice %699 {offsets = [0, 384], sizes = [2, 128], strides = [1, 1]} : vector<2x512xf32> to vector<2x128xf32>
    %715 = arith.negf %714 : vector<2x128xf32>
    %716 = math.exp %715 : vector<2x128xf32>
    %cst_276 = arith.constant 1.000000e+00 : f32
    %717 = vector.broadcast %cst_276 : f32 to vector<2x128xf32>
    %718 = arith.addf %717, %716 : vector<2x128xf32>
    %719 = arith.divf %717, %718 : vector<2x128xf32>
    %720 = arith.mulf %711, %687 : vector<2x128xf32>
    %721 = arith.mulf %705, %713 : vector<2x128xf32>
    %722 = arith.addf %720, %721 : vector<2x128xf32>
    %723 = math.tanh %722 : vector<2x128xf32>
    %724 = arith.mulf %719, %723 : vector<2x128xf32>
    %c0_277 = arith.constant 0 : index
    %c2_278 = arith.constant 2 : index
    %c0_279 = arith.constant 0 : index
    %725 = vector.load %arg5[%c0_277, %c2_278, %c0_279] : memref<2x8x128xf32, #tpu.memory_space<vmem>>, vector<2x1x128xf32>
    %726 = vector.shape_cast %725 : vector<2x1x128xf32> to vector<2x128xf32>
    %727 = vector.shape_cast %724 : vector<2x128xf32> to vector<2x1x128xf32>
    tpu.vector_store %arg5[%c0_277, %c2_278, %c0_279], %727 {strides = array<i32>} : memref<2x8x128xf32, #tpu.memory_space<vmem>>, vector<2x1x128xf32>,
    %728 = vector.extract_strided_slice %626 {offsets = [0, 3, 0], sizes = [2, 1, 512], strides = [1, 1, 1]} : vector<2x8x512xf32> to vector<2x1x512xf32>
    %729 = vector.shape_cast %728 : vector<2x1x512xf32> to vector<2x512xf32>
    %730 = arith.truncf %724 : vector<2x128xf32> to vector<2x128xbf16>
    %c2_280 = arith.constant 2 : index
    %c1_281 = arith.constant 1 : index
    %c0_282 = arith.constant 0 : index
    %c0_283 = arith.constant 0 : index
    %731 = vector.load %arg4[%c2_280, %c1_281, %c0_282, %c0_283] : memref<4x2x128x512xbf16, #tpu.memory_space<vmem>>, vector<1x1x128x512xbf16>
    %732 = vector.shape_cast %731 : vector<1x1x128x512xbf16> to vector<128x512xbf16>
    %cst_284 = arith.constant dense<0.000000e+00> : vector<2x512xf32>
    %733 = tpu.matmul %730, %732, %cst_284 {dimension_numbers = #tpu.dot_dimension_numbers<[1], [0], [0], [1], [0, 0, 1, 1], [], []>} : vector<2x128xbf16>, vector<128x512xbf16>, vector<2x512xf32> -> vector<2x512xf32>
    %734 = arith.addf %729, %733 : vector<2x512xf32>
    %735 = vector.extract_strided_slice %734 {offsets = [0, 0], sizes = [2, 128], strides = [1, 1]} : vector<2x512xf32> to vector<2x128xf32>
    %736 = arith.negf %735 : vector<2x128xf32>
    %737 = math.exp %736 : vector<2x128xf32>
    %cst_285 = arith.constant 1.000000e+00 : f32
    %738 = vector.broadcast %cst_285 : f32 to vector<2x128xf32>
    %739 = arith.addf %738, %737 : vector<2x128xf32>
    %740 = arith.divf %738, %739 : vector<2x128xf32>
    %741 = vector.extract_strided_slice %734 {offsets = [0, 128], sizes = [2, 128], strides = [1, 1]} : vector<2x512xf32> to vector<2x128xf32>
    %742 = arith.negf %741 : vector<2x128xf32>
    %743 = math.exp %742 : vector<2x128xf32>
    %cst_286 = arith.constant 1.000000e+00 : f32
    %744 = vector.broadcast %cst_286 : f32 to vector<2x128xf32>
    %745 = arith.addf %744, %743 : vector<2x128xf32>
    %746 = arith.divf %744, %745 : vector<2x128xf32>
    %747 = vector.extract_strided_slice %734 {offsets = [0, 256], sizes = [2, 128], strides = [1, 1]} : vector<2x512xf32> to vector<2x128xf32>
    %748 = math.tanh %747 : vector<2x128xf32>
    %749 = vector.extract_strided_slice %734 {offsets = [0, 384], sizes = [2, 128], strides = [1, 1]} : vector<2x512xf32> to vector<2x128xf32>
    %750 = arith.negf %749 : vector<2x128xf32>
    %751 = math.exp %750 : vector<2x128xf32>
    %cst_287 = arith.constant 1.000000e+00 : f32
    %752 = vector.broadcast %cst_287 : f32 to vector<2x128xf32>
    %753 = arith.addf %752, %751 : vector<2x128xf32>
    %754 = arith.divf %752, %753 : vector<2x128xf32>
    %755 = arith.mulf %746, %722 : vector<2x128xf32>
    %756 = arith.mulf %740, %748 : vector<2x128xf32>
    %757 = arith.addf %755, %756 : vector<2x128xf32>
    %758 = math.tanh %757 : vector<2x128xf32>
    %759 = arith.mulf %754, %758 : vector<2x128xf32>
    %c0_288 = arith.constant 0 : index
    %c3_289 = arith.constant 3 : index
    %c0_290 = arith.constant 0 : index
    %760 = vector.load %arg5[%c0_288, %c3_289, %c0_290] : memref<2x8x128xf32, #tpu.memory_space<vmem>>, vector<2x1x128xf32>
    %761 = vector.shape_cast %760 : vector<2x1x128xf32> to vector<2x128xf32>
    %762 = vector.shape_cast %759 : vector<2x128xf32> to vector<2x1x128xf32>
    tpu.vector_store %arg5[%c0_288, %c3_289, %c0_290], %762 {strides = array<i32>} : memref<2x8x128xf32, #tpu.memory_space<vmem>>, vector<2x1x128xf32>,
    %763 = vector.extract_strided_slice %626 {offsets = [0, 4, 0], sizes = [2, 1, 512], strides = [1, 1, 1]} : vector<2x8x512xf32> to vector<2x1x512xf32>
    %764 = vector.shape_cast %763 : vector<2x1x512xf32> to vector<2x512xf32>
    %765 = arith.truncf %759 : vector<2x128xf32> to vector<2x128xbf16>
    %c2_291 = arith.constant 2 : index
    %c1_292 = arith.constant 1 : index
    %c0_293 = arith.constant 0 : index
    %c0_294 = arith.constant 0 : index
    %766 = vector.load %arg4[%c2_291, %c1_292, %c0_293, %c0_294] : memref<4x2x128x512xbf16, #tpu.memory_space<vmem>>, vector<1x1x128x512xbf16>
    %767 = vector.shape_cast %766 : vector<1x1x128x512xbf16> to vector<128x512xbf16>
    %cst_295 = arith.constant dense<0.000000e+00> : vector<2x512xf32>
    %768 = tpu.matmul %765, %767, %cst_295 {dimension_numbers = #tpu.dot_dimension_numbers<[1], [0], [0], [1], [0, 0, 1, 1], [], []>} : vector<2x128xbf16>, vector<128x512xbf16>, vector<2x512xf32> -> vector<2x512xf32>
    %769 = arith.addf %764, %768 : vector<2x512xf32>
    %770 = vector.extract_strided_slice %769 {offsets = [0, 0], sizes = [2, 128], strides = [1, 1]} : vector<2x512xf32> to vector<2x128xf32>
    %771 = arith.negf %770 : vector<2x128xf32>
    %772 = math.exp %771 : vector<2x128xf32>
    %cst_296 = arith.constant 1.000000e+00 : f32
    %773 = vector.broadcast %cst_296 : f32 to vector<2x128xf32>
    %774 = arith.addf %773, %772 : vector<2x128xf32>
    %775 = arith.divf %773, %774 : vector<2x128xf32>
    %776 = vector.extract_strided_slice %769 {offsets = [0, 128], sizes = [2, 128], strides = [1, 1]} : vector<2x512xf32> to vector<2x128xf32>
    %777 = arith.negf %776 : vector<2x128xf32>
    %778 = math.exp %777 : vector<2x128xf32>
    %cst_297 = arith.constant 1.000000e+00 : f32
    %779 = vector.broadcast %cst_297 : f32 to vector<2x128xf32>
    %780 = arith.addf %779, %778 : vector<2x128xf32>
    %781 = arith.divf %779, %780 : vector<2x128xf32>
    %782 = vector.extract_strided_slice %769 {offsets = [0, 256], sizes = [2, 128], strides = [1, 1]} : vector<2x512xf32> to vector<2x128xf32>
    %783 = math.tanh %782 : vector<2x128xf32>
    %784 = vector.extract_strided_slice %769 {offsets = [0, 384], sizes = [2, 128], strides = [1, 1]} : vector<2x512xf32> to vector<2x128xf32>
    %785 = arith.negf %784 : vector<2x128xf32>
    %786 = math.exp %785 : vector<2x128xf32>
    %cst_298 = arith.constant 1.000000e+00 : f32
    %787 = vector.broadcast %cst_298 : f32 to vector<2x128xf32>
    %788 = arith.addf %787, %786 : vector<2x128xf32>
    %789 = arith.divf %787, %788 : vector<2x128xf32>
    %790 = arith.mulf %781, %757 : vector<2x128xf32>
    %791 = arith.mulf %775, %783 : vector<2x128xf32>
    %792 = arith.addf %790, %791 : vector<2x128xf32>
    %793 = math.tanh %792 : vector<2x128xf32>
    %794 = arith.mulf %789, %793 : vector<2x128xf32>
    %c0_299 = arith.constant 0 : index
    %c4_300 = arith.constant 4 : index
    %c0_301 = arith.constant 0 : index
    %795 = vector.load %arg5[%c0_299, %c4_300, %c0_301] : memref<2x8x128xf32, #tpu.memory_space<vmem>>, vector<2x1x128xf32>
    %796 = vector.shape_cast %795 : vector<2x1x128xf32> to vector<2x128xf32>
    %797 = vector.shape_cast %794 : vector<2x128xf32> to vector<2x1x128xf32>
    tpu.vector_store %arg5[%c0_299, %c4_300, %c0_301], %797 {strides = array<i32>} : memref<2x8x128xf32, #tpu.memory_space<vmem>>, vector<2x1x128xf32>,
    %798 = vector.extract_strided_slice %626 {offsets = [0, 5, 0], sizes = [2, 1, 512], strides = [1, 1, 1]} : vector<2x8x512xf32> to vector<2x1x512xf32>
    %799 = vector.shape_cast %798 : vector<2x1x512xf32> to vector<2x512xf32>
    %800 = arith.truncf %794 : vector<2x128xf32> to vector<2x128xbf16>
    %c2_302 = arith.constant 2 : index
    %c1_303 = arith.constant 1 : index
    %c0_304 = arith.constant 0 : index
    %c0_305 = arith.constant 0 : index
    %801 = vector.load %arg4[%c2_302, %c1_303, %c0_304, %c0_305] : memref<4x2x128x512xbf16, #tpu.memory_space<vmem>>, vector<1x1x128x512xbf16>
    %802 = vector.shape_cast %801 : vector<1x1x128x512xbf16> to vector<128x512xbf16>
    %cst_306 = arith.constant dense<0.000000e+00> : vector<2x512xf32>
    %803 = tpu.matmul %800, %802, %cst_306 {dimension_numbers = #tpu.dot_dimension_numbers<[1], [0], [0], [1], [0, 0, 1, 1], [], []>} : vector<2x128xbf16>, vector<128x512xbf16>, vector<2x512xf32> -> vector<2x512xf32>
    %804 = arith.addf %799, %803 : vector<2x512xf32>
    %805 = vector.extract_strided_slice %804 {offsets = [0, 0], sizes = [2, 128], strides = [1, 1]} : vector<2x512xf32> to vector<2x128xf32>
    %806 = arith.negf %805 : vector<2x128xf32>
    %807 = math.exp %806 : vector<2x128xf32>
    %cst_307 = arith.constant 1.000000e+00 : f32
    %808 = vector.broadcast %cst_307 : f32 to vector<2x128xf32>
    %809 = arith.addf %808, %807 : vector<2x128xf32>
    %810 = arith.divf %808, %809 : vector<2x128xf32>
    %811 = vector.extract_strided_slice %804 {offsets = [0, 128], sizes = [2, 128], strides = [1, 1]} : vector<2x512xf32> to vector<2x128xf32>
    %812 = arith.negf %811 : vector<2x128xf32>
    %813 = math.exp %812 : vector<2x128xf32>
    %cst_308 = arith.constant 1.000000e+00 : f32
    %814 = vector.broadcast %cst_308 : f32 to vector<2x128xf32>
    %815 = arith.addf %814, %813 : vector<2x128xf32>
    %816 = arith.divf %814, %815 : vector<2x128xf32>
    %817 = vector.extract_strided_slice %804 {offsets = [0, 256], sizes = [2, 128], strides = [1, 1]} : vector<2x512xf32> to vector<2x128xf32>
    %818 = math.tanh %817 : vector<2x128xf32>
    %819 = vector.extract_strided_slice %804 {offsets = [0, 384], sizes = [2, 128], strides = [1, 1]} : vector<2x512xf32> to vector<2x128xf32>
    %820 = arith.negf %819 : vector<2x128xf32>
    %821 = math.exp %820 : vector<2x128xf32>
    %cst_309 = arith.constant 1.000000e+00 : f32
    %822 = vector.broadcast %cst_309 : f32 to vector<2x128xf32>
    %823 = arith.addf %822, %821 : vector<2x128xf32>
    %824 = arith.divf %822, %823 : vector<2x128xf32>
    %825 = arith.mulf %816, %792 : vector<2x128xf32>
    %826 = arith.mulf %810, %818 : vector<2x128xf32>
    %827 = arith.addf %825, %826 : vector<2x128xf32>
    %828 = math.tanh %827 : vector<2x128xf32>
    %829 = arith.mulf %824, %828 : vector<2x128xf32>
    %c0_310 = arith.constant 0 : index
    %c5_311 = arith.constant 5 : index
    %c0_312 = arith.constant 0 : index
    %830 = vector.load %arg5[%c0_310, %c5_311, %c0_312] : memref<2x8x128xf32, #tpu.memory_space<vmem>>, vector<2x1x128xf32>
    %831 = vector.shape_cast %830 : vector<2x1x128xf32> to vector<2x128xf32>
    %832 = vector.shape_cast %829 : vector<2x128xf32> to vector<2x1x128xf32>
    tpu.vector_store %arg5[%c0_310, %c5_311, %c0_312], %832 {strides = array<i32>} : memref<2x8x128xf32, #tpu.memory_space<vmem>>, vector<2x1x128xf32>,
    %833 = vector.extract_strided_slice %626 {offsets = [0, 6, 0], sizes = [2, 1, 512], strides = [1, 1, 1]} : vector<2x8x512xf32> to vector<2x1x512xf32>
    %834 = vector.shape_cast %833 : vector<2x1x512xf32> to vector<2x512xf32>
    %835 = arith.truncf %829 : vector<2x128xf32> to vector<2x128xbf16>
    %c2_313 = arith.constant 2 : index
    %c1_314 = arith.constant 1 : index
    %c0_315 = arith.constant 0 : index
    %c0_316 = arith.constant 0 : index
    %836 = vector.load %arg4[%c2_313, %c1_314, %c0_315, %c0_316] : memref<4x2x128x512xbf16, #tpu.memory_space<vmem>>, vector<1x1x128x512xbf16>
    %837 = vector.shape_cast %836 : vector<1x1x128x512xbf16> to vector<128x512xbf16>
    %cst_317 = arith.constant dense<0.000000e+00> : vector<2x512xf32>
    %838 = tpu.matmul %835, %837, %cst_317 {dimension_numbers = #tpu.dot_dimension_numbers<[1], [0], [0], [1], [0, 0, 1, 1], [], []>} : vector<2x128xbf16>, vector<128x512xbf16>, vector<2x512xf32> -> vector<2x512xf32>
    %839 = arith.addf %834, %838 : vector<2x512xf32>
    %840 = vector.extract_strided_slice %839 {offsets = [0, 0], sizes = [2, 128], strides = [1, 1]} : vector<2x512xf32> to vector<2x128xf32>
    %841 = arith.negf %840 : vector<2x128xf32>
    %842 = math.exp %841 : vector<2x128xf32>
    %cst_318 = arith.constant 1.000000e+00 : f32
    %843 = vector.broadcast %cst_318 : f32 to vector<2x128xf32>
    %844 = arith.addf %843, %842 : vector<2x128xf32>
    %845 = arith.divf %843, %844 : vector<2x128xf32>
    %846 = vector.extract_strided_slice %839 {offsets = [0, 128], sizes = [2, 128], strides = [1, 1]} : vector<2x512xf32> to vector<2x128xf32>
    %847 = arith.negf %846 : vector<2x128xf32>
    %848 = math.exp %847 : vector<2x128xf32>
    %cst_319 = arith.constant 1.000000e+00 : f32
    %849 = vector.broadcast %cst_319 : f32 to vector<2x128xf32>
    %850 = arith.addf %849, %848 : vector<2x128xf32>
    %851 = arith.divf %849, %850 : vector<2x128xf32>
    %852 = vector.extract_strided_slice %839 {offsets = [0, 256], sizes = [2, 128], strides = [1, 1]} : vector<2x512xf32> to vector<2x128xf32>
    %853 = math.tanh %852 : vector<2x128xf32>
    %854 = vector.extract_strided_slice %839 {offsets = [0, 384], sizes = [2, 128], strides = [1, 1]} : vector<2x512xf32> to vector<2x128xf32>
    %855 = arith.negf %854 : vector<2x128xf32>
    %856 = math.exp %855 : vector<2x128xf32>
    %cst_320 = arith.constant 1.000000e+00 : f32
    %857 = vector.broadcast %cst_320 : f32 to vector<2x128xf32>
    %858 = arith.addf %857, %856 : vector<2x128xf32>
    %859 = arith.divf %857, %858 : vector<2x128xf32>
    %860 = arith.mulf %851, %827 : vector<2x128xf32>
    %861 = arith.mulf %845, %853 : vector<2x128xf32>
    %862 = arith.addf %860, %861 : vector<2x128xf32>
    %863 = math.tanh %862 : vector<2x128xf32>
    %864 = arith.mulf %859, %863 : vector<2x128xf32>
    %c0_321 = arith.constant 0 : index
    %c6_322 = arith.constant 6 : index
    %c0_323 = arith.constant 0 : index
    %865 = vector.load %arg5[%c0_321, %c6_322, %c0_323] : memref<2x8x128xf32, #tpu.memory_space<vmem>>, vector<2x1x128xf32>
    %866 = vector.shape_cast %865 : vector<2x1x128xf32> to vector<2x128xf32>
    %867 = vector.shape_cast %864 : vector<2x128xf32> to vector<2x1x128xf32>
    tpu.vector_store %arg5[%c0_321, %c6_322, %c0_323], %867 {strides = array<i32>} : memref<2x8x128xf32, #tpu.memory_space<vmem>>, vector<2x1x128xf32>,
    %868 = vector.extract_strided_slice %626 {offsets = [0, 7, 0], sizes = [2, 1, 512], strides = [1, 1, 1]} : vector<2x8x512xf32> to vector<2x1x512xf32>
    %869 = vector.shape_cast %868 : vector<2x1x512xf32> to vector<2x512xf32>
    %870 = arith.truncf %864 : vector<2x128xf32> to vector<2x128xbf16>
    %c2_324 = arith.constant 2 : index
    %c1_325 = arith.constant 1 : index
    %c0_326 = arith.constant 0 : index
    %c0_327 = arith.constant 0 : index
    %871 = vector.load %arg4[%c2_324, %c1_325, %c0_326, %c0_327] : memref<4x2x128x512xbf16, #tpu.memory_space<vmem>>, vector<1x1x128x512xbf16>
    %872 = vector.shape_cast %871 : vector<1x1x128x512xbf16> to vector<128x512xbf16>
    %cst_328 = arith.constant dense<0.000000e+00> : vector<2x512xf32>
    %873 = tpu.matmul %870, %872, %cst_328 {dimension_numbers = #tpu.dot_dimension_numbers<[1], [0], [0], [1], [0, 0, 1, 1], [], []>} : vector<2x128xbf16>, vector<128x512xbf16>, vector<2x512xf32> -> vector<2x512xf32>
    %874 = arith.addf %869, %873 : vector<2x512xf32>
    %875 = vector.extract_strided_slice %874 {offsets = [0, 0], sizes = [2, 128], strides = [1, 1]} : vector<2x512xf32> to vector<2x128xf32>
    %876 = arith.negf %875 : vector<2x128xf32>
    %877 = math.exp %876 : vector<2x128xf32>
    %cst_329 = arith.constant 1.000000e+00 : f32
    %878 = vector.broadcast %cst_329 : f32 to vector<2x128xf32>
    %879 = arith.addf %878, %877 : vector<2x128xf32>
    %880 = arith.divf %878, %879 : vector<2x128xf32>
    %881 = vector.extract_strided_slice %874 {offsets = [0, 128], sizes = [2, 128], strides = [1, 1]} : vector<2x512xf32> to vector<2x128xf32>
    %882 = arith.negf %881 : vector<2x128xf32>
    %883 = math.exp %882 : vector<2x128xf32>
    %cst_330 = arith.constant 1.000000e+00 : f32
    %884 = vector.broadcast %cst_330 : f32 to vector<2x128xf32>
    %885 = arith.addf %884, %883 : vector<2x128xf32>
    %886 = arith.divf %884, %885 : vector<2x128xf32>
    %887 = vector.extract_strided_slice %874 {offsets = [0, 256], sizes = [2, 128], strides = [1, 1]} : vector<2x512xf32> to vector<2x128xf32>
    %888 = math.tanh %887 : vector<2x128xf32>
    %889 = vector.extract_strided_slice %874 {offsets = [0, 384], sizes = [2, 128], strides = [1, 1]} : vector<2x512xf32> to vector<2x128xf32>
    %890 = arith.negf %889 : vector<2x128xf32>
    %891 = math.exp %890 : vector<2x128xf32>
    %cst_331 = arith.constant 1.000000e+00 : f32
    %892 = vector.broadcast %cst_331 : f32 to vector<2x128xf32>
    %893 = arith.addf %892, %891 : vector<2x128xf32>
    %894 = arith.divf %892, %893 : vector<2x128xf32>
    %895 = arith.mulf %886, %862 : vector<2x128xf32>
    %896 = arith.mulf %880, %888 : vector<2x128xf32>
    %897 = arith.addf %895, %896 : vector<2x128xf32>
    %898 = math.tanh %897 : vector<2x128xf32>
    %899 = arith.mulf %894, %898 : vector<2x128xf32>
    %c0_332 = arith.constant 0 : index
    %c7_333 = arith.constant 7 : index
    %c0_334 = arith.constant 0 : index
    %900 = vector.load %arg5[%c0_332, %c7_333, %c0_334] : memref<2x8x128xf32, #tpu.memory_space<vmem>>, vector<2x1x128xf32>
    %901 = vector.shape_cast %900 : vector<2x1x128xf32> to vector<2x128xf32>
    %902 = vector.shape_cast %899 : vector<2x128xf32> to vector<2x1x128xf32>
    tpu.vector_store %arg5[%c0_332, %c7_333, %c0_334], %902 {strides = array<i32>} : memref<2x8x128xf32, #tpu.memory_space<vmem>>, vector<2x1x128xf32>,
    %c0_335 = arith.constant 0 : index
    %c0_336 = arith.constant 0 : index
    %c0_337 = arith.constant 0 : index
    %903 = vector.load %arg5[%c0_335, %c0_336, %c0_337] : memref<2x8x128xf32, #tpu.memory_space<vmem>>, vector<2x8x128xf32>
    %c3_i32_338 = arith.constant 3 : i32
    %c3_i32_339 = arith.constant 3 : i32
    %c3_i32_340 = arith.constant 3 : i32
    %c0_i32_341 = arith.constant 0 : i32
    %c0_i32_342 = arith.constant 0 : i32
    %c0_i32_343 = arith.constant 0 : i32
    %904 = tpu.memref_slice %arg2[%c3_i32_338, %c0_i32_341, %c0_i32_342, %c0_i32_343] : memref<4x2x128x512xbf16, #tpu.memory_space<any>> -> memref<1x2x128x512xbf16, #tpu.memory_space<any>>
    %905 = tpu.memref_squeeze %904 : memref<1x2x128x512xbf16, #tpu.memory_space<any>> -> memref<2x128x512xbf16, #tpu.memory_space<any>>
    %c0_i32_344 = arith.constant 0 : i32
    %c0_i32_345 = arith.constant 0 : i32
    %c0_i32_346 = arith.constant 0 : i32
    %906 = tpu.memref_slice %arg4[%c3_i32_339, %c0_i32_344, %c0_i32_345, %c0_i32_346] : memref<4x2x128x512xbf16, #tpu.memory_space<vmem>> -> memref<1x2x128x512xbf16, #tpu.memory_space<vmem>>
    %907 = tpu.memref_squeeze %906 : memref<1x2x128x512xbf16, #tpu.memory_space<vmem>> -> memref<2x128x512xbf16, #tpu.memory_space<vmem>>
    %908 = tpu.memref_slice %arg7[%c3_i32_340] : memref<4x!tpu.dma_semaphore, #tpu.memory_space<semaphore_mem>> -> memref<1x!tpu.dma_semaphore, #tpu.memory_space<semaphore_mem>>
    %909 = tpu.memref_squeeze %908 : memref<1x!tpu.dma_semaphore, #tpu.memory_space<semaphore_mem>> -> memref<!tpu.dma_semaphore, #tpu.memory_space<semaphore_mem>>
    tpu.wait_dma2 semaphore(%909 : memref<!tpu.dma_semaphore, #tpu.memory_space<semaphore_mem>>) src(%905 : memref<2x128x512xbf16, #tpu.memory_space<any>>) dst(%907 : memref<2x128x512xbf16, #tpu.memory_space<vmem>>)
    %c3_347 = arith.constant 3 : index
    %c0_348 = arith.constant 0 : index
    %c0_349 = arith.constant 0 : index
    %910 = vector.load %arg1[%c3_347, %c0_348, %c0_349] : memref<4x1x512xf32, #tpu.memory_space<vmem>>, vector<1x1x512xf32>
    %911 = vector.shape_cast %910 : vector<1x1x512xf32> to vector<1x512xf32>
    %912 = vector.shape_cast %903 : vector<2x8x128xf32> to vector<16x128xf32>
    %913 = arith.truncf %912 : vector<16x128xf32> to vector<16x128xbf16>
    %c3_350 = arith.constant 3 : index
    %c0_351 = arith.constant 0 : index
    %c0_352 = arith.constant 0 : index
    %c0_353 = arith.constant 0 : index
    %914 = vector.load %arg4[%c3_350, %c0_351, %c0_352, %c0_353] : memref<4x2x128x512xbf16, #tpu.memory_space<vmem>>, vector<1x1x128x512xbf16>
    %915 = vector.shape_cast %914 : vector<1x1x128x512xbf16> to vector<128x512xbf16>
    %cst_354 = arith.constant dense<0.000000e+00> : vector<16x512xf32>
    %916 = tpu.matmul %913, %915, %cst_354 {dimension_numbers = #tpu.dot_dimension_numbers<[1], [0], [0], [1], [0, 0, 1, 1], [], []>} : vector<16x128xbf16>, vector<128x512xbf16>, vector<16x512xf32> -> vector<16x512xf32>
    %917 = vector.broadcast %911 : vector<1x512xf32> to vector<16x512xf32>
    %918 = arith.addf %916, %917 : vector<16x512xf32>
    %919 = vector.shape_cast %918 : vector<16x512xf32> to vector<2x8x512xf32>
    %920 = vector.extract_strided_slice %919 {offsets = [0, 0, 0], sizes = [2, 1, 512], strides = [1, 1, 1]} : vector<2x8x512xf32> to vector<2x1x512xf32>
    %921 = vector.shape_cast %920 : vector<2x1x512xf32> to vector<2x512xf32>
    %cst_355 = arith.constant 0.000000e+00 : f32
    %922 = vector.broadcast %cst_355 : f32 to vector<2x128xf32>
    %923 = vector.extract_strided_slice %921 {offsets = [0, 0], sizes = [2, 128], strides = [1, 1]} : vector<2x512xf32> to vector<2x128xf32>
    %924 = arith.negf %923 : vector<2x128xf32>
    %925 = math.exp %924 : vector<2x128xf32>
    %cst_356 = arith.constant 1.000000e+00 : f32
    %926 = vector.broadcast %cst_356 : f32 to vector<2x128xf32>
    %927 = arith.addf %926, %925 : vector<2x128xf32>
    %928 = arith.divf %926, %927 : vector<2x128xf32>
    %929 = vector.extract_strided_slice %921 {offsets = [0, 128], sizes = [2, 128], strides = [1, 1]} : vector<2x512xf32> to vector<2x128xf32>
    %930 = arith.negf %929 : vector<2x128xf32>
    %931 = math.exp %930 : vector<2x128xf32>
    %cst_357 = arith.constant 1.000000e+00 : f32
    %932 = vector.broadcast %cst_357 : f32 to vector<2x128xf32>
    %933 = arith.addf %932, %931 : vector<2x128xf32>
    %934 = arith.divf %932, %933 : vector<2x128xf32>
    %935 = vector.extract_strided_slice %921 {offsets = [0, 256], sizes = [2, 128], strides = [1, 1]} : vector<2x512xf32> to vector<2x128xf32>
    %936 = math.tanh %935 : vector<2x128xf32>
    %937 = vector.extract_strided_slice %921 {offsets = [0, 384], sizes = [2, 128], strides = [1, 1]} : vector<2x512xf32> to vector<2x128xf32>
    %938 = arith.negf %937 : vector<2x128xf32>
    %939 = math.exp %938 : vector<2x128xf32>
    %cst_358 = arith.constant 1.000000e+00 : f32
    %940 = vector.broadcast %cst_358 : f32 to vector<2x128xf32>
    %941 = arith.addf %940, %939 : vector<2x128xf32>
    %942 = arith.divf %940, %941 : vector<2x128xf32>
    %943 = arith.mulf %934, %922 : vector<2x128xf32>
    %944 = arith.mulf %928, %936 : vector<2x128xf32>
    %945 = arith.addf %943, %944 : vector<2x128xf32>
    %946 = math.tanh %945 : vector<2x128xf32>
    %947 = arith.mulf %942, %946 : vector<2x128xf32>
    %948 = vector.extract_strided_slice %919 {offsets = [0, 1, 0], sizes = [2, 1, 512], strides = [1, 1, 1]} : vector<2x8x512xf32> to vector<2x1x512xf32>
    %949 = vector.shape_cast %948 : vector<2x1x512xf32> to vector<2x512xf32>
    %950 = arith.truncf %947 : vector<2x128xf32> to vector<2x128xbf16>
    %c3_359 = arith.constant 3 : index
    %c1_360 = arith.constant 1 : index
    %c0_361 = arith.constant 0 : index
    %c0_362 = arith.constant 0 : index
    %951 = vector.load %arg4[%c3_359, %c1_360, %c0_361, %c0_362] : memref<4x2x128x512xbf16, #tpu.memory_space<vmem>>, vector<1x1x128x512xbf16>
    %952 = vector.shape_cast %951 : vector<1x1x128x512xbf16> to vector<128x512xbf16>
    %cst_363 = arith.constant dense<0.000000e+00> : vector<2x512xf32>
    %953 = tpu.matmul %950, %952, %cst_363 {dimension_numbers = #tpu.dot_dimension_numbers<[1], [0], [0], [1], [0, 0, 1, 1], [], []>} : vector<2x128xbf16>, vector<128x512xbf16>, vector<2x512xf32> -> vector<2x512xf32>
    %954 = arith.addf %949, %953 : vector<2x512xf32>
    %955 = vector.extract_strided_slice %954 {offsets = [0, 0], sizes = [2, 128], strides = [1, 1]} : vector<2x512xf32> to vector<2x128xf32>
    %956 = arith.negf %955 : vector<2x128xf32>
    %957 = math.exp %956 : vector<2x128xf32>
    %cst_364 = arith.constant 1.000000e+00 : f32
    %958 = vector.broadcast %cst_364 : f32 to vector<2x128xf32>
    %959 = arith.addf %958, %957 : vector<2x128xf32>
    %960 = arith.divf %958, %959 : vector<2x128xf32>
    %961 = vector.extract_strided_slice %954 {offsets = [0, 128], sizes = [2, 128], strides = [1, 1]} : vector<2x512xf32> to vector<2x128xf32>
    %962 = arith.negf %961 : vector<2x128xf32>
    %963 = math.exp %962 : vector<2x128xf32>
    %cst_365 = arith.constant 1.000000e+00 : f32
    %964 = vector.broadcast %cst_365 : f32 to vector<2x128xf32>
    %965 = arith.addf %964, %963 : vector<2x128xf32>
    %966 = arith.divf %964, %965 : vector<2x128xf32>
    %967 = vector.extract_strided_slice %954 {offsets = [0, 256], sizes = [2, 128], strides = [1, 1]} : vector<2x512xf32> to vector<2x128xf32>
    %968 = math.tanh %967 : vector<2x128xf32>
    %969 = vector.extract_strided_slice %954 {offsets = [0, 384], sizes = [2, 128], strides = [1, 1]} : vector<2x512xf32> to vector<2x128xf32>
    %970 = arith.negf %969 : vector<2x128xf32>
    %971 = math.exp %970 : vector<2x128xf32>
    %cst_366 = arith.constant 1.000000e+00 : f32
    %972 = vector.broadcast %cst_366 : f32 to vector<2x128xf32>
    %973 = arith.addf %972, %971 : vector<2x128xf32>
    %974 = arith.divf %972, %973 : vector<2x128xf32>
    %975 = arith.mulf %966, %945 : vector<2x128xf32>
    %976 = arith.mulf %960, %968 : vector<2x128xf32>
    %977 = arith.addf %975, %976 : vector<2x128xf32>
    %978 = math.tanh %977 : vector<2x128xf32>
    %979 = arith.mulf %974, %978 : vector<2x128xf32>
    %980 = vector.extract_strided_slice %919 {offsets = [0, 2, 0], sizes = [2, 1, 512], strides = [1, 1, 1]} : vector<2x8x512xf32> to vector<2x1x512xf32>
    %981 = vector.shape_cast %980 : vector<2x1x512xf32> to vector<2x512xf32>
    %982 = arith.truncf %979 : vector<2x128xf32> to vector<2x128xbf16>
    %c3_367 = arith.constant 3 : index
    %c1_368 = arith.constant 1 : index
    %c0_369 = arith.constant 0 : index
    %c0_370 = arith.constant 0 : index
    %983 = vector.load %arg4[%c3_367, %c1_368, %c0_369, %c0_370] : memref<4x2x128x512xbf16, #tpu.memory_space<vmem>>, vector<1x1x128x512xbf16>
    %984 = vector.shape_cast %983 : vector<1x1x128x512xbf16> to vector<128x512xbf16>
    %cst_371 = arith.constant dense<0.000000e+00> : vector<2x512xf32>
    %985 = tpu.matmul %982, %984, %cst_371 {dimension_numbers = #tpu.dot_dimension_numbers<[1], [0], [0], [1], [0, 0, 1, 1], [], []>} : vector<2x128xbf16>, vector<128x512xbf16>, vector<2x512xf32> -> vector<2x512xf32>
    %986 = arith.addf %981, %985 : vector<2x512xf32>
    %987 = vector.extract_strided_slice %986 {offsets = [0, 0], sizes = [2, 128], strides = [1, 1]} : vector<2x512xf32> to vector<2x128xf32>
    %988 = arith.negf %987 : vector<2x128xf32>
    %989 = math.exp %988 : vector<2x128xf32>
    %cst_372 = arith.constant 1.000000e+00 : f32
    %990 = vector.broadcast %cst_372 : f32 to vector<2x128xf32>
    %991 = arith.addf %990, %989 : vector<2x128xf32>
    %992 = arith.divf %990, %991 : vector<2x128xf32>
    %993 = vector.extract_strided_slice %986 {offsets = [0, 128], sizes = [2, 128], strides = [1, 1]} : vector<2x512xf32> to vector<2x128xf32>
    %994 = arith.negf %993 : vector<2x128xf32>
    %995 = math.exp %994 : vector<2x128xf32>
    %cst_373 = arith.constant 1.000000e+00 : f32
    %996 = vector.broadcast %cst_373 : f32 to vector<2x128xf32>
    %997 = arith.addf %996, %995 : vector<2x128xf32>
    %998 = arith.divf %996, %997 : vector<2x128xf32>
    %999 = vector.extract_strided_slice %986 {offsets = [0, 256], sizes = [2, 128], strides = [1, 1]} : vector<2x512xf32> to vector<2x128xf32>
    %1000 = math.tanh %999 : vector<2x128xf32>
    %1001 = vector.extract_strided_slice %986 {offsets = [0, 384], sizes = [2, 128], strides = [1, 1]} : vector<2x512xf32> to vector<2x128xf32>
    %1002 = arith.negf %1001 : vector<2x128xf32>
    %1003 = math.exp %1002 : vector<2x128xf32>
    %cst_374 = arith.constant 1.000000e+00 : f32
    %1004 = vector.broadcast %cst_374 : f32 to vector<2x128xf32>
    %1005 = arith.addf %1004, %1003 : vector<2x128xf32>
    %1006 = arith.divf %1004, %1005 : vector<2x128xf32>
    %1007 = arith.mulf %998, %977 : vector<2x128xf32>
    %1008 = arith.mulf %992, %1000 : vector<2x128xf32>
    %1009 = arith.addf %1007, %1008 : vector<2x128xf32>
    %1010 = math.tanh %1009 : vector<2x128xf32>
    %1011 = arith.mulf %1006, %1010 : vector<2x128xf32>
    %1012 = vector.extract_strided_slice %919 {offsets = [0, 3, 0], sizes = [2, 1, 512], strides = [1, 1, 1]} : vector<2x8x512xf32> to vector<2x1x512xf32>
    %1013 = vector.shape_cast %1012 : vector<2x1x512xf32> to vector<2x512xf32>
    %1014 = arith.truncf %1011 : vector<2x128xf32> to vector<2x128xbf16>
    %c3_375 = arith.constant 3 : index
    %c1_376 = arith.constant 1 : index
    %c0_377 = arith.constant 0 : index
    %c0_378 = arith.constant 0 : index
    %1015 = vector.load %arg4[%c3_375, %c1_376, %c0_377, %c0_378] : memref<4x2x128x512xbf16, #tpu.memory_space<vmem>>, vector<1x1x128x512xbf16>
    %1016 = vector.shape_cast %1015 : vector<1x1x128x512xbf16> to vector<128x512xbf16>
    %cst_379 = arith.constant dense<0.000000e+00> : vector<2x512xf32>
    %1017 = tpu.matmul %1014, %1016, %cst_379 {dimension_numbers = #tpu.dot_dimension_numbers<[1], [0], [0], [1], [0, 0, 1, 1], [], []>} : vector<2x128xbf16>, vector<128x512xbf16>, vector<2x512xf32> -> vector<2x512xf32>
    %1018 = arith.addf %1013, %1017 : vector<2x512xf32>
    %1019 = vector.extract_strided_slice %1018 {offsets = [0, 0], sizes = [2, 128], strides = [1, 1]} : vector<2x512xf32> to vector<2x128xf32>
    %1020 = arith.negf %1019 : vector<2x128xf32>
    %1021 = math.exp %1020 : vector<2x128xf32>
    %cst_380 = arith.constant 1.000000e+00 : f32
    %1022 = vector.broadcast %cst_380 : f32 to vector<2x128xf32>
    %1023 = arith.addf %1022, %1021 : vector<2x128xf32>
    %1024 = arith.divf %1022, %1023 : vector<2x128xf32>
    %1025 = vector.extract_strided_slice %1018 {offsets = [0, 128], sizes = [2, 128], strides = [1, 1]} : vector<2x512xf32> to vector<2x128xf32>
    %1026 = arith.negf %1025 : vector<2x128xf32>
    %1027 = math.exp %1026 : vector<2x128xf32>
    %cst_381 = arith.constant 1.000000e+00 : f32
    %1028 = vector.broadcast %cst_381 : f32 to vector<2x128xf32>
    %1029 = arith.addf %1028, %1027 : vector<2x128xf32>
    %1030 = arith.divf %1028, %1029 : vector<2x128xf32>
    %1031 = vector.extract_strided_slice %1018 {offsets = [0, 256], sizes = [2, 128], strides = [1, 1]} : vector<2x512xf32> to vector<2x128xf32>
    %1032 = math.tanh %1031 : vector<2x128xf32>
    %1033 = vector.extract_strided_slice %1018 {offsets = [0, 384], sizes = [2, 128], strides = [1, 1]} : vector<2x512xf32> to vector<2x128xf32>
    %1034 = arith.negf %1033 : vector<2x128xf32>
    %1035 = math.exp %1034 : vector<2x128xf32>
    %cst_382 = arith.constant 1.000000e+00 : f32
    %1036 = vector.broadcast %cst_382 : f32 to vector<2x128xf32>
    %1037 = arith.addf %1036, %1035 : vector<2x128xf32>
    %1038 = arith.divf %1036, %1037 : vector<2x128xf32>
    %1039 = arith.mulf %1030, %1009 : vector<2x128xf32>
    %1040 = arith.mulf %1024, %1032 : vector<2x128xf32>
    %1041 = arith.addf %1039, %1040 : vector<2x128xf32>
    %1042 = math.tanh %1041 : vector<2x128xf32>
    %1043 = arith.mulf %1038, %1042 : vector<2x128xf32>
    %1044 = vector.extract_strided_slice %919 {offsets = [0, 4, 0], sizes = [2, 1, 512], strides = [1, 1, 1]} : vector<2x8x512xf32> to vector<2x1x512xf32>
    %1045 = vector.shape_cast %1044 : vector<2x1x512xf32> to vector<2x512xf32>
    %1046 = arith.truncf %1043 : vector<2x128xf32> to vector<2x128xbf16>
    %c3_383 = arith.constant 3 : index
    %c1_384 = arith.constant 1 : index
    %c0_385 = arith.constant 0 : index
    %c0_386 = arith.constant 0 : index
    %1047 = vector.load %arg4[%c3_383, %c1_384, %c0_385, %c0_386] : memref<4x2x128x512xbf16, #tpu.memory_space<vmem>>, vector<1x1x128x512xbf16>
    %1048 = vector.shape_cast %1047 : vector<1x1x128x512xbf16> to vector<128x512xbf16>
    %cst_387 = arith.constant dense<0.000000e+00> : vector<2x512xf32>
    %1049 = tpu.matmul %1046, %1048, %cst_387 {dimension_numbers = #tpu.dot_dimension_numbers<[1], [0], [0], [1], [0, 0, 1, 1], [], []>} : vector<2x128xbf16>, vector<128x512xbf16>, vector<2x512xf32> -> vector<2x512xf32>
    %1050 = arith.addf %1045, %1049 : vector<2x512xf32>
    %1051 = vector.extract_strided_slice %1050 {offsets = [0, 0], sizes = [2, 128], strides = [1, 1]} : vector<2x512xf32> to vector<2x128xf32>
    %1052 = arith.negf %1051 : vector<2x128xf32>
    %1053 = math.exp %1052 : vector<2x128xf32>
    %cst_388 = arith.constant 1.000000e+00 : f32
    %1054 = vector.broadcast %cst_388 : f32 to vector<2x128xf32>
    %1055 = arith.addf %1054, %1053 : vector<2x128xf32>
    %1056 = arith.divf %1054, %1055 : vector<2x128xf32>
    %1057 = vector.extract_strided_slice %1050 {offsets = [0, 128], sizes = [2, 128], strides = [1, 1]} : vector<2x512xf32> to vector<2x128xf32>
    %1058 = arith.negf %1057 : vector<2x128xf32>
    %1059 = math.exp %1058 : vector<2x128xf32>
    %cst_389 = arith.constant 1.000000e+00 : f32
    %1060 = vector.broadcast %cst_389 : f32 to vector<2x128xf32>
    %1061 = arith.addf %1060, %1059 : vector<2x128xf32>
    %1062 = arith.divf %1060, %1061 : vector<2x128xf32>
    %1063 = vector.extract_strided_slice %1050 {offsets = [0, 256], sizes = [2, 128], strides = [1, 1]} : vector<2x512xf32> to vector<2x128xf32>
    %1064 = math.tanh %1063 : vector<2x128xf32>
    %1065 = vector.extract_strided_slice %1050 {offsets = [0, 384], sizes = [2, 128], strides = [1, 1]} : vector<2x512xf32> to vector<2x128xf32>
    %1066 = arith.negf %1065 : vector<2x128xf32>
    %1067 = math.exp %1066 : vector<2x128xf32>
    %cst_390 = arith.constant 1.000000e+00 : f32
    %1068 = vector.broadcast %cst_390 : f32 to vector<2x128xf32>
    %1069 = arith.addf %1068, %1067 : vector<2x128xf32>
    %1070 = arith.divf %1068, %1069 : vector<2x128xf32>
    %1071 = arith.mulf %1062, %1041 : vector<2x128xf32>
    %1072 = arith.mulf %1056, %1064 : vector<2x128xf32>
    %1073 = arith.addf %1071, %1072 : vector<2x128xf32>
    %1074 = math.tanh %1073 : vector<2x128xf32>
    %1075 = arith.mulf %1070, %1074 : vector<2x128xf32>
    %c0_391 = arith.constant 0 : index
    %c0_392 = arith.constant 0 : index
    %c0_393 = arith.constant 0 : index
    %1076 = vector.load %arg3[%c0_391, %c0_392, %c0_393] : memref<2x4x128xf32, #tpu.memory_space<vmem>>, vector<2x1x128xf32>
    %1077 = vector.shape_cast %1076 : vector<2x1x128xf32> to vector<2x128xf32>
    %1078 = vector.shape_cast %1075 : vector<2x128xf32> to vector<2x1x128xf32>
    tpu.vector_store %arg3[%c0_391, %c0_392, %c0_393], %1078 {strides = array<i32>} : memref<2x4x128xf32, #tpu.memory_space<vmem>>, vector<2x1x128xf32>,
    %1079 = vector.extract_strided_slice %919 {offsets = [0, 5, 0], sizes = [2, 1, 512], strides = [1, 1, 1]} : vector<2x8x512xf32> to vector<2x1x512xf32>
    %1080 = vector.shape_cast %1079 : vector<2x1x512xf32> to vector<2x512xf32>
    %1081 = arith.truncf %1075 : vector<2x128xf32> to vector<2x128xbf16>
    %c3_394 = arith.constant 3 : index
    %c1_395 = arith.constant 1 : index
    %c0_396 = arith.constant 0 : index
    %c0_397 = arith.constant 0 : index
    %1082 = vector.load %arg4[%c3_394, %c1_395, %c0_396, %c0_397] : memref<4x2x128x512xbf16, #tpu.memory_space<vmem>>, vector<1x1x128x512xbf16>
    %1083 = vector.shape_cast %1082 : vector<1x1x128x512xbf16> to vector<128x512xbf16>
    %cst_398 = arith.constant dense<0.000000e+00> : vector<2x512xf32>
    %1084 = tpu.matmul %1081, %1083, %cst_398 {dimension_numbers = #tpu.dot_dimension_numbers<[1], [0], [0], [1], [0, 0, 1, 1], [], []>} : vector<2x128xbf16>, vector<128x512xbf16>, vector<2x512xf32> -> vector<2x512xf32>
    %1085 = arith.addf %1080, %1084 : vector<2x512xf32>
    %1086 = vector.extract_strided_slice %1085 {offsets = [0, 0], sizes = [2, 128], strides = [1, 1]} : vector<2x512xf32> to vector<2x128xf32>
    %1087 = arith.negf %1086 : vector<2x128xf32>
    %1088 = math.exp %1087 : vector<2x128xf32>
    %cst_399 = arith.constant 1.000000e+00 : f32
    %1089 = vector.broadcast %cst_399 : f32 to vector<2x128xf32>
    %1090 = arith.addf %1089, %1088 : vector<2x128xf32>
    %1091 = arith.divf %1089, %1090 : vector<2x128xf32>
    %1092 = vector.extract_strided_slice %1085 {offsets = [0, 128], sizes = [2, 128], strides = [1, 1]} : vector<2x512xf32> to vector<2x128xf32>
    %1093 = arith.negf %1092 : vector<2x128xf32>
    %1094 = math.exp %1093 : vector<2x128xf32>
    %cst_400 = arith.constant 1.000000e+00 : f32
    %1095 = vector.broadcast %cst_400 : f32 to vector<2x128xf32>
    %1096 = arith.addf %1095, %1094 : vector<2x128xf32>
    %1097 = arith.divf %1095, %1096 : vector<2x128xf32>
    %1098 = vector.extract_strided_slice %1085 {offsets = [0, 256], sizes = [2, 128], strides = [1, 1]} : vector<2x512xf32> to vector<2x128xf32>
    %1099 = math.tanh %1098 : vector<2x128xf32>
    %1100 = vector.extract_strided_slice %1085 {offsets = [0, 384], sizes = [2, 128], strides = [1, 1]} : vector<2x512xf32> to vector<2x128xf32>
    %1101 = arith.negf %1100 : vector<2x128xf32>
    %1102 = math.exp %1101 : vector<2x128xf32>
    %cst_401 = arith.constant 1.000000e+00 : f32
    %1103 = vector.broadcast %cst_401 : f32 to vector<2x128xf32>
    %1104 = arith.addf %1103, %1102 : vector<2x128xf32>
    %1105 = arith.divf %1103, %1104 : vector<2x128xf32>
    %1106 = arith.mulf %1097, %1073 : vector<2x128xf32>
    %1107 = arith.mulf %1091, %1099 : vector<2x128xf32>
    %1108 = arith.addf %1106, %1107 : vector<2x128xf32>
    %1109 = math.tanh %1108 : vector<2x128xf32>
    %1110 = arith.mulf %1105, %1109 : vector<2x128xf32>
    %c0_402 = arith.constant 0 : index
    %c1_403 = arith.constant 1 : index
    %c0_404 = arith.constant 0 : index
    %1111 = vector.load %arg3[%c0_402, %c1_403, %c0_404] : memref<2x4x128xf32, #tpu.memory_space<vmem>>, vector<2x1x128xf32>
    %1112 = vector.shape_cast %1111 : vector<2x1x128xf32> to vector<2x128xf32>
    %1113 = vector.shape_cast %1110 : vector<2x128xf32> to vector<2x1x128xf32>
    tpu.vector_store %arg3[%c0_402, %c1_403, %c0_404], %1113 {strides = array<i32>} : memref<2x4x128xf32, #tpu.memory_space<vmem>>, vector<2x1x128xf32>,
    %1114 = vector.extract_strided_slice %919 {offsets = [0, 6, 0], sizes = [2, 1, 512], strides = [1, 1, 1]} : vector<2x8x512xf32> to vector<2x1x512xf32>
    %1115 = vector.shape_cast %1114 : vector<2x1x512xf32> to vector<2x512xf32>
    %1116 = arith.truncf %1110 : vector<2x128xf32> to vector<2x128xbf16>
    %c3_405 = arith.constant 3 : index
    %c1_406 = arith.constant 1 : index
    %c0_407 = arith.constant 0 : index
    %c0_408 = arith.constant 0 : index
    %1117 = vector.load %arg4[%c3_405, %c1_406, %c0_407, %c0_408] : memref<4x2x128x512xbf16, #tpu.memory_space<vmem>>, vector<1x1x128x512xbf16>
    %1118 = vector.shape_cast %1117 : vector<1x1x128x512xbf16> to vector<128x512xbf16>
    %cst_409 = arith.constant dense<0.000000e+00> : vector<2x512xf32>
    %1119 = tpu.matmul %1116, %1118, %cst_409 {dimension_numbers = #tpu.dot_dimension_numbers<[1], [0], [0], [1], [0, 0, 1, 1], [], []>} : vector<2x128xbf16>, vector<128x512xbf16>, vector<2x512xf32> -> vector<2x512xf32>
    %1120 = arith.addf %1115, %1119 : vector<2x512xf32>
    %1121 = vector.extract_strided_slice %1120 {offsets = [0, 0], sizes = [2, 128], strides = [1, 1]} : vector<2x512xf32> to vector<2x128xf32>
    %1122 = arith.negf %1121 : vector<2x128xf32>
    %1123 = math.exp %1122 : vector<2x128xf32>
    %cst_410 = arith.constant 1.000000e+00 : f32
    %1124 = vector.broadcast %cst_410 : f32 to vector<2x128xf32>
    %1125 = arith.addf %1124, %1123 : vector<2x128xf32>
    %1126 = arith.divf %1124, %1125 : vector<2x128xf32>
    %1127 = vector.extract_strided_slice %1120 {offsets = [0, 128], sizes = [2, 128], strides = [1, 1]} : vector<2x512xf32> to vector<2x128xf32>
    %1128 = arith.negf %1127 : vector<2x128xf32>
    %1129 = math.exp %1128 : vector<2x128xf32>
    %cst_411 = arith.constant 1.000000e+00 : f32
    %1130 = vector.broadcast %cst_411 : f32 to vector<2x128xf32>
    %1131 = arith.addf %1130, %1129 : vector<2x128xf32>
    %1132 = arith.divf %1130, %1131 : vector<2x128xf32>
    %1133 = vector.extract_strided_slice %1120 {offsets = [0, 256], sizes = [2, 128], strides = [1, 1]} : vector<2x512xf32> to vector<2x128xf32>
    %1134 = math.tanh %1133 : vector<2x128xf32>
    %1135 = vector.extract_strided_slice %1120 {offsets = [0, 384], sizes = [2, 128], strides = [1, 1]} : vector<2x512xf32> to vector<2x128xf32>
    %1136 = arith.negf %1135 : vector<2x128xf32>
    %1137 = math.exp %1136 : vector<2x128xf32>
    %cst_412 = arith.constant 1.000000e+00 : f32
    %1138 = vector.broadcast %cst_412 : f32 to vector<2x128xf32>
    %1139 = arith.addf %1138, %1137 : vector<2x128xf32>
    %1140 = arith.divf %1138, %1139 : vector<2x128xf32>
    %1141 = arith.mulf %1132, %1108 : vector<2x128xf32>
    %1142 = arith.mulf %1126, %1134 : vector<2x128xf32>
    %1143 = arith.addf %1141, %1142 : vector<2x128xf32>
    %1144 = math.tanh %1143 : vector<2x128xf32>
    %1145 = arith.mulf %1140, %1144 : vector<2x128xf32>
    %c0_413 = arith.constant 0 : index
    %c2_414 = arith.constant 2 : index
    %c0_415 = arith.constant 0 : index
    %1146 = vector.load %arg3[%c0_413, %c2_414, %c0_415] : memref<2x4x128xf32, #tpu.memory_space<vmem>>, vector<2x1x128xf32>
    %1147 = vector.shape_cast %1146 : vector<2x1x128xf32> to vector<2x128xf32>
    %1148 = vector.shape_cast %1145 : vector<2x128xf32> to vector<2x1x128xf32>
    tpu.vector_store %arg3[%c0_413, %c2_414, %c0_415], %1148 {strides = array<i32>} : memref<2x4x128xf32, #tpu.memory_space<vmem>>, vector<2x1x128xf32>,
    %1149 = vector.extract_strided_slice %919 {offsets = [0, 7, 0], sizes = [2, 1, 512], strides = [1, 1, 1]} : vector<2x8x512xf32> to vector<2x1x512xf32>
    %1150 = vector.shape_cast %1149 : vector<2x1x512xf32> to vector<2x512xf32>
    %1151 = arith.truncf %1145 : vector<2x128xf32> to vector<2x128xbf16>
    %c3_416 = arith.constant 3 : index
    %c1_417 = arith.constant 1 : index
    %c0_418 = arith.constant 0 : index
    %c0_419 = arith.constant 0 : index
    %1152 = vector.load %arg4[%c3_416, %c1_417, %c0_418, %c0_419] : memref<4x2x128x512xbf16, #tpu.memory_space<vmem>>, vector<1x1x128x512xbf16>
    %1153 = vector.shape_cast %1152 : vector<1x1x128x512xbf16> to vector<128x512xbf16>
    %cst_420 = arith.constant dense<0.000000e+00> : vector<2x512xf32>
    %1154 = tpu.matmul %1151, %1153, %cst_420 {dimension_numbers = #tpu.dot_dimension_numbers<[1], [0], [0], [1], [0, 0, 1, 1], [], []>} : vector<2x128xbf16>, vector<128x512xbf16>, vector<2x512xf32> -> vector<2x512xf32>
    %1155 = arith.addf %1150, %1154 : vector<2x512xf32>
    %1156 = vector.extract_strided_slice %1155 {offsets = [0, 0], sizes = [2, 128], strides = [1, 1]} : vector<2x512xf32> to vector<2x128xf32>
    %1157 = arith.negf %1156 : vector<2x128xf32>
    %1158 = math.exp %1157 : vector<2x128xf32>
    %cst_421 = arith.constant 1.000000e+00 : f32
    %1159 = vector.broadcast %cst_421 : f32 to vector<2x128xf32>
    %1160 = arith.addf %1159, %1158 : vector<2x128xf32>
    %1161 = arith.divf %1159, %1160 : vector<2x128xf32>
    %1162 = vector.extract_strided_slice %1155 {offsets = [0, 128], sizes = [2, 128], strides = [1, 1]} : vector<2x512xf32> to vector<2x128xf32>
    %1163 = arith.negf %1162 : vector<2x128xf32>
    %1164 = math.exp %1163 : vector<2x128xf32>
    %cst_422 = arith.constant 1.000000e+00 : f32
    %1165 = vector.broadcast %cst_422 : f32 to vector<2x128xf32>
    %1166 = arith.addf %1165, %1164 : vector<2x128xf32>
    %1167 = arith.divf %1165, %1166 : vector<2x128xf32>
    %1168 = vector.extract_strided_slice %1155 {offsets = [0, 256], sizes = [2, 128], strides = [1, 1]} : vector<2x512xf32> to vector<2x128xf32>
    %1169 = math.tanh %1168 : vector<2x128xf32>
    %1170 = vector.extract_strided_slice %1155 {offsets = [0, 384], sizes = [2, 128], strides = [1, 1]} : vector<2x512xf32> to vector<2x128xf32>
    %1171 = arith.negf %1170 : vector<2x128xf32>
    %1172 = math.exp %1171 : vector<2x128xf32>
    %cst_423 = arith.constant 1.000000e+00 : f32
    %1173 = vector.broadcast %cst_423 : f32 to vector<2x128xf32>
    %1174 = arith.addf %1173, %1172 : vector<2x128xf32>
    %1175 = arith.divf %1173, %1174 : vector<2x128xf32>
    %1176 = arith.mulf %1167, %1143 : vector<2x128xf32>
    %1177 = arith.mulf %1161, %1169 : vector<2x128xf32>
    %1178 = arith.addf %1176, %1177 : vector<2x128xf32>
    %1179 = math.tanh %1178 : vector<2x128xf32>
    %1180 = arith.mulf %1175, %1179 : vector<2x128xf32>
    %c0_424 = arith.constant 0 : index
    %c3_425 = arith.constant 3 : index
    %c0_426 = arith.constant 0 : index
    %1181 = vector.load %arg3[%c0_424, %c3_425, %c0_426] : memref<2x4x128xf32, #tpu.memory_space<vmem>>, vector<2x1x128xf32>
    %1182 = vector.shape_cast %1181 : vector<2x1x128xf32> to vector<2x128xf32>
    %1183 = vector.shape_cast %1180 : vector<2x128xf32> to vector<2x1x128xf32>
    tpu.vector_store %arg3[%c0_424, %c3_425, %c0_426], %1183 {strides = array<i32>} : memref<2x4x128xf32, #tpu.memory_space<vmem>>, vector<2x1x128xf32>,
    return
  }
}

</mosaic_0001>

<llo_original>
// kernel: lstm_autoencoder_forward.1
$region0: #{lstm_autoencoder_forward.1}
  #allocation0 [shape = 'u32[]', space=smem, size = 0x4, offset = 0x4, fixed_abs, tag = 'smem constant byte address 0x4 - core index']
  #allocation1 [shape = 'u32[144,128]{1,0:T(1,128)}', space=vmem, size = 0x12000, scoped, tag = 'internal scratch']
  #allocation2 [shape = 'bf16[4,2,128,512]{3,2,1,0:T(16,128)(2,1)}', space=vmem, size = 0x100000, scoped, tag = 'scratch operand']
  #allocation3 [shape = 'f32[2,8,128]{2,1,0:T(8,128)}', space=vmem, size = 0x2000, scoped, tag = 'scratch operand']
  #allocation4 [shape = 'f32[2,8,128]{2,1,0:T(8,128)}', space=vmem, size = 0x2000, scoped, tag = 'scratch operand']
  #allocation5 [shape = 's32[4]{0}', space=sflag, size = 0x10, scoped, tag = 'scratch operand']
  #allocation8 [shape = 's32[]', space=sflag, size = 0x4, offset = 0, fixed_abs, tag = 'sflag constant byte address 0x0 - dummy sync flag']
  #allocation10 [shape = 's32[]', space=sflag, size = 0x4, offset = 0, fixed_abs, tag = 'sflag constant byte address 0x0 - dummy sync flag']
  #allocation12 [shape = 's32[]', space=sflag, size = 0x4, offset = 0, fixed_abs, tag = 'sflag constant byte address 0x0 - dummy sync flag']
  #allocation14 [shape = 's32[]', space=sflag, size = 0x4, offset = 0, fixed_abs, tag = 'sflag constant byte address 0x0 - dummy sync flag']
  %s0 = inlined_call_operand.vmem [shape: f32[2,8,128], index: 0, kind: input, shape index: {}]
  %s1 = inlined_call_operand.vmem [shape: f32[4,1,512], index: 1, kind: input, shape index: {}]
  %s2 = inlined_call_operand.hbm [shape: bf16[4,2,128,512], index: 2, kind: input, shape index: {}]
  %s3 = inlined_call_operand.hbm [shape: f32[2,4,128], index: 3, kind: output, shape index: {}]
  %s4 = sld [smem:[#allocation0]]
  $region18: #{lstm_autoencoder_forward.1} parent=0
    _
  %s6 = ssub.s32 1, %s4
  %s7 = scalar_select 0, %s6, %s4
  $region1: #{lstm_autoencoder_forward.1} parent=0
    #allocation6 [shape = 'u8[4096]{0}', space=vmem, size = 0x1000, scoped, tag = 'output window, operand 0, single buffered']
    #allocation7 [shape = 's32[1]{0}', space=sflag, size = 0x4, scoped, tag = 'scoped memory for lstm_autoencoder_forward.1']
    #allocation9 [shape = 'u32[9]{0}', space=smem, size = 0x24, scoped, tag = 'DMA stride descriptor']
    #allocation11 [shape = 'u32[9]{0}', space=smem, size = 0x24, scoped, tag = 'DMA stride descriptor']
    #allocation13 [shape = 'u32[9]{0}', space=smem, size = 0x24, scoped, tag = 'DMA stride descriptor']
    #allocation15 [shape = 'u32[9]{0}', space=smem, size = 0x24, scoped, tag = 'DMA stride descriptor']
    %8 = vsyncpa [#allocation7], 0
    // Predicated region
    $region2: #{lstm_autoencoder_forward.1} parent=1 // pred_check
      _
    $region3: #{lstm_autoencoder_forward.1} parent=1 // pred_check_branch
      %10 = sbr.rel (0) target = $region5
    $region4: #{lstm_autoencoder_forward.1} parent=1 // pred_region
      _
    $region5: #{lstm_autoencoder_forward.1} parent=1 // pred_fallthru
      _
    // Predicated region
    $region6: #{lstm_autoencoder_forward.1} parent=1 // pred_check
      _
    $region7: #{lstm_autoencoder_forward.1} parent=1 // pred_check_branch
      %12 = sbr.rel (0) target = $region9
    $region8: #{lstm_autoencoder_forward.1} parent=1 // pred_region
      _
    $region9: #{lstm_autoencoder_forward.1} parent=1 // pred_fallthru
      _
    %s15 = sshll.u32 1, 14
    %s16 = sxor.u32 4294967295, %s15
    %s18 = sld [smem:[#allocation0]]
    %s19 = sadd.s32 2, %s18
    %s21 = sshll.u32 7, 26
    %s22 = sxor.u32 4294967295, %s21
    %s23 = sand.u32 0, %s22
    %s24 = sshll.u32 %s19, 26
    %s25 = sor.u32 %s23, %s24
    %s26 = sshll.u32 [#allocation2], 4
    %s27 = int_to_ptr.vmem [resolvable:$true] %s26
    %30 = sst [smem:[#allocation9]] 512
    %s31 = scalar_lea.smem [#allocation9], 1
    %32 = sst [smem:[%s31]] 512
    %s33 = scalar_lea.smem [#allocation9], 2
    %34 = sst [smem:[%s33]] 4
    %s35 = scalar_lea.smem [#allocation9], 3
    %36 = sst [smem:[%s35]] 64
    %s37 = scalar_lea.smem [#allocation9], 4
    %38 = sst [smem:[%s37]] 128
    %s39 = scalar_lea.smem [#allocation9], 5
    %40 = sst [smem:[%s39]] 2
    %s41 = scalar_lea.smem [#allocation9], 6
    %42 = sst [smem:[%s41]] 256
    %s43 = scalar_lea.smem [#allocation9], 7
    %44 = sst [smem:[%s43]] 64
    %s45 = scalar_lea.smem [#allocation9], 8
    %46 = sst [smem:[%s45]] 4
    %48 = dma.general %s2, 8192, %s27, [#allocation5], [#allocation8], [#allocation9], %s25, 0
    %s49 = scalar_lea.hbm %s2, 8192
    %s50 = scalar_lea.vmem [#allocation2], 512
    %s51 = scalar_lea.sflag [#allocation5], 1
    %s53 = sshll.u32 1, 14
    %s54 = sxor.u32 4294967295, %s53
    %s56 = sadd.s32 2, %s18
    %s58 = sshll.u32 7, 26
    %s59 = sxor.u32 4294967295, %s58
    %s60 = sand.u32 0, %s59
    %s61 = sshll.u32 %s56, 26
    %s62 = sor.u32 %s60, %s61
    %s63 = sshll.u32 %s50, 4
    %s64 = int_to_ptr.vmem [resolvable:$true] %s63
    %67 = sst [smem:[#allocation11]] 512
    %s68 = scalar_lea.smem [#allocation11], 1
    %69 = sst [smem:[%s68]] 512
    %s70 = scalar_lea.smem [#allocation11], 2
    %71 = sst [smem:[%s70]] 4
    %s72 = scalar_lea.smem [#allocation11], 3
    %73 = sst [smem:[%s72]] 64
    %s74 = scalar_lea.smem [#allocation11], 4
    %75 = sst [smem:[%s74]] 128
    %s76 = scalar_lea.smem [#allocation11], 5
    %77 = sst [smem:[%s76]] 2
    %s78 = scalar_lea.smem [#allocation11], 6
    %79 = sst [smem:[%s78]] 256
    %s80 = scalar_lea.smem [#allocation11], 7
    %81 = sst [smem:[%s80]] 64
    %s82 = scalar_lea.smem [#allocation11], 8
    %83 = sst [smem:[%s82]] 4
    %85 = dma.general %s49, 8192, %s64, %s51, [#allocation10], [#allocation11], %s62, 0
    %s86 = scalar_lea.hbm %s2, 16384
    %s87 = scalar_lea.vmem [#allocation2], 1024
    %s88 = scalar_lea.sflag [#allocation5], 2
    %s90 = sshll.u32 1, 14
    %s91 = sxor.u32 4294967295, %s90
    %s93 = sadd.s32 2, %s18
    %s95 = sshll.u32 7, 26
    %s96 = sxor.u32 4294967295, %s95
    %s97 = sand.u32 0, %s96
    %s98 = sshll.u32 %s93, 26
    %s99 = sor.u32 %s97, %s98
    %s100 = sshll.u32 %s87, 4
    %s101 = int_to_ptr.vmem [resolvable:$true] %s100
    %104 = sst [smem:[#allocation13]] 512
    %s105 = scalar_lea.smem [#allocation13], 1
    %106 = sst [smem:[%s105]] 512
    %s107 = scalar_lea.smem [#allocation13], 2
    %108 = sst [smem:[%s107]] 4
    %s109 = scalar_lea.smem [#allocation13], 3
    %110 = sst [smem:[%s109]] 64
    %s111 = scalar_lea.smem [#allocation13], 4
    %112 = sst [smem:[%s111]] 128
    %s113 = scalar_lea.smem [#allocation13], 5
    %114 = sst [smem:[%s113]] 2
    %s115 = scalar_lea.smem [#allocation13], 6
    %116 = sst [smem:[%s115]] 256
    %s117 = scalar_lea.smem [#allocation13], 7
    %118 = sst [smem:[%s117]] 64
    %s119 = scalar_lea.smem [#allocation13], 8
    %120 = sst [smem:[%s119]] 4
    %122 = dma.general %s86, 8192, %s101, %s88, [#allocation12], [#allocation13], %s99, 0
    %s123 = scalar_lea.hbm %s2, 24576
    %s124 = scalar_lea.vmem [#allocation2], 1536
    %s125 = scalar_lea.sflag [#allocation5], 3
    %s127 = sshll.u32 1, 14
    %s128 = sxor.u32 4294967295, %s127
    %s130 = sadd.s32 2, %s18
    %s132 = sshll.u32 7, 26
    %s133 = sxor.u32 4294967295, %s132
    %s134 = sand.u32 0, %s133
    %s135 = sshll.u32 %s130, 26
    %s136 = sor.u32 %s134, %s135
    %s137 = sshll.u32 %s124, 4
    %s138 = int_to_ptr.vmem [resolvable:$true] %s137
    %141 = sst [smem:[#allocation15]] 512
    %s142 = scalar_lea.smem [#allocation15], 1
    %143 = sst [smem:[%s142]] 512
    %s144 = scalar_lea.smem [#allocation15], 2
    %145 = sst [smem:[%s144]] 4
    %s146 = scalar_lea.smem [#allocation15], 3
    %147 = sst [smem:[%s146]] 64
    %s148 = scalar_lea.smem [#allocation15], 4
    %149 = sst [smem:[%s148]] 128
    %s150 = scalar_lea.smem [#allocation15], 5
    %151 = sst [smem:[%s150]] 2
    %s152 = scalar_lea.smem [#allocation15], 6
    %153 = sst [smem:[%s152]] 256
    %s154 = scalar_lea.smem [#allocation15], 7
    %155 = sst [smem:[%s154]] 64
    %s156 = scalar_lea.smem [#allocation15], 8
    %157 = sst [smem:[%s156]] 4
    %159 = dma.general %s123, 8192, %s138, %s125, [#allocation14], [#allocation15], %s136, 0
    %v160 = vld [vmem:[%s0] sm:$0xff]
    %v161 = vld [vmem:[%s0 + $0x8] sm:$0xff]
    %s162 = smul.u32 4, 2
    %s163 = smul.u32 %s162, 16
    %s164 = smul.u32 %s163, 4
    %s165 = sshll.u32 %s164, 4
    %166 = dma.done [#allocation5], %s165
    %v167 = vld [vmem:[%s1] sm:$0xf]
    %v168 = vpack.c.bf16 %v161, %v160
    %v169 = vld [vmem:[#allocation2] sm:$0xff]
    %v170 = vld [vmem:[#allocation2 + $0x8] sm:$0xff]
    %v171 = vld [vmem:[#allocation2 + $0x10] sm:$0xff]
    %v172 = vld [vmem:[#allocation2 + $0x18] sm:$0xff]
    %v173 = vld [vmem:[#allocation2 + $0x20] sm:$0xff]
    %v174 = vld [vmem:[#allocation2 + $0x28] sm:$0xff]
    %v175 = vld [vmem:[#allocation2 + $0x30] sm:$0xff]
    %v176 = vld [vmem:[#allocation2 + $0x38] sm:$0xff]
    %v177 = vld [vmem:[#allocation2 + $0x40] sm:$0xff]
    %v178 = vld [vmem:[#allocation2 + $0x48] sm:$0xff]
    %v179 = vld [vmem:[#allocation2 + $0x50] sm:$0xff]
    %v180 = vld [vmem:[#allocation2 + $0x58] sm:$0xff]
    %v181 = vld [vmem:[#allocation2 + $0x60] sm:$0xff]
    %v182 = vld [vmem:[#allocation2 + $0x68] sm:$0xff]
    %v183 = vld [vmem:[#allocation2 + $0x70] sm:$0xff]
    %v184 = vld [vmem:[#allocation2 + $0x78] sm:$0xff]
    %v185 = vld [vmem:[#allocation2 + $0x80] sm:$0xff]
    %v186 = vld [vmem:[#allocation2 + $0x88] sm:$0xff]
    %v187 = vld [vmem:[#allocation2 + $0x90] sm:$0xff]
    %v188 = vld [vmem:[#allocation2 + $0x98] sm:$0xff]
    %v189 = vld [vmem:[#allocation2 + $0xa0] sm:$0xff]
    %v190 = vld [vmem:[#allocation2 + $0xa8] sm:$0xff]
    %v191 = vld [vmem:[#allocation2 + $0xb0] sm:$0xff]
    %v192 = vld [vmem:[#allocation2 + $0xb8] sm:$0xff]
    %v193 = vld [vmem:[#allocation2 + $0xc0] sm:$0xff]
    %v194 = vld [vmem:[#allocation2 + $0xc8] sm:$0xff]
    %v195 = vld [vmem:[#allocation2 + $0xd0] sm:$0xff]
    %v196 = vld [vmem:[#allocation2 + $0xd8] sm:$0xff]
    %v197 = vld [vmem:[#allocation2 + $0xe0] sm:$0xff]
    %v198 = vld [vmem:[#allocation2 + $0xe8] sm:$0xff]
    %v199 = vld [vmem:[#allocation2 + $0xf0] sm:$0xff]
    %v200 = vld [vmem:[#allocation2 + $0xf8] sm:$0xff]
    %v202 = vlaneseq
    %v203 = vshrl.u32 %v202, 7
    %v204 = vsub.s32 0, %v203
    %v205 = vrot.slane %v167, %v204
    %v206 = vlaneseq
    %v207 = vshrl.u32 %v206, 7
    %v208 = vsub.s32 1, %v207
    %v209 = vrot.slane %v167, %v208
    %v210 = vlaneseq
    %v211 = vshrl.u32 %v210, 7
    %v212 = vsub.s32 2, %v211
    %v213 = vrot.slane %v167, %v212
    %v214 = vlaneseq
    %v215 = vshrl.u32 %v214, 7
    %v216 = vsub.s32 3, %v215
    %v217 = vrot.slane %v167, %v216
    %222 = vmatprep.subr.bf16.mxu0 %v170
    %223 = vmatpush1.bf16.msra.mxu0 %v169
    %224 = vmatprep.subr.bf16.mxu0 %v174
    %225 = vmatpush1.bf16.msra.mxu0 %v173
    %226 = vmatprep.subr.bf16.mxu0 %v178
    %227 = vmatpush1.bf16.msra.mxu0 %v177
    %228 = vmatprep.subr.bf16.mxu0 %v182
    %229 = vmatpush1.bf16.msra.mxu0 %v181
    %230 = vmatprep.subr.bf16.mxu0 %v186
    %231 = vmatpush1.bf16.msra.mxu0 %v185
    %232 = vmatprep.subr.bf16.mxu0 %v190
    %233 = vmatpush1.bf16.msra.mxu0 %v189
    %234 = vmatprep.subr.bf16.mxu0 %v194
    %235 = vmatpush1.bf16.msra.mxu0 %v193
    %236 = vmatprep.subr.bf16.mxu0 %v198
    %237 = vmatpush1.bf16.msra.mxu0 %v197
    %238 = vmatprep.subr.bf16.mxu0 0
    %239 = vmatpush1.bf16.msra.mxu0 0
    %240 = vmatprep.subr.bf16.mxu0 0
    %241 = vmatpush1.bf16.msra.mxu0 0
    %242 = vmatprep.subr.bf16.mxu0 0
    %243 = vmatpush1.bf16.msra.mxu0 0
    %244 = vmatprep.subr.bf16.mxu0 0
    %245 = vmatpush1.bf16.msra.mxu0 0
    %246 = vmatprep.subr.bf16.mxu0 0
    %247 = vmatpush1.bf16.msra.mxu0 0
    %248 = vmatprep.subr.bf16.mxu0 0
    %249 = vmatpush1.bf16.msra.mxu0 0
    %250 = vmatprep.subr.bf16.mxu0 0
    %251 = vmatpush1.bf16.msra.mxu0 0
    %252 = vmatprep.subr.bf16.mxu0 0
    %253 = vmatpush1.bf16.msra.mxu0 0
    %254 = vmatprep.mubr.bf16.mxu0 0
    %255 = vmatmul.mubr.bf16.gmra.mrb[0].mxu0 %v168
    %v256 = vpop.f32.mrb[0].mxu0
    %v257 = vadd.f32 %v205, %v256
    %v258 = vpop.f32.mrb[0].mxu0
    %v259 = vadd.f32 %v209, %v258
    %v260 = vpop.f32.mrb[0].mxu0
    %v261 = vadd.f32 %v205, %v260
    %v262 = vpop.f32.mrb[0].mxu0
    %v263 = vadd.f32 %v209, %v262
    %264 = vdwg.mxu0
    %265 = vmatprep.subr.bf16.mxu0 %v172
    %266 = vmatpush1.bf16.msra.mxu0 %v171
    %267 = vmatprep.subr.bf16.mxu0 %v176
    %268 = vmatpush1.bf16.msra.mxu0 %v175
    %269 = vmatprep.subr.bf16.mxu0 %v180
    %270 = vmatpush1.bf16.msra.mxu0 %v179
    %271 = vmatprep.subr.bf16.mxu0 %v184
    %272 = vmatpush1.bf16.msra.mxu0 %v183
    %273 = vmatprep.subr.bf16.mxu0 %v188
    %274 = vmatpush1.bf16.msra.mxu0 %v187
    %275 = vmatprep.subr.bf16.mxu0 %v192
    %276 = vmatpush1.bf16.msra.mxu0 %v191
    %277 = vmatprep.subr.bf16.mxu0 %v196
    %278 = vmatpush1.bf16.msra.mxu0 %v195
    %279 = vmatprep.subr.bf16.mxu0 %v200
    %280 = vmatpush1.bf16.msra.mxu0 %v199
    %281 = vmatprep.subr.bf16.mxu0 0
    %282 = vmatpush1.bf16.msra.mxu0 0
    %283 = vmatprep.subr.bf16.mxu0 0
    %284 = vmatpush1.bf16.msra.mxu0 0
    %285 = vmatprep.subr.bf16.mxu0 0
    %286 = vmatpush1.bf16.msra.mxu0 0
    %287 = vmatprep.subr.bf16.mxu0 0
    %288 = vmatpush1.bf16.msra.mxu0 0
    %289 = vmatprep.subr.bf16.mxu0 0
    %290 = vmatpush1.bf16.msra.mxu0 0
    %291 = vmatprep.subr.bf16.mxu0 0
    %292 = vmatpush1.bf16.msra.mxu0 0
    %293 = vmatprep.subr.bf16.mxu0 0
    %294 = vmatpush1.bf16.msra.mxu0 0
    %295 = vmatprep.subr.bf16.mxu0 0
    %296 = vmatpush1.bf16.msra.mxu0 0
    %297 = vmatprep.mubr.bf16.mxu0 0
    %298 = vmatmul.mubr.bf16.gmra.mrb[0].mxu0 %v168
    %v299 = vpop.f32.mrb[0].mxu0
    %v300 = vadd.f32 %v213, %v299
    %v301 = vpop.f32.mrb[0].mxu0
    %v302 = vadd.f32 %v217, %v301
    %v303 = vpop.f32.mrb[0].mxu0
    %v304 = vadd.f32 %v213, %v303
    %v305 = vpop.f32.mrb[0].mxu0
    %v306 = vadd.f32 %v217, %v305
    %307 = vdwg.mxu0
    %v308 = vxor.u32 %v257, 2147483648
    %v309 = vxor.u32 %v261, 2147483648
    %v310 = vmul.f32 %v308, 1.442695
    %v311 = vpow.pop %v310
    %v312 = vmul.f32 %v309, 1.442695
    %v313 = vpow.pop %v312
    %v314 = vadd.f32 %v311, 1.0
    %v315 = vadd.f32 %v313, 1.0
    %v316 = vrcp.pop %v314
    %v317 = vmul.f32 1.0, %v316
    %v318 = vrcp.pop %v315
    %v319 = vmul.f32 1.0, %v318
    %v320 = vxor.u32 %v259, 2147483648
    %v321 = vxor.u32 %v263, 2147483648
    %v322 = vmul.f32 %v320, 1.442695
    %v323 = vpow.pop %v322
    %v324 = vmul.f32 %v321, 1.442695
    %v325 = vpow.pop %v324
    %v326 = vadd.f32 %v323, 1.0
    %v327 = vadd.f32 %v325, 1.0
    %v328 = vrcp.pop %v326
    %v329 = vmul.f32 1.0, %v328
    %v330 = vrcp.pop %v327
    %v331 = vmul.f32 1.0, %v330
    %v332 = vtanh.pop %v300
    %v333 = vtanh.pop %v304
    %v334 = vxor.u32 %v302, 2147483648
    %v335 = vxor.u32 %v306, 2147483648
    %v336 = vmul.f32 %v334, 1.442695
    %v337 = vpow.pop %v336
    %v338 = vmul.f32 %v335, 1.442695
    %v339 = vpow.pop %v338
    %v340 = vadd.f32 %v337, 1.0
    %v341 = vadd.f32 %v339, 1.0
    %v342 = vrcp.pop %v340
    %v343 = vmul.f32 1.0, %v342
    %v344 = vrcp.pop %v341
    %v345 = vmul.f32 1.0, %v344
    %v346 = vmul.f32 %v329, 0.0
    %v347 = vmul.f32 %v331, 0.0
    %v348 = vmul.f32 %v317, %v332
    %v349 = vmul.f32 %v319, %v333
    %v350 = vadd.f32 %v346, %v348
    %v351 = vadd.f32 %v347, %v349
    %v352 = vtanh.pop %v350
    %v353 = vtanh.pop %v351
    %v354 = vmul.f32 %v343, %v352
    %v355 = vmul.f32 %v345, %v353
    %356 = vst [vmem:[#allocation3] sm:$0x1] %v354
    %357 = vst [vmem:[#allocation3 + $0x8] sm:$0x1] %v355
    %v358 = vpack.c.bf16 %v354, %v354
    %v359 = vpack.c.bf16 %v355, %v355
    %s360 = scalar_lea.vmem [#allocation2], 256
    %v361 = vld [vmem:[%s360] sm:$0xff]
    %v362 = vld [vmem:[%s360 + $0x8] sm:$0xff]
    %v363 = vld [vmem:[%s360 + $0x10] sm:$0xff]
    %v364 = vld [vmem:[%s360 + $0x18] sm:$0xff]
    %v365 = vld [vmem:[%s360 + $0x20] sm:$0xff]
    %v366 = vld [vmem:[%s360 + $0x28] sm:$0xff]
    %v367 = vld [vmem:[%s360 + $0x30] sm:$0xff]
    %v368 = vld [vmem:[%s360 + $0x38] sm:$0xff]
    %v369 = vld [vmem:[%s360 + $0x40] sm:$0xff]
    %v370 = vld [vmem:[%s360 + $0x48] sm:$0xff]
    %v371 = vld [vmem:[%s360 + $0x50] sm:$0xff]
    %v372 = vld [vmem:[%s360 + $0x58] sm:$0xff]
    %v373 = vld [vmem:[%s360 + $0x60] sm:$0xff]
    %v374 = vld [vmem:[%s360 + $0x68] sm:$0xff]
    %v375 = vld [vmem:[%s360 + $0x70] sm:$0xff]
    %v376 = vld [vmem:[%s360 + $0x78] sm:$0xff]
    %v377 = vld [vmem:[%s360 + $0x80] sm:$0xff]
    %v378 = vld [vmem:[%s360 + $0x88] sm:$0xff]
    %v379 = vld [vmem:[%s360 + $0x90] sm:$0xff]
    %v380 = vld [vmem:[%s360 + $0x98] sm:$0xff]
    %v381 = vld [vmem:[%s360 + $0xa0] sm:$0xff]
    %v382 = vld [vmem:[%s360 + $0xa8] sm:$0xff]
    %v383 = vld [vmem:[%s360 + $0xb0] sm:$0xff]
    %v384 = vld [vmem:[%s360 + $0xb8] sm:$0xff]
    %v385 = vld [vmem:[%s360 + $0xc0] sm:$0xff]
    %v386 = vld [vmem:[%s360 + $0xc8] sm:$0xff]
    %v387 = vld [vmem:[%s360 + $0xd0] sm:$0xff]
    %v388 = vld [vmem:[%s360 + $0xd8] sm:$0xff]
    %v389 = vld [vmem:[%s360 + $0xe0] sm:$0xff]
    %v390 = vld [vmem:[%s360 + $0xe8] sm:$0xff]
    %v391 = vld [vmem:[%s360 + $0xf0] sm:$0xff]
    %v392 = vld [vmem:[%s360 + $0xf8] sm:$0xff]
    %v395 = vunpack.c.l.b16 %v358
    %v396 = vunpack.c.l.b16 %v359
    %v397 = vrot.slane %v396, 7
    %vm398 = vcmask 1041409
    %v399 = vsel %vm398, %v397, %v395
    %v400 = vpack.c.b16 %v399, %v399
    %402 = vmatprep.subr.bf16.mxu0 %v362
    %403 = vmatpush1.bf16.msra.mxu0 %v361
    %404 = vmatprep.subr.bf16.mxu0 %v366
    %405 = vmatpush1.bf16.msra.mxu0 %v365
    %406 = vmatprep.subr.bf16.mxu0 %v370
    %407 = vmatpush1.bf16.msra.mxu0 %v369
    %408 = vmatprep.subr.bf16.mxu0 %v374
    %409 = vmatpush1.bf16.msra.mxu0 %v373
    %410 = vmatprep.subr.bf16.mxu0 %v378
    %411 = vmatpush1.bf16.msra.mxu0 %v377
    %412 = vmatprep.subr.bf16.mxu0 %v382
    %413 = vmatpush1.bf16.msra.mxu0 %v381
    %414 = vmatprep.subr.bf16.mxu0 %v386
    %415 = vmatpush1.bf16.msra.mxu0 %v385
    %416 = vmatprep.subr.bf16.mxu0 %v390
    %417 = vmatpush1.bf16.msra.mxu0 %v389
    %418 = vmatprep.subr.bf16.mxu0 0
    %419 = vmatpush1.bf16.msra.mxu0 0
    %420 = vmatprep.subr.bf16.mxu0 0
    %421 = vmatpush1.bf16.msra.mxu0 0
    %422 = vmatprep.subr.bf16.mxu0 0
    %423 = vmatpush1.bf16.msra.mxu0 0
    %424 = vmatprep.subr.bf16.mxu0 0
    %425 = vmatpush1.bf16.msra.mxu0 0
    %426 = vmatprep.subr.bf16.mxu0 0
    %427 = vmatpush1.bf16.msra.mxu0 0
    %428 = vmatprep.subr.bf16.mxu0 0
    %429 = vmatpush1.bf16.msra.mxu0 0
    %430 = vmatprep.subr.bf16.mxu0 0
    %431 = vmatpush1.bf16.msra.mxu0 0
    %432 = vmatprep.subr.bf16.mxu0 0
    %433 = vmatpush1.bf16.msra.mxu0 0
    %434 = vmatprep.mubr.bf16.mxu0 0
    %435 = vmatmul.mubr.bf16.gmra.mrb[0].mxu0 %v400
    %v436 = vpop.f32.mrb[0].mxu0
    %v437 = vadd.f32 0.0, %v436
    %v438 = vpop.f32.mrb[0].mxu0
    %v439 = vadd.f32 0.0, %v438
    %v440 = vpop.f32.mrb[0].mxu0
    %v441 = vpop.f32.mrb[0].mxu0
    %442 = vdwg.mxu0
    %443 = vmatprep.subr.bf16.mxu0 %v364
    %444 = vmatpush1.bf16.msra.mxu0 %v363
    %445 = vmatprep.subr.bf16.mxu0 %v368
    %446 = vmatpush1.bf16.msra.mxu0 %v367
    %447 = vmatprep.subr.bf16.mxu0 %v372
    %448 = vmatpush1.bf16.msra.mxu0 %v371
    %449 = vmatprep.subr.bf16.mxu0 %v376
    %450 = vmatpush1.bf16.msra.mxu0 %v375
    %451 = vmatprep.subr.bf16.mxu0 %v380
    %452 = vmatpush1.bf16.msra.mxu0 %v379
    %453 = vmatprep.subr.bf16.mxu0 %v384
    %454 = vmatpush1.bf16.msra.mxu0 %v383
    %455 = vmatprep.subr.bf16.mxu0 %v388
    %456 = vmatpush1.bf16.msra.mxu0 %v387
    %457 = vmatprep.subr.bf16.mxu0 %v392
    %458 = vmatpush1.bf16.msra.mxu0 %v391
    %459 = vmatprep.subr.bf16.mxu0 0
    %460 = vmatpush1.bf16.msra.mxu0 0
    %461 = vmatprep.subr.bf16.mxu0 0
    %462 = vmatpush1.bf16.msra.mxu0 0
    %463 = vmatprep.subr.bf16.mxu0 0
    %464 = vmatpush1.bf16.msra.mxu0 0
    %465 = vmatprep.subr.bf16.mxu0 0
    %466 = vmatpush1.bf16.msra.mxu0 0
    %467 = vmatprep.subr.bf16.mxu0 0
    %468 = vmatpush1.bf16.msra.mxu0 0
    %469 = vmatprep.subr.bf16.mxu0 0
    %470 = vmatpush1.bf16.msra.mxu0 0
    %471 = vmatprep.subr.bf16.mxu0 0
    %472 = vmatpush1.bf16.msra.mxu0 0
    %473 = vmatprep.subr.bf16.mxu0 0
    %474 = vmatpush1.bf16.msra.mxu0 0
    %475 = vmatprep.mubr.bf16.mxu0 0
    %476 = vmatmul.mubr.bf16.gmra.mrb[0].mxu0 %v400
    %v477 = vpop.f32.mrb[0].mxu0
    %v478 = vadd.f32 0.0, %v477
    %v479 = vpop.f32.mrb[0].mxu0
    %v480 = vadd.f32 0.0, %v479
    %v481 = vpop.f32.mrb[0].mxu0
    %v482 = vpop.f32.mrb[0].mxu0
    %483 = vdwg.mxu0
    %v488 = vrot.slane %v437, 7
    %v489 = vrot.slane %v439, 7
    %v490 = vrot.slane %v478, 7
    %v491 = vrot.slane %v480, 7
    %v500 = vadd.f32 %v257, %v488
    %v501 = vadd.f32 %v259, %v489
    %v502 = vadd.f32 %v300, %v490
    %v503 = vadd.f32 %v302, %v491
    %v504 = vadd.f32 %v261, %v437
    %v505 = vadd.f32 %v263, %v439
    %v506 = vadd.f32 %v304, %v478
    %v507 = vadd.f32 %v306, %v480
    %v508 = vxor.u32 %v500, 2147483648
    %v509 = vxor.u32 %v504, 2147483648
    %v510 = vmul.f32 %v508, 1.442695
    %v511 = vpow.pop %v510
    %v512 = vmul.f32 %v509, 1.442695
    %v513 = vpow.pop %v512
    %v514 = vadd.f32 %v511, 1.0
    %v515 = vadd.f32 %v513, 1.0
    %v516 = vrcp.pop %v514
    %v517 = vmul.f32 1.0, %v516
    %v518 = vrcp.pop %v515
    %v519 = vmul.f32 1.0, %v518
    %v520 = vxor.u32 %v501, 2147483648
    %v521 = vxor.u32 %v505, 2147483648
    %v522 = vmul.f32 %v520, 1.442695
    %v523 = vpow.pop %v522
    %v524 = vmul.f32 %v521, 1.442695
    %v525 = vpow.pop %v524
    %v526 = vadd.f32 %v523, 1.0
    %v527 = vadd.f32 %v525, 1.0
    %v528 = vrcp.pop %v526
    %v529 = vmul.f32 1.0, %v528
    %v530 = vrcp.pop %v527
    %v531 = vmul.f32 1.0, %v530
    %v532 = vtanh.pop %v502
    %v533 = vtanh.pop %v506
    %v534 = vxor.u32 %v503, 2147483648
    %v535 = vxor.u32 %v507, 2147483648
    %v536 = vmul.f32 %v534, 1.442695
    %v537 = vpow.pop %v536
    %v538 = vmul.f32 %v535, 1.442695
    %v539 = vpow.pop %v538
    %v540 = vadd.f32 %v537, 1.0
    %v541 = vadd.f32 %v539, 1.0
    %v542 = vrcp.pop %v540
    %v543 = vmul.f32 1.0, %v542
    %v544 = vrcp.pop %v541
    %v545 = vmul.f32 1.0, %v544
    %v548 = vrot.slane %v350, 7
    %v549 = vrot.slane %v351, 7
    %v552 = vmul.f32 %v529, %v548
    %v553 = vmul.f32 %v531, %v549
    %v554 = vmul.f32 %v517, %v532
    %v555 = vmul.f32 %v519, %v533
    %v556 = vadd.f32 %v552, %v554
    %v557 = vadd.f32 %v553, %v555
    %v558 = vtanh.pop %v556
    %v559 = vtanh.pop %v557
    %v560 = vmul.f32 %v543, %v558
    %v561 = vmul.f32 %v545, %v559
    %562 = vst [vmem:[#allocation3] sm:$0x2] %v560
    %563 = vst [vmem:[#allocation3 + $0x8] sm:$0x2] %v561
    %v564 = vpack.c.bf16 %v560, %v560
    %v565 = vpack.c.bf16 %v561, %v561
    %v566 = vld [vmem:[%s360] sm:$0xff]
    %v567 = vld [vmem:[%s360 + $0x8] sm:$0xff]
    %v568 = vld [vmem:[%s360 + $0x10] sm:$0xff]
    %v569 = vld [vmem:[%s360 + $0x18] sm:$0xff]
    %v570 = vld [vmem:[%s360 + $0x20] sm:$0xff]
    %v571 = vld [vmem:[%s360 + $0x28] sm:$0xff]
    %v572 = vld [vmem:[%s360 + $0x30] sm:$0xff]
    %v573 = vld [vmem:[%s360 + $0x38] sm:$0xff]
    %v574 = vld [vmem:[%s360 + $0x40] sm:$0xff]
    %v575 = vld [vmem:[%s360 + $0x48] sm:$0xff]
    %v576 = vld [vmem:[%s360 + $0x50] sm:$0xff]
    %v577 = vld [vmem:[%s360 + $0x58] sm:$0xff]
    %v578 = vld [vmem:[%s360 + $0x60] sm:$0xff]
    %v579 = vld [vmem:[%s360 + $0x68] sm:$0xff]
    %v580 = vld [vmem:[%s360 + $0x70] sm:$0xff]
    %v581 = vld [vmem:[%s360 + $0x78] sm:$0xff]
    %v582 = vld [vmem:[%s360 + $0x80] sm:$0xff]
    %v583 = vld [vmem:[%s360 + $0x88] sm:$0xff]
    %v584 = vld [vmem:[%s360 + $0x90] sm:$0xff]
    %v585 = vld [vmem:[%s360 + $0x98] sm:$0xff]
    %v586 = vld [vmem:[%s360 + $0xa0] sm:$0xff]
    %v587 = vld [vmem:[%s360 + $0xa8] sm:$0xff]
    %v588 = vld [vmem:[%s360 + $0xb0] sm:$0xff]
    %v589 = vld [vmem:[%s360 + $0xb8] sm:$0xff]
    %v590 = vld [vmem:[%s360 + $0xc0] sm:$0xff]
    %v591 = vld [vmem:[%s360 + $0xc8] sm:$0xff]
    %v592 = vld [vmem:[%s360 + $0xd0] sm:$0xff]
    %v593 = vld [vmem:[%s360 + $0xd8] sm:$0xff]
    %v594 = vld [vmem:[%s360 + $0xe0] sm:$0xff]
    %v595 = vld [vmem:[%s360 + $0xe8] sm:$0xff]
    %v596 = vld [vmem:[%s360 + $0xf0] sm:$0xff]
    %v597 = vld [vmem:[%s360 + $0xf8] sm:$0xff]
    %v600 = vunpack.c.l.b16 %v564
    %v601 = vunpack.c.l.b16 %v565
    %v602 = vrot.slane %v600, 1
    %v603 = vsel %vm398, %v601, %v602
    %v604 = vpack.c.b16 %v603, %v603
    %606 = vmatprep.subr.bf16.mxu0 %v567
    %607 = vmatpush1.bf16.msra.mxu0 %v566
    %608 = vmatprep.subr.bf16.mxu0 %v571
    %609 = vmatpush1.bf16.msra.mxu0 %v570
    %610 = vmatprep.subr.bf16.mxu0 %v575
    %611 = vmatpush1.bf16.msra.mxu0 %v574
    %612 = vmatprep.subr.bf16.mxu0 %v579
    %613 = vmatpush1.bf16.msra.mxu0 %v578
    %614 = vmatprep.subr.bf16.mxu0 %v583
    %615 = vmatpush1.bf16.msra.mxu0 %v582
    %616 = vmatprep.subr.bf16.mxu0 %v587
    %617 = vmatpush1.bf16.msra.mxu0 %v586
    %618 = vmatprep.subr.bf16.mxu0 %v591
    %619 = vmatpush1.bf16.msra.mxu0 %v590
    %620 = vmatprep.subr.bf16.mxu0 %v595
    %621 = vmatpush1.bf16.msra.mxu0 %v594
    %622 = vmatprep.subr.bf16.mxu0 0
    %623 = vmatpush1.bf16.msra.mxu0 0
    %624 = vmatprep.subr.bf16.mxu0 0
    %625 = vmatpush1.bf16.msra.mxu0 0
    %626 = vmatprep.subr.bf16.mxu0 0
    %627 = vmatpush1.bf16.msra.mxu0 0
    %628 = vmatprep.subr.bf16.mxu0 0
    %629 = vmatpush1.bf16.msra.mxu0 0
    %630 = vmatprep.subr.bf16.mxu0 0
    %631 = vmatpush1.bf16.msra.mxu0 0
    %632 = vmatprep.subr.bf16.mxu0 0
    %633 = vmatpush1.bf16.msra.mxu0 0
    %634 = vmatprep.subr.bf16.mxu0 0
    %635 = vmatpush1.bf16.msra.mxu0 0
    %636 = vmatprep.subr.bf16.mxu0 0
    %637 = vmatpush1.bf16.msra.mxu0 0
    %638 = vmatprep.mubr.bf16.mxu0 0
    %639 = vmatmul.mubr.bf16.gmra.mrb[0].mxu0 %v604
    %v640 = vpop.f32.mrb[0].mxu0
    %v641 = vadd.f32 0.0, %v640
    %v642 = vpop.f32.mrb[0].mxu0
    %v643 = vadd.f32 0.0, %v642
    %v644 = vpop.f32.mrb[0].mxu0
    %v645 = vpop.f32.mrb[0].mxu0
    %646 = vdwg.mxu0
    %647 = vmatprep.subr.bf16.mxu0 %v569
    %648 = vmatpush1.bf16.msra.mxu0 %v568
    %649 = vmatprep.subr.bf16.mxu0 %v573
    %650 = vmatpush1.bf16.msra.mxu0 %v572
    %651 = vmatprep.subr.bf16.mxu0 %v577
    %652 = vmatpush1.bf16.msra.mxu0 %v576
    %653 = vmatprep.subr.bf16.mxu0 %v581
    %654 = vmatpush1.bf16.msra.mxu0 %v580
    %655 = vmatprep.subr.bf16.mxu0 %v585
    %656 = vmatpush1.bf16.msra.mxu0 %v584
    %657 = vmatprep.subr.bf16.mxu0 %v589
    %658 = vmatpush1.bf16.msra.mxu0 %v588
    %659 = vmatprep.subr.bf16.mxu0 %v593
    %660 = vmatpush1.bf16.msra.mxu0 %v592
    %661 = vmatprep.subr.bf16.mxu0 %v597
    %662 = vmatpush1.bf16.msra.mxu0 %v596
    %663 = vmatprep.subr.bf16.mxu0 0
    %664 = vmatpush1.bf16.msra.mxu0 0
    %665 = vmatprep.subr.bf16.mxu0 0
    %666 = vmatpush1.bf16.msra.mxu0 0
    %667 = vmatprep.subr.bf16.mxu0 0
    %668 = vmatpush1.bf16.msra.mxu0 0
    %669 = vmatprep.subr.bf16.mxu0 0
    %670 = vmatpush1.bf16.msra.mxu0 0
    %671 = vmatprep.subr.bf16.mxu0 0
    %672 = vmatpush1.bf16.msra.mxu0 0
    %673 = vmatprep.subr.bf16.mxu0 0
    %674 = vmatpush1.bf16.msra.mxu0 0
    %675 = vmatprep.subr.bf16.mxu0 0
    %676 = vmatpush1.bf16.msra.mxu0 0
    %677 = vmatprep.subr.bf16.mxu0 0
    %678 = vmatpush1.bf16.msra.mxu0 0
    %679 = vmatprep.mubr.bf16.mxu0 0
    %680 = vmatmul.mubr.bf16.gmra.mrb[0].mxu0 %v604
    %v681 = vpop.f32.mrb[0].mxu0
    %v682 = vadd.f32 0.0, %v681
    %v683 = vpop.f32.mrb[0].mxu0
    %v684 = vadd.f32 0.0, %v683
    %v685 = vpop.f32.mrb[0].mxu0
    %v686 = vpop.f32.mrb[0].mxu0
    %687 = vdwg.mxu0
    %v692 = vrot.slane %v641, 6
    %v693 = vrot.slane %v643, 6
    %v694 = vrot.slane %v682, 6
    %v695 = vrot.slane %v684, 6
    %v696 = vrot.slane %v641, 7
    %v697 = vrot.slane %v643, 7
    %v698 = vrot.slane %v682, 7
    %v699 = vrot.slane %v684, 7
    %v708 = vadd.f32 %v257, %v692
    %v709 = vadd.f32 %v259, %v693
    %v710 = vadd.f32 %v300, %v694
    %v711 = vadd.f32 %v302, %v695
    %v712 = vadd.f32 %v261, %v696
    %v713 = vadd.f32 %v263, %v697
    %v714 = vadd.f32 %v304, %v698
    %v715 = vadd.f32 %v306, %v699
    %v716 = vxor.u32 %v708, 2147483648
    %v717 = vxor.u32 %v712, 2147483648
    %v718 = vmul.f32 %v716, 1.442695
    %v719 = vpow.pop %v718
    %v720 = vmul.f32 %v717, 1.442695
    %v721 = vpow.pop %v720
    %v722 = vadd.f32 %v719, 1.0
    %v723 = vadd.f32 %v721, 1.0
    %v724 = vrcp.pop %v722
    %v725 = vmul.f32 1.0, %v724
    %v726 = vrcp.pop %v723
    %v727 = vmul.f32 1.0, %v726
    %v728 = vxor.u32 %v709, 2147483648
    %v729 = vxor.u32 %v713, 2147483648
    %v730 = vmul.f32 %v728, 1.442695
    %v731 = vpow.pop %v730
    %v732 = vmul.f32 %v729, 1.442695
    %v733 = vpow.pop %v732
    %v734 = vadd.f32 %v731, 1.0
    %v735 = vadd.f32 %v733, 1.0
    %v736 = vrcp.pop %v734
    %v737 = vmul.f32 1.0, %v736
    %v738 = vrcp.pop %v735
    %v739 = vmul.f32 1.0, %v738
    %v740 = vtanh.pop %v710
    %v741 = vtanh.pop %v714
    %v742 = vxor.u32 %v711, 2147483648
    %v743 = vxor.u32 %v715, 2147483648
    %v744 = vmul.f32 %v742, 1.442695
    %v745 = vpow.pop %v744
    %v746 = vmul.f32 %v743, 1.442695
    %v747 = vpow.pop %v746
    %v748 = vadd.f32 %v745, 1.0
    %v749 = vadd.f32 %v747, 1.0
    %v750 = vrcp.pop %v748
    %v751 = vmul.f32 1.0, %v750
    %v752 = vrcp.pop %v749
    %v753 = vmul.f32 1.0, %v752
    %v756 = vrot.slane %v556, 7
    %v757 = vrot.slane %v557, 7
    %v760 = vmul.f32 %v737, %v756
    %v761 = vmul.f32 %v739, %v757
    %v762 = vmul.f32 %v725, %v740
    %v763 = vmul.f32 %v727, %v741
    %v764 = vadd.f32 %v760, %v762
    %v765 = vadd.f32 %v761, %v763
    %v766 = vtanh.pop %v764
    %v767 = vtanh.pop %v765
    %v768 = vmul.f32 %v751, %v766
    %v769 = vmul.f32 %v753, %v767
    %770 = vst [vmem:[#allocation3] sm:$0x4] %v768
    %771 = vst [vmem:[#allocation3 + $0x8] sm:$0x4] %v769
    %v772 = vpack.c.bf16 %v768, %v768
    %v773 = vpack.c.bf16 %v769, %v769
    %v774 = vld [vmem:[%s360] sm:$0xff]
    %v775 = vld [vmem:[%s360 + $0x8] sm:$0xff]
    %v776 = vld [vmem:[%s360 + $0x10] sm:$0xff]
    %v777 = vld [vmem:[%s360 + $0x18] sm:$0xff]
    %v778 = vld [vmem:[%s360 + $0x20] sm:$0xff]
    %v779 = vld [vmem:[%s360 + $0x28] sm:$0xff]
    %v780 = vld [vmem:[%s360 + $0x30] sm:$0xff]
    %v781 = vld [vmem:[%s360 + $0x38] sm:$0xff]
    %v782 = vld [vmem:[%s360 + $0x40] sm:$0xff]
    %v783 = vld [vmem:[%s360 + $0x48] sm:$0xff]
    %v784 = vld [vmem:[%s360 + $0x50] sm:$0xff]
    %v785 = vld [vmem:[%s360 + $0x58] sm:$0xff]
    %v786 = vld [vmem:[%s360 + $0x60] sm:$0xff]
    %v787 = vld [vmem:[%s360 + $0x68] sm:$0xff]
    %v788 = vld [vmem:[%s360 + $0x70] sm:$0xff]
    %v789 = vld [vmem:[%s360 + $0x78] sm:$0xff]
    %v790 = vld [vmem:[%s360 + $0x80] sm:$0xff]
    %v791 = vld [vmem:[%s360 + $0x88] sm:$0xff]
    %v792 = vld [vmem:[%s360 + $0x90] sm:$0xff]
    %v793 = vld [vmem:[%s360 + $0x98] sm:$0xff]
    %v794 = vld [vmem:[%s360 + $0xa0] sm:$0xff]
    %v795 = vld [vmem:[%s360 + $0xa8] sm:$0xff]
    %v796 = vld [vmem:[%s360 + $0xb0] sm:$0xff]
    %v797 = vld [vmem:[%s360 + $0xb8] sm:$0xff]
    %v798 = vld [vmem:[%s360 + $0xc0] sm:$0xff]
    %v799 = vld [vmem:[%s360 + $0xc8] sm:$0xff]
    %v800 = vld [vmem:[%s360 + $0xd0] sm:$0xff]
    %v801 = vld [vmem:[%s360 + $0xd8] sm:$0xff]
    %v802 = vld [vmem:[%s360 + $0xe0] sm:$0xff]
    %v803 = vld [vmem:[%s360 + $0xe8] sm:$0xff]
    %v804 = vld [vmem:[%s360 + $0xf0] sm:$0xff]
    %v805 = vld [vmem:[%s360 + $0xf8] sm:$0xff]
    %v808 = vunpack.c.l.b16 %v772
    %v809 = vunpack.c.l.b16 %v773
    %v810 = vrot.slane %v808, 2
    %v811 = vrot.slane %v809, 1
    %v812 = vsel %vm398, %v811, %v810
    %v813 = vpack.c.b16 %v812, %v812
    %815 = vmatprep.subr.bf16.mxu0 %v775
    %816 = vmatpush1.bf16.msra.mxu0 %v774
    %817 = vmatprep.subr.bf16.mxu0 %v779
    %818 = vmatpush1.bf16.msra.mxu0 %v778
    %819 = vmatprep.subr.bf16.mxu0 %v783
    %820 = vmatpush1.bf16.msra.mxu0 %v782
    %821 = vmatprep.subr.bf16.mxu0 %v787
    %822 = vmatpush1.bf16.msra.mxu0 %v786
    %823 = vmatprep.subr.bf16.mxu0 %v791
    %824 = vmatpush1.bf16.msra.mxu0 %v790
    %825 = vmatprep.subr.bf16.mxu0 %v795
    %826 = vmatpush1.bf16.msra.mxu0 %v794
    %827 = vmatprep.subr.bf16.mxu0 %v799
    %828 = vmatpush1.bf16.msra.mxu0 %v798
    %829 = vmatprep.subr.bf16.mxu0 %v803
    %830 = vmatpush1.bf16.msra.mxu0 %v802
    %831 = vmatprep.subr.bf16.mxu0 0
    %832 = vmatpush1.bf16.msra.mxu0 0
    %833 = vmatprep.subr.bf16.mxu0 0
    %834 = vmatpush1.bf16.msra.mxu0 0
    %835 = vmatprep.subr.bf16.mxu0 0
    %836 = vmatpush1.bf16.msra.mxu0 0
    %837 = vmatprep.subr.bf16.mxu0 0
    %838 = vmatpush1.bf16.msra.mxu0 0
    %839 = vmatprep.subr.bf16.mxu0 0
    %840 = vmatpush1.bf16.msra.mxu0 0
    %841 = vmatprep.subr.bf16.mxu0 0
    %842 = vmatpush1.bf16.msra.mxu0 0
    %843 = vmatprep.subr.bf16.mxu0 0
    %844 = vmatpush1.bf16.msra.mxu0 0
    %845 = vmatprep.subr.bf16.mxu0 0
    %846 = vmatpush1.bf16.msra.mxu0 0
    %847 = vmatprep.mubr.bf16.mxu0 0
    %848 = vmatmul.mubr.bf16.gmra.mrb[0].mxu0 %v813
    %v849 = vpop.f32.mrb[0].mxu0
    %v850 = vadd.f32 0.0, %v849
    %v851 = vpop.f32.mrb[0].mxu0
    %v852 = vadd.f32 0.0, %v851
    %v853 = vpop.f32.mrb[0].mxu0
    %v854 = vpop.f32.mrb[0].mxu0
    %855 = vdwg.mxu0
    %856 = vmatprep.subr.bf16.mxu0 %v777
    %857 = vmatpush1.bf16.msra.mxu0 %v776
    %858 = vmatprep.subr.bf16.mxu0 %v781
    %859 = vmatpush1.bf16.msra.mxu0 %v780
    %860 = vmatprep.subr.bf16.mxu0 %v785
    %861 = vmatpush1.bf16.msra.mxu0 %v784
    %862 = vmatprep.subr.bf16.mxu0 %v789
    %863 = vmatpush1.bf16.msra.mxu0 %v788
    %864 = vmatprep.subr.bf16.mxu0 %v793
    %865 = vmatpush1.bf16.msra.mxu0 %v792
    %866 = vmatprep.subr.bf16.mxu0 %v797
    %867 = vmatpush1.bf16.msra.mxu0 %v796
    %868 = vmatprep.subr.bf16.mxu0 %v801
    %869 = vmatpush1.bf16.msra.mxu0 %v800
    %870 = vmatprep.subr.bf16.mxu0 %v805
    %871 = vmatpush1.bf16.msra.mxu0 %v804
    %872 = vmatprep.subr.bf16.mxu0 0
    %873 = vmatpush1.bf16.msra.mxu0 0
    %874 = vmatprep.subr.bf16.mxu0 0
    %875 = vmatpush1.bf16.msra.mxu0 0
    %876 = vmatprep.subr.bf16.mxu0 0
    %877 = vmatpush1.bf16.msra.mxu0 0
    %878 = vmatprep.subr.bf16.mxu0 0
    %879 = vmatpush1.bf16.msra.mxu0 0
    %880 = vmatprep.subr.bf16.mxu0 0
    %881 = vmatpush1.bf16.msra.mxu0 0
    %882 = vmatprep.subr.bf16.mxu0 0
    %883 = vmatpush1.bf16.msra.mxu0 0
    %884 = vmatprep.subr.bf16.mxu0 0
    %885 = vmatpush1.bf16.msra.mxu0 0
    %886 = vmatprep.subr.bf16.mxu0 0
    %887 = vmatpush1.bf16.msra.mxu0 0
    %888 = vmatprep.mubr.bf16.mxu0 0
    %889 = vmatmul.mubr.bf16.gmra.mrb[0].mxu0 %v813
    %v890 = vpop.f32.mrb[0].mxu0
    %v891 = vadd.f32 0.0, %v890
    %v892 = vpop.f32.mrb[0].mxu0
    %v893 = vadd.f32 0.0, %v892
    %v894 = vpop.f32.mrb[0].mxu0
    %v895 = vpop.f32.mrb[0].mxu0
    %896 = vdwg.mxu0
    %v901 = vrot.slane %v850, 5
    %v902 = vrot.slane %v852, 5
    %v903 = vrot.slane %v891, 5
    %v904 = vrot.slane %v893, 5
    %v905 = vrot.slane %v850, 6
    %v906 = vrot.slane %v852, 6
    %v907 = vrot.slane %v891, 6
    %v908 = vrot.slane %v893, 6
    %v917 = vadd.f32 %v257, %v901
    %v918 = vadd.f32 %v259, %v902
    %v919 = vadd.f32 %v300, %v903
    %v920 = vadd.f32 %v302, %v904
    %v921 = vadd.f32 %v261, %v905
    %v922 = vadd.f32 %v263, %v906
    %v923 = vadd.f32 %v304, %v907
    %v924 = vadd.f32 %v306, %v908
    %v925 = vxor.u32 %v917, 2147483648
    %v926 = vxor.u32 %v921, 2147483648
    %v927 = vmul.f32 %v925, 1.442695
    %v928 = vpow.pop %v927
    %v929 = vmul.f32 %v926, 1.442695
    %v930 = vpow.pop %v929
    %v931 = vadd.f32 %v928, 1.0
    %v932 = vadd.f32 %v930, 1.0
    %v933 = vrcp.pop %v931
    %v934 = vmul.f32 1.0, %v933
    %v935 = vrcp.pop %v932
    %v936 = vmul.f32 1.0, %v935
    %v937 = vxor.u32 %v918, 2147483648
    %v938 = vxor.u32 %v922, 2147483648
    %v939 = vmul.f32 %v937, 1.442695
    %v940 = vpow.pop %v939
    %v941 = vmul.f32 %v938, 1.442695
    %v942 = vpow.pop %v941
    %v943 = vadd.f32 %v940, 1.0
    %v944 = vadd.f32 %v942, 1.0
    %v945 = vrcp.pop %v943
    %v946 = vmul.f32 1.0, %v945
    %v947 = vrcp.pop %v944
    %v948 = vmul.f32 1.0, %v947
    %v949 = vtanh.pop %v919
    %v950 = vtanh.pop %v923
    %v951 = vxor.u32 %v920, 2147483648
    %v952 = vxor.u32 %v924, 2147483648
    %v953 = vmul.f32 %v951, 1.442695
    %v954 = vpow.pop %v953
    %v955 = vmul.f32 %v952, 1.442695
    %v956 = vpow.pop %v955
    %v957 = vadd.f32 %v954, 1.0
    %v958 = vadd.f32 %v956, 1.0
    %v959 = vrcp.pop %v957
    %v960 = vmul.f32 1.0, %v959
    %v961 = vrcp.pop %v958
    %v962 = vmul.f32 1.0, %v961
    %v965 = vrot.slane %v764, 7
    %v966 = vrot.slane %v765, 7
    %v969 = vmul.f32 %v946, %v965
    %v970 = vmul.f32 %v948, %v966
    %v971 = vmul.f32 %v934, %v949
    %v972 = vmul.f32 %v936, %v950
    %v973 = vadd.f32 %v969, %v971
    %v974 = vadd.f32 %v970, %v972
    %v975 = vtanh.pop %v973
    %v976 = vtanh.pop %v974
    %v977 = vmul.f32 %v960, %v975
    %v978 = vmul.f32 %v962, %v976
    %979 = vst [vmem:[#allocation3] sm:$0x8] %v977
    %980 = vst [vmem:[#allocation3 + $0x8] sm:$0x8] %v978
    %v981 = vpack.c.bf16 %v977, %v977
    %v982 = vpack.c.bf16 %v978, %v978
    %v983 = vld [vmem:[%s360] sm:$0xff]
    %v984 = vld [vmem:[%s360 + $0x8] sm:$0xff]
    %v985 = vld [vmem:[%s360 + $0x10] sm:$0xff]
    %v986 = vld [vmem:[%s360 + $0x18] sm:$0xff]
    %v987 = vld [vmem:[%s360 + $0x20] sm:$0xff]
    %v988 = vld [vmem:[%s360 + $0x28] sm:$0xff]
    %v989 = vld [vmem:[%s360 + $0x30] sm:$0xff]
    %v990 = vld [vmem:[%s360 + $0x38] sm:$0xff]
    %v991 = vld [vmem:[%s360 + $0x40] sm:$0xff]
    %v992 = vld [vmem:[%s360 + $0x48] sm:$0xff]
    %v993 = vld [vmem:[%s360 + $0x50] sm:$0xff]
    %v994 = vld [vmem:[%s360 + $0x58] sm:$0xff]
    %v995 = vld [vmem:[%s360 + $0x60] sm:$0xff]
    %v996 = vld [vmem:[%s360 + $0x68] sm:$0xff]
    %v997 = vld [vmem:[%s360 + $0x70] sm:$0xff]
    %v998 = vld [vmem:[%s360 + $0x78] sm:$0xff]
    %v999 = vld [vmem:[%s360 + $0x80] sm:$0xff]
    %v1000 = vld [vmem:[%s360 + $0x88] sm:$0xff]
    %v1001 = vld [vmem:[%s360 + $0x90] sm:$0xff]
    %v1002 = vld [vmem:[%s360 + $0x98] sm:$0xff]
    %v1003 = vld [vmem:[%s360 + $0xa0] sm:$0xff]
    %v1004 = vld [vmem:[%s360 + $0xa8] sm:$0xff]
    %v1005 = vld [vmem:[%s360 + $0xb0] sm:$0xff]
    %v1006 = vld [vmem:[%s360 + $0xb8] sm:$0xff]
    %v1007 = vld [vmem:[%s360 + $0xc0] sm:$0xff]
    %v1008 = vld [vmem:[%s360 + $0xc8] sm:$0xff]
    %v1009 = vld [vmem:[%s360 + $0xd0] sm:$0xff]
    %v1010 = vld [vmem:[%s360 + $0xd8] sm:$0xff]
    %v1011 = vld [vmem:[%s360 + $0xe0] sm:$0xff]
    %v1012 = vld [vmem:[%s360 + $0xe8] sm:$0xff]
    %v1013 = vld [vmem:[%s360 + $0xf0] sm:$0xff]
    %v1014 = vld [vmem:[%s360 + $0xf8] sm:$0xff]
    %v1017 = vunpack.c.l.b16 %v981
    %v1018 = vunpack.c.l.b16 %v982
    %v1019 = vrot.slane %v1017, 3
    %v1020 = vrot.slane %v1018, 2
    %v1021 = vsel %vm398, %v1020, %v1019
    %v1022 = vpack.c.b16 %v1021, %v1021
    %1024 = vmatprep.subr.bf16.mxu0 %v984
    %1025 = vmatpush1.bf16.msra.mxu0 %v983
    %1026 = vmatprep.subr.bf16.mxu0 %v988
    %1027 = vmatpush1.bf16.msra.mxu0 %v987
    %1028 = vmatprep.subr.bf16.mxu0 %v992
    %1029 = vmatpush1.bf16.msra.mxu0 %v991
    %1030 = vmatprep.subr.bf16.mxu0 %v996
    %1031 = vmatpush1.bf16.msra.mxu0 %v995
    %1032 = vmatprep.subr.bf16.mxu0 %v1000
    %1033 = vmatpush1.bf16.msra.mxu0 %v999
    %1034 = vmatprep.subr.bf16.mxu0 %v1004
    %1035 = vmatpush1.bf16.msra.mxu0 %v1003
    %1036 = vmatprep.subr.bf16.mxu0 %v1008
    %1037 = vmatpush1.bf16.msra.mxu0 %v1007
    %1038 = vmatprep.subr.bf16.mxu0 %v1012
    %1039 = vmatpush1.bf16.msra.mxu0 %v1011
    %1040 = vmatprep.subr.bf16.mxu0 0
    %1041 = vmatpush1.bf16.msra.mxu0 0
    %1042 = vmatprep.subr.bf16.mxu0 0
    %1043 = vmatpush1.bf16.msra.mxu0 0
    %1044 = vmatprep.subr.bf16.mxu0 0
    %1045 = vmatpush1.bf16.msra.mxu0 0
    %1046 = vmatprep.subr.bf16.mxu0 0
    %1047 = vmatpush1.bf16.msra.mxu0 0
    %1048 = vmatprep.subr.bf16.mxu0 0
    %1049 = vmatpush1.bf16.msra.mxu0 0
    %1050 = vmatprep.subr.bf16.mxu0 0
    %1051 = vmatpush1.bf16.msra.mxu0 0
    %1052 = vmatprep.subr.bf16.mxu0 0
    %1053 = vmatpush1.bf16.msra.mxu0 0
    %1054 = vmatprep.subr.bf16.mxu0 0
    %1055 = vmatpush1.bf16.msra.mxu0 0
    %1056 = vmatprep.mubr.bf16.mxu0 0
    %1057 = vmatmul.mubr.bf16.gmra.mrb[0].mxu0 %v1022
    %v1058 = vpop.f32.mrb[0].mxu0
    %v1059 = vadd.f32 0.0, %v1058
    %v1060 = vpop.f32.mrb[0].mxu0
    %v1061 = vadd.f32 0.0, %v1060
    %v1062 = vpop.f32.mrb[0].mxu0
    %v1063 = vpop.f32.mrb[0].mxu0
    %1064 = vdwg.mxu0
    %1065 = vmatprep.subr.bf16.mxu0 %v986
    %1066 = vmatpush1.bf16.msra.mxu0 %v985
    %1067 = vmatprep.subr.bf16.mxu0 %v990
    %1068 = vmatpush1.bf16.msra.mxu0 %v989
    %1069 = vmatprep.subr.bf16.mxu0 %v994
    %1070 = vmatpush1.bf16.msra.mxu0 %v993
    %1071 = vmatprep.subr.bf16.mxu0 %v998
    %1072 = vmatpush1.bf16.msra.mxu0 %v997
    %1073 = vmatprep.subr.bf16.mxu0 %v1002
    %1074 = vmatpush1.bf16.msra.mxu0 %v1001
    %1075 = vmatprep.subr.bf16.mxu0 %v1006
    %1076 = vmatpush1.bf16.msra.mxu0 %v1005
    %1077 = vmatprep.subr.bf16.mxu0 %v1010
    %1078 = vmatpush1.bf16.msra.mxu0 %v1009
    %1079 = vmatprep.subr.bf16.mxu0 %v1014
    %1080 = vmatpush1.bf16.msra.mxu0 %v1013
    %1081 = vmatprep.subr.bf16.mxu0 0
    %1082 = vmatpush1.bf16.msra.mxu0 0
    %1083 = vmatprep.subr.bf16.mxu0 0
    %1084 = vmatpush1.bf16.msra.mxu0 0
    %1085 = vmatprep.subr.bf16.mxu0 0
    %1086 = vmatpush1.bf16.msra.mxu0 0
    %1087 = vmatprep.subr.bf16.mxu0 0
    %1088 = vmatpush1.bf16.msra.mxu0 0
    %1089 = vmatprep.subr.bf16.mxu0 0
    %1090 = vmatpush1.bf16.msra.mxu0 0
    %1091 = vmatprep.subr.bf16.mxu0 0
    %1092 = vmatpush1.bf16.msra.mxu0 0
    %1093 = vmatprep.subr.bf16.mxu0 0
    %1094 = vmatpush1.bf16.msra.mxu0 0
    %1095 = vmatprep.subr.bf16.mxu0 0
    %1096 = vmatpush1.bf16.msra.mxu0 0
    %1097 = vmatprep.mubr.bf16.mxu0 0
    %1098 = vmatmul.mubr.bf16.gmra.mrb[0].mxu0 %v1022
    %v1099 = vpop.f32.mrb[0].mxu0
    %v1100 = vadd.f32 0.0, %v1099
    %v1101 = vpop.f32.mrb[0].mxu0
    %v1102 = vadd.f32 0.0, %v1101
    %v1103 = vpop.f32.mrb[0].mxu0
    %v1104 = vpop.f32.mrb[0].mxu0
    %1105 = vdwg.mxu0
    %v1110 = vrot.slane %v1059, 4
    %v1111 = vrot.slane %v1061, 4
    %v1112 = vrot.slane %v1100, 4
    %v1113 = vrot.slane %v1102, 4
    %v1114 = vrot.slane %v1059, 5
    %v1115 = vrot.slane %v1061, 5
    %v1116 = vrot.slane %v1100, 5
    %v1117 = vrot.slane %v1102, 5
    %v1126 = vadd.f32 %v257, %v1110
    %v1127 = vadd.f32 %v259, %v1111
    %v1128 = vadd.f32 %v300, %v1112
    %v1129 = vadd.f32 %v302, %v1113
    %v1130 = vadd.f32 %v261, %v1114
    %v1131 = vadd.f32 %v263, %v1115
    %v1132 = vadd.f32 %v304, %v1116
    %v1133 = vadd.f32 %v306, %v1117
    %v1134 = vxor.u32 %v1126, 2147483648
    %v1135 = vxor.u32 %v1130, 2147483648
    %v1136 = vmul.f32 %v1134, 1.442695
    %v1137 = vpow.pop %v1136
    %v1138 = vmul.f32 %v1135, 1.442695
    %v1139 = vpow.pop %v1138
    %v1140 = vadd.f32 %v1137, 1.0
    %v1141 = vadd.f32 %v1139, 1.0
    %v1142 = vrcp.pop %v1140
    %v1143 = vmul.f32 1.0, %v1142
    %v1144 = vrcp.pop %v1141
    %v1145 = vmul.f32 1.0, %v1144
    %v1146 = vxor.u32 %v1127, 2147483648
    %v1147 = vxor.u32 %v1131, 2147483648
    %v1148 = vmul.f32 %v1146, 1.442695
    %v1149 = vpow.pop %v1148
    %v1150 = vmul.f32 %v1147, 1.442695
    %v1151 = vpow.pop %v1150
    %v1152 = vadd.f32 %v1149, 1.0
    %v1153 = vadd.f32 %v1151, 1.0
    %v1154 = vrcp.pop %v1152
    %v1155 = vmul.f32 1.0, %v1154
    %v1156 = vrcp.pop %v1153
    %v1157 = vmul.f32 1.0, %v1156
    %v1158 = vtanh.pop %v1128
    %v1159 = vtanh.pop %v1132
    %v1160 = vxor.u32 %v1129, 2147483648
    %v1161 = vxor.u32 %v1133, 2147483648
    %v1162 = vmul.f32 %v1160, 1.442695
    %v1163 = vpow.pop %v1162
    %v1164 = vmul.f32 %v1161, 1.442695
    %v1165 = vpow.pop %v1164
    %v1166 = vadd.f32 %v1163, 1.0
    %v1167 = vadd.f32 %v1165, 1.0
    %v1168 = vrcp.pop %v1166
    %v1169 = vmul.f32 1.0, %v1168
    %v1170 = vrcp.pop %v1167
    %v1171 = vmul.f32 1.0, %v1170
    %v1174 = vrot.slane %v973, 7
    %v1175 = vrot.slane %v974, 7
    %v1178 = vmul.f32 %v1155, %v1174
    %v1179 = vmul.f32 %v1157, %v1175
    %v1180 = vmul.f32 %v1143, %v1158
    %v1181 = vmul.f32 %v1145, %v1159
    %v1182 = vadd.f32 %v1178, %v1180
    %v1183 = vadd.f32 %v1179, %v1181
    %v1184 = vtanh.pop %v1182
    %v1185 = vtanh.pop %v1183
    %v1186 = vmul.f32 %v1169, %v1184
    %v1187 = vmul.f32 %v1171, %v1185
    %1188 = vst [vmem:[#allocation3] sm:$0x10] %v1186
    %1189 = vst [vmem:[#allocation3 + $0x8] sm:$0x10] %v1187
    %v1190 = vpack.c.bf16 %v1186, %v1186
    %v1191 = vpack.c.bf16 %v1187, %v1187
    %v1192 = vld [vmem:[%s360] sm:$0xff]
    %v1193 = vld [vmem:[%s360 + $0x8] sm:$0xff]
    %v1194 = vld [vmem:[%s360 + $0x10] sm:$0xff]
    %v1195 = vld [vmem:[%s360 + $0x18] sm:$0xff]
    %v1196 = vld [vmem:[%s360 + $0x20] sm:$0xff]
    %v1197 = vld [vmem:[%s360 + $0x28] sm:$0xff]
    %v1198 = vld [vmem:[%s360 + $0x30] sm:$0xff]
    %v1199 = vld [vmem:[%s360 + $0x38] sm:$0xff]
    %v1200 = vld [vmem:[%s360 + $0x40] sm:$0xff]
    %v1201 = vld [vmem:[%s360 + $0x48] sm:$0xff]
    %v1202 = vld [vmem:[%s360 + $0x50] sm:$0xff]
    %v1203 = vld [vmem:[%s360 + $0x58] sm:$0xff]
    %v1204 = vld [vmem:[%s360 + $0x60] sm:$0xff]
    %v1205 = vld [vmem:[%s360 + $0x68] sm:$0xff]
    %v1206 = vld [vmem:[%s360 + $0x70] sm:$0xff]
    %v1207 = vld [vmem:[%s360 + $0x78] sm:$0xff]
    %v1208 = vld [vmem:[%s360 + $0x80] sm:$0xff]
    %v1209 = vld [vmem:[%s360 + $0x88] sm:$0xff]
    %v1210 = vld [vmem:[%s360 + $0x90] sm:$0xff]
    %v1211 = vld [vmem:[%s360 + $0x98] sm:$0xff]
    %v1212 = vld [vmem:[%s360 + $0xa0] sm:$0xff]
    %v1213 = vld [vmem:[%s360 + $0xa8] sm:$0xff]
    %v1214 = vld [vmem:[%s360 + $0xb0] sm:$0xff]
    %v1215 = vld [vmem:[%s360 + $0xb8] sm:$0xff]
    %v1216 = vld [vmem:[%s360 + $0xc0] sm:$0xff]
    %v1217 = vld [vmem:[%s360 + $0xc8] sm:$0xff]
    %v1218 = vld [vmem:[%s360 + $0xd0] sm:$0xff]
    %v1219 = vld [vmem:[%s360 + $0xd8] sm:$0xff]
    %v1220 = vld [vmem:[%s360 + $0xe0] sm:$0xff]
    %v1221 = vld [vmem:[%s360 + $0xe8] sm:$0xff]
    %v1222 = vld [vmem:[%s360 + $0xf0] sm:$0xff]
    %v1223 = vld [vmem:[%s360 + $0xf8] sm:$0xff]
    %v1226 = vunpack.c.l.b16 %v1190
    %v1227 = vunpack.c.l.b16 %v1191
    %v1228 = vrot.slane %v1226, 4
    %v1229 = vrot.slane %v1227, 3
    %v1230 = vsel %vm398, %v1229, %v1228
    %v1231 = vpack.c.b16 %v1230, %v1230
    %1233 = vmatprep.subr.bf16.mxu0 %v1193
    %1234 = vmatpush1.bf16.msra.mxu0 %v1192
    %1235 = vmatprep.subr.bf16.mxu0 %v1197
    %1236 = vmatpush1.bf16.msra.mxu0 %v1196
    %1237 = vmatprep.subr.bf16.mxu0 %v1201
    %1238 = vmatpush1.bf16.msra.mxu0 %v1200
    %1239 = vmatprep.subr.bf16.mxu0 %v1205
    %1240 = vmatpush1.bf16.msra.mxu0 %v1204
    %1241 = vmatprep.subr.bf16.mxu0 %v1209
    %1242 = vmatpush1.bf16.msra.mxu0 %v1208
    %1243 = vmatprep.subr.bf16.mxu0 %v1213
    %1244 = vmatpush1.bf16.msra.mxu0 %v1212
    %1245 = vmatprep.subr.bf16.mxu0 %v1217
    %1246 = vmatpush1.bf16.msra.mxu0 %v1216
    %1247 = vmatprep.subr.bf16.mxu0 %v1221
    %1248 = vmatpush1.bf16.msra.mxu0 %v1220
    %1249 = vmatprep.subr.bf16.mxu0 0
    %1250 = vmatpush1.bf16.msra.mxu0 0
    %1251 = vmatprep.subr.bf16.mxu0 0
    %1252 = vmatpush1.bf16.msra.mxu0 0
    %1253 = vmatprep.subr.bf16.mxu0 0
    %1254 = vmatpush1.bf16.msra.mxu0 0
    %1255 = vmatprep.subr.bf16.mxu0 0
    %1256 = vmatpush1.bf16.msra.mxu0 0
    %1257 = vmatprep.subr.bf16.mxu0 0
    %1258 = vmatpush1.bf16.msra.mxu0 0
    %1259 = vmatprep.subr.bf16.mxu0 0
    %1260 = vmatpush1.bf16.msra.mxu0 0
    %1261 = vmatprep.subr.bf16.mxu0 0
    %1262 = vmatpush1.bf16.msra.mxu0 0
    %1263 = vmatprep.subr.bf16.mxu0 0
    %1264 = vmatpush1.bf16.msra.mxu0 0
    %1265 = vmatprep.mubr.bf16.mxu0 0
    %1266 = vmatmul.mubr.bf16.gmra.mrb[0].mxu0 %v1231
    %v1267 = vpop.f32.mrb[0].mxu0
    %v1268 = vadd.f32 0.0, %v1267
    %v1269 = vpop.f32.mrb[0].mxu0
    %v1270 = vadd.f32 0.0, %v1269
    %v1271 = vpop.f32.mrb[0].mxu0
    %v1272 = vpop.f32.mrb[0].mxu0
    %1273 = vdwg.mxu0
    %1274 = vmatprep.subr.bf16.mxu0 %v1195
    %1275 = vmatpush1.bf16.msra.mxu0 %v1194
    %1276 = vmatprep.subr.bf16.mxu0 %v1199
    %1277 = vmatpush1.bf16.msra.mxu0 %v1198
    %1278 = vmatprep.subr.bf16.mxu0 %v1203
    %1279 = vmatpush1.bf16.msra.mxu0 %v1202
    %1280 = vmatprep.subr.bf16.mxu0 %v1207
    %1281 = vmatpush1.bf16.msra.mxu0 %v1206
    %1282 = vmatprep.subr.bf16.mxu0 %v1211
    %1283 = vmatpush1.bf16.msra.mxu0 %v1210
    %1284 = vmatprep.subr.bf16.mxu0 %v1215
    %1285 = vmatpush1.bf16.msra.mxu0 %v1214
    %1286 = vmatprep.subr.bf16.mxu0 %v1219
    %1287 = vmatpush1.bf16.msra.mxu0 %v1218
    %1288 = vmatprep.subr.bf16.mxu0 %v1223
    %1289 = vmatpush1.bf16.msra.mxu0 %v1222
    %1290 = vmatprep.subr.bf16.mxu0 0
    %1291 = vmatpush1.bf16.msra.mxu0 0
    %1292 = vmatprep.subr.bf16.mxu0 0
    %1293 = vmatpush1.bf16.msra.mxu0 0
    %1294 = vmatprep.subr.bf16.mxu0 0
    %1295 = vmatpush1.bf16.msra.mxu0 0
    %1296 = vmatprep.subr.bf16.mxu0 0
    %1297 = vmatpush1.bf16.msra.mxu0 0
    %1298 = vmatprep.subr.bf16.mxu0 0
    %1299 = vmatpush1.bf16.msra.mxu0 0
    %1300 = vmatprep.subr.bf16.mxu0 0
    %1301 = vmatpush1.bf16.msra.mxu0 0
    %1302 = vmatprep.subr.bf16.mxu0 0
    %1303 = vmatpush1.bf16.msra.mxu0 0
    %1304 = vmatprep.subr.bf16.mxu0 0
    %1305 = vmatpush1.bf16.msra.mxu0 0
    %1306 = vmatprep.mubr.bf16.mxu0 0
    %1307 = vmatmul.mubr.bf16.gmra.mrb[0].mxu0 %v1231
    %v1308 = vpop.f32.mrb[0].mxu0
    %v1309 = vadd.f32 0.0, %v1308
    %v1310 = vpop.f32.mrb[0].mxu0
    %v1311 = vadd.f32 0.0, %v1310
    %v1312 = vpop.f32.mrb[0].mxu0
    %v1313 = vpop.f32.mrb[0].mxu0
    %1314 = vdwg.mxu0
    %v1319 = vrot.slane %v1268, 3
    %v1320 = vrot.slane %v1270, 3
    %v1321 = vrot.slane %v1309, 3
    %v1322 = vrot.slane %v1311, 3
    %v1323 = vrot.slane %v1268, 4
    %v1324 = vrot.slane %v1270, 4
    %v1325 = vrot.slane %v1309, 4
    %v1326 = vrot.slane %v1311, 4
    %v1335 = vadd.f32 %v257, %v1319
    %v1336 = vadd.f32 %v259, %v1320
    %v1337 = vadd.f32 %v300, %v1321
    %v1338 = vadd.f32 %v302, %v1322
    %v1339 = vadd.f32 %v261, %v1323
    %v1340 = vadd.f32 %v263, %v1324
    %v1341 = vadd.f32 %v304, %v1325
    %v1342 = vadd.f32 %v306, %v1326
    %v1343 = vxor.u32 %v1335, 2147483648
    %v1344 = vxor.u32 %v1339, 2147483648
    %v1345 = vmul.f32 %v1343, 1.442695
    %v1346 = vpow.pop %v1345
    %v1347 = vmul.f32 %v1344, 1.442695
    %v1348 = vpow.pop %v1347
    %v1349 = vadd.f32 %v1346, 1.0
    %v1350 = vadd.f32 %v1348, 1.0
    %v1351 = vrcp.pop %v1349
    %v1352 = vmul.f32 1.0, %v1351
    %v1353 = vrcp.pop %v1350
    %v1354 = vmul.f32 1.0, %v1353
    %v1355 = vxor.u32 %v1336, 2147483648
    %v1356 = vxor.u32 %v1340, 2147483648
    %v1357 = vmul.f32 %v1355, 1.442695
    %v1358 = vpow.pop %v1357
    %v1359 = vmul.f32 %v1356, 1.442695
    %v1360 = vpow.pop %v1359
    %v1361 = vadd.f32 %v1358, 1.0
    %v1362 = vadd.f32 %v1360, 1.0
    %v1363 = vrcp.pop %v1361
    %v1364 = vmul.f32 1.0, %v1363
    %v1365 = vrcp.pop %v1362
    %v1366 = vmul.f32 1.0, %v1365
    %v1367 = vtanh.pop %v1337
    %v1368 = vtanh.pop %v1341
    %v1369 = vxor.u32 %v1338, 2147483648
    %v1370 = vxor.u32 %v1342, 2147483648
    %v1371 = vmul.f32 %v1369, 1.442695
    %v1372 = vpow.pop %v1371
    %v1373 = vmul.f32 %v1370, 1.442695
    %v1374 = vpow.pop %v1373
    %v1375 = vadd.f32 %v1372, 1.0
    %v1376 = vadd.f32 %v1374, 1.0
    %v1377 = vrcp.pop %v1375
    %v1378 = vmul.f32 1.0, %v1377
    %v1379 = vrcp.pop %v1376
    %v1380 = vmul.f32 1.0, %v1379
    %v1383 = vrot.slane %v1182, 7
    %v1384 = vrot.slane %v1183, 7
    %v1387 = vmul.f32 %v1364, %v1383
    %v1388 = vmul.f32 %v1366, %v1384
    %v1389 = vmul.f32 %v1352, %v1367
    %v1390 = vmul.f32 %v1354, %v1368
    %v1391 = vadd.f32 %v1387, %v1389
    %v1392 = vadd.f32 %v1388, %v1390
    %v1393 = vtanh.pop %v1391
    %v1394 = vtanh.pop %v1392
    %v1395 = vmul.f32 %v1378, %v1393
    %v1396 = vmul.f32 %v1380, %v1394
    %1397 = vst [vmem:[#allocation3] sm:$0x20] %v1395
    %1398 = vst [vmem:[#allocation3 + $0x8] sm:$0x20] %v1396
    %v1399 = vpack.c.bf16 %v1395, %v1395
    %v1400 = vpack.c.bf16 %v1396, %v1396
    %v1401 = vld [vmem:[%s360] sm:$0xff]
    %v1402 = vld [vmem:[%s360 + $0x8] sm:$0xff]
    %v1403 = vld [vmem:[%s360 + $0x10] sm:$0xff]
    %v1404 = vld [vmem:[%s360 + $0x18] sm:$0xff]
    %v1405 = vld [vmem:[%s360 + $0x20] sm:$0xff]
    %v1406 = vld [vmem:[%s360 + $0x28] sm:$0xff]
    %v1407 = vld [vmem:[%s360 + $0x30] sm:$0xff]
    %v1408 = vld [vmem:[%s360 + $0x38] sm:$0xff]
    %v1409 = vld [vmem:[%s360 + $0x40] sm:$0xff]
    %v1410 = vld [vmem:[%s360 + $0x48] sm:$0xff]
    %v1411 = vld [vmem:[%s360 + $0x50] sm:$0xff]
    %v1412 = vld [vmem:[%s360 + $0x58] sm:$0xff]
    %v1413 = vld [vmem:[%s360 + $0x60] sm:$0xff]
    %v1414 = vld [vmem:[%s360 + $0x68] sm:$0xff]
    %v1415 = vld [vmem:[%s360 + $0x70] sm:$0xff]
    %v1416 = vld [vmem:[%s360 + $0x78] sm:$0xff]
    %v1417 = vld [vmem:[%s360 + $0x80] sm:$0xff]
    %v1418 = vld [vmem:[%s360 + $0x88] sm:$0xff]
    %v1419 = vld [vmem:[%s360 + $0x90] sm:$0xff]
    %v1420 = vld [vmem:[%s360 + $0x98] sm:$0xff]
    %v1421 = vld [vmem:[%s360 + $0xa0] sm:$0xff]
    %v1422 = vld [vmem:[%s360 + $0xa8] sm:$0xff]
    %v1423 = vld [vmem:[%s360 + $0xb0] sm:$0xff]
    %v1424 = vld [vmem:[%s360 + $0xb8] sm:$0xff]
    %v1425 = vld [vmem:[%s360 + $0xc0] sm:$0xff]
    %v1426 = vld [vmem:[%s360 + $0xc8] sm:$0xff]
    %v1427 = vld [vmem:[%s360 + $0xd0] sm:$0xff]
    %v1428 = vld [vmem:[%s360 + $0xd8] sm:$0xff]
    %v1429 = vld [vmem:[%s360 + $0xe0] sm:$0xff]
    %v1430 = vld [vmem:[%s360 + $0xe8] sm:$0xff]
    %v1431 = vld [vmem:[%s360 + $0xf0] sm:$0xff]
    %v1432 = vld [vmem:[%s360 + $0xf8] sm:$0xff]
    %v1435 = vunpack.c.l.b16 %v1399
    %v1436 = vunpack.c.l.b16 %v1400
    %v1437 = vrot.slane %v1435, 5
    %v1438 = vrot.slane %v1436, 4
    %v1439 = vsel %vm398, %v1438, %v1437
    %v1440 = vpack.c.b16 %v1439, %v1439
    %1442 = vmatprep.subr.bf16.mxu0 %v1402
    %1443 = vmatpush1.bf16.msra.mxu0 %v1401
    %1444 = vmatprep.subr.bf16.mxu0 %v1406
    %1445 = vmatpush1.bf16.msra.mxu0 %v1405
    %1446 = vmatprep.subr.bf16.mxu0 %v1410
    %1447 = vmatpush1.bf16.msra.mxu0 %v1409
    %1448 = vmatprep.subr.bf16.mxu0 %v1414
    %1449 = vmatpush1.bf16.msra.mxu0 %v1413
    %1450 = vmatprep.subr.bf16.mxu0 %v1418
    %1451 = vmatpush1.bf16.msra.mxu0 %v1417
    %1452 = vmatprep.subr.bf16.mxu0 %v1422
    %1453 = vmatpush1.bf16.msra.mxu0 %v1421
    %1454 = vmatprep.subr.bf16.mxu0 %v1426
    %1455 = vmatpush1.bf16.msra.mxu0 %v1425
    %1456 = vmatprep.subr.bf16.mxu0 %v1430
    %1457 = vmatpush1.bf16.msra.mxu0 %v1429
    %1458 = vmatprep.subr.bf16.mxu0 0
    %1459 = vmatpush1.bf16.msra.mxu0 0
    %1460 = vmatprep.subr.bf16.mxu0 0
    %1461 = vmatpush1.bf16.msra.mxu0 0
    %1462 = vmatprep.subr.bf16.mxu0 0
    %1463 = vmatpush1.bf16.msra.mxu0 0
    %1464 = vmatprep.subr.bf16.mxu0 0
    %1465 = vmatpush1.bf16.msra.mxu0 0
    %1466 = vmatprep.subr.bf16.mxu0 0
    %1467 = vmatpush1.bf16.msra.mxu0 0
    %1468 = vmatprep.subr.bf16.mxu0 0
    %1469 = vmatpush1.bf16.msra.mxu0 0
    %1470 = vmatprep.subr.bf16.mxu0 0
    %1471 = vmatpush1.bf16.msra.mxu0 0
    %1472 = vmatprep.subr.bf16.mxu0 0
    %1473 = vmatpush1.bf16.msra.mxu0 0
    %1474 = vmatprep.mubr.bf16.mxu0 0
    %1475 = vmatmul.mubr.bf16.gmra.mrb[0].mxu0 %v1440
    %v1476 = vpop.f32.mrb[0].mxu0
    %v1477 = vadd.f32 0.0, %v1476
    %v1478 = vpop.f32.mrb[0].mxu0
    %v1479 = vadd.f32 0.0, %v1478
    %v1480 = vpop.f32.mrb[0].mxu0
    %v1481 = vpop.f32.mrb[0].mxu0
    %1482 = vdwg.mxu0
    %1483 = vmatprep.subr.bf16.mxu0 %v1404
    %1484 = vmatpush1.bf16.msra.mxu0 %v1403
    %1485 = vmatprep.subr.bf16.mxu0 %v1408
    %1486 = vmatpush1.bf16.msra.mxu0 %v1407
    %1487 = vmatprep.subr.bf16.mxu0 %v1412
    %1488 = vmatpush1.bf16.msra.mxu0 %v1411
    %1489 = vmatprep.subr.bf16.mxu0 %v1416
    %1490 = vmatpush1.bf16.msra.mxu0 %v1415
    %1491 = vmatprep.subr.bf16.mxu0 %v1420
    %1492 = vmatpush1.bf16.msra.mxu0 %v1419
    %1493 = vmatprep.subr.bf16.mxu0 %v1424
    %1494 = vmatpush1.bf16.msra.mxu0 %v1423
    %1495 = vmatprep.subr.bf16.mxu0 %v1428
    %1496 = vmatpush1.bf16.msra.mxu0 %v1427
    %1497 = vmatprep.subr.bf16.mxu0 %v1432
    %1498 = vmatpush1.bf16.msra.mxu0 %v1431
    %1499 = vmatprep.subr.bf16.mxu0 0
    %1500 = vmatpush1.bf16.msra.mxu0 0
    %1501 = vmatprep.subr.bf16.mxu0 0
    %1502 = vmatpush1.bf16.msra.mxu0 0
    %1503 = vmatprep.subr.bf16.mxu0 0
    %1504 = vmatpush1.bf16.msra.mxu0 0
    %1505 = vmatprep.subr.bf16.mxu0 0
    %1506 = vmatpush1.bf16.msra.mxu0 0
    %1507 = vmatprep.subr.bf16.mxu0 0
    %1508 = vmatpush1.bf16.msra.mxu0 0
    %1509 = vmatprep.subr.bf16.mxu0 0
    %1510 = vmatpush1.bf16.msra.mxu0 0
    %1511 = vmatprep.subr.bf16.mxu0 0
    %1512 = vmatpush1.bf16.msra.mxu0 0
    %1513 = vmatprep.subr.bf16.mxu0 0
    %1514 = vmatpush1.bf16.msra.mxu0 0
    %1515 = vmatprep.mubr.bf16.mxu0 0
    %1516 = vmatmul.mubr.bf16.gmra.mrb[0].mxu0 %v1440
    %v1517 = vpop.f32.mrb[0].mxu0
    %v1518 = vadd.f32 0.0, %v1517
    %v1519 = vpop.f32.mrb[0].mxu0
    %v1520 = vadd.f32 0.0, %v1519
    %v1521 = vpop.f32.mrb[0].mxu0
    %v1522 = vpop.f32.mrb[0].mxu0
    %1523 = vdwg.mxu0
    %v1528 = vrot.slane %v1477, 2
    %v1529 = vrot.slane %v1479, 2
    %v1530 = vrot.slane %v1518, 2
    %v1531 = vrot.slane %v1520, 2
    %v1532 = vrot.slane %v1477, 3
    %v1533 = vrot.slane %v1479, 3
    %v1534 = vrot.slane %v1518, 3
    %v1535 = vrot.slane %v1520, 3
    %v1544 = vadd.f32 %v257, %v1528
    %v1545 = vadd.f32 %v259, %v1529
    %v1546 = vadd.f32 %v300, %v1530
    %v1547 = vadd.f32 %v302, %v1531
    %v1548 = vadd.f32 %v261, %v1532
    %v1549 = vadd.f32 %v263, %v1533
    %v1550 = vadd.f32 %v304, %v1534
    %v1551 = vadd.f32 %v306, %v1535
    %v1552 = vxor.u32 %v1544, 2147483648
    %v1553 = vxor.u32 %v1548, 2147483648
    %v1554 = vmul.f32 %v1552, 1.442695
    %v1555 = vpow.pop %v1554
    %v1556 = vmul.f32 %v1553, 1.442695
    %v1557 = vpow.pop %v1556
    %v1558 = vadd.f32 %v1555, 1.0
    %v1559 = vadd.f32 %v1557, 1.0
    %v1560 = vrcp.pop %v1558
    %v1561 = vmul.f32 1.0, %v1560
    %v1562 = vrcp.pop %v1559
    %v1563 = vmul.f32 1.0, %v1562
    %v1564 = vxor.u32 %v1545, 2147483648
    %v1565 = vxor.u32 %v1549, 2147483648
    %v1566 = vmul.f32 %v1564, 1.442695
    %v1567 = vpow.pop %v1566
    %v1568 = vmul.f32 %v1565, 1.442695
    %v1569 = vpow.pop %v1568
    %v1570 = vadd.f32 %v1567, 1.0
    %v1571 = vadd.f32 %v1569, 1.0
    %v1572 = vrcp.pop %v1570
    %v1573 = vmul.f32 1.0, %v1572
    %v1574 = vrcp.pop %v1571
    %v1575 = vmul.f32 1.0, %v1574
    %v1576 = vtanh.pop %v1546
    %v1577 = vtanh.pop %v1550
    %v1578 = vxor.u32 %v1547, 2147483648
    %v1579 = vxor.u32 %v1551, 2147483648
    %v1580 = vmul.f32 %v1578, 1.442695
    %v1581 = vpow.pop %v1580
    %v1582 = vmul.f32 %v1579, 1.442695
    %v1583 = vpow.pop %v1582
    %v1584 = vadd.f32 %v1581, 1.0
    %v1585 = vadd.f32 %v1583, 1.0
    %v1586 = vrcp.pop %v1584
    %v1587 = vmul.f32 1.0, %v1586
    %v1588 = vrcp.pop %v1585
    %v1589 = vmul.f32 1.0, %v1588
    %v1592 = vrot.slane %v1391, 7
    %v1593 = vrot.slane %v1392, 7
    %v1596 = vmul.f32 %v1573, %v1592
    %v1597 = vmul.f32 %v1575, %v1593
    %v1598 = vmul.f32 %v1561, %v1576
    %v1599 = vmul.f32 %v1563, %v1577
    %v1600 = vadd.f32 %v1596, %v1598
    %v1601 = vadd.f32 %v1597, %v1599
    %v1602 = vtanh.pop %v1600
    %v1603 = vtanh.pop %v1601
    %v1604 = vmul.f32 %v1587, %v1602
    %v1605 = vmul.f32 %v1589, %v1603
    %1606 = vst [vmem:[#allocation3] sm:$0x40] %v1604
    %1607 = vst [vmem:[#allocation3 + $0x8] sm:$0x40] %v1605
    %v1608 = vpack.c.bf16 %v1604, %v1604
    %v1609 = vpack.c.bf16 %v1605, %v1605
    %v1610 = vld [vmem:[%s360] sm:$0xff]
    %v1611 = vld [vmem:[%s360 + $0x8] sm:$0xff]
    %v1612 = vld [vmem:[%s360 + $0x10] sm:$0xff]
    %v1613 = vld [vmem:[%s360 + $0x18] sm:$0xff]
    %v1614 = vld [vmem:[%s360 + $0x20] sm:$0xff]
    %v1615 = vld [vmem:[%s360 + $0x28] sm:$0xff]
    %v1616 = vld [vmem:[%s360 + $0x30] sm:$0xff]
    %v1617 = vld [vmem:[%s360 + $0x38] sm:$0xff]
    %v1618 = vld [vmem:[%s360 + $0x40] sm:$0xff]
    %v1619 = vld [vmem:[%s360 + $0x48] sm:$0xff]
    %v1620 = vld [vmem:[%s360 + $0x50] sm:$0xff]
    %v1621 = vld [vmem:[%s360 + $0x58] sm:$0xff]
    %v1622 = vld [vmem:[%s360 + $0x60] sm:$0xff]
    %v1623 = vld [vmem:[%s360 + $0x68] sm:$0xff]
    %v1624 = vld [vmem:[%s360 + $0x70] sm:$0xff]
    %v1625 = vld [vmem:[%s360 + $0x78] sm:$0xff]
    %v1626 = vld [vmem:[%s360 + $0x80] sm:$0xff]
    %v1627 = vld [vmem:[%s360 + $0x88] sm:$0xff]
    %v1628 = vld [vmem:[%s360 + $0x90] sm:$0xff]
    %v1629 = vld [vmem:[%s360 + $0x98] sm:$0xff]
    %v1630 = vld [vmem:[%s360 + $0xa0] sm:$0xff]
    %v1631 = vld [vmem:[%s360 + $0xa8] sm:$0xff]
    %v1632 = vld [vmem:[%s360 + $0xb0] sm:$0xff]
    %v1633 = vld [vmem:[%s360 + $0xb8] sm:$0xff]
    %v1634 = vld [vmem:[%s360 + $0xc0] sm:$0xff]
    %v1635 = vld [vmem:[%s360 + $0xc8] sm:$0xff]
    %v1636 = vld [vmem:[%s360 + $0xd0] sm:$0xff]
    %v1637 = vld [vmem:[%s360 + $0xd8] sm:$0xff]
    %v1638 = vld [vmem:[%s360 + $0xe0] sm:$0xff]
    %v1639 = vld [vmem:[%s360 + $0xe8] sm:$0xff]
    %v1640 = vld [vmem:[%s360 + $0xf0] sm:$0xff]
    %v1641 = vld [vmem:[%s360 + $0xf8] sm:$0xff]
    %v1644 = vunpack.c.l.b16 %v1608
    %v1645 = vunpack.c.l.b16 %v1609
    %v1646 = vrot.slane %v1644, 6
    %v1647 = vrot.slane %v1645, 5
    %v1648 = vsel %vm398, %v1647, %v1646
    %v1649 = vpack.c.b16 %v1648, %v1648
    %1651 = vmatprep.subr.bf16.mxu0 %v1611
    %1652 = vmatpush1.bf16.msra.mxu0 %v1610
    %1653 = vmatprep.subr.bf16.mxu0 %v1615
    %1654 = vmatpush1.bf16.msra.mxu0 %v1614
    %1655 = vmatprep.subr.bf16.mxu0 %v1619
    %1656 = vmatpush1.bf16.msra.mxu0 %v1618
    %1657 = vmatprep.subr.bf16.mxu0 %v1623
    %1658 = vmatpush1.bf16.msra.mxu0 %v1622
    %1659 = vmatprep.subr.bf16.mxu0 %v1627
    %1660 = vmatpush1.bf16.msra.mxu0 %v1626
    %1661 = vmatprep.subr.bf16.mxu0 %v1631
    %1662 = vmatpush1.bf16.msra.mxu0 %v1630
    %1663 = vmatprep.subr.bf16.mxu0 %v1635
    %1664 = vmatpush1.bf16.msra.mxu0 %v1634
    %1665 = vmatprep.subr.bf16.mxu0 %v1639
    %1666 = vmatpush1.bf16.msra.mxu0 %v1638
    %1667 = vmatprep.subr.bf16.mxu0 0
    %1668 = vmatpush1.bf16.msra.mxu0 0
    %1669 = vmatprep.subr.bf16.mxu0 0
    %1670 = vmatpush1.bf16.msra.mxu0 0
    %1671 = vmatprep.subr.bf16.mxu0 0
    %1672 = vmatpush1.bf16.msra.mxu0 0
    %1673 = vmatprep.subr.bf16.mxu0 0
    %1674 = vmatpush1.bf16.msra.mxu0 0
    %1675 = vmatprep.subr.bf16.mxu0 0
    %1676 = vmatpush1.bf16.msra.mxu0 0
    %1677 = vmatprep.subr.bf16.mxu0 0
    %1678 = vmatpush1.bf16.msra.mxu0 0
    %1679 = vmatprep.subr.bf16.mxu0 0
    %1680 = vmatpush1.bf16.msra.mxu0 0
    %1681 = vmatprep.subr.bf16.mxu0 0
    %1682 = vmatpush1.bf16.msra.mxu0 0
    %1683 = vmatprep.mubr.bf16.mxu0 0
    %1684 = vmatmul.mubr.bf16.gmra.mrb[0].mxu0 %v1649
    %v1685 = vpop.f32.mrb[0].mxu0
    %v1686 = vadd.f32 0.0, %v1685
    %v1687 = vpop.f32.mrb[0].mxu0
    %v1688 = vadd.f32 0.0, %v1687
    %v1689 = vpop.f32.mrb[0].mxu0
    %v1690 = vpop.f32.mrb[0].mxu0
    %1691 = vdwg.mxu0
    %1692 = vmatprep.subr.bf16.mxu0 %v1613
    %1693 = vmatpush1.bf16.msra.mxu0 %v1612
    %1694 = vmatprep.subr.bf16.mxu0 %v1617
    %1695 = vmatpush1.bf16.msra.mxu0 %v1616
    %1696 = vmatprep.subr.bf16.mxu0 %v1621
    %1697 = vmatpush1.bf16.msra.mxu0 %v1620
    %1698 = vmatprep.subr.bf16.mxu0 %v1625
    %1699 = vmatpush1.bf16.msra.mxu0 %v1624
    %1700 = vmatprep.subr.bf16.mxu0 %v1629
    %1701 = vmatpush1.bf16.msra.mxu0 %v1628
    %1702 = vmatprep.subr.bf16.mxu0 %v1633
    %1703 = vmatpush1.bf16.msra.mxu0 %v1632
    %1704 = vmatprep.subr.bf16.mxu0 %v1637
    %1705 = vmatpush1.bf16.msra.mxu0 %v1636
    %1706 = vmatprep.subr.bf16.mxu0 %v1641
    %1707 = vmatpush1.bf16.msra.mxu0 %v1640
    %1708 = vmatprep.subr.bf16.mxu0 0
    %1709 = vmatpush1.bf16.msra.mxu0 0
    %1710 = vmatprep.subr.bf16.mxu0 0
    %1711 = vmatpush1.bf16.msra.mxu0 0
    %1712 = vmatprep.subr.bf16.mxu0 0
    %1713 = vmatpush1.bf16.msra.mxu0 0
    %1714 = vmatprep.subr.bf16.mxu0 0
    %1715 = vmatpush1.bf16.msra.mxu0 0
    %1716 = vmatprep.subr.bf16.mxu0 0
    %1717 = vmatpush1.bf16.msra.mxu0 0
    %1718 = vmatprep.subr.bf16.mxu0 0
    %1719 = vmatpush1.bf16.msra.mxu0 0
    %1720 = vmatprep.subr.bf16.mxu0 0
    %1721 = vmatpush1.bf16.msra.mxu0 0
    %1722 = vmatprep.subr.bf16.mxu0 0
    %1723 = vmatpush1.bf16.msra.mxu0 0
    %1724 = vmatprep.mubr.bf16.mxu0 0
    %1725 = vmatmul.mubr.bf16.gmra.mrb[0].mxu0 %v1649
    %v1726 = vpop.f32.mrb[0].mxu0
    %v1727 = vadd.f32 0.0, %v1726
    %v1728 = vpop.f32.mrb[0].mxu0
    %v1729 = vadd.f32 0.0, %v1728
    %v1730 = vpop.f32.mrb[0].mxu0
    %v1731 = vpop.f32.mrb[0].mxu0
    %1732 = vdwg.mxu0
    %v1737 = vrot.slane %v1686, 1
    %v1738 = vrot.slane %v1688, 1
    %v1739 = vrot.slane %v1727, 1
    %v1740 = vrot.slane %v1729, 1
    %v1741 = vrot.slane %v1686, 2
    %v1742 = vrot.slane %v1688, 2
    %v1743 = vrot.slane %v1727, 2
    %v1744 = vrot.slane %v1729, 2
    %v1753 = vadd.f32 %v257, %v1737
    %v1754 = vadd.f32 %v259, %v1738
    %v1755 = vadd.f32 %v300, %v1739
    %v1756 = vadd.f32 %v302, %v1740
    %v1757 = vadd.f32 %v261, %v1741
    %v1758 = vadd.f32 %v263, %v1742
    %v1759 = vadd.f32 %v304, %v1743
    %v1760 = vadd.f32 %v306, %v1744
    %v1761 = vxor.u32 %v1753, 2147483648
    %v1762 = vxor.u32 %v1757, 2147483648
    %v1763 = vmul.f32 %v1761, 1.442695
    %v1764 = vpow.pop %v1763
    %v1765 = vmul.f32 %v1762, 1.442695
    %v1766 = vpow.pop %v1765
    %v1767 = vadd.f32 %v1764, 1.0
    %v1768 = vadd.f32 %v1766, 1.0
    %v1769 = vrcp.pop %v1767
    %v1770 = vmul.f32 1.0, %v1769
    %v1771 = vrcp.pop %v1768
    %v1772 = vmul.f32 1.0, %v1771
    %v1773 = vxor.u32 %v1754, 2147483648
    %v1774 = vxor.u32 %v1758, 2147483648
    %v1775 = vmul.f32 %v1773, 1.442695
    %v1776 = vpow.pop %v1775
    %v1777 = vmul.f32 %v1774, 1.442695
    %v1778 = vpow.pop %v1777
    %v1779 = vadd.f32 %v1776, 1.0
    %v1780 = vadd.f32 %v1778, 1.0
    %v1781 = vrcp.pop %v1779
    %v1782 = vmul.f32 1.0, %v1781
    %v1783 = vrcp.pop %v1780
    %v1784 = vmul.f32 1.0, %v1783
    %v1785 = vtanh.pop %v1755
    %v1786 = vtanh.pop %v1759
    %v1787 = vxor.u32 %v1756, 2147483648
    %v1788 = vxor.u32 %v1760, 2147483648
    %v1789 = vmul.f32 %v1787, 1.442695
    %v1790 = vpow.pop %v1789
    %v1791 = vmul.f32 %v1788, 1.442695
    %v1792 = vpow.pop %v1791
    %v1793 = vadd.f32 %v1790, 1.0
    %v1794 = vadd.f32 %v1792, 1.0
    %v1795 = vrcp.pop %v1793
    %v1796 = vmul.f32 1.0, %v1795
    %v1797 = vrcp.pop %v1794
    %v1798 = vmul.f32 1.0, %v1797
    %v1801 = vrot.slane %v1600, 7
    %v1802 = vrot.slane %v1601, 7
    %v1805 = vmul.f32 %v1782, %v1801
    %v1806 = vmul.f32 %v1784, %v1802
    %v1807 = vmul.f32 %v1770, %v1785
    %v1808 = vmul.f32 %v1772, %v1786
    %v1809 = vadd.f32 %v1805, %v1807
    %v1810 = vadd.f32 %v1806, %v1808
    %v1811 = vtanh.pop %v1809
    %v1812 = vtanh.pop %v1810
    %v1813 = vmul.f32 %v1796, %v1811
    %v1814 = vmul.f32 %v1798, %v1812
    %1815 = vst [vmem:[#allocation3] sm:$0x80] %v1813
    %1816 = vst [vmem:[#allocation3 + $0x8] sm:$0x80] %v1814
    %v1817 = vld [vmem:[#allocation3] sm:$0xff]
    %v1818 = vld [vmem:[#allocation3 + $0x8] sm:$0xff]
    %s1819 = sshll.u32 %s164, 4
    %1820 = dma.done %s51, %s1819
    %s1821 = scalar_lea.vmem %s1, 4
    %v1822 = vld [vmem:[%s1821] sm:$0xf]
    %v1823 = vpack.c.bf16 %v1818, %v1817
    %v1824 = vld [vmem:[%s50] sm:$0xff]
    %v1825 = vld [vmem:[%s50 + $0x8] sm:$0xff]
    %v1826 = vld [vmem:[%s50 + $0x10] sm:$0xff]
    %v1827 = vld [vmem:[%s50 + $0x18] sm:$0xff]
    %v1828 = vld [vmem:[%s50 + $0x20] sm:$0xff]
    %v1829 = vld [vmem:[%s50 + $0x28] sm:$0xff]
    %v1830 = vld [vmem:[%s50 + $0x30] sm:$0xff]
    %v1831 = vld [vmem:[%s50 + $0x38] sm:$0xff]
    %v1832 = vld [vmem:[%s50 + $0x40] sm:$0xff]
    %v1833 = vld [vmem:[%s50 + $0x48] sm:$0xff]
    %v1834 = vld [vmem:[%s50 + $0x50] sm:$0xff]
    %v1835 = vld [vmem:[%s50 + $0x58] sm:$0xff]
    %v1836 = vld [vmem:[%s50 + $0x60] sm:$0xff]
    %v1837 = vld [vmem:[%s50 + $0x68] sm:$0xff]
    %v1838 = vld [vmem:[%s50 + $0x70] sm:$0xff]
    %v1839 = vld [vmem:[%s50 + $0x78] sm:$0xff]
    %v1840 = vld [vmem:[%s50 + $0x80] sm:$0xff]
    %v1841 = vld [vmem:[%s50 + $0x88] sm:$0xff]
    %v1842 = vld [vmem:[%s50 + $0x90] sm:$0xff]
    %v1843 = vld [vmem:[%s50 + $0x98] sm:$0xff]
    %v1844 = vld [vmem:[%s50 + $0xa0] sm:$0xff]
    %v1845 = vld [vmem:[%s50 + $0xa8] sm:$0xff]
    %v1846 = vld [vmem:[%s50 + $0xb0] sm:$0xff]
    %v1847 = vld [vmem:[%s50 + $0xb8] sm:$0xff]
    %v1848 = vld [vmem:[%s50 + $0xc0] sm:$0xff]
    %v1849 = vld [vmem:[%s50 + $0xc8] sm:$0xff]
    %v1850 = vld [vmem:[%s50 + $0xd0] sm:$0xff]
    %v1851 = vld [vmem:[%s50 + $0xd8] sm:$0xff]
    %v1852 = vld [vmem:[%s50 + $0xe0] sm:$0xff]
    %v1853 = vld [vmem:[%s50 + $0xe8] sm:$0xff]
    %v1854 = vld [vmem:[%s50 + $0xf0] sm:$0xff]
    %v1855 = vld [vmem:[%s50 + $0xf8] sm:$0xff]
    %v1857 = vlaneseq
    %v1858 = vshrl.u32 %v1857, 7
    %v1859 = vsub.s32 0, %v1858
    %v1860 = vrot.slane %v1822, %v1859
    %v1861 = vlaneseq
    %v1862 = vshrl.u32 %v1861, 7
    %v1863 = vsub.s32 1, %v1862
    %v1864 = vrot.slane %v1822, %v1863
    %v1865 = vlaneseq
    %v1866 = vshrl.u32 %v1865, 7
    %v1867 = vsub.s32 2, %v1866
    %v1868 = vrot.slane %v1822, %v1867
    %v1869 = vlaneseq
    %v1870 = vshrl.u32 %v1869, 7
    %v1871 = vsub.s32 3, %v1870
    %v1872 = vrot.slane %v1822, %v1871
    %1877 = vmatprep.subr.bf16.mxu0 %v1825
    %1878 = vmatpush1.bf16.msra.mxu0 %v1824
    %1879 = vmatprep.subr.bf16.mxu0 %v1829
    %1880 = vmatpush1.bf16.msra.mxu0 %v1828
    %1881 = vmatprep.subr.bf16.mxu0 %v1833
    %1882 = vmatpush1.bf16.msra.mxu0 %v1832
    %1883 = vmatprep.subr.bf16.mxu0 %v1837
    %1884 = vmatpush1.bf16.msra.mxu0 %v1836
    %1885 = vmatprep.subr.bf16.mxu0 %v1841
    %1886 = vmatpush1.bf16.msra.mxu0 %v1840
    %1887 = vmatprep.subr.bf16.mxu0 %v1845
    %1888 = vmatpush1.bf16.msra.mxu0 %v1844
    %1889 = vmatprep.subr.bf16.mxu0 %v1849
    %1890 = vmatpush1.bf16.msra.mxu0 %v1848
    %1891 = vmatprep.subr.bf16.mxu0 %v1853
    %1892 = vmatpush1.bf16.msra.mxu0 %v1852
    %1893 = vmatprep.subr.bf16.mxu0 0
    %1894 = vmatpush1.bf16.msra.mxu0 0
    %1895 = vmatprep.subr.bf16.mxu0 0
    %1896 = vmatpush1.bf16.msra.mxu0 0
    %1897 = vmatprep.subr.bf16.mxu0 0
    %1898 = vmatpush1.bf16.msra.mxu0 0
    %1899 = vmatprep.subr.bf16.mxu0 0
    %1900 = vmatpush1.bf16.msra.mxu0 0
    %1901 = vmatprep.subr.bf16.mxu0 0
    %1902 = vmatpush1.bf16.msra.mxu0 0
    %1903 = vmatprep.subr.bf16.mxu0 0
    %1904 = vmatpush1.bf16.msra.mxu0 0
    %1905 = vmatprep.subr.bf16.mxu0 0
    %1906 = vmatpush1.bf16.msra.mxu0 0
    %1907 = vmatprep.subr.bf16.mxu0 0
    %1908 = vmatpush1.bf16.msra.mxu0 0
    %1909 = vmatprep.mubr.bf16.mxu0 0
    %1910 = vmatmul.mubr.bf16.gmra.mrb[0].mxu0 %v1823
    %v1911 = vpop.f32.mrb[0].mxu0
    %v1912 = vadd.f32 %v1860, %v1911
    %v1913 = vpop.f32.mrb[0].mxu0
    %v1914 = vadd.f32 %v1864, %v1913
    %v1915 = vpop.f32.mrb[0].mxu0
    %v1916 = vadd.f32 %v1860, %v1915
    %v1917 = vpop.f32.mrb[0].mxu0
    %v1918 = vadd.f32 %v1864, %v1917
    %1919 = vdwg.mxu0
    %1920 = vmatprep.subr.bf16.mxu0 %v1827
    %1921 = vmatpush1.bf16.msra.mxu0 %v1826
    %1922 = vmatprep.subr.bf16.mxu0 %v1831
    %1923 = vmatpush1.bf16.msra.mxu0 %v1830
    %1924 = vmatprep.subr.bf16.mxu0 %v1835
    %1925 = vmatpush1.bf16.msra.mxu0 %v1834
    %1926 = vmatprep.subr.bf16.mxu0 %v1839
    %1927 = vmatpush1.bf16.msra.mxu0 %v1838
    %1928 = vmatprep.subr.bf16.mxu0 %v1843
    %1929 = vmatpush1.bf16.msra.mxu0 %v1842
    %1930 = vmatprep.subr.bf16.mxu0 %v1847
    %1931 = vmatpush1.bf16.msra.mxu0 %v1846
    %1932 = vmatprep.subr.bf16.mxu0 %v1851
    %1933 = vmatpush1.bf16.msra.mxu0 %v1850
    %1934 = vmatprep.subr.bf16.mxu0 %v1855
    %1935 = vmatpush1.bf16.msra.mxu0 %v1854
    %1936 = vmatprep.subr.bf16.mxu0 0
    %1937 = vmatpush1.bf16.msra.mxu0 0
    %1938 = vmatprep.subr.bf16.mxu0 0
    %1939 = vmatpush1.bf16.msra.mxu0 0
    %1940 = vmatprep.subr.bf16.mxu0 0
    %1941 = vmatpush1.bf16.msra.mxu0 0
    %1942 = vmatprep.subr.bf16.mxu0 0
    %1943 = vmatpush1.bf16.msra.mxu0 0
    %1944 = vmatprep.subr.bf16.mxu0 0
    %1945 = vmatpush1.bf16.msra.mxu0 0
    %1946 = vmatprep.subr.bf16.mxu0 0
    %1947 = vmatpush1.bf16.msra.mxu0 0
    %1948 = vmatprep.subr.bf16.mxu0 0
    %1949 = vmatpush1.bf16.msra.mxu0 0
    %1950 = vmatprep.subr.bf16.mxu0 0
    %1951 = vmatpush1.bf16.msra.mxu0 0
    %1952 = vmatprep.mubr.bf16.mxu0 0
    %1953 = vmatmul.mubr.bf16.gmra.mrb[0].mxu0 %v1823
    %v1954 = vpop.f32.mrb[0].mxu0
    %v1955 = vadd.f32 %v1868, %v1954
    %v1956 = vpop.f32.mrb[0].mxu0
    %v1957 = vadd.f32 %v1872, %v1956
    %v1958 = vpop.f32.mrb[0].mxu0
    %v1959 = vadd.f32 %v1868, %v1958
    %v1960 = vpop.f32.mrb[0].mxu0
    %v1961 = vadd.f32 %v1872, %v1960
    %1962 = vdwg.mxu0
    %v1963 = vxor.u32 %v1912, 2147483648
    %v1964 = vxor.u32 %v1916, 2147483648
    %v1965 = vmul.f32 %v1963, 1.442695
    %v1966 = vpow.pop %v1965
    %v1967 = vmul.f32 %v1964, 1.442695
    %v1968 = vpow.pop %v1967
    %v1969 = vadd.f32 %v1966, 1.0
    %v1970 = vadd.f32 %v1968, 1.0
    %v1971 = vrcp.pop %v1969
    %v1972 = vmul.f32 1.0, %v1971
    %v1973 = vrcp.pop %v1970
    %v1974 = vmul.f32 1.0, %v1973
    %v1975 = vxor.u32 %v1914, 2147483648
    %v1976 = vxor.u32 %v1918, 2147483648
    %v1977 = vmul.f32 %v1975, 1.442695
    %v1978 = vpow.pop %v1977
    %v1979 = vmul.f32 %v1976, 1.442695
    %v1980 = vpow.pop %v1979
    %v1981 = vadd.f32 %v1978, 1.0
    %v1982 = vadd.f32 %v1980, 1.0
    %v1983 = vrcp.pop %v1981
    %v1984 = vmul.f32 1.0, %v1983
    %v1985 = vrcp.pop %v1982
    %v1986 = vmul.f32 1.0, %v1985
    %v1987 = vtanh.pop %v1955
    %v1988 = vtanh.pop %v1959
    %v1989 = vxor.u32 %v1957, 2147483648
    %v1990 = vxor.u32 %v1961, 2147483648
    %v1991 = vmul.f32 %v1989, 1.442695
    %v1992 = vpow.pop %v1991
    %v1993 = vmul.f32 %v1990, 1.442695
    %v1994 = vpow.pop %v1993
    %v1995 = vadd.f32 %v1992, 1.0
    %v1996 = vadd.f32 %v1994, 1.0
    %v1997 = vrcp.pop %v1995
    %v1998 = vmul.f32 1.0, %v1997
    %v1999 = vrcp.pop %v1996
    %v2000 = vmul.f32 1.0, %v1999
    %v2001 = vmul.f32 %v1984, 0.0
    %v2002 = vmul.f32 %v1986, 0.0
    %v2003 = vmul.f32 %v1972, %v1987
    %v2004 = vmul.f32 %v1974, %v1988
    %v2005 = vadd.f32 %v2001, %v2003
    %v2006 = vadd.f32 %v2002, %v2004
    %v2007 = vtanh.pop %v2005
    %v2008 = vtanh.pop %v2006
    %v2009 = vmul.f32 %v1998, %v2007
    %v2010 = vmul.f32 %v2000, %v2008
    %2011 = vst [vmem:[#allocation4] sm:$0x1] %v2009
    %2012 = vst [vmem:[#allocation4 + $0x8] sm:$0x1] %v2010
    %v2013 = vpack.c.bf16 %v2009, %v2009
    %v2014 = vpack.c.bf16 %v2010, %v2010
    %s2015 = scalar_lea.vmem [#allocation2], 768
    %v2016 = vld [vmem:[%s2015] sm:$0xff]
    %v2017 = vld [vmem:[%s2015 + $0x8] sm:$0xff]
    %v2018 = vld [vmem:[%s2015 + $0x10] sm:$0xff]
    %v2019 = vld [vmem:[%s2015 + $0x18] sm:$0xff]
    %v2020 = vld [vmem:[%s2015 + $0x20] sm:$0xff]
    %v2021 = vld [vmem:[%s2015 + $0x28] sm:$0xff]
    %v2022 = vld [vmem:[%s2015 + $0x30] sm:$0xff]
    %v2023 = vld [vmem:[%s2015 + $0x38] sm:$0xff]
    %v2024 = vld [vmem:[%s2015 + $0x40] sm:$0xff]
    %v2025 = vld [vmem:[%s2015 + $0x48] sm:$0xff]
    %v2026 = vld [vmem:[%s2015 + $0x50] sm:$0xff]
    %v2027 = vld [vmem:[%s2015 + $0x58] sm:$0xff]
    %v2028 = vld [vmem:[%s2015 + $0x60] sm:$0xff]
    %v2029 = vld [vmem:[%s2015 + $0x68] sm:$0xff]
    %v2030 = vld [vmem:[%s2015 + $0x70] sm:$0xff]
    %v2031 = vld [vmem:[%s2015 + $0x78] sm:$0xff]
    %v2032 = vld [vmem:[%s2015 + $0x80] sm:$0xff]
    %v2033 = vld [vmem:[%s2015 + $0x88] sm:$0xff]
    %v2034 = vld [vmem:[%s2015 + $0x90] sm:$0xff]
    %v2035 = vld [vmem:[%s2015 + $0x98] sm:$0xff]
    %v2036 = vld [vmem:[%s2015 + $0xa0] sm:$0xff]
    %v2037 = vld [vmem:[%s2015 + $0xa8] sm:$0xff]
    %v2038 = vld [vmem:[%s2015 + $0xb0] sm:$0xff]
    %v2039 = vld [vmem:[%s2015 + $0xb8] sm:$0xff]
    %v2040 = vld [vmem:[%s2015 + $0xc0] sm:$0xff]
    %v2041 = vld [vmem:[%s2015 + $0xc8] sm:$0xff]
    %v2042 = vld [vmem:[%s2015 + $0xd0] sm:$0xff]
    %v2043 = vld [vmem:[%s2015 + $0xd8] sm:$0xff]
    %v2044 = vld [vmem:[%s2015 + $0xe0] sm:$0xff]
    %v2045 = vld [vmem:[%s2015 + $0xe8] sm:$0xff]
    %v2046 = vld [vmem:[%s2015 + $0xf0] sm:$0xff]
    %v2047 = vld [vmem:[%s2015 + $0xf8] sm:$0xff]
    %v2050 = vunpack.c.l.b16 %v2013
    %v2051 = vunpack.c.l.b16 %v2014
    %v2052 = vrot.slane %v2051, 7
    %v2053 = vsel %vm398, %v2052, %v2050
    %v2054 = vpack.c.b16 %v2053, %v2053
    %2056 = vmatprep.subr.bf16.mxu0 %v2017
    %2057 = vmatpush1.bf16.msra.mxu0 %v2016
    %2058 = vmatprep.subr.bf16.mxu0 %v2021
    %2059 = vmatpush1.bf16.msra.mxu0 %v2020
    %2060 = vmatprep.subr.bf16.mxu0 %v2025
    %2061 = vmatpush1.bf16.msra.mxu0 %v2024
    %2062 = vmatprep.subr.bf16.mxu0 %v2029
    %2063 = vmatpush1.bf16.msra.mxu0 %v2028
    %2064 = vmatprep.subr.bf16.mxu0 %v2033
    %2065 = vmatpush1.bf16.msra.mxu0 %v2032
    %2066 = vmatprep.subr.bf16.mxu0 %v2037
    %2067 = vmatpush1.bf16.msra.mxu0 %v2036
    %2068 = vmatprep.subr.bf16.mxu0 %v2041
    %2069 = vmatpush1.bf16.msra.mxu0 %v2040
    %2070 = vmatprep.subr.bf16.mxu0 %v2045
    %2071 = vmatpush1.bf16.msra.mxu0 %v2044
    %2072 = vmatprep.subr.bf16.mxu0 0
    %2073 = vmatpush1.bf16.msra.mxu0 0
    %2074 = vmatprep.subr.bf16.mxu0 0
    %2075 = vmatpush1.bf16.msra.mxu0 0
    %2076 = vmatprep.subr.bf16.mxu0 0
    %2077 = vmatpush1.bf16.msra.mxu0 0
    %2078 = vmatprep.subr.bf16.mxu0 0
    %2079 = vmatpush1.bf16.msra.mxu0 0
    %2080 = vmatprep.subr.bf16.mxu0 0
    %2081 = vmatpush1.bf16.msra.mxu0 0
    %2082 = vmatprep.subr.bf16.mxu0 0
    %2083 = vmatpush1.bf16.msra.mxu0 0
    %2084 = vmatprep.subr.bf16.mxu0 0
    %2085 = vmatpush1.bf16.msra.mxu0 0
    %2086 = vmatprep.subr.bf16.mxu0 0
    %2087 = vmatpush1.bf16.msra.mxu0 0
    %2088 = vmatprep.mubr.bf16.mxu0 0
    %2089 = vmatmul.mubr.bf16.gmra.mrb[0].mxu0 %v2054
    %v2090 = vpop.f32.mrb[0].mxu0
    %v2091 = vadd.f32 0.0, %v2090
    %v2092 = vpop.f32.mrb[0].mxu0
    %v2093 = vadd.f32 0.0, %v2092
    %v2094 = vpop.f32.mrb[0].mxu0
    %v2095 = vpop.f32.mrb[0].mxu0
    %2096 = vdwg.mxu0
    %2097 = vmatprep.subr.bf16.mxu0 %v2019
    %2098 = vmatpush1.bf16.msra.mxu0 %v2018
    %2099 = vmatprep.subr.bf16.mxu0 %v2023
    %2100 = vmatpush1.bf16.msra.mxu0 %v2022
    %2101 = vmatprep.subr.bf16.mxu0 %v2027
    %2102 = vmatpush1.bf16.msra.mxu0 %v2026
    %2103 = vmatprep.subr.bf16.mxu0 %v2031
    %2104 = vmatpush1.bf16.msra.mxu0 %v2030
    %2105 = vmatprep.subr.bf16.mxu0 %v2035
    %2106 = vmatpush1.bf16.msra.mxu0 %v2034
    %2107 = vmatprep.subr.bf16.mxu0 %v2039
    %2108 = vmatpush1.bf16.msra.mxu0 %v2038
    %2109 = vmatprep.subr.bf16.mxu0 %v2043
    %2110 = vmatpush1.bf16.msra.mxu0 %v2042
    %2111 = vmatprep.subr.bf16.mxu0 %v2047
    %2112 = vmatpush1.bf16.msra.mxu0 %v2046
    %2113 = vmatprep.subr.bf16.mxu0 0
    %2114 = vmatpush1.bf16.msra.mxu0 0
    %2115 = vmatprep.subr.bf16.mxu0 0
    %2116 = vmatpush1.bf16.msra.mxu0 0
    %2117 = vmatprep.subr.bf16.mxu0 0
    %2118 = vmatpush1.bf16.msra.mxu0 0
    %2119 = vmatprep.subr.bf16.mxu0 0
    %2120 = vmatpush1.bf16.msra.mxu0 0
    %2121 = vmatprep.subr.bf16.mxu0 0
    %2122 = vmatpush1.bf16.msra.mxu0 0
    %2123 = vmatprep.subr.bf16.mxu0 0
    %2124 = vmatpush1.bf16.msra.mxu0 0
    %2125 = vmatprep.subr.bf16.mxu0 0
    %2126 = vmatpush1.bf16.msra.mxu0 0
    %2127 = vmatprep.subr.bf16.mxu0 0
    %2128 = vmatpush1.bf16.msra.mxu0 0
    %2129 = vmatprep.mubr.bf16.mxu0 0
    %2130 = vmatmul.mubr.bf16.gmra.mrb[0].mxu0 %v2054
    %v2131 = vpop.f32.mrb[0].mxu0
    %v2132 = vadd.f32 0.0, %v2131
    %v2133 = vpop.f32.mrb[0].mxu0
    %v2134 = vadd.f32 0.0, %v2133
    %v2135 = vpop.f32.mrb[0].mxu0
    %v2136 = vpop.f32.mrb[0].mxu0
    %2137 = vdwg.mxu0
    %v2142 = vrot.slane %v2091, 7
    %v2143 = vrot.slane %v2093, 7
    %v2144 = vrot.slane %v2132, 7
    %v2145 = vrot.slane %v2134, 7
    %v2154 = vadd.f32 %v1912, %v2142
    %v2155 = vadd.f32 %v1914, %v2143
    %v2156 = vadd.f32 %v1955, %v2144
    %v2157 = vadd.f32 %v1957, %v2145
    %v2158 = vadd.f32 %v1916, %v2091
    %v2159 = vadd.f32 %v1918, %v2093
    %v2160 = vadd.f32 %v1959, %v2132
    %v2161 = vadd.f32 %v1961, %v2134
    %v2162 = vxor.u32 %v2154, 2147483648
    %v2163 = vxor.u32 %v2158, 2147483648
    %v2164 = vmul.f32 %v2162, 1.442695
    %v2165 = vpow.pop %v2164
    %v2166 = vmul.f32 %v2163, 1.442695
    %v2167 = vpow.pop %v2166
    %v2168 = vadd.f32 %v2165, 1.0
    %v2169 = vadd.f32 %v2167, 1.0
    %v2170 = vrcp.pop %v2168
    %v2171 = vmul.f32 1.0, %v2170
    %v2172 = vrcp.pop %v2169
    %v2173 = vmul.f32 1.0, %v2172
    %v2174 = vxor.u32 %v2155, 2147483648
    %v2175 = vxor.u32 %v2159, 2147483648
    %v2176 = vmul.f32 %v2174, 1.442695
    %v2177 = vpow.pop %v2176
    %v2178 = vmul.f32 %v2175, 1.442695
    %v2179 = vpow.pop %v2178
    %v2180 = vadd.f32 %v2177, 1.0
    %v2181 = vadd.f32 %v2179, 1.0
    %v2182 = vrcp.pop %v2180
    %v2183 = vmul.f32 1.0, %v2182
    %v2184 = vrcp.pop %v2181
    %v2185 = vmul.f32 1.0, %v2184
    %v2186 = vtanh.pop %v2156
    %v2187 = vtanh.pop %v2160
    %v2188 = vxor.u32 %v2157, 2147483648
    %v2189 = vxor.u32 %v2161, 2147483648
    %v2190 = vmul.f32 %v2188, 1.442695
    %v2191 = vpow.pop %v2190
    %v2192 = vmul.f32 %v2189, 1.442695
    %v2193 = vpow.pop %v2192
    %v2194 = vadd.f32 %v2191, 1.0
    %v2195 = vadd.f32 %v2193, 1.0
    %v2196 = vrcp.pop %v2194
    %v2197 = vmul.f32 1.0, %v2196
    %v2198 = vrcp.pop %v2195
    %v2199 = vmul.f32 1.0, %v2198
    %v2202 = vrot.slane %v2005, 7
    %v2203 = vrot.slane %v2006, 7
    %v2206 = vmul.f32 %v2183, %v2202
    %v2207 = vmul.f32 %v2185, %v2203
    %v2208 = vmul.f32 %v2171, %v2186
    %v2209 = vmul.f32 %v2173, %v2187
    %v2210 = vadd.f32 %v2206, %v2208
    %v2211 = vadd.f32 %v2207, %v2209
    %v2212 = vtanh.pop %v2210
    %v2213 = vtanh.pop %v2211
    %v2214 = vmul.f32 %v2197, %v2212
    %v2215 = vmul.f32 %v2199, %v2213
    %2216 = vst [vmem:[#allocation4] sm:$0x2] %v2214
    %2217 = vst [vmem:[#allocation4 + $0x8] sm:$0x2] %v2215
    %v2218 = vpack.c.bf16 %v2214, %v2214
    %v2219 = vpack.c.bf16 %v2215, %v2215
    %v2220 = vld [vmem:[%s2015] sm:$0xff]
    %v2221 = vld [vmem:[%s2015 + $0x8] sm:$0xff]
    %v2222 = vld [vmem:[%s2015 + $0x10] sm:$0xff]
    %v2223 = vld [vmem:[%s2015 + $0x18] sm:$0xff]
    %v2224 = vld [vmem:[%s2015 + $0x20] sm:$0xff]
    %v2225 = vld [vmem:[%s2015 + $0x28] sm:$0xff]
    %v2226 = vld [vmem:[%s2015 + $0x30] sm:$0xff]
    %v2227 = vld [vmem:[%s2015 + $0x38] sm:$0xff]
    %v2228 = vld [vmem:[%s2015 + $0x40] sm:$0xff]
    %v2229 = vld [vmem:[%s2015 + $0x48] sm:$0xff]
    %v2230 = vld [vmem:[%s2015 + $0x50] sm:$0xff]
    %v2231 = vld [vmem:[%s2015 + $0x58] sm:$0xff]
    %v2232 = vld [vmem:[%s2015 + $0x60] sm:$0xff]
    %v2233 = vld [vmem:[%s2015 + $0x68] sm:$0xff]
    %v2234 = vld [vmem:[%s2015 + $0x70] sm:$0xff]
    %v2235 = vld [vmem:[%s2015 + $0x78] sm:$0xff]
    %v2236 = vld [vmem:[%s2015 + $0x80] sm:$0xff]
    %v2237 = vld [vmem:[%s2015 + $0x88] sm:$0xff]
    %v2238 = vld [vmem:[%s2015 + $0x90] sm:$0xff]
    %v2239 = vld [vmem:[%s2015 + $0x98] sm:$0xff]
    %v2240 = vld [vmem:[%s2015 + $0xa0] sm:$0xff]
    %v2241 = vld [vmem:[%s2015 + $0xa8] sm:$0xff]
    %v2242 = vld [vmem:[%s2015 + $0xb0] sm:$0xff]
    %v2243 = vld [vmem:[%s2015 + $0xb8] sm:$0xff]
    %v2244 = vld [vmem:[%s2015 + $0xc0] sm:$0xff]
    %v2245 = vld [vmem:[%s2015 + $0xc8] sm:$0xff]
    %v2246 = vld [vmem:[%s2015 + $0xd0] sm:$0xff]
    %v2247 = vld [vmem:[%s2015 + $0xd8] sm:$0xff]
    %v2248 = vld [vmem:[%s2015 + $0xe0] sm:$0xff]
    %v2249 = vld [vmem:[%s2015 + $0xe8] sm:$0xff]
    %v2250 = vld [vmem:[%s2015 + $0xf0] sm:$0xff]
    %v2251 = vld [vmem:[%s2015 + $0xf8] sm:$0xff]
    %v2254 = vunpack.c.l.b16 %v2218
    %v2255 = vunpack.c.l.b16 %v2219
    %v2256 = vrot.slane %v2254, 1
    %v2257 = vsel %vm398, %v2255, %v2256
    %v2258 = vpack.c.b16 %v2257, %v2257
    %2260 = vmatprep.subr.bf16.mxu0 %v2221
    %2261 = vmatpush1.bf16.msra.mxu0 %v2220
    %2262 = vmatprep.subr.bf16.mxu0 %v2225
    %2263 = vmatpush1.bf16.msra.mxu0 %v2224
    %2264 = vmatprep.subr.bf16.mxu0 %v2229
    %2265 = vmatpush1.bf16.msra.mxu0 %v2228
    %2266 = vmatprep.subr.bf16.mxu0 %v2233
    %2267 = vmatpush1.bf16.msra.mxu0 %v2232
    %2268 = vmatprep.subr.bf16.mxu0 %v2237
    %2269 = vmatpush1.bf16.msra.mxu0 %v2236
    %2270 = vmatprep.subr.bf16.mxu0 %v2241
    %2271 = vmatpush1.bf16.msra.mxu0 %v2240
    %2272 = vmatprep.subr.bf16.mxu0 %v2245
    %2273 = vmatpush1.bf16.msra.mxu0 %v2244
    %2274 = vmatprep.subr.bf16.mxu0 %v2249
    %2275 = vmatpush1.bf16.msra.mxu0 %v2248
    %2276 = vmatprep.subr.bf16.mxu0 0
    %2277 = vmatpush1.bf16.msra.mxu0 0
    %2278 = vmatprep.subr.bf16.mxu0 0
    %2279 = vmatpush1.bf16.msra.mxu0 0
    %2280 = vmatprep.subr.bf16.mxu0 0
    %2281 = vmatpush1.bf16.msra.mxu0 0
    %2282 = vmatprep.subr.bf16.mxu0 0
    %2283 = vmatpush1.bf16.msra.mxu0 0
    %2284 = vmatprep.subr.bf16.mxu0 0
    %2285 = vmatpush1.bf16.msra.mxu0 0
    %2286 = vmatprep.subr.bf16.mxu0 0
    %2287 = vmatpush1.bf16.msra.mxu0 0
    %2288 = vmatprep.subr.bf16.mxu0 0
    %2289 = vmatpush1.bf16.msra.mxu0 0
    %2290 = vmatprep.subr.bf16.mxu0 0
    %2291 = vmatpush1.bf16.msra.mxu0 0
    %2292 = vmatprep.mubr.bf16.mxu0 0
    %2293 = vmatmul.mubr.bf16.gmra.mrb[0].mxu0 %v2258
    %v2294 = vpop.f32.mrb[0].mxu0
    %v2295 = vadd.f32 0.0, %v2294
    %v2296 = vpop.f32.mrb[0].mxu0
    %v2297 = vadd.f32 0.0, %v2296
    %v2298 = vpop.f32.mrb[0].mxu0
    %v2299 = vpop.f32.mrb[0].mxu0
    %2300 = vdwg.mxu0
    %2301 = vmatprep.subr.bf16.mxu0 %v2223
    %2302 = vmatpush1.bf16.msra.mxu0 %v2222
    %2303 = vmatprep.subr.bf16.mxu0 %v2227
    %2304 = vmatpush1.bf16.msra.mxu0 %v2226
    %2305 = vmatprep.subr.bf16.mxu0 %v2231
    %2306 = vmatpush1.bf16.msra.mxu0 %v2230
    %2307 = vmatprep.subr.bf16.mxu0 %v2235
    %2308 = vmatpush1.bf16.msra.mxu0 %v2234
    %2309 = vmatprep.subr.bf16.mxu0 %v2239
    %2310 = vmatpush1.bf16.msra.mxu0 %v2238
    %2311 = vmatprep.subr.bf16.mxu0 %v2243
    %2312 = vmatpush1.bf16.msra.mxu0 %v2242
    %2313 = vmatprep.subr.bf16.mxu0 %v2247
    %2314 = vmatpush1.bf16.msra.mxu0 %v2246
    %2315 = vmatprep.subr.bf16.mxu0 %v2251
    %2316 = vmatpush1.bf16.msra.mxu0 %v2250
    %2317 = vmatprep.subr.bf16.mxu0 0
    %2318 = vmatpush1.bf16.msra.mxu0 0
    %2319 = vmatprep.subr.bf16.mxu0 0
    %2320 = vmatpush1.bf16.msra.mxu0 0
    %2321 = vmatprep.subr.bf16.mxu0 0
    %2322 = vmatpush1.bf16.msra.mxu0 0
    %2323 = vmatprep.subr.bf16.mxu0 0
    %2324 = vmatpush1.bf16.msra.mxu0 0
    %2325 = vmatprep.subr.bf16.mxu0 0
    %2326 = vmatpush1.bf16.msra.mxu0 0
    %2327 = vmatprep.subr.bf16.mxu0 0
    %2328 = vmatpush1.bf16.msra.mxu0 0
    %2329 = vmatprep.subr.bf16.mxu0 0
    %2330 = vmatpush1.bf16.msra.mxu0 0
    %2331 = vmatprep.subr.bf16.mxu0 0
    %2332 = vmatpush1.bf16.msra.mxu0 0
    %2333 = vmatprep.mubr.bf16.mxu0 0
    %2334 = vmatmul.mubr.bf16.gmra.mrb[0].mxu0 %v2258
    %v2335 = vpop.f32.mrb[0].mxu0
    %v2336 = vadd.f32 0.0, %v2335
    %v2337 = vpop.f32.mrb[0].mxu0
    %v2338 = vadd.f32 0.0, %v2337
    %v2339 = vpop.f32.mrb[0].mxu0
    %v2340 = vpop.f32.mrb[0].mxu0
    %2341 = vdwg.mxu0
    %v2346 = vrot.slane %v2295, 6
    %v2347 = vrot.slane %v2297, 6
    %v2348 = vrot.slane %v2336, 6
    %v2349 = vrot.slane %v2338, 6
    %v2350 = vrot.slane %v2295, 7
    %v2351 = vrot.slane %v2297, 7
    %v2352 = vrot.slane %v2336, 7
    %v2353 = vrot.slane %v2338, 7
    %v2362 = vadd.f32 %v1912, %v2346
    %v2363 = vadd.f32 %v1914, %v2347
    %v2364 = vadd.f32 %v1955, %v2348
    %v2365 = vadd.f32 %v1957, %v2349
    %v2366 = vadd.f32 %v1916, %v2350
    %v2367 = vadd.f32 %v1918, %v2351
    %v2368 = vadd.f32 %v1959, %v2352
    %v2369 = vadd.f32 %v1961, %v2353
    %v2370 = vxor.u32 %v2362, 2147483648
    %v2371 = vxor.u32 %v2366, 2147483648
    %v2372 = vmul.f32 %v2370, 1.442695
    %v2373 = vpow.pop %v2372
    %v2374 = vmul.f32 %v2371, 1.442695
    %v2375 = vpow.pop %v2374
    %v2376 = vadd.f32 %v2373, 1.0
    %v2377 = vadd.f32 %v2375, 1.0
    %v2378 = vrcp.pop %v2376
    %v2379 = vmul.f32 1.0, %v2378
    %v2380 = vrcp.pop %v2377
    %v2381 = vmul.f32 1.0, %v2380
    %v2382 = vxor.u32 %v2363, 2147483648
    %v2383 = vxor.u32 %v2367, 2147483648
    %v2384 = vmul.f32 %v2382, 1.442695
    %v2385 = vpow.pop %v2384
    %v2386 = vmul.f32 %v2383, 1.442695
    %v2387 = vpow.pop %v2386
    %v2388 = vadd.f32 %v2385, 1.0
    %v2389 = vadd.f32 %v2387, 1.0
    %v2390 = vrcp.pop %v2388
    %v2391 = vmul.f32 1.0, %v2390
    %v2392 = vrcp.pop %v2389
    %v2393 = vmul.f32 1.0, %v2392
    %v2394 = vtanh.pop %v2364
    %v2395 = vtanh.pop %v2368
    %v2396 = vxor.u32 %v2365, 2147483648
    %v2397 = vxor.u32 %v2369, 2147483648
    %v2398 = vmul.f32 %v2396, 1.442695
    %v2399 = vpow.pop %v2398
    %v2400 = vmul.f32 %v2397, 1.442695
    %v2401 = vpow.pop %v2400
    %v2402 = vadd.f32 %v2399, 1.0
    %v2403 = vadd.f32 %v2401, 1.0
    %v2404 = vrcp.pop %v2402
    %v2405 = vmul.f32 1.0, %v2404
    %v2406 = vrcp.pop %v2403
    %v2407 = vmul.f32 1.0, %v2406
    %v2410 = vrot.slane %v2210, 7
    %v2411 = vrot.slane %v2211, 7
    %v2414 = vmul.f32 %v2391, %v2410
    %v2415 = vmul.f32 %v2393, %v2411
    %v2416 = vmul.f32 %v2379, %v2394
    %v2417 = vmul.f32 %v2381, %v2395
    %v2418 = vadd.f32 %v2414, %v2416
    %v2419 = vadd.f32 %v2415, %v2417
    %v2420 = vtanh.pop %v2418
    %v2421 = vtanh.pop %v2419
    %v2422 = vmul.f32 %v2405, %v2420
    %v2423 = vmul.f32 %v2407, %v2421
    %2424 = vst [vmem:[#allocation4] sm:$0x4] %v2422
    %2425 = vst [vmem:[#allocation4 + $0x8] sm:$0x4] %v2423
    %v2426 = vpack.c.bf16 %v2422, %v2422
    %v2427 = vpack.c.bf16 %v2423, %v2423
    %v2428 = vld [vmem:[%s2015] sm:$0xff]
    %v2429 = vld [vmem:[%s2015 + $0x8] sm:$0xff]
    %v2430 = vld [vmem:[%s2015 + $0x10] sm:$0xff]
    %v2431 = vld [vmem:[%s2015 + $0x18] sm:$0xff]
    %v2432 = vld [vmem:[%s2015 + $0x20] sm:$0xff]
    %v2433 = vld [vmem:[%s2015 + $0x28] sm:$0xff]
    %v2434 = vld [vmem:[%s2015 + $0x30] sm:$0xff]
    %v2435 = vld [vmem:[%s2015 + $0x38] sm:$0xff]
    %v2436 = vld [vmem:[%s2015 + $0x40] sm:$0xff]
    %v2437 = vld [vmem:[%s2015 + $0x48] sm:$0xff]
    %v2438 = vld [vmem:[%s2015 + $0x50] sm:$0xff]
    %v2439 = vld [vmem:[%s2015 + $0x58] sm:$0xff]
    %v2440 = vld [vmem:[%s2015 + $0x60] sm:$0xff]
    %v2441 = vld [vmem:[%s2015 + $0x68] sm:$0xff]
    %v2442 = vld [vmem:[%s2015 + $0x70] sm:$0xff]
    %v2443 = vld [vmem:[%s2015 + $0x78] sm:$0xff]
    %v2444 = vld [vmem:[%s2015 + $0x80] sm:$0xff]
    %v2445 = vld [vmem:[%s2015 + $0x88] sm:$0xff]
    %v2446 = vld [vmem:[%s2015 + $0x90] sm:$0xff]
    %v2447 = vld [vmem:[%s2015 + $0x98] sm:$0xff]
    %v2448 = vld [vmem:[%s2015 + $0xa0] sm:$0xff]
    %v2449 = vld [vmem:[%s2015 + $0xa8] sm:$0xff]
    %v2450 = vld [vmem:[%s2015 + $0xb0] sm:$0xff]
    %v2451 = vld [vmem:[%s2015 + $0xb8] sm:$0xff]
    %v2452 = vld [vmem:[%s2015 + $0xc0] sm:$0xff]
    %v2453 = vld [vmem:[%s2015 + $0xc8] sm:$0xff]
    %v2454 = vld [vmem:[%s2015 + $0xd0] sm:$0xff]
    %v2455 = vld [vmem:[%s2015 + $0xd8] sm:$0xff]
    %v2456 = vld [vmem:[%s2015 + $0xe0] sm:$0xff]
    %v2457 = vld [vmem:[%s2015 + $0xe8] sm:$0xff]
    %v2458 = vld [vmem:[%s2015 + $0xf0] sm:$0xff]
    %v2459 = vld [vmem:[%s2015 + $0xf8] sm:$0xff]
    %v2462 = vunpack.c.l.b16 %v2426
    %v2463 = vunpack.c.l.b16 %v2427
    %v2464 = vrot.slane %v2462, 2
    %v2465 = vrot.slane %v2463, 1
    %v2466 = vsel %vm398, %v2465, %v2464
    %v2467 = vpack.c.b16 %v2466, %v2466
    %2469 = vmatprep.subr.bf16.mxu0 %v2429
    %2470 = vmatpush1.bf16.msra.mxu0 %v2428
    %2471 = vmatprep.subr.bf16.mxu0 %v2433
    %2472 = vmatpush1.bf16.msra.mxu0 %v2432
    %2473 = vmatprep.subr.bf16.mxu0 %v2437
    %2474 = vmatpush1.bf16.msra.mxu0 %v2436
    %2475 = vmatprep.subr.bf16.mxu0 %v2441
    %2476 = vmatpush1.bf16.msra.mxu0 %v2440
    %2477 = vmatprep.subr.bf16.mxu0 %v2445
    %2478 = vmatpush1.bf16.msra.mxu0 %v2444
    %2479 = vmatprep.subr.bf16.mxu0 %v2449
    %2480 = vmatpush1.bf16.msra.mxu0 %v2448
    %2481 = vmatprep.subr.bf16.mxu0 %v2453
    %2482 = vmatpush1.bf16.msra.mxu0 %v2452
    %2483 = vmatprep.subr.bf16.mxu0 %v2457
    %2484 = vmatpush1.bf16.msra.mxu0 %v2456
    %2485 = vmatprep.subr.bf16.mxu0 0
    %2486 = vmatpush1.bf16.msra.mxu0 0
    %2487 = vmatprep.subr.bf16.mxu0 0
    %2488 = vmatpush1.bf16.msra.mxu0 0
    %2489 = vmatprep.subr.bf16.mxu0 0
    %2490 = vmatpush1.bf16.msra.mxu0 0
    %2491 = vmatprep.subr.bf16.mxu0 0
    %2492 = vmatpush1.bf16.msra.mxu0 0
    %2493 = vmatprep.subr.bf16.mxu0 0
    %2494 = vmatpush1.bf16.msra.mxu0 0
    %2495 = vmatprep.subr.bf16.mxu0 0
    %2496 = vmatpush1.bf16.msra.mxu0 0
    %2497 = vmatprep.subr.bf16.mxu0 0
    %2498 = vmatpush1.bf16.msra.mxu0 0
    %2499 = vmatprep.subr.bf16.mxu0 0
    %2500 = vmatpush1.bf16.msra.mxu0 0
    %2501 = vmatprep.mubr.bf16.mxu0 0
    %2502 = vmatmul.mubr.bf16.gmra.mrb[0].mxu0 %v2467
    %v2503 = vpop.f32.mrb[0].mxu0
    %v2504 = vadd.f32 0.0, %v2503
    %v2505 = vpop.f32.mrb[0].mxu0
    %v2506 = vadd.f32 0.0, %v2505
    %v2507 = vpop.f32.mrb[0].mxu0
    %v2508 = vpop.f32.mrb[0].mxu0
    %2509 = vdwg.mxu0
    %2510 = vmatprep.subr.bf16.mxu0 %v2431
    %2511 = vmatpush1.bf16.msra.mxu0 %v2430
    %2512 = vmatprep.subr.bf16.mxu0 %v2435
    %2513 = vmatpush1.bf16.msra.mxu0 %v2434
    %2514 = vmatprep.subr.bf16.mxu0 %v2439
    %2515 = vmatpush1.bf16.msra.mxu0 %v2438
    %2516 = vmatprep.subr.bf16.mxu0 %v2443
    %2517 = vmatpush1.bf16.msra.mxu0 %v2442
    %2518 = vmatprep.subr.bf16.mxu0 %v2447
    %2519 = vmatpush1.bf16.msra.mxu0 %v2446
    %2520 = vmatprep.subr.bf16.mxu0 %v2451
    %2521 = vmatpush1.bf16.msra.mxu0 %v2450
    %2522 = vmatprep.subr.bf16.mxu0 %v2455
    %2523 = vmatpush1.bf16.msra.mxu0 %v2454
    %2524 = vmatprep.subr.bf16.mxu0 %v2459
    %2525 = vmatpush1.bf16.msra.mxu0 %v2458
    %2526 = vmatprep.subr.bf16.mxu0 0
    %2527 = vmatpush1.bf16.msra.mxu0 0
    %2528 = vmatprep.subr.bf16.mxu0 0
    %2529 = vmatpush1.bf16.msra.mxu0 0
    %2530 = vmatprep.subr.bf16.mxu0 0
    %2531 = vmatpush1.bf16.msra.mxu0 0
    %2532 = vmatprep.subr.bf16.mxu0 0
    %2533 = vmatpush1.bf16.msra.mxu0 0
    %2534 = vmatprep.subr.bf16.mxu0 0
    %2535 = vmatpush1.bf16.msra.mxu0 0
    %2536 = vmatprep.subr.bf16.mxu0 0
    %2537 = vmatpush1.bf16.msra.mxu0 0
    %2538 = vmatprep.subr.bf16.mxu0 0
    %2539 = vmatpush1.bf16.msra.mxu0 0
    %2540 = vmatprep.subr.bf16.mxu0 0
    %2541 = vmatpush1.bf16.msra.mxu0 0
    %2542 = vmatprep.mubr.bf16.mxu0 0
    %2543 = vmatmul.mubr.bf16.gmra.mrb[0].mxu0 %v2467
    %v2544 = vpop.f32.mrb[0].mxu0
    %v2545 = vadd.f32 0.0, %v2544
    %v2546 = vpop.f32.mrb[0].mxu0
    %v2547 = vadd.f32 0.0, %v2546
    %v2548 = vpop.f32.mrb[0].mxu0
    %v2549 = vpop.f32.mrb[0].mxu0
    %2550 = vdwg.mxu0
    %v2555 = vrot.slane %v2504, 5
    %v2556 = vrot.slane %v2506, 5
    %v2557 = vrot.slane %v2545, 5
    %v2558 = vrot.slane %v2547, 5
    %v2559 = vrot.slane %v2504, 6
    %v2560 = vrot.slane %v2506, 6
    %v2561 = vrot.slane %v2545, 6
    %v2562 = vrot.slane %v2547, 6
    %v2571 = vadd.f32 %v1912, %v2555
    %v2572 = vadd.f32 %v1914, %v2556
    %v2573 = vadd.f32 %v1955, %v2557
    %v2574 = vadd.f32 %v1957, %v2558
    %v2575 = vadd.f32 %v1916, %v2559
    %v2576 = vadd.f32 %v1918, %v2560
    %v2577 = vadd.f32 %v1959, %v2561
    %v2578 = vadd.f32 %v1961, %v2562
    %v2579 = vxor.u32 %v2571, 2147483648
    %v2580 = vxor.u32 %v2575, 2147483648
    %v2581 = vmul.f32 %v2579, 1.442695
    %v2582 = vpow.pop %v2581
    %v2583 = vmul.f32 %v2580, 1.442695
    %v2584 = vpow.pop %v2583
    %v2585 = vadd.f32 %v2582, 1.0
    %v2586 = vadd.f32 %v2584, 1.0
    %v2587 = vrcp.pop %v2585
    %v2588 = vmul.f32 1.0, %v2587
    %v2589 = vrcp.pop %v2586
    %v2590 = vmul.f32 1.0, %v2589
    %v2591 = vxor.u32 %v2572, 2147483648
    %v2592 = vxor.u32 %v2576, 2147483648
    %v2593 = vmul.f32 %v2591, 1.442695
    %v2594 = vpow.pop %v2593
    %v2595 = vmul.f32 %v2592, 1.442695
    %v2596 = vpow.pop %v2595
    %v2597 = vadd.f32 %v2594, 1.0
    %v2598 = vadd.f32 %v2596, 1.0
    %v2599 = vrcp.pop %v2597
    %v2600 = vmul.f32 1.0, %v2599
    %v2601 = vrcp.pop %v2598
    %v2602 = vmul.f32 1.0, %v2601
    %v2603 = vtanh.pop %v2573
    %v2604 = vtanh.pop %v2577
    %v2605 = vxor.u32 %v2574, 2147483648
    %v2606 = vxor.u32 %v2578, 2147483648
    %v2607 = vmul.f32 %v2605, 1.442695
    %v2608 = vpow.pop %v2607
    %v2609 = vmul.f32 %v2606, 1.442695
    %v2610 = vpow.pop %v2609
    %v2611 = vadd.f32 %v2608, 1.0
    %v2612 = vadd.f32 %v2610, 1.0
    %v2613 = vrcp.pop %v2611
    %v2614 = vmul.f32 1.0, %v2613
    %v2615 = vrcp.pop %v2612
    %v2616 = vmul.f32 1.0, %v2615
    %v2619 = vrot.slane %v2418, 7
    %v2620 = vrot.slane %v2419, 7
    %v2623 = vmul.f32 %v2600, %v2619
    %v2624 = vmul.f32 %v2602, %v2620
    %v2625 = vmul.f32 %v2588, %v2603
    %v2626 = vmul.f32 %v2590, %v2604
    %v2627 = vadd.f32 %v2623, %v2625
    %v2628 = vadd.f32 %v2624, %v2626
    %v2629 = vtanh.pop %v2627
    %v2630 = vtanh.pop %v2628
    %v2631 = vmul.f32 %v2614, %v2629
    %v2632 = vmul.f32 %v2616, %v2630
    %2633 = vst [vmem:[#allocation4] sm:$0x8] %v2631
    %2634 = vst [vmem:[#allocation4 + $0x8] sm:$0x8] %v2632
    %v2635 = vpack.c.bf16 %v2631, %v2631
    %v2636 = vpack.c.bf16 %v2632, %v2632
    %v2637 = vld [vmem:[%s2015] sm:$0xff]
    %v2638 = vld [vmem:[%s2015 + $0x8] sm:$0xff]
    %v2639 = vld [vmem:[%s2015 + $0x10] sm:$0xff]
    %v2640 = vld [vmem:[%s2015 + $0x18] sm:$0xff]
    %v2641 = vld [vmem:[%s2015 + $0x20] sm:$0xff]
    %v2642 = vld [vmem:[%s2015 + $0x28] sm:$0xff]
    %v2643 = vld [vmem:[%s2015 + $0x30] sm:$0xff]
    %v2644 = vld [vmem:[%s2015 + $0x38] sm:$0xff]
    %v2645 = vld [vmem:[%s2015 + $0x40] sm:$0xff]
    %v2646 = vld [vmem:[%s2015 + $0x48] sm:$0xff]
    %v2647 = vld [vmem:[%s2015 + $0x50] sm:$0xff]
    %v2648 = vld [vmem:[%s2015 + $0x58] sm:$0xff]
    %v2649 = vld [vmem:[%s2015 + $0x60] sm:$0xff]
    %v2650 = vld [vmem:[%s2015 + $0x68] sm:$0xff]
    %v2651 = vld [vmem:[%s2015 + $0x70] sm:$0xff]
    %v2652 = vld [vmem:[%s2015 + $0x78] sm:$0xff]
    %v2653 = vld [vmem:[%s2015 + $0x80] sm:$0xff]
    %v2654 = vld [vmem:[%s2015 + $0x88] sm:$0xff]
    %v2655 = vld [vmem:[%s2015 + $0x90] sm:$0xff]
    %v2656 = vld [vmem:[%s2015 + $0x98] sm:$0xff]
    %v2657 = vld [vmem:[%s2015 + $0xa0] sm:$0xff]
    %v2658 = vld [vmem:[%s2015 + $0xa8] sm:$0xff]
    %v2659 = vld [vmem:[%s2015 + $0xb0] sm:$0xff]
    %v2660 = vld [vmem:[%s2015 + $0xb8] sm:$0xff]
    %v2661 = vld [vmem:[%s2015 + $0xc0] sm:$0xff]
    %v2662 = vld [vmem:[%s2015 + $0xc8] sm:$0xff]
    %v2663 = vld [vmem:[%s2015 + $0xd0] sm:$0xff]
    %v2664 = vld [vmem:[%s2015 + $0xd8] sm:$0xff]
    %v2665 = vld [vmem:[%s2015 + $0xe0] sm:$0xff]
    %v2666 = vld [vmem:[%s2015 + $0xe8] sm:$0xff]
    %v2667 = vld [vmem:[%s2015 + $0xf0] sm:$0xff]
    %v2668 = vld [vmem:[%s2015 + $0xf8] sm:$0xff]
    %v2671 = vunpack.c.l.b16 %v2635
    %v2672 = vunpack.c.l.b16 %v2636
    %v2673 = vrot.slane %v2671, 3
    %v2674 = vrot.slane %v2672, 2
    %v2675 = vsel %vm398, %v2674, %v2673
    %v2676 = vpack.c.b16 %v2675, %v2675
    %2678 = vmatprep.subr.bf16.mxu0 %v2638
    %2679 = vmatpush1.bf16.msra.mxu0 %v2637
    %2680 = vmatprep.subr.bf16.mxu0 %v2642
    %2681 = vmatpush1.bf16.msra.mxu0 %v2641
    %2682 = vmatprep.subr.bf16.mxu0 %v2646
    %2683 = vmatpush1.bf16.msra.mxu0 %v2645
    %2684 = vmatprep.subr.bf16.mxu0 %v2650
    %2685 = vmatpush1.bf16.msra.mxu0 %v2649
    %2686 = vmatprep.subr.bf16.mxu0 %v2654
    %2687 = vmatpush1.bf16.msra.mxu0 %v2653
    %2688 = vmatprep.subr.bf16.mxu0 %v2658
    %2689 = vmatpush1.bf16.msra.mxu0 %v2657
    %2690 = vmatprep.subr.bf16.mxu0 %v2662
    %2691 = vmatpush1.bf16.msra.mxu0 %v2661
    %2692 = vmatprep.subr.bf16.mxu0 %v2666
    %2693 = vmatpush1.bf16.msra.mxu0 %v2665
    %2694 = vmatprep.subr.bf16.mxu0 0
    %2695 = vmatpush1.bf16.msra.mxu0 0
    %2696 = vmatprep.subr.bf16.mxu0 0
    %2697 = vmatpush1.bf16.msra.mxu0 0
    %2698 = vmatprep.subr.bf16.mxu0 0
    %2699 = vmatpush1.bf16.msra.mxu0 0
    %2700 = vmatprep.subr.bf16.mxu0 0
    %2701 = vmatpush1.bf16.msra.mxu0 0
    %2702 = vmatprep.subr.bf16.mxu0 0
    %2703 = vmatpush1.bf16.msra.mxu0 0
    %2704 = vmatprep.subr.bf16.mxu0 0
    %2705 = vmatpush1.bf16.msra.mxu0 0
    %2706 = vmatprep.subr.bf16.mxu0 0
    %2707 = vmatpush1.bf16.msra.mxu0 0
    %2708 = vmatprep.subr.bf16.mxu0 0
    %2709 = vmatpush1.bf16.msra.mxu0 0
    %2710 = vmatprep.mubr.bf16.mxu0 0
    %2711 = vmatmul.mubr.bf16.gmra.mrb[0].mxu0 %v2676
    %v2712 = vpop.f32.mrb[0].mxu0
    %v2713 = vadd.f32 0.0, %v2712
    %v2714 = vpop.f32.mrb[0].mxu0
    %v2715 = vadd.f32 0.0, %v2714
    %v2716 = vpop.f32.mrb[0].mxu0
    %v2717 = vpop.f32.mrb[0].mxu0
    %2718 = vdwg.mxu0
    %2719 = vmatprep.subr.bf16.mxu0 %v2640
    %2720 = vmatpush1.bf16.msra.mxu0 %v2639
    %2721 = vmatprep.subr.bf16.mxu0 %v2644
    %2722 = vmatpush1.bf16.msra.mxu0 %v2643
    %2723 = vmatprep.subr.bf16.mxu0 %v2648
    %2724 = vmatpush1.bf16.msra.mxu0 %v2647
    %2725 = vmatprep.subr.bf16.mxu0 %v2652
    %2726 = vmatpush1.bf16.msra.mxu0 %v2651
    %2727 = vmatprep.subr.bf16.mxu0 %v2656
    %2728 = vmatpush1.bf16.msra.mxu0 %v2655
    %2729 = vmatprep.subr.bf16.mxu0 %v2660
    %2730 = vmatpush1.bf16.msra.mxu0 %v2659
    %2731 = vmatprep.subr.bf16.mxu0 %v2664
    %2732 = vmatpush1.bf16.msra.mxu0 %v2663
    %2733 = vmatprep.subr.bf16.mxu0 %v2668
    %2734 = vmatpush1.bf16.msra.mxu0 %v2667
    %2735 = vmatprep.subr.bf16.mxu0 0
    %2736 = vmatpush1.bf16.msra.mxu0 0
    %2737 = vmatprep.subr.bf16.mxu0 0
    %2738 = vmatpush1.bf16.msra.mxu0 0
    %2739 = vmatprep.subr.bf16.mxu0 0
    %2740 = vmatpush1.bf16.msra.mxu0 0
    %2741 = vmatprep.subr.bf16.mxu0 0
    %2742 = vmatpush1.bf16.msra.mxu0 0
    %2743 = vmatprep.subr.bf16.mxu0 0
    %2744 = vmatpush1.bf16.msra.mxu0 0
    %2745 = vmatprep.subr.bf16.mxu0 0
    %2746 = vmatpush1.bf16.msra.mxu0 0
    %2747 = vmatprep.subr.bf16.mxu0 0
    %2748 = vmatpush1.bf16.msra.mxu0 0
    %2749 = vmatprep.subr.bf16.mxu0 0
    %2750 = vmatpush1.bf16.msra.mxu0 0
    %2751 = vmatprep.mubr.bf16.mxu0 0
    %2752 = vmatmul.mubr.bf16.gmra.mrb[0].mxu0 %v2676
    %v2753 = vpop.f32.mrb[0].mxu0
    %v2754 = vadd.f32 0.0, %v2753
    %v2755 = vpop.f32.mrb[0].mxu0
    %v2756 = vadd.f32 0.0, %v2755
    %v2757 = vpop.f32.mrb[0].mxu0
    %v2758 = vpop.f32.mrb[0].mxu0
    %2759 = vdwg.mxu0
    %v2764 = vrot.slane %v2713, 4
    %v2765 = vrot.slane %v2715, 4
    %v2766 = vrot.slane %v2754, 4
    %v2767 = vrot.slane %v2756, 4
    %v2768 = vrot.slane %v2713, 5
    %v2769 = vrot.slane %v2715, 5
    %v2770 = vrot.slane %v2754, 5
    %v2771 = vrot.slane %v2756, 5
    %v2780 = vadd.f32 %v1912, %v2764
    %v2781 = vadd.f32 %v1914, %v2765
    %v2782 = vadd.f32 %v1955, %v2766
    %v2783 = vadd.f32 %v1957, %v2767
    %v2784 = vadd.f32 %v1916, %v2768
    %v2785 = vadd.f32 %v1918, %v2769
    %v2786 = vadd.f32 %v1959, %v2770
    %v2787 = vadd.f32 %v1961, %v2771
    %v2788 = vxor.u32 %v2780, 2147483648
    %v2789 = vxor.u32 %v2784, 2147483648
    %v2790 = vmul.f32 %v2788, 1.442695
    %v2791 = vpow.pop %v2790
    %v2792 = vmul.f32 %v2789, 1.442695
    %v2793 = vpow.pop %v2792
    %v2794 = vadd.f32 %v2791, 1.0
    %v2795 = vadd.f32 %v2793, 1.0
    %v2796 = vrcp.pop %v2794
    %v2797 = vmul.f32 1.0, %v2796
    %v2798 = vrcp.pop %v2795
    %v2799 = vmul.f32 1.0, %v2798
    %v2800 = vxor.u32 %v2781, 2147483648
    %v2801 = vxor.u32 %v2785, 2147483648
    %v2802 = vmul.f32 %v2800, 1.442695
    %v2803 = vpow.pop %v2802
    %v2804 = vmul.f32 %v2801, 1.442695
    %v2805 = vpow.pop %v2804
    %v2806 = vadd.f32 %v2803, 1.0
    %v2807 = vadd.f32 %v2805, 1.0
    %v2808 = vrcp.pop %v2806
    %v2809 = vmul.f32 1.0, %v2808
    %v2810 = vrcp.pop %v2807
    %v2811 = vmul.f32 1.0, %v2810
    %v2812 = vtanh.pop %v2782
    %v2813 = vtanh.pop %v2786
    %v2814 = vxor.u32 %v2783, 2147483648
    %v2815 = vxor.u32 %v2787, 2147483648
    %v2816 = vmul.f32 %v2814, 1.442695
    %v2817 = vpow.pop %v2816
    %v2818 = vmul.f32 %v2815, 1.442695
    %v2819 = vpow.pop %v2818
    %v2820 = vadd.f32 %v2817, 1.0
    %v2821 = vadd.f32 %v2819, 1.0
    %v2822 = vrcp.pop %v2820
    %v2823 = vmul.f32 1.0, %v2822
    %v2824 = vrcp.pop %v2821
    %v2825 = vmul.f32 1.0, %v2824
    %v2828 = vrot.slane %v2627, 7
    %v2829 = vrot.slane %v2628, 7
    %v2832 = vmul.f32 %v2809, %v2828
    %v2833 = vmul.f32 %v2811, %v2829
    %v2834 = vmul.f32 %v2797, %v2812
    %v2835 = vmul.f32 %v2799, %v2813
    %v2836 = vadd.f32 %v2832, %v2834
    %v2837 = vadd.f32 %v2833, %v2835
    %v2838 = vtanh.pop %v2836
    %v2839 = vtanh.pop %v2837
    %v2840 = vmul.f32 %v2823, %v2838
    %v2841 = vmul.f32 %v2825, %v2839
    %2842 = vst [vmem:[#allocation4] sm:$0x10] %v2840
    %2843 = vst [vmem:[#allocation4 + $0x8] sm:$0x10] %v2841
    %v2844 = vpack.c.bf16 %v2840, %v2840
    %v2845 = vpack.c.bf16 %v2841, %v2841
    %v2846 = vld [vmem:[%s2015] sm:$0xff]
    %v2847 = vld [vmem:[%s2015 + $0x8] sm:$0xff]
    %v2848 = vld [vmem:[%s2015 + $0x10] sm:$0xff]
    %v2849 = vld [vmem:[%s2015 + $0x18] sm:$0xff]
    %v2850 = vld [vmem:[%s2015 + $0x20] sm:$0xff]
    %v2851 = vld [vmem:[%s2015 + $0x28] sm:$0xff]
    %v2852 = vld [vmem:[%s2015 + $0x30] sm:$0xff]
    %v2853 = vld [vmem:[%s2015 + $0x38] sm:$0xff]
    %v2854 = vld [vmem:[%s2015 + $0x40] sm:$0xff]
    %v2855 = vld [vmem:[%s2015 + $0x48] sm:$0xff]
    %v2856 = vld [vmem:[%s2015 + $0x50] sm:$0xff]
    %v2857 = vld [vmem:[%s2015 + $0x58] sm:$0xff]
    %v2858 = vld [vmem:[%s2015 + $0x60] sm:$0xff]
    %v2859 = vld [vmem:[%s2015 + $0x68] sm:$0xff]
    %v2860 = vld [vmem:[%s2015 + $0x70] sm:$0xff]
    %v2861 = vld [vmem:[%s2015 + $0x78] sm:$0xff]
    %v2862 = vld [vmem:[%s2015 + $0x80] sm:$0xff]
    %v2863 = vld [vmem:[%s2015 + $0x88] sm:$0xff]
    %v2864 = vld [vmem:[%s2015 + $0x90] sm:$0xff]
    %v2865 = vld [vmem:[%s2015 + $0x98] sm:$0xff]
    %v2866 = vld [vmem:[%s2015 + $0xa0] sm:$0xff]
    %v2867 = vld [vmem:[%s2015 + $0xa8] sm:$0xff]
    %v2868 = vld [vmem:[%s2015 + $0xb0] sm:$0xff]
    %v2869 = vld [vmem:[%s2015 + $0xb8] sm:$0xff]
    %v2870 = vld [vmem:[%s2015 + $0xc0] sm:$0xff]
    %v2871 = vld [vmem:[%s2015 + $0xc8] sm:$0xff]
    %v2872 = vld [vmem:[%s2015 + $0xd0] sm:$0xff]
    %v2873 = vld [vmem:[%s2015 + $0xd8] sm:$0xff]
    %v2874 = vld [vmem:[%s2015 + $0xe0] sm:$0xff]
    %v2875 = vld [vmem:[%s2015 + $0xe8] sm:$0xff]
    %v2876 = vld [vmem:[%s2015 + $0xf0] sm:$0xff]
    %v2877 = vld [vmem:[%s2015 + $0xf8] sm:$0xff]
    %v2880 = vunpack.c.l.b16 %v2844
    %v2881 = vunpack.c.l.b16 %v2845
    %v2882 = vrot.slane %v2880, 4
    %v2883 = vrot.slane %v2881, 3
    %v2884 = vsel %vm398, %v2883, %v2882
    %v2885 = vpack.c.b16 %v2884, %v2884
    %2887 = vmatprep.subr.bf16.mxu0 %v2847
    %2888 = vmatpush1.bf16.msra.mxu0 %v2846
    %2889 = vmatprep.subr.bf16.mxu0 %v2851
    %2890 = vmatpush1.bf16.msra.mxu0 %v2850
    %2891 = vmatprep.subr.bf16.mxu0 %v2855
    %2892 = vmatpush1.bf16.msra.mxu0 %v2854
    %2893 = vmatprep.subr.bf16.mxu0 %v2859
    %2894 = vmatpush1.bf16.msra.mxu0 %v2858
    %2895 = vmatprep.subr.bf16.mxu0 %v2863
    %2896 = vmatpush1.bf16.msra.mxu0 %v2862
    %2897 = vmatprep.subr.bf16.mxu0 %v2867
    %2898 = vmatpush1.bf16.msra.mxu0 %v2866
    %2899 = vmatprep.subr.bf16.mxu0 %v2871
    %2900 = vmatpush1.bf16.msra.mxu0 %v2870
    %2901 = vmatprep.subr.bf16.mxu0 %v2875
    %2902 = vmatpush1.bf16.msra.mxu0 %v2874
    %2903 = vmatprep.subr.bf16.mxu0 0
    %2904 = vmatpush1.bf16.msra.mxu0 0
    %2905 = vmatprep.subr.bf16.mxu0 0
    %2906 = vmatpush1.bf16.msra.mxu0 0
    %2907 = vmatprep.subr.bf16.mxu0 0
    %2908 = vmatpush1.bf16.msra.mxu0 0
    %2909 = vmatprep.subr.bf16.mxu0 0
    %2910 = vmatpush1.bf16.msra.mxu0 0
    %2911 = vmatprep.subr.bf16.mxu0 0
    %2912 = vmatpush1.bf16.msra.mxu0 0
    %2913 = vmatprep.subr.bf16.mxu0 0
    %2914 = vmatpush1.bf16.msra.mxu0 0
    %2915 = vmatprep.subr.bf16.mxu0 0
    %2916 = vmatpush1.bf16.msra.mxu0 0
    %2917 = vmatprep.subr.bf16.mxu0 0
    %2918 = vmatpush1.bf16.msra.mxu0 0
    %2919 = vmatprep.mubr.bf16.mxu0 0
    %2920 = vmatmul.mubr.bf16.gmra.mrb[0].mxu0 %v2885
    %v2921 = vpop.f32.mrb[0].mxu0
    %v2922 = vadd.f32 0.0, %v2921
    %v2923 = vpop.f32.mrb[0].mxu0
    %v2924 = vadd.f32 0.0, %v2923
    %v2925 = vpop.f32.mrb[0].mxu0
    %v2926 = vpop.f32.mrb[0].mxu0
    %2927 = vdwg.mxu0
    %2928 = vmatprep.subr.bf16.mxu0 %v2849
    %2929 = vmatpush1.bf16.msra.mxu0 %v2848
    %2930 = vmatprep.subr.bf16.mxu0 %v2853
    %2931 = vmatpush1.bf16.msra.mxu0 %v2852
    %2932 = vmatprep.subr.bf16.mxu0 %v2857
    %2933 = vmatpush1.bf16.msra.mxu0 %v2856
    %2934 = vmatprep.subr.bf16.mxu0 %v2861
    %2935 = vmatpush1.bf16.msra.mxu0 %v2860
    %2936 = vmatprep.subr.bf16.mxu0 %v2865
    %2937 = vmatpush1.bf16.msra.mxu0 %v2864
    %2938 = vmatprep.subr.bf16.mxu0 %v2869
    %2939 = vmatpush1.bf16.msra.mxu0 %v2868
    %2940 = vmatprep.subr.bf16.mxu0 %v2873
    %2941 = vmatpush1.bf16.msra.mxu0 %v2872
    %2942 = vmatprep.subr.bf16.mxu0 %v2877
    %2943 = vmatpush1.bf16.msra.mxu0 %v2876
    %2944 = vmatprep.subr.bf16.mxu0 0
    %2945 = vmatpush1.bf16.msra.mxu0 0
    %2946 = vmatprep.subr.bf16.mxu0 0
    %2947 = vmatpush1.bf16.msra.mxu0 0
    %2948 = vmatprep.subr.bf16.mxu0 0
    %2949 = vmatpush1.bf16.msra.mxu0 0
    %2950 = vmatprep.subr.bf16.mxu0 0
    %2951 = vmatpush1.bf16.msra.mxu0 0
    %2952 = vmatprep.subr.bf16.mxu0 0
    %2953 = vmatpush1.bf16.msra.mxu0 0
    %2954 = vmatprep.subr.bf16.mxu0 0
    %2955 = vmatpush1.bf16.msra.mxu0 0
    %2956 = vmatprep.subr.bf16.mxu0 0
    %2957 = vmatpush1.bf16.msra.mxu0 0
    %2958 = vmatprep.subr.bf16.mxu0 0
    %2959 = vmatpush1.bf16.msra.mxu0 0
    %2960 = vmatprep.mubr.bf16.mxu0 0
    %2961 = vmatmul.mubr.bf16.gmra.mrb[0].mxu0 %v2885
    %v2962 = vpop.f32.mrb[0].mxu0
    %v2963 = vadd.f32 0.0, %v2962
    %v2964 = vpop.f32.mrb[0].mxu0
    %v2965 = vadd.f32 0.0, %v2964
    %v2966 = vpop.f32.mrb[0].mxu0
    %v2967 = vpop.f32.mrb[0].mxu0
    %2968 = vdwg.mxu0
    %v2973 = vrot.slane %v2922, 3
    %v2974 = vrot.slane %v2924, 3
    %v2975 = vrot.slane %v2963, 3
    %v2976 = vrot.slane %v2965, 3
    %v2977 = vrot.slane %v2922, 4
    %v2978 = vrot.slane %v2924, 4
    %v2979 = vrot.slane %v2963, 4
    %v2980 = vrot.slane %v2965, 4
    %v2989 = vadd.f32 %v1912, %v2973
    %v2990 = vadd.f32 %v1914, %v2974
    %v2991 = vadd.f32 %v1955, %v2975
    %v2992 = vadd.f32 %v1957, %v2976
    %v2993 = vadd.f32 %v1916, %v2977
    %v2994 = vadd.f32 %v1918, %v2978
    %v2995 = vadd.f32 %v1959, %v2979
    %v2996 = vadd.f32 %v1961, %v2980
    %v2997 = vxor.u32 %v2989, 2147483648
    %v2998 = vxor.u32 %v2993, 2147483648
    %v2999 = vmul.f32 %v2997, 1.442695
    %v3000 = vpow.pop %v2999
    %v3001 = vmul.f32 %v2998, 1.442695
    %v3002 = vpow.pop %v3001
    %v3003 = vadd.f32 %v3000, 1.0
    %v3004 = vadd.f32 %v3002, 1.0
    %v3005 = vrcp.pop %v3003
    %v3006 = vmul.f32 1.0, %v3005
    %v3007 = vrcp.pop %v3004
    %v3008 = vmul.f32 1.0, %v3007
    %v3009 = vxor.u32 %v2990, 2147483648
    %v3010 = vxor.u32 %v2994, 2147483648
    %v3011 = vmul.f32 %v3009, 1.442695
    %v3012 = vpow.pop %v3011
    %v3013 = vmul.f32 %v3010, 1.442695
    %v3014 = vpow.pop %v3013
    %v3015 = vadd.f32 %v3012, 1.0
    %v3016 = vadd.f32 %v3014, 1.0
    %v3017 = vrcp.pop %v3015
    %v3018 = vmul.f32 1.0, %v3017
    %v3019 = vrcp.pop %v3016
    %v3020 = vmul.f32 1.0, %v3019
    %v3021 = vtanh.pop %v2991
    %v3022 = vtanh.pop %v2995
    %v3023 = vxor.u32 %v2992, 2147483648
    %v3024 = vxor.u32 %v2996, 2147483648
    %v3025 = vmul.f32 %v3023, 1.442695
    %v3026 = vpow.pop %v3025
    %v3027 = vmul.f32 %v3024, 1.442695
    %v3028 = vpow.pop %v3027
    %v3029 = vadd.f32 %v3026, 1.0
    %v3030 = vadd.f32 %v3028, 1.0
    %v3031 = vrcp.pop %v3029
    %v3032 = vmul.f32 1.0, %v3031
    %v3033 = vrcp.pop %v3030
    %v3034 = vmul.f32 1.0, %v3033
    %v3037 = vrot.slane %v2836, 7
    %v3038 = vrot.slane %v2837, 7
    %v3041 = vmul.f32 %v3018, %v3037
    %v3042 = vmul.f32 %v3020, %v3038
    %v3043 = vmul.f32 %v3006, %v3021
    %v3044 = vmul.f32 %v3008, %v3022
    %v3045 = vadd.f32 %v3041, %v3043
    %v3046 = vadd.f32 %v3042, %v3044
    %v3047 = vtanh.pop %v3045
    %v3048 = vtanh.pop %v3046
    %v3049 = vmul.f32 %v3032, %v3047
    %v3050 = vmul.f32 %v3034, %v3048
    %3051 = vst [vmem:[#allocation4] sm:$0x20] %v3049
    %3052 = vst [vmem:[#allocation4 + $0x8] sm:$0x20] %v3050
    %v3053 = vpack.c.bf16 %v3049, %v3049
    %v3054 = vpack.c.bf16 %v3050, %v3050
    %v3055 = vld [vmem:[%s2015] sm:$0xff]
    %v3056 = vld [vmem:[%s2015 + $0x8] sm:$0xff]
    %v3057 = vld [vmem:[%s2015 + $0x10] sm:$0xff]
    %v3058 = vld [vmem:[%s2015 + $0x18] sm:$0xff]
    %v3059 = vld [vmem:[%s2015 + $0x20] sm:$0xff]
    %v3060 = vld [vmem:[%s2015 + $0x28] sm:$0xff]
    %v3061 = vld [vmem:[%s2015 + $0x30] sm:$0xff]
    %v3062 = vld [vmem:[%s2015 + $0x38] sm:$0xff]
    %v3063 = vld [vmem:[%s2015 + $0x40] sm:$0xff]
    %v3064 = vld [vmem:[%s2015 + $0x48] sm:$0xff]
    %v3065 = vld [vmem:[%s2015 + $0x50] sm:$0xff]
    %v3066 = vld [vmem:[%s2015 + $0x58] sm:$0xff]
    %v3067 = vld [vmem:[%s2015 + $0x60] sm:$0xff]
    %v3068 = vld [vmem:[%s2015 + $0x68] sm:$0xff]
    %v3069 = vld [vmem:[%s2015 + $0x70] sm:$0xff]
    %v3070 = vld [vmem:[%s2015 + $0x78] sm:$0xff]
    %v3071 = vld [vmem:[%s2015 + $0x80] sm:$0xff]
    %v3072 = vld [vmem:[%s2015 + $0x88] sm:$0xff]
    %v3073 = vld [vmem:[%s2015 + $0x90] sm:$0xff]
    %v3074 = vld [vmem:[%s2015 + $0x98] sm:$0xff]
    %v3075 = vld [vmem:[%s2015 + $0xa0] sm:$0xff]
    %v3076 = vld [vmem:[%s2015 + $0xa8] sm:$0xff]
    %v3077 = vld [vmem:[%s2015 + $0xb0] sm:$0xff]
    %v3078 = vld [vmem:[%s2015 + $0xb8] sm:$0xff]
    %v3079 = vld [vmem:[%s2015 + $0xc0] sm:$0xff]
    %v3080 = vld [vmem:[%s2015 + $0xc8] sm:$0xff]
    %v3081 = vld [vmem:[%s2015 + $0xd0] sm:$0xff]
    %v3082 = vld [vmem:[%s2015 + $0xd8] sm:$0xff]
    %v3083 = vld [vmem:[%s2015 + $0xe0] sm:$0xff]
    %v3084 = vld [vmem:[%s2015 + $0xe8] sm:$0xff]
    %v3085 = vld [vmem:[%s2015 + $0xf0] sm:$0xff]
    %v3086 = vld [vmem:[%s2015 + $0xf8] sm:$0xff]
    %v3089 = vunpack.c.l.b16 %v3053
    %v3090 = vunpack.c.l.b16 %v3054
    %v3091 = vrot.slane %v3089, 5
    %v3092 = vrot.slane %v3090, 4
    %v3093 = vsel %vm398, %v3092, %v3091
    %v3094 = vpack.c.b16 %v3093, %v3093
    %3096 = vmatprep.subr.bf16.mxu0 %v3056
    %3097 = vmatpush1.bf16.msra.mxu0 %v3055
    %3098 = vmatprep.subr.bf16.mxu0 %v3060
    %3099 = vmatpush1.bf16.msra.mxu0 %v3059
    %3100 = vmatprep.subr.bf16.mxu0 %v3064
    %3101 = vmatpush1.bf16.msra.mxu0 %v3063
    %3102 = vmatprep.subr.bf16.mxu0 %v3068
    %3103 = vmatpush1.bf16.msra.mxu0 %v3067
    %3104 = vmatprep.subr.bf16.mxu0 %v3072
    %3105 = vmatpush1.bf16.msra.mxu0 %v3071
    %3106 = vmatprep.subr.bf16.mxu0 %v3076
    %3107 = vmatpush1.bf16.msra.mxu0 %v3075
    %3108 = vmatprep.subr.bf16.mxu0 %v3080
    %3109 = vmatpush1.bf16.msra.mxu0 %v3079
    %3110 = vmatprep.subr.bf16.mxu0 %v3084
    %3111 = vmatpush1.bf16.msra.mxu0 %v3083
    %3112 = vmatprep.subr.bf16.mxu0 0
    %3113 = vmatpush1.bf16.msra.mxu0 0
    %3114 = vmatprep.subr.bf16.mxu0 0
    %3115 = vmatpush1.bf16.msra.mxu0 0
    %3116 = vmatprep.subr.bf16.mxu0 0
    %3117 = vmatpush1.bf16.msra.mxu0 0
    %3118 = vmatprep.subr.bf16.mxu0 0
    %3119 = vmatpush1.bf16.msra.mxu0 0
    %3120 = vmatprep.subr.bf16.mxu0 0
    %3121 = vmatpush1.bf16.msra.mxu0 0
    %3122 = vmatprep.subr.bf16.mxu0 0
    %3123 = vmatpush1.bf16.msra.mxu0 0
    %3124 = vmatprep.subr.bf16.mxu0 0
    %3125 = vmatpush1.bf16.msra.mxu0 0
    %3126 = vmatprep.subr.bf16.mxu0 0
    %3127 = vmatpush1.bf16.msra.mxu0 0
    %3128 = vmatprep.mubr.bf16.mxu0 0
    %3129 = vmatmul.mubr.bf16.gmra.mrb[0].mxu0 %v3094
    %v3130 = vpop.f32.mrb[0].mxu0
    %v3131 = vadd.f32 0.0, %v3130
    %v3132 = vpop.f32.mrb[0].mxu0
    %v3133 = vadd.f32 0.0, %v3132
    %v3134 = vpop.f32.mrb[0].mxu0
    %v3135 = vpop.f32.mrb[0].mxu0
    %3136 = vdwg.mxu0
    %3137 = vmatprep.subr.bf16.mxu0 %v3058
    %3138 = vmatpush1.bf16.msra.mxu0 %v3057
    %3139 = vmatprep.subr.bf16.mxu0 %v3062
    %3140 = vmatpush1.bf16.msra.mxu0 %v3061
    %3141 = vmatprep.subr.bf16.mxu0 %v3066
    %3142 = vmatpush1.bf16.msra.mxu0 %v3065
    %3143 = vmatprep.subr.bf16.mxu0 %v3070
    %3144 = vmatpush1.bf16.msra.mxu0 %v3069
    %3145 = vmatprep.subr.bf16.mxu0 %v3074
    %3146 = vmatpush1.bf16.msra.mxu0 %v3073
    %3147 = vmatprep.subr.bf16.mxu0 %v3078
    %3148 = vmatpush1.bf16.msra.mxu0 %v3077
    %3149 = vmatprep.subr.bf16.mxu0 %v3082
    %3150 = vmatpush1.bf16.msra.mxu0 %v3081
    %3151 = vmatprep.subr.bf16.mxu0 %v3086
    %3152 = vmatpush1.bf16.msra.mxu0 %v3085
    %3153 = vmatprep.subr.bf16.mxu0 0
    %3154 = vmatpush1.bf16.msra.mxu0 0
    %3155 = vmatprep.subr.bf16.mxu0 0
    %3156 = vmatpush1.bf16.msra.mxu0 0
    %3157 = vmatprep.subr.bf16.mxu0 0
    %3158 = vmatpush1.bf16.msra.mxu0 0
    %3159 = vmatprep.subr.bf16.mxu0 0
    %3160 = vmatpush1.bf16.msra.mxu0 0
    %3161 = vmatprep.subr.bf16.mxu0 0
    %3162 = vmatpush1.bf16.msra.mxu0 0
    %3163 = vmatprep.subr.bf16.mxu0 0
    %3164 = vmatpush1.bf16.msra.mxu0 0
    %3165 = vmatprep.subr.bf16.mxu0 0
    %3166 = vmatpush1.bf16.msra.mxu0 0
    %3167 = vmatprep.subr.bf16.mxu0 0
    %3168 = vmatpush1.bf16.msra.mxu0 0
    %3169 = vmatprep.mubr.bf16.mxu0 0
    %3170 = vmatmul.mubr.bf16.gmra.mrb[0].mxu0 %v3094
    %v3171 = vpop.f32.mrb[0].mxu0
    %v3172 = vadd.f32 0.0, %v3171
    %v3173 = vpop.f32.mrb[0].mxu0
    %v3174 = vadd.f32 0.0, %v3173
    %v3175 = vpop.f32.mrb[0].mxu0
    %v3176 = vpop.f32.mrb[0].mxu0
    %3177 = vdwg.mxu0
    %v3182 = vrot.slane %v3131, 2
    %v3183 = vrot.slane %v3133, 2
    %v3184 = vrot.slane %v3172, 2
    %v3185 = vrot.slane %v3174, 2
    %v3186 = vrot.slane %v3131, 3
    %v3187 = vrot.slane %v3133, 3
    %v3188 = vrot.slane %v3172, 3
    %v3189 = vrot.slane %v3174, 3
    %v3198 = vadd.f32 %v1912, %v3182
    %v3199 = vadd.f32 %v1914, %v3183
    %v3200 = vadd.f32 %v1955, %v3184
    %v3201 = vadd.f32 %v1957, %v3185
    %v3202 = vadd.f32 %v1916, %v3186
    %v3203 = vadd.f32 %v1918, %v3187
    %v3204 = vadd.f32 %v1959, %v3188
    %v3205 = vadd.f32 %v1961, %v3189
    %v3206 = vxor.u32 %v3198, 2147483648
    %v3207 = vxor.u32 %v3202, 2147483648
    %v3208 = vmul.f32 %v3206, 1.442695
    %v3209 = vpow.pop %v3208
    %v3210 = vmul.f32 %v3207, 1.442695
    %v3211 = vpow.pop %v3210
    %v3212 = vadd.f32 %v3209, 1.0
    %v3213 = vadd.f32 %v3211, 1.0
    %v3214 = vrcp.pop %v3212
    %v3215 = vmul.f32 1.0, %v3214
    %v3216 = vrcp.pop %v3213
    %v3217 = vmul.f32 1.0, %v3216
    %v3218 = vxor.u32 %v3199, 2147483648
    %v3219 = vxor.u32 %v3203, 2147483648
    %v3220 = vmul.f32 %v3218, 1.442695
    %v3221 = vpow.pop %v3220
    %v3222 = vmul.f32 %v3219, 1.442695
    %v3223 = vpow.pop %v3222
    %v3224 = vadd.f32 %v3221, 1.0
    %v3225 = vadd.f32 %v3223, 1.0
    %v3226 = vrcp.pop %v3224
    %v3227 = vmul.f32 1.0, %v3226
    %v3228 = vrcp.pop %v3225
    %v3229 = vmul.f32 1.0, %v3228
    %v3230 = vtanh.pop %v3200
    %v3231 = vtanh.pop %v3204
    %v3232 = vxor.u32 %v3201, 2147483648
    %v3233 = vxor.u32 %v3205, 2147483648
    %v3234 = vmul.f32 %v3232, 1.442695
    %v3235 = vpow.pop %v3234
    %v3236 = vmul.f32 %v3233, 1.442695
    %v3237 = vpow.pop %v3236
    %v3238 = vadd.f32 %v3235, 1.0
    %v3239 = vadd.f32 %v3237, 1.0
    %v3240 = vrcp.pop %v3238
    %v3241 = vmul.f32 1.0, %v3240
    %v3242 = vrcp.pop %v3239
    %v3243 = vmul.f32 1.0, %v3242
    %v3246 = vrot.slane %v3045, 7
    %v3247 = vrot.slane %v3046, 7
    %v3250 = vmul.f32 %v3227, %v3246
    %v3251 = vmul.f32 %v3229, %v3247
    %v3252 = vmul.f32 %v3215, %v3230
    %v3253 = vmul.f32 %v3217, %v3231
    %v3254 = vadd.f32 %v3250, %v3252
    %v3255 = vadd.f32 %v3251, %v3253
    %v3256 = vtanh.pop %v3254
    %v3257 = vtanh.pop %v3255
    %v3258 = vmul.f32 %v3241, %v3256
    %v3259 = vmul.f32 %v3243, %v3257
    %3260 = vst [vmem:[#allocation4] sm:$0x40] %v3258
    %3261 = vst [vmem:[#allocation4 + $0x8] sm:$0x40] %v3259
    %v3262 = vpack.c.bf16 %v3258, %v3258
    %v3263 = vpack.c.bf16 %v3259, %v3259
    %v3264 = vld [vmem:[%s2015] sm:$0xff]
    %v3265 = vld [vmem:[%s2015 + $0x8] sm:$0xff]
    %v3266 = vld [vmem:[%s2015 + $0x10] sm:$0xff]
    %v3267 = vld [vmem:[%s2015 + $0x18] sm:$0xff]
    %v3268 = vld [vmem:[%s2015 + $0x20] sm:$0xff]
    %v3269 = vld [vmem:[%s2015 + $0x28] sm:$0xff]
    %v3270 = vld [vmem:[%s2015 + $0x30] sm:$0xff]
    %v3271 = vld [vmem:[%s2015 + $0x38] sm:$0xff]
    %v3272 = vld [vmem:[%s2015 + $0x40] sm:$0xff]
    %v3273 = vld [vmem:[%s2015 + $0x48] sm:$0xff]
    %v3274 = vld [vmem:[%s2015 + $0x50] sm:$0xff]
    %v3275 = vld [vmem:[%s2015 + $0x58] sm:$0xff]
    %v3276 = vld [vmem:[%s2015 + $0x60] sm:$0xff]
    %v3277 = vld [vmem:[%s2015 + $0x68] sm:$0xff]
    %v3278 = vld [vmem:[%s2015 + $0x70] sm:$0xff]
    %v3279 = vld [vmem:[%s2015 + $0x78] sm:$0xff]
    %v3280 = vld [vmem:[%s2015 + $0x80] sm:$0xff]
    %v3281 = vld [vmem:[%s2015 + $0x88] sm:$0xff]
    %v3282 = vld [vmem:[%s2015 + $0x90] sm:$0xff]
    %v3283 = vld [vmem:[%s2015 + $0x98] sm:$0xff]
    %v3284 = vld [vmem:[%s2015 + $0xa0] sm:$0xff]
    %v3285 = vld [vmem:[%s2015 + $0xa8] sm:$0xff]
    %v3286 = vld [vmem:[%s2015 + $0xb0] sm:$0xff]
    %v3287 = vld [vmem:[%s2015 + $0xb8] sm:$0xff]
    %v3288 = vld [vmem:[%s2015 + $0xc0] sm:$0xff]
    %v3289 = vld [vmem:[%s2015 + $0xc8] sm:$0xff]
    %v3290 = vld [vmem:[%s2015 + $0xd0] sm:$0xff]
    %v3291 = vld [vmem:[%s2015 + $0xd8] sm:$0xff]
    %v3292 = vld [vmem:[%s2015 + $0xe0] sm:$0xff]
    %v3293 = vld [vmem:[%s2015 + $0xe8] sm:$0xff]
    %v3294 = vld [vmem:[%s2015 + $0xf0] sm:$0xff]
    %v3295 = vld [vmem:[%s2015 + $0xf8] sm:$0xff]
    %v3298 = vunpack.c.l.b16 %v3262
    %v3299 = vunpack.c.l.b16 %v3263
    %v3300 = vrot.slane %v3298, 6
    %v3301 = vrot.slane %v3299, 5
    %v3302 = vsel %vm398, %v3301, %v3300
    %v3303 = vpack.c.b16 %v3302, %v3302
    %3305 = vmatprep.subr.bf16.mxu0 %v3265
    %3306 = vmatpush1.bf16.msra.mxu0 %v3264
    %3307 = vmatprep.subr.bf16.mxu0 %v3269
    %3308 = vmatpush1.bf16.msra.mxu0 %v3268
    %3309 = vmatprep.subr.bf16.mxu0 %v3273
    %3310 = vmatpush1.bf16.msra.mxu0 %v3272
    %3311 = vmatprep.subr.bf16.mxu0 %v3277
    %3312 = vmatpush1.bf16.msra.mxu0 %v3276
    %3313 = vmatprep.subr.bf16.mxu0 %v3281
    %3314 = vmatpush1.bf16.msra.mxu0 %v3280
    %3315 = vmatprep.subr.bf16.mxu0 %v3285
    %3316 = vmatpush1.bf16.msra.mxu0 %v3284
    %3317 = vmatprep.subr.bf16.mxu0 %v3289
    %3318 = vmatpush1.bf16.msra.mxu0 %v3288
    %3319 = vmatprep.subr.bf16.mxu0 %v3293
    %3320 = vmatpush1.bf16.msra.mxu0 %v3292
    %3321 = vmatprep.subr.bf16.mxu0 0
    %3322 = vmatpush1.bf16.msra.mxu0 0
    %3323 = vmatprep.subr.bf16.mxu0 0
    %3324 = vmatpush1.bf16.msra.mxu0 0
    %3325 = vmatprep.subr.bf16.mxu0 0
    %3326 = vmatpush1.bf16.msra.mxu0 0
    %3327 = vmatprep.subr.bf16.mxu0 0
    %3328 = vmatpush1.bf16.msra.mxu0 0
    %3329 = vmatprep.subr.bf16.mxu0 0
    %3330 = vmatpush1.bf16.msra.mxu0 0
    %3331 = vmatprep.subr.bf16.mxu0 0
    %3332 = vmatpush1.bf16.msra.mxu0 0
    %3333 = vmatprep.subr.bf16.mxu0 0
    %3334 = vmatpush1.bf16.msra.mxu0 0
    %3335 = vmatprep.subr.bf16.mxu0 0
    %3336 = vmatpush1.bf16.msra.mxu0 0
    %3337 = vmatprep.mubr.bf16.mxu0 0
    %3338 = vmatmul.mubr.bf16.gmra.mrb[0].mxu0 %v3303
    %v3339 = vpop.f32.mrb[0].mxu0
    %v3340 = vadd.f32 0.0, %v3339
    %v3341 = vpop.f32.mrb[0].mxu0
    %v3342 = vadd.f32 0.0, %v3341
    %v3343 = vpop.f32.mrb[0].mxu0
    %v3344 = vpop.f32.mrb[0].mxu0
    %3345 = vdwg.mxu0
    %3346 = vmatprep.subr.bf16.mxu0 %v3267
    %3347 = vmatpush1.bf16.msra.mxu0 %v3266
    %3348 = vmatprep.subr.bf16.mxu0 %v3271
    %3349 = vmatpush1.bf16.msra.mxu0 %v3270
    %3350 = vmatprep.subr.bf16.mxu0 %v3275
    %3351 = vmatpush1.bf16.msra.mxu0 %v3274
    %3352 = vmatprep.subr.bf16.mxu0 %v3279
    %3353 = vmatpush1.bf16.msra.mxu0 %v3278
    %3354 = vmatprep.subr.bf16.mxu0 %v3283
    %3355 = vmatpush1.bf16.msra.mxu0 %v3282
    %3356 = vmatprep.subr.bf16.mxu0 %v3287
    %3357 = vmatpush1.bf16.msra.mxu0 %v3286
    %3358 = vmatprep.subr.bf16.mxu0 %v3291
    %3359 = vmatpush1.bf16.msra.mxu0 %v3290
    %3360 = vmatprep.subr.bf16.mxu0 %v3295
    %3361 = vmatpush1.bf16.msra.mxu0 %v3294
    %3362 = vmatprep.subr.bf16.mxu0 0
    %3363 = vmatpush1.bf16.msra.mxu0 0
    %3364 = vmatprep.subr.bf16.mxu0 0
    %3365 = vmatpush1.bf16.msra.mxu0 0
    %3366 = vmatprep.subr.bf16.mxu0 0
    %3367 = vmatpush1.bf16.msra.mxu0 0
    %3368 = vmatprep.subr.bf16.mxu0 0
    %3369 = vmatpush1.bf16.msra.mxu0 0
    %3370 = vmatprep.subr.bf16.mxu0 0
    %3371 = vmatpush1.bf16.msra.mxu0 0
    %3372 = vmatprep.subr.bf16.mxu0 0
    %3373 = vmatpush1.bf16.msra.mxu0 0
    %3374 = vmatprep.subr.bf16.mxu0 0
    %3375 = vmatpush1.bf16.msra.mxu0 0
    %3376 = vmatprep.subr.bf16.mxu0 0
    %3377 = vmatpush1.bf16.msra.mxu0 0
    %3378 = vmatprep.mubr.bf16.mxu0 0
    %3379 = vmatmul.mubr.bf16.gmra.mrb[0].mxu0 %v3303
    %v3380 = vpop.f32.mrb[0].mxu0
    %v3381 = vadd.f32 0.0, %v3380
    %v3382 = vpop.f32.mrb[0].mxu0
    %v3383 = vadd.f32 0.0, %v3382
    %v3384 = vpop.f32.mrb[0].mxu0
    %v3385 = vpop.f32.mrb[0].mxu0
    %3386 = vdwg.mxu0
    %v3391 = vrot.slane %v3340, 1
    %v3392 = vrot.slane %v3342, 1
    %v3393 = vrot.slane %v3381, 1
    %v3394 = vrot.slane %v3383, 1
    %v3395 = vrot.slane %v3340, 2
    %v3396 = vrot.slane %v3342, 2
    %v3397 = vrot.slane %v3381, 2
    %v3398 = vrot.slane %v3383, 2
    %v3407 = vadd.f32 %v1912, %v3391
    %v3408 = vadd.f32 %v1914, %v3392
    %v3409 = vadd.f32 %v1955, %v3393
    %v3410 = vadd.f32 %v1957, %v3394
    %v3411 = vadd.f32 %v1916, %v3395
    %v3412 = vadd.f32 %v1918, %v3396
    %v3413 = vadd.f32 %v1959, %v3397
    %v3414 = vadd.f32 %v1961, %v3398
    %v3415 = vxor.u32 %v3407, 2147483648
    %v3416 = vxor.u32 %v3411, 2147483648
    %v3417 = vmul.f32 %v3415, 1.442695
    %v3418 = vpow.pop %v3417
    %v3419 = vmul.f32 %v3416, 1.442695
    %v3420 = vpow.pop %v3419
    %v3421 = vadd.f32 %v3418, 1.0
    %v3422 = vadd.f32 %v3420, 1.0
    %v3423 = vrcp.pop %v3421
    %v3424 = vmul.f32 1.0, %v3423
    %v3425 = vrcp.pop %v3422
    %v3426 = vmul.f32 1.0, %v3425
    %v3427 = vxor.u32 %v3408, 2147483648
    %v3428 = vxor.u32 %v3412, 2147483648
    %v3429 = vmul.f32 %v3427, 1.442695
    %v3430 = vpow.pop %v3429
    %v3431 = vmul.f32 %v3428, 1.442695
    %v3432 = vpow.pop %v3431
    %v3433 = vadd.f32 %v3430, 1.0
    %v3434 = vadd.f32 %v3432, 1.0
    %v3435 = vrcp.pop %v3433
    %v3436 = vmul.f32 1.0, %v3435
    %v3437 = vrcp.pop %v3434
    %v3438 = vmul.f32 1.0, %v3437
    %v3439 = vtanh.pop %v3409
    %v3440 = vtanh.pop %v3413
    %v3441 = vxor.u32 %v3410, 2147483648
    %v3442 = vxor.u32 %v3414, 2147483648
    %v3443 = vmul.f32 %v3441, 1.442695
    %v3444 = vpow.pop %v3443
    %v3445 = vmul.f32 %v3442, 1.442695
    %v3446 = vpow.pop %v3445
    %v3447 = vadd.f32 %v3444, 1.0
    %v3448 = vadd.f32 %v3446, 1.0
    %v3449 = vrcp.pop %v3447
    %v3450 = vmul.f32 1.0, %v3449
    %v3451 = vrcp.pop %v3448
    %v3452 = vmul.f32 1.0, %v3451
    %v3455 = vrot.slane %v3254, 7
    %v3456 = vrot.slane %v3255, 7
    %v3459 = vmul.f32 %v3436, %v3455
    %v3460 = vmul.f32 %v3438, %v3456
    %v3461 = vmul.f32 %v3424, %v3439
    %v3462 = vmul.f32 %v3426, %v3440
    %v3463 = vadd.f32 %v3459, %v3461
    %v3464 = vadd.f32 %v3460, %v3462
    %v3465 = vtanh.pop %v3463
    %v3466 = vtanh.pop %v3464
    %v3467 = vmul.f32 %v3450, %v3465
    %v3468 = vmul.f32 %v3452, %v3466
    %3469 = vst [vmem:[#allocation4] sm:$0x80] %v3467
    %3470 = vst [vmem:[#allocation4 + $0x8] sm:$0x80] %v3468
    %v3471 = vld [vmem:[#allocation4] sm:$0xff]
    %v3472 = vld [vmem:[#allocation4 + $0x8] sm:$0xff]
    %s3473 = sshll.u32 %s164, 4
    %3474 = dma.done %s88, %s3473
    %s3475 = scalar_lea.vmem %s1, 8
    %v3476 = vld [vmem:[%s3475] sm:$0xf]
    %v3477 = vpack.c.bf16 %v3472, %v3471
    %v3478 = vld [vmem:[%s87] sm:$0xff]
    %v3479 = vld [vmem:[%s87 + $0x8] sm:$0xff]
    %v3480 = vld [vmem:[%s87 + $0x10] sm:$0xff]
    %v3481 = vld [vmem:[%s87 + $0x18] sm:$0xff]
    %v3482 = vld [vmem:[%s87 + $0x20] sm:$0xff]
    %v3483 = vld [vmem:[%s87 + $0x28] sm:$0xff]
    %v3484 = vld [vmem:[%s87 + $0x30] sm:$0xff]
    %v3485 = vld [vmem:[%s87 + $0x38] sm:$0xff]
    %v3486 = vld [vmem:[%s87 + $0x40] sm:$0xff]
    %v3487 = vld [vmem:[%s87 + $0x48] sm:$0xff]
    %v3488 = vld [vmem:[%s87 + $0x50] sm:$0xff]
    %v3489 = vld [vmem:[%s87 + $0x58] sm:$0xff]
    %v3490 = vld [vmem:[%s87 + $0x60] sm:$0xff]
    %v3491 = vld [vmem:[%s87 + $0x68] sm:$0xff]
    %v3492 = vld [vmem:[%s87 + $0x70] sm:$0xff]
    %v3493 = vld [vmem:[%s87 + $0x78] sm:$0xff]
    %v3494 = vld [vmem:[%s87 + $0x80] sm:$0xff]
    %v3495 = vld [vmem:[%s87 + $0x88] sm:$0xff]
    %v3496 = vld [vmem:[%s87 + $0x90] sm:$0xff]
    %v3497 = vld [vmem:[%s87 + $0x98] sm:$0xff]
    %v3498 = vld [vmem:[%s87 + $0xa0] sm:$0xff]
    %v3499 = vld [vmem:[%s87 + $0xa8] sm:$0xff]
    %v3500 = vld [vmem:[%s87 + $0xb0] sm:$0xff]
    %v3501 = vld [vmem:[%s87 + $0xb8] sm:$0xff]
    %v3502 = vld [vmem:[%s87 + $0xc0] sm:$0xff]
    %v3503 = vld [vmem:[%s87 + $0xc8] sm:$0xff]
    %v3504 = vld [vmem:[%s87 + $0xd0] sm:$0xff]
    %v3505 = vld [vmem:[%s87 + $0xd8] sm:$0xff]
    %v3506 = vld [vmem:[%s87 + $0xe0] sm:$0xff]
    %v3507 = vld [vmem:[%s87 + $0xe8] sm:$0xff]
    %v3508 = vld [vmem:[%s87 + $0xf0] sm:$0xff]
    %v3509 = vld [vmem:[%s87 + $0xf8] sm:$0xff]
    %v3511 = vlaneseq
    %v3512 = vshrl.u32 %v3511, 7
    %v3513 = vsub.s32 0, %v3512
    %v3514 = vrot.slane %v3476, %v3513
    %v3515 = vlaneseq
    %v3516 = vshrl.u32 %v3515, 7
    %v3517 = vsub.s32 1, %v3516
    %v3518 = vrot.slane %v3476, %v3517
    %v3519 = vlaneseq
    %v3520 = vshrl.u32 %v3519, 7
    %v3521 = vsub.s32 2, %v3520
    %v3522 = vrot.slane %v3476, %v3521
    %v3523 = vlaneseq
    %v3524 = vshrl.u32 %v3523, 7
    %v3525 = vsub.s32 3, %v3524
    %v3526 = vrot.slane %v3476, %v3525
    %3531 = vmatprep.subr.bf16.mxu0 %v3479
    %3532 = vmatpush1.bf16.msra.mxu0 %v3478
    %3533 = vmatprep.subr.bf16.mxu0 %v3483
    %3534 = vmatpush1.bf16.msra.mxu0 %v3482
    %3535 = vmatprep.subr.bf16.mxu0 %v3487
    %3536 = vmatpush1.bf16.msra.mxu0 %v3486
    %3537 = vmatprep.subr.bf16.mxu0 %v3491
    %3538 = vmatpush1.bf16.msra.mxu0 %v3490
    %3539 = vmatprep.subr.bf16.mxu0 %v3495
    %3540 = vmatpush1.bf16.msra.mxu0 %v3494
    %3541 = vmatprep.subr.bf16.mxu0 %v3499
    %3542 = vmatpush1.bf16.msra.mxu0 %v3498
    %3543 = vmatprep.subr.bf16.mxu0 %v3503
    %3544 = vmatpush1.bf16.msra.mxu0 %v3502
    %3545 = vmatprep.subr.bf16.mxu0 %v3507
    %3546 = vmatpush1.bf16.msra.mxu0 %v3506
    %3547 = vmatprep.subr.bf16.mxu0 0
    %3548 = vmatpush1.bf16.msra.mxu0 0
    %3549 = vmatprep.subr.bf16.mxu0 0
    %3550 = vmatpush1.bf16.msra.mxu0 0
    %3551 = vmatprep.subr.bf16.mxu0 0
    %3552 = vmatpush1.bf16.msra.mxu0 0
    %3553 = vmatprep.subr.bf16.mxu0 0
    %3554 = vmatpush1.bf16.msra.mxu0 0
    %3555 = vmatprep.subr.bf16.mxu0 0
    %3556 = vmatpush1.bf16.msra.mxu0 0
    %3557 = vmatprep.subr.bf16.mxu0 0
    %3558 = vmatpush1.bf16.msra.mxu0 0
    %3559 = vmatprep.subr.bf16.mxu0 0
    %3560 = vmatpush1.bf16.msra.mxu0 0
    %3561 = vmatprep.subr.bf16.mxu0 0
    %3562 = vmatpush1.bf16.msra.mxu0 0
    %3563 = vmatprep.mubr.bf16.mxu0 0
    %3564 = vmatmul.mubr.bf16.gmra.mrb[0].mxu0 %v3477
    %v3565 = vpop.f32.mrb[0].mxu0
    %v3566 = vadd.f32 %v3514, %v3565
    %v3567 = vpop.f32.mrb[0].mxu0
    %v3568 = vadd.f32 %v3518, %v3567
    %v3569 = vpop.f32.mrb[0].mxu0
    %v3570 = vadd.f32 %v3514, %v3569
    %v3571 = vpop.f32.mrb[0].mxu0
    %v3572 = vadd.f32 %v3518, %v3571
    %3573 = vdwg.mxu0
    %3574 = vmatprep.subr.bf16.mxu0 %v3481
    %3575 = vmatpush1.bf16.msra.mxu0 %v3480
    %3576 = vmatprep.subr.bf16.mxu0 %v3485
    %3577 = vmatpush1.bf16.msra.mxu0 %v3484
    %3578 = vmatprep.subr.bf16.mxu0 %v3489
    %3579 = vmatpush1.bf16.msra.mxu0 %v3488
    %3580 = vmatprep.subr.bf16.mxu0 %v3493
    %3581 = vmatpush1.bf16.msra.mxu0 %v3492
    %3582 = vmatprep.subr.bf16.mxu0 %v3497
    %3583 = vmatpush1.bf16.msra.mxu0 %v3496
    %3584 = vmatprep.subr.bf16.mxu0 %v3501
    %3585 = vmatpush1.bf16.msra.mxu0 %v3500
    %3586 = vmatprep.subr.bf16.mxu0 %v3505
    %3587 = vmatpush1.bf16.msra.mxu0 %v3504
    %3588 = vmatprep.subr.bf16.mxu0 %v3509
    %3589 = vmatpush1.bf16.msra.mxu0 %v3508
    %3590 = vmatprep.subr.bf16.mxu0 0
    %3591 = vmatpush1.bf16.msra.mxu0 0
    %3592 = vmatprep.subr.bf16.mxu0 0
    %3593 = vmatpush1.bf16.msra.mxu0 0
    %3594 = vmatprep.subr.bf16.mxu0 0
    %3595 = vmatpush1.bf16.msra.mxu0 0
    %3596 = vmatprep.subr.bf16.mxu0 0
    %3597 = vmatpush1.bf16.msra.mxu0 0
    %3598 = vmatprep.subr.bf16.mxu0 0
    %3599 = vmatpush1.bf16.msra.mxu0 0
    %3600 = vmatprep.subr.bf16.mxu0 0
    %3601 = vmatpush1.bf16.msra.mxu0 0
    %3602 = vmatprep.subr.bf16.mxu0 0
    %3603 = vmatpush1.bf16.msra.mxu0 0
    %3604 = vmatprep.subr.bf16.mxu0 0
    %3605 = vmatpush1.bf16.msra.mxu0 0
    %3606 = vmatprep.mubr.bf16.mxu0 0
    %3607 = vmatmul.mubr.bf16.gmra.mrb[0].mxu0 %v3477
    %v3608 = vpop.f32.mrb[0].mxu0
    %v3609 = vadd.f32 %v3522, %v3608
    %v3610 = vpop.f32.mrb[0].mxu0
    %v3611 = vadd.f32 %v3526, %v3610
    %v3612 = vpop.f32.mrb[0].mxu0
    %v3613 = vadd.f32 %v3522, %v3612
    %v3614 = vpop.f32.mrb[0].mxu0
    %v3615 = vadd.f32 %v3526, %v3614
    %3616 = vdwg.mxu0
    %v3617 = vxor.u32 %v3566, 2147483648
    %v3618 = vxor.u32 %v3570, 2147483648
    %v3619 = vmul.f32 %v3617, 1.442695
    %v3620 = vpow.pop %v3619
    %v3621 = vmul.f32 %v3618, 1.442695
    %v3622 = vpow.pop %v3621
    %v3623 = vadd.f32 %v3620, 1.0
    %v3624 = vadd.f32 %v3622, 1.0
    %v3625 = vrcp.pop %v3623
    %v3626 = vmul.f32 1.0, %v3625
    %v3627 = vrcp.pop %v3624
    %v3628 = vmul.f32 1.0, %v3627
    %v3629 = vxor.u32 %v3568, 2147483648
    %v3630 = vxor.u32 %v3572, 2147483648
    %v3631 = vmul.f32 %v3629, 1.442695
    %v3632 = vpow.pop %v3631
    %v3633 = vmul.f32 %v3630, 1.442695
    %v3634 = vpow.pop %v3633
    %v3635 = vadd.f32 %v3632, 1.0
    %v3636 = vadd.f32 %v3634, 1.0
    %v3637 = vrcp.pop %v3635
    %v3638 = vmul.f32 1.0, %v3637
    %v3639 = vrcp.pop %v3636
    %v3640 = vmul.f32 1.0, %v3639
    %v3641 = vtanh.pop %v3609
    %v3642 = vtanh.pop %v3613
    %v3643 = vxor.u32 %v3611, 2147483648
    %v3644 = vxor.u32 %v3615, 2147483648
    %v3645 = vmul.f32 %v3643, 1.442695
    %v3646 = vpow.pop %v3645
    %v3647 = vmul.f32 %v3644, 1.442695
    %v3648 = vpow.pop %v3647
    %v3649 = vadd.f32 %v3646, 1.0
    %v3650 = vadd.f32 %v3648, 1.0
    %v3651 = vrcp.pop %v3649
    %v3652 = vmul.f32 1.0, %v3651
    %v3653 = vrcp.pop %v3650
    %v3654 = vmul.f32 1.0, %v3653
    %v3655 = vmul.f32 %v3638, 0.0
    %v3656 = vmul.f32 %v3640, 0.0
    %v3657 = vmul.f32 %v3626, %v3641
    %v3658 = vmul.f32 %v3628, %v3642
    %v3659 = vadd.f32 %v3655, %v3657
    %v3660 = vadd.f32 %v3656, %v3658
    %v3661 = vtanh.pop %v3659
    %v3662 = vtanh.pop %v3660
    %v3663 = vmul.f32 %v3652, %v3661
    %v3664 = vmul.f32 %v3654, %v3662
    %3665 = vst [vmem:[#allocation3] sm:$0x1] %v3663
    %3666 = vst [vmem:[#allocation3 + $0x8] sm:$0x1] %v3664
    %v3667 = vpack.c.bf16 %v3663, %v3663
    %v3668 = vpack.c.bf16 %v3664, %v3664
    %s3669 = scalar_lea.vmem [#allocation2], 1280
    %v3670 = vld [vmem:[%s3669] sm:$0xff]
    %v3671 = vld [vmem:[%s3669 + $0x8] sm:$0xff]
    %v3672 = vld [vmem:[%s3669 + $0x10] sm:$0xff]
    %v3673 = vld [vmem:[%s3669 + $0x18] sm:$0xff]
    %v3674 = vld [vmem:[%s3669 + $0x20] sm:$0xff]
    %v3675 = vld [vmem:[%s3669 + $0x28] sm:$0xff]
    %v3676 = vld [vmem:[%s3669 + $0x30] sm:$0xff]
    %v3677 = vld [vmem:[%s3669 + $0x38] sm:$0xff]
    %v3678 = vld [vmem:[%s3669 + $0x40] sm:$0xff]
    %v3679 = vld [vmem:[%s3669 + $0x48] sm:$0xff]
    %v3680 = vld [vmem:[%s3669 + $0x50] sm:$0xff]
    %v3681 = vld [vmem:[%s3669 + $0x58] sm:$0xff]
    %v3682 = vld [vmem:[%s3669 + $0x60] sm:$0xff]
    %v3683 = vld [vmem:[%s3669 + $0x68] sm:$0xff]
    %v3684 = vld [vmem:[%s3669 + $0x70] sm:$0xff]
    %v3685 = vld [vmem:[%s3669 + $0x78] sm:$0xff]
    %v3686 = vld [vmem:[%s3669 + $0x80] sm:$0xff]
    %v3687 = vld [vmem:[%s3669 + $0x88] sm:$0xff]
    %v3688 = vld [vmem:[%s3669 + $0x90] sm:$0xff]
    %v3689 = vld [vmem:[%s3669 + $0x98] sm:$0xff]
    %v3690 = vld [vmem:[%s3669 + $0xa0] sm:$0xff]
    %v3691 = vld [vmem:[%s3669 + $0xa8] sm:$0xff]
    %v3692 = vld [vmem:[%s3669 + $0xb0] sm:$0xff]
    %v3693 = vld [vmem:[%s3669 + $0xb8] sm:$0xff]
    %v3694 = vld [vmem:[%s3669 + $0xc0] sm:$0xff]
    %v3695 = vld [vmem:[%s3669 + $0xc8] sm:$0xff]
    %v3696 = vld [vmem:[%s3669 + $0xd0] sm:$0xff]
    %v3697 = vld [vmem:[%s3669 + $0xd8] sm:$0xff]
    %v3698 = vld [vmem:[%s3669 + $0xe0] sm:$0xff]
    %v3699 = vld [vmem:[%s3669 + $0xe8] sm:$0xff]
    %v3700 = vld [vmem:[%s3669 + $0xf0] sm:$0xff]
    %v3701 = vld [vmem:[%s3669 + $0xf8] sm:$0xff]
    %v3704 = vunpack.c.l.b16 %v3667
    %v3705 = vunpack.c.l.b16 %v3668
    %v3706 = vrot.slane %v3705, 7
    %v3707 = vsel %vm398, %v3706, %v3704
    %v3708 = vpack.c.b16 %v3707, %v3707
    %3710 = vmatprep.subr.bf16.mxu0 %v3671
    %3711 = vmatpush1.bf16.msra.mxu0 %v3670
    %3712 = vmatprep.subr.bf16.mxu0 %v3675
    %3713 = vmatpush1.bf16.msra.mxu0 %v3674
    %3714 = vmatprep.subr.bf16.mxu0 %v3679
    %3715 = vmatpush1.bf16.msra.mxu0 %v3678
    %3716 = vmatprep.subr.bf16.mxu0 %v3683
    %3717 = vmatpush1.bf16.msra.mxu0 %v3682
    %3718 = vmatprep.subr.bf16.mxu0 %v3687
    %3719 = vmatpush1.bf16.msra.mxu0 %v3686
    %3720 = vmatprep.subr.bf16.mxu0 %v3691
    %3721 = vmatpush1.bf16.msra.mxu0 %v3690
    %3722 = vmatprep.subr.bf16.mxu0 %v3695
    %3723 = vmatpush1.bf16.msra.mxu0 %v3694
    %3724 = vmatprep.subr.bf16.mxu0 %v3699
    %3725 = vmatpush1.bf16.msra.mxu0 %v3698
    %3726 = vmatprep.subr.bf16.mxu0 0
    %3727 = vmatpush1.bf16.msra.mxu0 0
    %3728 = vmatprep.subr.bf16.mxu0 0
    %3729 = vmatpush1.bf16.msra.mxu0 0
    %3730 = vmatprep.subr.bf16.mxu0 0
    %3731 = vmatpush1.bf16.msra.mxu0 0
    %3732 = vmatprep.subr.bf16.mxu0 0
    %3733 = vmatpush1.bf16.msra.mxu0 0
    %3734 = vmatprep.subr.bf16.mxu0 0
    %3735 = vmatpush1.bf16.msra.mxu0 0
    %3736 = vmatprep.subr.bf16.mxu0 0
    %3737 = vmatpush1.bf16.msra.mxu0 0
    %3738 = vmatprep.subr.bf16.mxu0 0
    %3739 = vmatpush1.bf16.msra.mxu0 0
    %3740 = vmatprep.subr.bf16.mxu0 0
    %3741 = vmatpush1.bf16.msra.mxu0 0
    %3742 = vmatprep.mubr.bf16.mxu0 0
    %3743 = vmatmul.mubr.bf16.gmra.mrb[0].mxu0 %v3708
    %v3744 = vpop.f32.mrb[0].mxu0
    %v3745 = vadd.f32 0.0, %v3744
    %v3746 = vpop.f32.mrb[0].mxu0
    %v3747 = vadd.f32 0.0, %v3746
    %v3748 = vpop.f32.mrb[0].mxu0
    %v3749 = vpop.f32.mrb[0].mxu0
    %3750 = vdwg.mxu0
    %3751 = vmatprep.subr.bf16.mxu0 %v3673
    %3752 = vmatpush1.bf16.msra.mxu0 %v3672
    %3753 = vmatprep.subr.bf16.mxu0 %v3677
    %3754 = vmatpush1.bf16.msra.mxu0 %v3676
    %3755 = vmatprep.subr.bf16.mxu0 %v3681
    %3756 = vmatpush1.bf16.msra.mxu0 %v3680
    %3757 = vmatprep.subr.bf16.mxu0 %v3685
    %3758 = vmatpush1.bf16.msra.mxu0 %v3684
    %3759 = vmatprep.subr.bf16.mxu0 %v3689
    %3760 = vmatpush1.bf16.msra.mxu0 %v3688
    %3761 = vmatprep.subr.bf16.mxu0 %v3693
    %3762 = vmatpush1.bf16.msra.mxu0 %v3692
    %3763 = vmatprep.subr.bf16.mxu0 %v3697
    %3764 = vmatpush1.bf16.msra.mxu0 %v3696
    %3765 = vmatprep.subr.bf16.mxu0 %v3701
    %3766 = vmatpush1.bf16.msra.mxu0 %v3700
    %3767 = vmatprep.subr.bf16.mxu0 0
    %3768 = vmatpush1.bf16.msra.mxu0 0
    %3769 = vmatprep.subr.bf16.mxu0 0
    %3770 = vmatpush1.bf16.msra.mxu0 0
    %3771 = vmatprep.subr.bf16.mxu0 0
    %3772 = vmatpush1.bf16.msra.mxu0 0
    %3773 = vmatprep.subr.bf16.mxu0 0
    %3774 = vmatpush1.bf16.msra.mxu0 0
    %3775 = vmatprep.subr.bf16.mxu0 0
    %3776 = vmatpush1.bf16.msra.mxu0 0
    %3777 = vmatprep.subr.bf16.mxu0 0
    %3778 = vmatpush1.bf16.msra.mxu0 0
    %3779 = vmatprep.subr.bf16.mxu0 0
    %3780 = vmatpush1.bf16.msra.mxu0 0
    %3781 = vmatprep.subr.bf16.mxu0 0
    %3782 = vmatpush1.bf16.msra.mxu0 0
    %3783 = vmatprep.mubr.bf16.mxu0 0
    %3784 = vmatmul.mubr.bf16.gmra.mrb[0].mxu0 %v3708
    %v3785 = vpop.f32.mrb[0].mxu0
    %v3786 = vadd.f32 0.0, %v3785
    %v3787 = vpop.f32.mrb[0].mxu0
    %v3788 = vadd.f32 0.0, %v3787
    %v3789 = vpop.f32.mrb[0].mxu0
    %v3790 = vpop.f32.mrb[0].mxu0
    %3791 = vdwg.mxu0
    %v3796 = vrot.slane %v3745, 7
    %v3797 = vrot.slane %v3747, 7
    %v3798 = vrot.slane %v3786, 7
    %v3799 = vrot.slane %v3788, 7
    %v3808 = vadd.f32 %v3566, %v3796
    %v3809 = vadd.f32 %v3568, %v3797
    %v3810 = vadd.f32 %v3609, %v3798
    %v3811 = vadd.f32 %v3611, %v3799
    %v3812 = vadd.f32 %v3570, %v3745
    %v3813 = vadd.f32 %v3572, %v3747
    %v3814 = vadd.f32 %v3613, %v3786
    %v3815 = vadd.f32 %v3615, %v3788
    %v3816 = vxor.u32 %v3808, 2147483648
    %v3817 = vxor.u32 %v3812, 2147483648
    %v3818 = vmul.f32 %v3816, 1.442695
    %v3819 = vpow.pop %v3818
    %v3820 = vmul.f32 %v3817, 1.442695
    %v3821 = vpow.pop %v3820
    %v3822 = vadd.f32 %v3819, 1.0
    %v3823 = vadd.f32 %v3821, 1.0
    %v3824 = vrcp.pop %v3822
    %v3825 = vmul.f32 1.0, %v3824
    %v3826 = vrcp.pop %v3823
    %v3827 = vmul.f32 1.0, %v3826
    %v3828 = vxor.u32 %v3809, 2147483648
    %v3829 = vxor.u32 %v3813, 2147483648
    %v3830 = vmul.f32 %v3828, 1.442695
    %v3831 = vpow.pop %v3830
    %v3832 = vmul.f32 %v3829, 1.442695
    %v3833 = vpow.pop %v3832
    %v3834 = vadd.f32 %v3831, 1.0
    %v3835 = vadd.f32 %v3833, 1.0
    %v3836 = vrcp.pop %v3834
    %v3837 = vmul.f32 1.0, %v3836
    %v3838 = vrcp.pop %v3835
    %v3839 = vmul.f32 1.0, %v3838
    %v3840 = vtanh.pop %v3810
    %v3841 = vtanh.pop %v3814
    %v3842 = vxor.u32 %v3811, 2147483648
    %v3843 = vxor.u32 %v3815, 2147483648
    %v3844 = vmul.f32 %v3842, 1.442695
    %v3845 = vpow.pop %v3844
    %v3846 = vmul.f32 %v3843, 1.442695
    %v3847 = vpow.pop %v3846
    %v3848 = vadd.f32 %v3845, 1.0
    %v3849 = vadd.f32 %v3847, 1.0
    %v3850 = vrcp.pop %v3848
    %v3851 = vmul.f32 1.0, %v3850
    %v3852 = vrcp.pop %v3849
    %v3853 = vmul.f32 1.0, %v3852
    %v3856 = vrot.slane %v3659, 7
    %v3857 = vrot.slane %v3660, 7
    %v3860 = vmul.f32 %v3837, %v3856
    %v3861 = vmul.f32 %v3839, %v3857
    %v3862 = vmul.f32 %v3825, %v3840
    %v3863 = vmul.f32 %v3827, %v3841
    %v3864 = vadd.f32 %v3860, %v3862
    %v3865 = vadd.f32 %v3861, %v3863
    %v3866 = vtanh.pop %v3864
    %v3867 = vtanh.pop %v3865
    %v3868 = vmul.f32 %v3851, %v3866
    %v3869 = vmul.f32 %v3853, %v3867
    %3870 = vst [vmem:[#allocation3] sm:$0x2] %v3868
    %3871 = vst [vmem:[#allocation3 + $0x8] sm:$0x2] %v3869
    %v3872 = vpack.c.bf16 %v3868, %v3868
    %v3873 = vpack.c.bf16 %v3869, %v3869
    %v3874 = vld [vmem:[%s3669] sm:$0xff]
    %v3875 = vld [vmem:[%s3669 + $0x8] sm:$0xff]
    %v3876 = vld [vmem:[%s3669 + $0x10] sm:$0xff]
    %v3877 = vld [vmem:[%s3669 + $0x18] sm:$0xff]
    %v3878 = vld [vmem:[%s3669 + $0x20] sm:$0xff]
    %v3879 = vld [vmem:[%s3669 + $0x28] sm:$0xff]
    %v3880 = vld [vmem:[%s3669 + $0x30] sm:$0xff]
    %v3881 = vld [vmem:[%s3669 + $0x38] sm:$0xff]
    %v3882 = vld [vmem:[%s3669 + $0x40] sm:$0xff]
    %v3883 = vld [vmem:[%s3669 + $0x48] sm:$0xff]
    %v3884 = vld [vmem:[%s3669 + $0x50] sm:$0xff]
    %v3885 = vld [vmem:[%s3669 + $0x58] sm:$0xff]
    %v3886 = vld [vmem:[%s3669 + $0x60] sm:$0xff]
    %v3887 = vld [vmem:[%s3669 + $0x68] sm:$0xff]
    %v3888 = vld [vmem:[%s3669 + $0x70] sm:$0xff]
    %v3889 = vld [vmem:[%s3669 + $0x78] sm:$0xff]
    %v3890 = vld [vmem:[%s3669 + $0x80] sm:$0xff]
    %v3891 = vld [vmem:[%s3669 + $0x88] sm:$0xff]
    %v3892 = vld [vmem:[%s3669 + $0x90] sm:$0xff]
    %v3893 = vld [vmem:[%s3669 + $0x98] sm:$0xff]
    %v3894 = vld [vmem:[%s3669 + $0xa0] sm:$0xff]
    %v3895 = vld [vmem:[%s3669 + $0xa8] sm:$0xff]
    %v3896 = vld [vmem:[%s3669 + $0xb0] sm:$0xff]
    %v3897 = vld [vmem:[%s3669 + $0xb8] sm:$0xff]
    %v3898 = vld [vmem:[%s3669 + $0xc0] sm:$0xff]
    %v3899 = vld [vmem:[%s3669 + $0xc8] sm:$0xff]
    %v3900 = vld [vmem:[%s3669 + $0xd0] sm:$0xff]
    %v3901 = vld [vmem:[%s3669 + $0xd8] sm:$0xff]
    %v3902 = vld [vmem:[%s3669 + $0xe0] sm:$0xff]
    %v3903 = vld [vmem:[%s3669 + $0xe8] sm:$0xff]
    %v3904 = vld [vmem:[%s3669 + $0xf0] sm:$0xff]
    %v3905 = vld [vmem:[%s3669 + $0xf8] sm:$0xff]
    %v3908 = vunpack.c.l.b16 %v3872
    %v3909 = vunpack.c.l.b16 %v3873
    %v3910 = vrot.slane %v3908, 1
    %v3911 = vsel %vm398, %v3909, %v3910
    %v3912 = vpack.c.b16 %v3911, %v3911
    %3914 = vmatprep.subr.bf16.mxu0 %v3875
    %3915 = vmatpush1.bf16.msra.mxu0 %v3874
    %3916 = vmatprep.subr.bf16.mxu0 %v3879
    %3917 = vmatpush1.bf16.msra.mxu0 %v3878
    %3918 = vmatprep.subr.bf16.mxu0 %v3883
    %3919 = vmatpush1.bf16.msra.mxu0 %v3882
    %3920 = vmatprep.subr.bf16.mxu0 %v3887
    %3921 = vmatpush1.bf16.msra.mxu0 %v3886
    %3922 = vmatprep.subr.bf16.mxu0 %v3891
    %3923 = vmatpush1.bf16.msra.mxu0 %v3890
    %3924 = vmatprep.subr.bf16.mxu0 %v3895
    %3925 = vmatpush1.bf16.msra.mxu0 %v3894
    %3926 = vmatprep.subr.bf16.mxu0 %v3899
    %3927 = vmatpush1.bf16.msra.mxu0 %v3898
    %3928 = vmatprep.subr.bf16.mxu0 %v3903
    %3929 = vmatpush1.bf16.msra.mxu0 %v3902
    %3930 = vmatprep.subr.bf16.mxu0 0
    %3931 = vmatpush1.bf16.msra.mxu0 0
    %3932 = vmatprep.subr.bf16.mxu0 0
    %3933 = vmatpush1.bf16.msra.mxu0 0
    %3934 = vmatprep.subr.bf16.mxu0 0
    %3935 = vmatpush1.bf16.msra.mxu0 0
    %3936 = vmatprep.subr.bf16.mxu0 0
    %3937 = vmatpush1.bf16.msra.mxu0 0
    %3938 = vmatprep.subr.bf16.mxu0 0
    %3939 = vmatpush1.bf16.msra.mxu0 0
    %3940 = vmatprep.subr.bf16.mxu0 0
    %3941 = vmatpush1.bf16.msra.mxu0 0
    %3942 = vmatprep.subr.bf16.mxu0 0
    %3943 = vmatpush1.bf16.msra.mxu0 0
    %3944 = vmatprep.subr.bf16.mxu0 0
    %3945 = vmatpush1.bf16.msra.mxu0 0
    %3946 = vmatprep.mubr.bf16.mxu0 0
    %3947 = vmatmul.mubr.bf16.gmra.mrb[0].mxu0 %v3912
    %v3948 = vpop.f32.mrb[0].mxu0
    %v3949 = vadd.f32 0.0, %v3948
    %v3950 = vpop.f32.mrb[0].mxu0
    %v3951 = vadd.f32 0.0, %v3950
    %v3952 = vpop.f32.mrb[0].mxu0
    %v3953 = vpop.f32.mrb[0].mxu0
    %3954 = vdwg.mxu0
    %3955 = vmatprep.subr.bf16.mxu0 %v3877
    %3956 = vmatpush1.bf16.msra.mxu0 %v3876
    %3957 = vmatprep.subr.bf16.mxu0 %v3881
    %3958 = vmatpush1.bf16.msra.mxu0 %v3880
    %3959 = vmatprep.subr.bf16.mxu0 %v3885
    %3960 = vmatpush1.bf16.msra.mxu0 %v3884
    %3961 = vmatprep.subr.bf16.mxu0 %v3889
    %3962 = vmatpush1.bf16.msra.mxu0 %v3888
    %3963 = vmatprep.subr.bf16.mxu0 %v3893
    %3964 = vmatpush1.bf16.msra.mxu0 %v3892
    %3965 = vmatprep.subr.bf16.mxu0 %v3897
    %3966 = vmatpush1.bf16.msra.mxu0 %v3896
    %3967 = vmatprep.subr.bf16.mxu0 %v3901
    %3968 = vmatpush1.bf16.msra.mxu0 %v3900
    %3969 = vmatprep.subr.bf16.mxu0 %v3905
    %3970 = vmatpush1.bf16.msra.mxu0 %v3904
    %3971 = vmatprep.subr.bf16.mxu0 0
    %3972 = vmatpush1.bf16.msra.mxu0 0
    %3973 = vmatprep.subr.bf16.mxu0 0
    %3974 = vmatpush1.bf16.msra.mxu0 0
    %3975 = vmatprep.subr.bf16.mxu0 0
    %3976 = vmatpush1.bf16.msra.mxu0 0
    %3977 = vmatprep.subr.bf16.mxu0 0
    %3978 = vmatpush1.bf16.msra.mxu0 0
    %3979 = vmatprep.subr.bf16.mxu0 0
    %3980 = vmatpush1.bf16.msra.mxu0 0
    %3981 = vmatprep.subr.bf16.mxu0 0
    %3982 = vmatpush1.bf16.msra.mxu0 0
    %3983 = vmatprep.subr.bf16.mxu0 0
    %3984 = vmatpush1.bf16.msra.mxu0 0
    %3985 = vmatprep.subr.bf16.mxu0 0
    %3986 = vmatpush1.bf16.msra.mxu0 0
    %3987 = vmatprep.mubr.bf16.mxu0 0
    %3988 = vmatmul.mubr.bf16.gmra.mrb[0].mxu0 %v3912
    %v3989 = vpop.f32.mrb[0].mxu0
    %v3990 = vadd.f32 0.0, %v3989
    %v3991 = vpop.f32.mrb[0].mxu0
    %v3992 = vadd.f32 0.0, %v3991
    %v3993 = vpop.f32.mrb[0].mxu0
    %v3994 = vpop.f32.mrb[0].mxu0
    %3995 = vdwg.mxu0
    %v4000 = vrot.slane %v3949, 6
    %v4001 = vrot.slane %v3951, 6
    %v4002 = vrot.slane %v3990, 6
    %v4003 = vrot.slane %v3992, 6
    %v4004 = vrot.slane %v3949, 7
    %v4005 = vrot.slane %v3951, 7
    %v4006 = vrot.slane %v3990, 7
    %v4007 = vrot.slane %v3992, 7
    %v4016 = vadd.f32 %v3566, %v4000
    %v4017 = vadd.f32 %v3568, %v4001
    %v4018 = vadd.f32 %v3609, %v4002
    %v4019 = vadd.f32 %v3611, %v4003
    %v4020 = vadd.f32 %v3570, %v4004
    %v4021 = vadd.f32 %v3572, %v4005
    %v4022 = vadd.f32 %v3613, %v4006
    %v4023 = vadd.f32 %v3615, %v4007
    %v4024 = vxor.u32 %v4016, 2147483648
    %v4025 = vxor.u32 %v4020, 2147483648
    %v4026 = vmul.f32 %v4024, 1.442695
    %v4027 = vpow.pop %v4026
    %v4028 = vmul.f32 %v4025, 1.442695
    %v4029 = vpow.pop %v4028
    %v4030 = vadd.f32 %v4027, 1.0
    %v4031 = vadd.f32 %v4029, 1.0
    %v4032 = vrcp.pop %v4030
    %v4033 = vmul.f32 1.0, %v4032
    %v4034 = vrcp.pop %v4031
    %v4035 = vmul.f32 1.0, %v4034
    %v4036 = vxor.u32 %v4017, 2147483648
    %v4037 = vxor.u32 %v4021, 2147483648
    %v4038 = vmul.f32 %v4036, 1.442695
    %v4039 = vpow.pop %v4038
    %v4040 = vmul.f32 %v4037, 1.442695
    %v4041 = vpow.pop %v4040
    %v4042 = vadd.f32 %v4039, 1.0
    %v4043 = vadd.f32 %v4041, 1.0
    %v4044 = vrcp.pop %v4042
    %v4045 = vmul.f32 1.0, %v4044
    %v4046 = vrcp.pop %v4043
    %v4047 = vmul.f32 1.0, %v4046
    %v4048 = vtanh.pop %v4018
    %v4049 = vtanh.pop %v4022
    %v4050 = vxor.u32 %v4019, 2147483648
    %v4051 = vxor.u32 %v4023, 2147483648
    %v4052 = vmul.f32 %v4050, 1.442695
    %v4053 = vpow.pop %v4052
    %v4054 = vmul.f32 %v4051, 1.442695
    %v4055 = vpow.pop %v4054
    %v4056 = vadd.f32 %v4053, 1.0
    %v4057 = vadd.f32 %v4055, 1.0
    %v4058 = vrcp.pop %v4056
    %v4059 = vmul.f32 1.0, %v4058
    %v4060 = vrcp.pop %v4057
    %v4061 = vmul.f32 1.0, %v4060
    %v4064 = vrot.slane %v3864, 7
    %v4065 = vrot.slane %v3865, 7
    %v4068 = vmul.f32 %v4045, %v4064
    %v4069 = vmul.f32 %v4047, %v4065
    %v4070 = vmul.f32 %v4033, %v4048
    %v4071 = vmul.f32 %v4035, %v4049
    %v4072 = vadd.f32 %v4068, %v4070
    %v4073 = vadd.f32 %v4069, %v4071
    %v4074 = vtanh.pop %v4072
    %v4075 = vtanh.pop %v4073
    %v4076 = vmul.f32 %v4059, %v4074
    %v4077 = vmul.f32 %v4061, %v4075
    %4078 = vst [vmem:[#allocation3] sm:$0x4] %v4076
    %4079 = vst [vmem:[#allocation3 + $0x8] sm:$0x4] %v4077
    %v4080 = vpack.c.bf16 %v4076, %v4076
    %v4081 = vpack.c.bf16 %v4077, %v4077
    %v4082 = vld [vmem:[%s3669] sm:$0xff]
    %v4083 = vld [vmem:[%s3669 + $0x8] sm:$0xff]
    %v4084 = vld [vmem:[%s3669 + $0x10] sm:$0xff]
    %v4085 = vld [vmem:[%s3669 + $0x18] sm:$0xff]
    %v4086 = vld [vmem:[%s3669 + $0x20] sm:$0xff]
    %v4087 = vld [vmem:[%s3669 + $0x28] sm:$0xff]
    %v4088 = vld [vmem:[%s3669 + $0x30] sm:$0xff]
    %v4089 = vld [vmem:[%s3669 + $0x38] sm:$0xff]
    %v4090 = vld [vmem:[%s3669 + $0x40] sm:$0xff]
    %v4091 = vld [vmem:[%s3669 + $0x48] sm:$0xff]
    %v4092 = vld [vmem:[%s3669 + $0x50] sm:$0xff]
    %v4093 = vld [vmem:[%s3669 + $0x58] sm:$0xff]
    %v4094 = vld [vmem:[%s3669 + $0x60] sm:$0xff]
    %v4095 = vld [vmem:[%s3669 + $0x68] sm:$0xff]
    %v4096 = vld [vmem:[%s3669 + $0x70] sm:$0xff]
    %v4097 = vld [vmem:[%s3669 + $0x78] sm:$0xff]
    %v4098 = vld [vmem:[%s3669 + $0x80] sm:$0xff]
    %v4099 = vld [vmem:[%s3669 + $0x88] sm:$0xff]
    %v4100 = vld [vmem:[%s3669 + $0x90] sm:$0xff]
    %v4101 = vld [vmem:[%s3669 + $0x98] sm:$0xff]
    %v4102 = vld [vmem:[%s3669 + $0xa0] sm:$0xff]
    %v4103 = vld [vmem:[%s3669 + $0xa8] sm:$0xff]
    %v4104 = vld [vmem:[%s3669 + $0xb0] sm:$0xff]
    %v4105 = vld [vmem:[%s3669 + $0xb8] sm:$0xff]
    %v4106 = vld [vmem:[%s3669 + $0xc0] sm:$0xff]
    %v4107 = vld [vmem:[%s3669 + $0xc8] sm:$0xff]
    %v4108 = vld [vmem:[%s3669 + $0xd0] sm:$0xff]
    %v4109 = vld [vmem:[%s3669 + $0xd8] sm:$0xff]
    %v4110 = vld [vmem:[%s3669 + $0xe0] sm:$0xff]
    %v4111 = vld [vmem:[%s3669 + $0xe8] sm:$0xff]
    %v4112 = vld [vmem:[%s3669 + $0xf0] sm:$0xff]
    %v4113 = vld [vmem:[%s3669 + $0xf8] sm:$0xff]
    %v4116 = vunpack.c.l.b16 %v4080
    %v4117 = vunpack.c.l.b16 %v4081
    %v4118 = vrot.slane %v4116, 2
    %v4119 = vrot.slane %v4117, 1
    %v4120 = vsel %vm398, %v4119, %v4118
    %v4121 = vpack.c.b16 %v4120, %v4120
    %4123 = vmatprep.subr.bf16.mxu0 %v4083
    %4124 = vmatpush1.bf16.msra.mxu0 %v4082
    %4125 = vmatprep.subr.bf16.mxu0 %v4087
    %4126 = vmatpush1.bf16.msra.mxu0 %v4086
    %4127 = vmatprep.subr.bf16.mxu0 %v4091
    %4128 = vmatpush1.bf16.msra.mxu0 %v4090
    %4129 = vmatprep.subr.bf16.mxu0 %v4095
    %4130 = vmatpush1.bf16.msra.mxu0 %v4094
    %4131 = vmatprep.subr.bf16.mxu0 %v4099
    %4132 = vmatpush1.bf16.msra.mxu0 %v4098
    %4133 = vmatprep.subr.bf16.mxu0 %v4103
    %4134 = vmatpush1.bf16.msra.mxu0 %v4102
    %4135 = vmatprep.subr.bf16.mxu0 %v4107
    %4136 = vmatpush1.bf16.msra.mxu0 %v4106
    %4137 = vmatprep.subr.bf16.mxu0 %v4111
    %4138 = vmatpush1.bf16.msra.mxu0 %v4110
    %4139 = vmatprep.subr.bf16.mxu0 0
    %4140 = vmatpush1.bf16.msra.mxu0 0
    %4141 = vmatprep.subr.bf16.mxu0 0
    %4142 = vmatpush1.bf16.msra.mxu0 0
    %4143 = vmatprep.subr.bf16.mxu0 0
    %4144 = vmatpush1.bf16.msra.mxu0 0
    %4145 = vmatprep.subr.bf16.mxu0 0
    %4146 = vmatpush1.bf16.msra.mxu0 0
    %4147 = vmatprep.subr.bf16.mxu0 0
    %4148 = vmatpush1.bf16.msra.mxu0 0
    %4149 = vmatprep.subr.bf16.mxu0 0
    %4150 = vmatpush1.bf16.msra.mxu0 0
    %4151 = vmatprep.subr.bf16.mxu0 0
    %4152 = vmatpush1.bf16.msra.mxu0 0
    %4153 = vmatprep.subr.bf16.mxu0 0
    %4154 = vmatpush1.bf16.msra.mxu0 0
    %4155 = vmatprep.mubr.bf16.mxu0 0
    %4156 = vmatmul.mubr.bf16.gmra.mrb[0].mxu0 %v4121
    %v4157 = vpop.f32.mrb[0].mxu0
    %v4158 = vadd.f32 0.0, %v4157
    %v4159 = vpop.f32.mrb[0].mxu0
    %v4160 = vadd.f32 0.0, %v4159
    %v4161 = vpop.f32.mrb[0].mxu0
    %v4162 = vpop.f32.mrb[0].mxu0
    %4163 = vdwg.mxu0
    %4164 = vmatprep.subr.bf16.mxu0 %v4085
    %4165 = vmatpush1.bf16.msra.mxu0 %v4084
    %4166 = vmatprep.subr.bf16.mxu0 %v4089
    %4167 = vmatpush1.bf16.msra.mxu0 %v4088
    %4168 = vmatprep.subr.bf16.mxu0 %v4093
    %4169 = vmatpush1.bf16.msra.mxu0 %v4092
    %4170 = vmatprep.subr.bf16.mxu0 %v4097
    %4171 = vmatpush1.bf16.msra.mxu0 %v4096
    %4172 = vmatprep.subr.bf16.mxu0 %v4101
    %4173 = vmatpush1.bf16.msra.mxu0 %v4100
    %4174 = vmatprep.subr.bf16.mxu0 %v4105
    %4175 = vmatpush1.bf16.msra.mxu0 %v4104
    %4176 = vmatprep.subr.bf16.mxu0 %v4109
    %4177 = vmatpush1.bf16.msra.mxu0 %v4108
    %4178 = vmatprep.subr.bf16.mxu0 %v4113
    %4179 = vmatpush1.bf16.msra.mxu0 %v4112
    %4180 = vmatprep.subr.bf16.mxu0 0
    %4181 = vmatpush1.bf16.msra.mxu0 0
    %4182 = vmatprep.subr.bf16.mxu0 0
    %4183 = vmatpush1.bf16.msra.mxu0 0
    %4184 = vmatprep.subr.bf16.mxu0 0
    %4185 = vmatpush1.bf16.msra.mxu0 0
    %4186 = vmatprep.subr.bf16.mxu0 0
    %4187 = vmatpush1.bf16.msra.mxu0 0
    %4188 = vmatprep.subr.bf16.mxu0 0
    %4189 = vmatpush1.bf16.msra.mxu0 0
    %4190 = vmatprep.subr.bf16.mxu0 0
    %4191 = vmatpush1.bf16.msra.mxu0 0
    %4192 = vmatprep.subr.bf16.mxu0 0
    %4193 = vmatpush1.bf16.msra.mxu0 0
    %4194 = vmatprep.subr.bf16.mxu0 0
    %4195 = vmatpush1.bf16.msra.mxu0 0
    %4196 = vmatprep.mubr.bf16.mxu0 0
    %4197 = vmatmul.mubr.bf16.gmra.mrb[0].mxu0 %v4121
    %v4198 = vpop.f32.mrb[0].mxu0
    %v4199 = vadd.f32 0.0, %v4198
    %v4200 = vpop.f32.mrb[0].mxu0
    %v4201 = vadd.f32 0.0, %v4200
    %v4202 = vpop.f32.mrb[0].mxu0
    %v4203 = vpop.f32.mrb[0].mxu0
    %4204 = vdwg.mxu0
    %v4209 = vrot.slane %v4158, 5
    %v4210 = vrot.slane %v4160, 5
    %v4211 = vrot.slane %v4199, 5
    %v4212 = vrot.slane %v4201, 5
    %v4213 = vrot.slane %v4158, 6
    %v4214 = vrot.slane %v4160, 6
    %v4215 = vrot.slane %v4199, 6
    %v4216 = vrot.slane %v4201, 6
    %v4225 = vadd.f32 %v3566, %v4209
    %v4226 = vadd.f32 %v3568, %v4210
    %v4227 = vadd.f32 %v3609, %v4211
    %v4228 = vadd.f32 %v3611, %v4212
    %v4229 = vadd.f32 %v3570, %v4213
    %v4230 = vadd.f32 %v3572, %v4214
    %v4231 = vadd.f32 %v3613, %v4215
    %v4232 = vadd.f32 %v3615, %v4216
    %v4233 = vxor.u32 %v4225, 2147483648
    %v4234 = vxor.u32 %v4229, 2147483648
    %v4235 = vmul.f32 %v4233, 1.442695
    %v4236 = vpow.pop %v4235
    %v4237 = vmul.f32 %v4234, 1.442695
    %v4238 = vpow.pop %v4237
    %v4239 = vadd.f32 %v4236, 1.0
    %v4240 = vadd.f32 %v4238, 1.0
    %v4241 = vrcp.pop %v4239
    %v4242 = vmul.f32 1.0, %v4241
    %v4243 = vrcp.pop %v4240
    %v4244 = vmul.f32 1.0, %v4243
    %v4245 = vxor.u32 %v4226, 2147483648
    %v4246 = vxor.u32 %v4230, 2147483648
    %v4247 = vmul.f32 %v4245, 1.442695
    %v4248 = vpow.pop %v4247
    %v4249 = vmul.f32 %v4246, 1.442695
    %v4250 = vpow.pop %v4249
    %v4251 = vadd.f32 %v4248, 1.0
    %v4252 = vadd.f32 %v4250, 1.0
    %v4253 = vrcp.pop %v4251
    %v4254 = vmul.f32 1.0, %v4253
    %v4255 = vrcp.pop %v4252
    %v4256 = vmul.f32 1.0, %v4255
    %v4257 = vtanh.pop %v4227
    %v4258 = vtanh.pop %v4231
    %v4259 = vxor.u32 %v4228, 2147483648
    %v4260 = vxor.u32 %v4232, 2147483648
    %v4261 = vmul.f32 %v4259, 1.442695
    %v4262 = vpow.pop %v4261
    %v4263 = vmul.f32 %v4260, 1.442695
    %v4264 = vpow.pop %v4263
    %v4265 = vadd.f32 %v4262, 1.0
    %v4266 = vadd.f32 %v4264, 1.0
    %v4267 = vrcp.pop %v4265
    %v4268 = vmul.f32 1.0, %v4267
    %v4269 = vrcp.pop %v4266
    %v4270 = vmul.f32 1.0, %v4269
    %v4273 = vrot.slane %v4072, 7
    %v4274 = vrot.slane %v4073, 7
    %v4277 = vmul.f32 %v4254, %v4273
    %v4278 = vmul.f32 %v4256, %v4274
    %v4279 = vmul.f32 %v4242, %v4257
    %v4280 = vmul.f32 %v4244, %v4258
    %v4281 = vadd.f32 %v4277, %v4279
    %v4282 = vadd.f32 %v4278, %v4280
    %v4283 = vtanh.pop %v4281
    %v4284 = vtanh.pop %v4282
    %v4285 = vmul.f32 %v4268, %v4283
    %v4286 = vmul.f32 %v4270, %v4284
    %4287 = vst [vmem:[#allocation3] sm:$0x8] %v4285
    %4288 = vst [vmem:[#allocation3 + $0x8] sm:$0x8] %v4286
    %v4289 = vpack.c.bf16 %v4285, %v4285
    %v4290 = vpack.c.bf16 %v4286, %v4286
    %v4291 = vld [vmem:[%s3669] sm:$0xff]
    %v4292 = vld [vmem:[%s3669 + $0x8] sm:$0xff]
    %v4293 = vld [vmem:[%s3669 + $0x10] sm:$0xff]
    %v4294 = vld [vmem:[%s3669 + $0x18] sm:$0xff]
    %v4295 = vld [vmem:[%s3669 + $0x20] sm:$0xff]
    %v4296 = vld [vmem:[%s3669 + $0x28] sm:$0xff]
    %v4297 = vld [vmem:[%s3669 + $0x30] sm:$0xff]
    %v4298 = vld [vmem:[%s3669 + $0x38] sm:$0xff]
    %v4299 = vld [vmem:[%s3669 + $0x40] sm:$0xff]
    %v4300 = vld [vmem:[%s3669 + $0x48] sm:$0xff]
    %v4301 = vld [vmem:[%s3669 + $0x50] sm:$0xff]
    %v4302 = vld [vmem:[%s3669 + $0x58] sm:$0xff]
    %v4303 = vld [vmem:[%s3669 + $0x60] sm:$0xff]
    %v4304 = vld [vmem:[%s3669 + $0x68] sm:$0xff]
    %v4305 = vld [vmem:[%s3669 + $0x70] sm:$0xff]
    %v4306 = vld [vmem:[%s3669 + $0x78] sm:$0xff]
    %v4307 = vld [vmem:[%s3669 + $0x80] sm:$0xff]
    %v4308 = vld [vmem:[%s3669 + $0x88] sm:$0xff]
    %v4309 = vld [vmem:[%s3669 + $0x90] sm:$0xff]
    %v4310 = vld [vmem:[%s3669 + $0x98] sm:$0xff]
    %v4311 = vld [vmem:[%s3669 + $0xa0] sm:$0xff]
    %v4312 = vld [vmem:[%s3669 + $0xa8] sm:$0xff]
    %v4313 = vld [vmem:[%s3669 + $0xb0] sm:$0xff]
    %v4314 = vld [vmem:[%s3669 + $0xb8] sm:$0xff]
    %v4315 = vld [vmem:[%s3669 + $0xc0] sm:$0xff]
    %v4316 = vld [vmem:[%s3669 + $0xc8] sm:$0xff]
    %v4317 = vld [vmem:[%s3669 + $0xd0] sm:$0xff]
    %v4318 = vld [vmem:[%s3669 + $0xd8] sm:$0xff]
    %v4319 = vld [vmem:[%s3669 + $0xe0] sm:$0xff]
    %v4320 = vld [vmem:[%s3669 + $0xe8] sm:$0xff]
    %v4321 = vld [vmem:[%s3669 + $0xf0] sm:$0xff]
    %v4322 = vld [vmem:[%s3669 + $0xf8] sm:$0xff]
    %v4325 = vunpack.c.l.b16 %v4289
    %v4326 = vunpack.c.l.b16 %v4290
    %v4327 = vrot.slane %v4325, 3
    %v4328 = vrot.slane %v4326, 2
    %v4329 = vsel %vm398, %v4328, %v4327
    %v4330 = vpack.c.b16 %v4329, %v4329
    %4332 = vmatprep.subr.bf16.mxu0 %v4292
    %4333 = vmatpush1.bf16.msra.mxu0 %v4291
    %4334 = vmatprep.subr.bf16.mxu0 %v4296
    %4335 = vmatpush1.bf16.msra.mxu0 %v4295
    %4336 = vmatprep.subr.bf16.mxu0 %v4300
    %4337 = vmatpush1.bf16.msra.mxu0 %v4299
    %4338 = vmatprep.subr.bf16.mxu0 %v4304
    %4339 = vmatpush1.bf16.msra.mxu0 %v4303
    %4340 = vmatprep.subr.bf16.mxu0 %v4308
    %4341 = vmatpush1.bf16.msra.mxu0 %v4307
    %4342 = vmatprep.subr.bf16.mxu0 %v4312
    %4343 = vmatpush1.bf16.msra.mxu0 %v4311
    %4344 = vmatprep.subr.bf16.mxu0 %v4316
    %4345 = vmatpush1.bf16.msra.mxu0 %v4315
    %4346 = vmatprep.subr.bf16.mxu0 %v4320
    %4347 = vmatpush1.bf16.msra.mxu0 %v4319
    %4348 = vmatprep.subr.bf16.mxu0 0
    %4349 = vmatpush1.bf16.msra.mxu0 0
    %4350 = vmatprep.subr.bf16.mxu0 0
    %4351 = vmatpush1.bf16.msra.mxu0 0
    %4352 = vmatprep.subr.bf16.mxu0 0
    %4353 = vmatpush1.bf16.msra.mxu0 0
    %4354 = vmatprep.subr.bf16.mxu0 0
    %4355 = vmatpush1.bf16.msra.mxu0 0
    %4356 = vmatprep.subr.bf16.mxu0 0
    %4357 = vmatpush1.bf16.msra.mxu0 0
    %4358 = vmatprep.subr.bf16.mxu0 0
    %4359 = vmatpush1.bf16.msra.mxu0 0
    %4360 = vmatprep.subr.bf16.mxu0 0
    %4361 = vmatpush1.bf16.msra.mxu0 0
    %4362 = vmatprep.subr.bf16.mxu0 0
    %4363 = vmatpush1.bf16.msra.mxu0 0
    %4364 = vmatprep.mubr.bf16.mxu0 0
    %4365 = vmatmul.mubr.bf16.gmra.mrb[0].mxu0 %v4330
    %v4366 = vpop.f32.mrb[0].mxu0
    %v4367 = vadd.f32 0.0, %v4366
    %v4368 = vpop.f32.mrb[0].mxu0
    %v4369 = vadd.f32 0.0, %v4368
    %v4370 = vpop.f32.mrb[0].mxu0
    %v4371 = vpop.f32.mrb[0].mxu0
    %4372 = vdwg.mxu0
    %4373 = vmatprep.subr.bf16.mxu0 %v4294
    %4374 = vmatpush1.bf16.msra.mxu0 %v4293
    %4375 = vmatprep.subr.bf16.mxu0 %v4298
    %4376 = vmatpush1.bf16.msra.mxu0 %v4297
    %4377 = vmatprep.subr.bf16.mxu0 %v4302
    %4378 = vmatpush1.bf16.msra.mxu0 %v4301
    %4379 = vmatprep.subr.bf16.mxu0 %v4306
    %4380 = vmatpush1.bf16.msra.mxu0 %v4305
    %4381 = vmatprep.subr.bf16.mxu0 %v4310
    %4382 = vmatpush1.bf16.msra.mxu0 %v4309
    %4383 = vmatprep.subr.bf16.mxu0 %v4314
    %4384 = vmatpush1.bf16.msra.mxu0 %v4313
    %4385 = vmatprep.subr.bf16.mxu0 %v4318
    %4386 = vmatpush1.bf16.msra.mxu0 %v4317
    %4387 = vmatprep.subr.bf16.mxu0 %v4322
    %4388 = vmatpush1.bf16.msra.mxu0 %v4321
    %4389 = vmatprep.subr.bf16.mxu0 0
    %4390 = vmatpush1.bf16.msra.mxu0 0
    %4391 = vmatprep.subr.bf16.mxu0 0
    %4392 = vmatpush1.bf16.msra.mxu0 0
    %4393 = vmatprep.subr.bf16.mxu0 0
    %4394 = vmatpush1.bf16.msra.mxu0 0
    %4395 = vmatprep.subr.bf16.mxu0 0
    %4396 = vmatpush1.bf16.msra.mxu0 0
    %4397 = vmatprep.subr.bf16.mxu0 0
    %4398 = vmatpush1.bf16.msra.mxu0 0
    %4399 = vmatprep.subr.bf16.mxu0 0
    %4400 = vmatpush1.bf16.msra.mxu0 0
    %4401 = vmatprep.subr.bf16.mxu0 0
    %4402 = vmatpush1.bf16.msra.mxu0 0
    %4403 = vmatprep.subr.bf16.mxu0 0
    %4404 = vmatpush1.bf16.msra.mxu0 0
    %4405 = vmatprep.mubr.bf16.mxu0 0
    %4406 = vmatmul.mubr.bf16.gmra.mrb[0].mxu0 %v4330
    %v4407 = vpop.f32.mrb[0].mxu0
    %v4408 = vadd.f32 0.0, %v4407
    %v4409 = vpop.f32.mrb[0].mxu0
    %v4410 = vadd.f32 0.0, %v4409
    %v4411 = vpop.f32.mrb[0].mxu0
    %v4412 = vpop.f32.mrb[0].mxu0
    %4413 = vdwg.mxu0
    %v4418 = vrot.slane %v4367, 4
    %v4419 = vrot.slane %v4369, 4
    %v4420 = vrot.slane %v4408, 4
    %v4421 = vrot.slane %v4410, 4
    %v4422 = vrot.slane %v4367, 5
    %v4423 = vrot.slane %v4369, 5
    %v4424 = vrot.slane %v4408, 5
    %v4425 = vrot.slane %v4410, 5
    %v4434 = vadd.f32 %v3566, %v4418
    %v4435 = vadd.f32 %v3568, %v4419
    %v4436 = vadd.f32 %v3609, %v4420
    %v4437 = vadd.f32 %v3611, %v4421
    %v4438 = vadd.f32 %v3570, %v4422
    %v4439 = vadd.f32 %v3572, %v4423
    %v4440 = vadd.f32 %v3613, %v4424
    %v4441 = vadd.f32 %v3615, %v4425
    %v4442 = vxor.u32 %v4434, 2147483648
    %v4443 = vxor.u32 %v4438, 2147483648
    %v4444 = vmul.f32 %v4442, 1.442695
    %v4445 = vpow.pop %v4444
    %v4446 = vmul.f32 %v4443, 1.442695
    %v4447 = vpow.pop %v4446
    %v4448 = vadd.f32 %v4445, 1.0
    %v4449 = vadd.f32 %v4447, 1.0
    %v4450 = vrcp.pop %v4448
    %v4451 = vmul.f32 1.0, %v4450
    %v4452 = vrcp.pop %v4449
    %v4453 = vmul.f32 1.0, %v4452
    %v4454 = vxor.u32 %v4435, 2147483648
    %v4455 = vxor.u32 %v4439, 2147483648
    %v4456 = vmul.f32 %v4454, 1.442695
    %v4457 = vpow.pop %v4456
    %v4458 = vmul.f32 %v4455, 1.442695
    %v4459 = vpow.pop %v4458
    %v4460 = vadd.f32 %v4457, 1.0
    %v4461 = vadd.f32 %v4459, 1.0
    %v4462 = vrcp.pop %v4460
    %v4463 = vmul.f32 1.0, %v4462
    %v4464 = vrcp.pop %v4461
    %v4465 = vmul.f32 1.0, %v4464
    %v4466 = vtanh.pop %v4436
    %v4467 = vtanh.pop %v4440
    %v4468 = vxor.u32 %v4437, 2147483648
    %v4469 = vxor.u32 %v4441, 2147483648
    %v4470 = vmul.f32 %v4468, 1.442695
    %v4471 = vpow.pop %v4470
    %v4472 = vmul.f32 %v4469, 1.442695
    %v4473 = vpow.pop %v4472
    %v4474 = vadd.f32 %v4471, 1.0
    %v4475 = vadd.f32 %v4473, 1.0
    %v4476 = vrcp.pop %v4474
    %v4477 = vmul.f32 1.0, %v4476
    %v4478 = vrcp.pop %v4475
    %v4479 = vmul.f32 1.0, %v4478
    %v4482 = vrot.slane %v4281, 7
    %v4483 = vrot.slane %v4282, 7
    %v4486 = vmul.f32 %v4463, %v4482
    %v4487 = vmul.f32 %v4465, %v4483
    %v4488 = vmul.f32 %v4451, %v4466
    %v4489 = vmul.f32 %v4453, %v4467
    %v4490 = vadd.f32 %v4486, %v4488
    %v4491 = vadd.f32 %v4487, %v4489
    %v4492 = vtanh.pop %v4490
    %v4493 = vtanh.pop %v4491
    %v4494 = vmul.f32 %v4477, %v4492
    %v4495 = vmul.f32 %v4479, %v4493
    %4496 = vst [vmem:[#allocation3] sm:$0x10] %v4494
    %4497 = vst [vmem:[#allocation3 + $0x8] sm:$0x10] %v4495
    %v4498 = vpack.c.bf16 %v4494, %v4494
    %v4499 = vpack.c.bf16 %v4495, %v4495
    %v4500 = vld [vmem:[%s3669] sm:$0xff]
    %v4501 = vld [vmem:[%s3669 + $0x8] sm:$0xff]
    %v4502 = vld [vmem:[%s3669 + $0x10] sm:$0xff]
    %v4503 = vld [vmem:[%s3669 + $0x18] sm:$0xff]
    %v4504 = vld [vmem:[%s3669 + $0x20] sm:$0xff]
    %v4505 = vld [vmem:[%s3669 + $0x28] sm:$0xff]
    %v4506 = vld [vmem:[%s3669 + $0x30] sm:$0xff]
    %v4507 = vld [vmem:[%s3669 + $0x38] sm:$0xff]
    %v4508 = vld [vmem:[%s3669 + $0x40] sm:$0xff]
    %v4509 = vld [vmem:[%s3669 + $0x48] sm:$0xff]
    %v4510 = vld [vmem:[%s3669 + $0x50] sm:$0xff]
    %v4511 = vld [vmem:[%s3669 + $0x58] sm:$0xff]
    %v4512 = vld [vmem:[%s3669 + $0x60] sm:$0xff]
    %v4513 = vld [vmem:[%s3669 + $0x68] sm:$0xff]
    %v4514 = vld [vmem:[%s3669 + $0x70] sm:$0xff]
    %v4515 = vld [vmem:[%s3669 + $0x78] sm:$0xff]
    %v4516 = vld [vmem:[%s3669 + $0x80] sm:$0xff]
    %v4517 = vld [vmem:[%s3669 + $0x88] sm:$0xff]
    %v4518 = vld [vmem:[%s3669 + $0x90] sm:$0xff]
    %v4519 = vld [vmem:[%s3669 + $0x98] sm:$0xff]
    %v4520 = vld [vmem:[%s3669 + $0xa0] sm:$0xff]
    %v4521 = vld [vmem:[%s3669 + $0xa8] sm:$0xff]
    %v4522 = vld [vmem:[%s3669 + $0xb0] sm:$0xff]
    %v4523 = vld [vmem:[%s3669 + $0xb8] sm:$0xff]
    %v4524 = vld [vmem:[%s3669 + $0xc0] sm:$0xff]
    %v4525 = vld [vmem:[%s3669 + $0xc8] sm:$0xff]
    %v4526 = vld [vmem:[%s3669 + $0xd0] sm:$0xff]
    %v4527 = vld [vmem:[%s3669 + $0xd8] sm:$0xff]
    %v4528 = vld [vmem:[%s3669 + $0xe0] sm:$0xff]
    %v4529 = vld [vmem:[%s3669 + $0xe8] sm:$0xff]
    %v4530 = vld [vmem:[%s3669 + $0xf0] sm:$0xff]
    %v4531 = vld [vmem:[%s3669 + $0xf8] sm:$0xff]
    %v4534 = vunpack.c.l.b16 %v4498
    %v4535 = vunpack.c.l.b16 %v4499
    %v4536 = vrot.slane %v4534, 4
    %v4537 = vrot.slane %v4535, 3
    %v4538 = vsel %vm398, %v4537, %v4536
    %v4539 = vpack.c.b16 %v4538, %v4538
    %4541 = vmatprep.subr.bf16.mxu0 %v4501
    %4542 = vmatpush1.bf16.msra.mxu0 %v4500
    %4543 = vmatprep.subr.bf16.mxu0 %v4505
    %4544 = vmatpush1.bf16.msra.mxu0 %v4504
    %4545 = vmatprep.subr.bf16.mxu0 %v4509
    %4546 = vmatpush1.bf16.msra.mxu0 %v4508
    %4547 = vmatprep.subr.bf16.mxu0 %v4513
    %4548 = vmatpush1.bf16.msra.mxu0 %v4512
    %4549 = vmatprep.subr.bf16.mxu0 %v4517
    %4550 = vmatpush1.bf16.msra.mxu0 %v4516
    %4551 = vmatprep.subr.bf16.mxu0 %v4521
    %4552 = vmatpush1.bf16.msra.mxu0 %v4520
    %4553 = vmatprep.subr.bf16.mxu0 %v4525
    %4554 = vmatpush1.bf16.msra.mxu0 %v4524
    %4555 = vmatprep.subr.bf16.mxu0 %v4529
    %4556 = vmatpush1.bf16.msra.mxu0 %v4528
    %4557 = vmatprep.subr.bf16.mxu0 0
    %4558 = vmatpush1.bf16.msra.mxu0 0
    %4559 = vmatprep.subr.bf16.mxu0 0
    %4560 = vmatpush1.bf16.msra.mxu0 0
    %4561 = vmatprep.subr.bf16.mxu0 0
    %4562 = vmatpush1.bf16.msra.mxu0 0
    %4563 = vmatprep.subr.bf16.mxu0 0
    %4564 = vmatpush1.bf16.msra.mxu0 0
    %4565 = vmatprep.subr.bf16.mxu0 0
    %4566 = vmatpush1.bf16.msra.mxu0 0
    %4567 = vmatprep.subr.bf16.mxu0 0
    %4568 = vmatpush1.bf16.msra.mxu0 0
    %4569 = vmatprep.subr.bf16.mxu0 0
    %4570 = vmatpush1.bf16.msra.mxu0 0
    %4571 = vmatprep.subr.bf16.mxu0 0
    %4572 = vmatpush1.bf16.msra.mxu0 0
    %4573 = vmatprep.mubr.bf16.mxu0 0
    %4574 = vmatmul.mubr.bf16.gmra.mrb[0].mxu0 %v4539
    %v4575 = vpop.f32.mrb[0].mxu0
    %v4576 = vadd.f32 0.0, %v4575
    %v4577 = vpop.f32.mrb[0].mxu0
    %v4578 = vadd.f32 0.0, %v4577
    %v4579 = vpop.f32.mrb[0].mxu0
    %v4580 = vpop.f32.mrb[0].mxu0
    %4581 = vdwg.mxu0
    %4582 = vmatprep.subr.bf16.mxu0 %v4503
    %4583 = vmatpush1.bf16.msra.mxu0 %v4502
    %4584 = vmatprep.subr.bf16.mxu0 %v4507
    %4585 = vmatpush1.bf16.msra.mxu0 %v4506
    %4586 = vmatprep.subr.bf16.mxu0 %v4511
    %4587 = vmatpush1.bf16.msra.mxu0 %v4510
    %4588 = vmatprep.subr.bf16.mxu0 %v4515
    %4589 = vmatpush1.bf16.msra.mxu0 %v4514
    %4590 = vmatprep.subr.bf16.mxu0 %v4519
    %4591 = vmatpush1.bf16.msra.mxu0 %v4518
    %4592 = vmatprep.subr.bf16.mxu0 %v4523
    %4593 = vmatpush1.bf16.msra.mxu0 %v4522
    %4594 = vmatprep.subr.bf16.mxu0 %v4527
    %4595 = vmatpush1.bf16.msra.mxu0 %v4526
    %4596 = vmatprep.subr.bf16.mxu0 %v4531
    %4597 = vmatpush1.bf16.msra.mxu0 %v4530
    %4598 = vmatprep.subr.bf16.mxu0 0
    %4599 = vmatpush1.bf16.msra.mxu0 0
    %4600 = vmatprep.subr.bf16.mxu0 0
    %4601 = vmatpush1.bf16.msra.mxu0 0
    %4602 = vmatprep.subr.bf16.mxu0 0
    %4603 = vmatpush1.bf16.msra.mxu0 0
    %4604 = vmatprep.subr.bf16.mxu0 0
    %4605 = vmatpush1.bf16.msra.mxu0 0
    %4606 = vmatprep.subr.bf16.mxu0 0
    %4607 = vmatpush1.bf16.msra.mxu0 0
    %4608 = vmatprep.subr.bf16.mxu0 0
    %4609 = vmatpush1.bf16.msra.mxu0 0
    %4610 = vmatprep.subr.bf16.mxu0 0
    %4611 = vmatpush1.bf16.msra.mxu0 0
    %4612 = vmatprep.subr.bf16.mxu0 0
    %4613 = vmatpush1.bf16.msra.mxu0 0
    %4614 = vmatprep.mubr.bf16.mxu0 0
    %4615 = vmatmul.mubr.bf16.gmra.mrb[0].mxu0 %v4539
    %v4616 = vpop.f32.mrb[0].mxu0
    %v4617 = vadd.f32 0.0, %v4616
    %v4618 = vpop.f32.mrb[0].mxu0
    %v4619 = vadd.f32 0.0, %v4618
    %v4620 = vpop.f32.mrb[0].mxu0
    %v4621 = vpop.f32.mrb[0].mxu0
    %4622 = vdwg.mxu0
    %v4627 = vrot.slane %v4576, 3
    %v4628 = vrot.slane %v4578, 3
    %v4629 = vrot.slane %v4617, 3
    %v4630 = vrot.slane %v4619, 3
    %v4631 = vrot.slane %v4576, 4
    %v4632 = vrot.slane %v4578, 4
    %v4633 = vrot.slane %v4617, 4
    %v4634 = vrot.slane %v4619, 4
    %v4643 = vadd.f32 %v3566, %v4627
    %v4644 = vadd.f32 %v3568, %v4628
    %v4645 = vadd.f32 %v3609, %v4629
    %v4646 = vadd.f32 %v3611, %v4630
    %v4647 = vadd.f32 %v3570, %v4631
    %v4648 = vadd.f32 %v3572, %v4632
    %v4649 = vadd.f32 %v3613, %v4633
    %v4650 = vadd.f32 %v3615, %v4634
    %v4651 = vxor.u32 %v4643, 2147483648
    %v4652 = vxor.u32 %v4647, 2147483648
    %v4653 = vmul.f32 %v4651, 1.442695
    %v4654 = vpow.pop %v4653
    %v4655 = vmul.f32 %v4652, 1.442695
    %v4656 = vpow.pop %v4655
    %v4657 = vadd.f32 %v4654, 1.0
    %v4658 = vadd.f32 %v4656, 1.0
    %v4659 = vrcp.pop %v4657
    %v4660 = vmul.f32 1.0, %v4659
    %v4661 = vrcp.pop %v4658
    %v4662 = vmul.f32 1.0, %v4661
    %v4663 = vxor.u32 %v4644, 2147483648
    %v4664 = vxor.u32 %v4648, 2147483648
    %v4665 = vmul.f32 %v4663, 1.442695
    %v4666 = vpow.pop %v4665
    %v4667 = vmul.f32 %v4664, 1.442695
    %v4668 = vpow.pop %v4667
    %v4669 = vadd.f32 %v4666, 1.0
    %v4670 = vadd.f32 %v4668, 1.0
    %v4671 = vrcp.pop %v4669
    %v4672 = vmul.f32 1.0, %v4671
    %v4673 = vrcp.pop %v4670
    %v4674 = vmul.f32 1.0, %v4673
    %v4675 = vtanh.pop %v4645
    %v4676 = vtanh.pop %v4649
    %v4677 = vxor.u32 %v4646, 2147483648
    %v4678 = vxor.u32 %v4650, 2147483648
    %v4679 = vmul.f32 %v4677, 1.442695
    %v4680 = vpow.pop %v4679
    %v4681 = vmul.f32 %v4678, 1.442695
    %v4682 = vpow.pop %v4681
    %v4683 = vadd.f32 %v4680, 1.0
    %v4684 = vadd.f32 %v4682, 1.0
    %v4685 = vrcp.pop %v4683
    %v4686 = vmul.f32 1.0, %v4685
    %v4687 = vrcp.pop %v4684
    %v4688 = vmul.f32 1.0, %v4687
    %v4691 = vrot.slane %v4490, 7
    %v4692 = vrot.slane %v4491, 7
    %v4695 = vmul.f32 %v4672, %v4691
    %v4696 = vmul.f32 %v4674, %v4692
    %v4697 = vmul.f32 %v4660, %v4675
    %v4698 = vmul.f32 %v4662, %v4676
    %v4699 = vadd.f32 %v4695, %v4697
    %v4700 = vadd.f32 %v4696, %v4698
    %v4701 = vtanh.pop %v4699
    %v4702 = vtanh.pop %v4700
    %v4703 = vmul.f32 %v4686, %v4701
    %v4704 = vmul.f32 %v4688, %v4702
    %4705 = vst [vmem:[#allocation3] sm:$0x20] %v4703
    %4706 = vst [vmem:[#allocation3 + $0x8] sm:$0x20] %v4704
    %v4707 = vpack.c.bf16 %v4703, %v4703
    %v4708 = vpack.c.bf16 %v4704, %v4704
    %v4709 = vld [vmem:[%s3669] sm:$0xff]
    %v4710 = vld [vmem:[%s3669 + $0x8] sm:$0xff]
    %v4711 = vld [vmem:[%s3669 + $0x10] sm:$0xff]
    %v4712 = vld [vmem:[%s3669 + $0x18] sm:$0xff]
    %v4713 = vld [vmem:[%s3669 + $0x20] sm:$0xff]
    %v4714 = vld [vmem:[%s3669 + $0x28] sm:$0xff]
    %v4715 = vld [vmem:[%s3669 + $0x30] sm:$0xff]
    %v4716 = vld [vmem:[%s3669 + $0x38] sm:$0xff]
    %v4717 = vld [vmem:[%s3669 + $0x40] sm:$0xff]
    %v4718 = vld [vmem:[%s3669 + $0x48] sm:$0xff]
    %v4719 = vld [vmem:[%s3669 + $0x50] sm:$0xff]
    %v4720 = vld [vmem:[%s3669 + $0x58] sm:$0xff]
    %v4721 = vld [vmem:[%s3669 + $0x60] sm:$0xff]
    %v4722 = vld [vmem:[%s3669 + $0x68] sm:$0xff]
    %v4723 = vld [vmem:[%s3669 + $0x70] sm:$0xff]
    %v4724 = vld [vmem:[%s3669 + $0x78] sm:$0xff]
    %v4725 = vld [vmem:[%s3669 + $0x80] sm:$0xff]
    %v4726 = vld [vmem:[%s3669 + $0x88] sm:$0xff]
    %v4727 = vld [vmem:[%s3669 + $0x90] sm:$0xff]
    %v4728 = vld [vmem:[%s3669 + $0x98] sm:$0xff]
    %v4729 = vld [vmem:[%s3669 + $0xa0] sm:$0xff]
    %v4730 = vld [vmem:[%s3669 + $0xa8] sm:$0xff]
    %v4731 = vld [vmem:[%s3669 + $0xb0] sm:$0xff]
    %v4732 = vld [vmem:[%s3669 + $0xb8] sm:$0xff]
    %v4733 = vld [vmem:[%s3669 + $0xc0] sm:$0xff]
    %v4734 = vld [vmem:[%s3669 + $0xc8] sm:$0xff]
    %v4735 = vld [vmem:[%s3669 + $0xd0] sm:$0xff]
    %v4736 = vld [vmem:[%s3669 + $0xd8] sm:$0xff]
    %v4737 = vld [vmem:[%s3669 + $0xe0] sm:$0xff]
    %v4738 = vld [vmem:[%s3669 + $0xe8] sm:$0xff]
    %v4739 = vld [vmem:[%s3669 + $0xf0] sm:$0xff]
    %v4740 = vld [vmem:[%s3669 + $0xf8] sm:$0xff]
    %v4743 = vunpack.c.l.b16 %v4707
    %v4744 = vunpack.c.l.b16 %v4708
    %v4745 = vrot.slane %v4743, 5
    %v4746 = vrot.slane %v4744, 4
    %v4747 = vsel %vm398, %v4746, %v4745
    %v4748 = vpack.c.b16 %v4747, %v4747
    %4750 = vmatprep.subr.bf16.mxu0 %v4710
    %4751 = vmatpush1.bf16.msra.mxu0 %v4709
    %4752 = vmatprep.subr.bf16.mxu0 %v4714
    %4753 = vmatpush1.bf16.msra.mxu0 %v4713
    %4754 = vmatprep.subr.bf16.mxu0 %v4718
    %4755 = vmatpush1.bf16.msra.mxu0 %v4717
    %4756 = vmatprep.subr.bf16.mxu0 %v4722
    %4757 = vmatpush1.bf16.msra.mxu0 %v4721
    %4758 = vmatprep.subr.bf16.mxu0 %v4726
    %4759 = vmatpush1.bf16.msra.mxu0 %v4725
    %4760 = vmatprep.subr.bf16.mxu0 %v4730
    %4761 = vmatpush1.bf16.msra.mxu0 %v4729
    %4762 = vmatprep.subr.bf16.mxu0 %v4734
    %4763 = vmatpush1.bf16.msra.mxu0 %v4733
    %4764 = vmatprep.subr.bf16.mxu0 %v4738
    %4765 = vmatpush1.bf16.msra.mxu0 %v4737
    %4766 = vmatprep.subr.bf16.mxu0 0
    %4767 = vmatpush1.bf16.msra.mxu0 0
    %4768 = vmatprep.subr.bf16.mxu0 0
    %4769 = vmatpush1.bf16.msra.mxu0 0
    %4770 = vmatprep.subr.bf16.mxu0 0
    %4771 = vmatpush1.bf16.msra.mxu0 0
    %4772 = vmatprep.subr.bf16.mxu0 0
    %4773 = vmatpush1.bf16.msra.mxu0 0
    %4774 = vmatprep.subr.bf16.mxu0 0
    %4775 = vmatpush1.bf16.msra.mxu0 0
    %4776 = vmatprep.subr.bf16.mxu0 0
    %4777 = vmatpush1.bf16.msra.mxu0 0
    %4778 = vmatprep.subr.bf16.mxu0 0
    %4779 = vmatpush1.bf16.msra.mxu0 0
    %4780 = vmatprep.subr.bf16.mxu0 0
    %4781 = vmatpush1.bf16.msra.mxu0 0
    %4782 = vmatprep.mubr.bf16.mxu0 0
    %4783 = vmatmul.mubr.bf16.gmra.mrb[0].mxu0 %v4748
    %v4784 = vpop.f32.mrb[0].mxu0
    %v4785 = vadd.f32 0.0, %v4784
    %v4786 = vpop.f32.mrb[0].mxu0
    %v4787 = vadd.f32 0.0, %v4786
    %v4788 = vpop.f32.mrb[0].mxu0
    %v4789 = vpop.f32.mrb[0].mxu0
    %4790 = vdwg.mxu0
    %4791 = vmatprep.subr.bf16.mxu0 %v4712
    %4792 = vmatpush1.bf16.msra.mxu0 %v4711
    %4793 = vmatprep.subr.bf16.mxu0 %v4716
    %4794 = vmatpush1.bf16.msra.mxu0 %v4715
    %4795 = vmatprep.subr.bf16.mxu0 %v4720
    %4796 = vmatpush1.bf16.msra.mxu0 %v4719
    %4797 = vmatprep.subr.bf16.mxu0 %v4724
    %4798 = vmatpush1.bf16.msra.mxu0 %v4723
    %4799 = vmatprep.subr.bf16.mxu0 %v4728
    %4800 = vmatpush1.bf16.msra.mxu0 %v4727
    %4801 = vmatprep.subr.bf16.mxu0 %v4732
    %4802 = vmatpush1.bf16.msra.mxu0 %v4731
    %4803 = vmatprep.subr.bf16.mxu0 %v4736
    %4804 = vmatpush1.bf16.msra.mxu0 %v4735
    %4805 = vmatprep.subr.bf16.mxu0 %v4740
    %4806 = vmatpush1.bf16.msra.mxu0 %v4739
    %4807 = vmatprep.subr.bf16.mxu0 0
    %4808 = vmatpush1.bf16.msra.mxu0 0
    %4809 = vmatprep.subr.bf16.mxu0 0
    %4810 = vmatpush1.bf16.msra.mxu0 0
    %4811 = vmatprep.subr.bf16.mxu0 0
    %4812 = vmatpush1.bf16.msra.mxu0 0
    %4813 = vmatprep.subr.bf16.mxu0 0
    %4814 = vmatpush1.bf16.msra.mxu0 0
    %4815 = vmatprep.subr.bf16.mxu0 0
    %4816 = vmatpush1.bf16.msra.mxu0 0
    %4817 = vmatprep.subr.bf16.mxu0 0
    %4818 = vmatpush1.bf16.msra.mxu0 0
    %4819 = vmatprep.subr.bf16.mxu0 0
    %4820 = vmatpush1.bf16.msra.mxu0 0
    %4821 = vmatprep.subr.bf16.mxu0 0
    %4822 = vmatpush1.bf16.msra.mxu0 0
    %4823 = vmatprep.mubr.bf16.mxu0 0
    %4824 = vmatmul.mubr.bf16.gmra.mrb[0].mxu0 %v4748
    %v4825 = vpop.f32.mrb[0].mxu0
    %v4826 = vadd.f32 0.0, %v4825
    %v4827 = vpop.f32.mrb[0].mxu0
    %v4828 = vadd.f32 0.0, %v4827
    %v4829 = vpop.f32.mrb[0].mxu0
    %v4830 = vpop.f32.mrb[0].mxu0
    %4831 = vdwg.mxu0
    %v4836 = vrot.slane %v4785, 2
    %v4837 = vrot.slane %v4787, 2
    %v4838 = vrot.slane %v4826, 2
    %v4839 = vrot.slane %v4828, 2
    %v4840 = vrot.slane %v4785, 3
    %v4841 = vrot.slane %v4787, 3
    %v4842 = vrot.slane %v4826, 3
    %v4843 = vrot.slane %v4828, 3
    %v4852 = vadd.f32 %v3566, %v4836
    %v4853 = vadd.f32 %v3568, %v4837
    %v4854 = vadd.f32 %v3609, %v4838
    %v4855 = vadd.f32 %v3611, %v4839
    %v4856 = vadd.f32 %v3570, %v4840
    %v4857 = vadd.f32 %v3572, %v4841
    %v4858 = vadd.f32 %v3613, %v4842
    %v4859 = vadd.f32 %v3615, %v4843
    %v4860 = vxor.u32 %v4852, 2147483648
    %v4861 = vxor.u32 %v4856, 2147483648
    %v4862 = vmul.f32 %v4860, 1.442695
    %v4863 = vpow.pop %v4862
    %v4864 = vmul.f32 %v4861, 1.442695
    %v4865 = vpow.pop %v4864
    %v4866 = vadd.f32 %v4863, 1.0
    %v4867 = vadd.f32 %v4865, 1.0
    %v4868 = vrcp.pop %v4866
    %v4869 = vmul.f32 1.0, %v4868
    %v4870 = vrcp.pop %v4867
    %v4871 = vmul.f32 1.0, %v4870
    %v4872 = vxor.u32 %v4853, 2147483648
    %v4873 = vxor.u32 %v4857, 2147483648
    %v4874 = vmul.f32 %v4872, 1.442695
    %v4875 = vpow.pop %v4874
    %v4876 = vmul.f32 %v4873, 1.442695
    %v4877 = vpow.pop %v4876
    %v4878 = vadd.f32 %v4875, 1.0
    %v4879 = vadd.f32 %v4877, 1.0
    %v4880 = vrcp.pop %v4878
    %v4881 = vmul.f32 1.0, %v4880
    %v4882 = vrcp.pop %v4879
    %v4883 = vmul.f32 1.0, %v4882
    %v4884 = vtanh.pop %v4854
    %v4885 = vtanh.pop %v4858
    %v4886 = vxor.u32 %v4855, 2147483648
    %v4887 = vxor.u32 %v4859, 2147483648
    %v4888 = vmul.f32 %v4886, 1.442695
    %v4889 = vpow.pop %v4888
    %v4890 = vmul.f32 %v4887, 1.442695
    %v4891 = vpow.pop %v4890
    %v4892 = vadd.f32 %v4889, 1.0
    %v4893 = vadd.f32 %v4891, 1.0
    %v4894 = vrcp.pop %v4892
    %v4895 = vmul.f32 1.0, %v4894
    %v4896 = vrcp.pop %v4893
    %v4897 = vmul.f32 1.0, %v4896
    %v4900 = vrot.slane %v4699, 7
    %v4901 = vrot.slane %v4700, 7
    %v4904 = vmul.f32 %v4881, %v4900
    %v4905 = vmul.f32 %v4883, %v4901
    %v4906 = vmul.f32 %v4869, %v4884
    %v4907 = vmul.f32 %v4871, %v4885
    %v4908 = vadd.f32 %v4904, %v4906
    %v4909 = vadd.f32 %v4905, %v4907
    %v4910 = vtanh.pop %v4908
    %v4911 = vtanh.pop %v4909
    %v4912 = vmul.f32 %v4895, %v4910
    %v4913 = vmul.f32 %v4897, %v4911
    %4914 = vst [vmem:[#allocation3] sm:$0x40] %v4912
    %4915 = vst [vmem:[#allocation3 + $0x8] sm:$0x40] %v4913
    %v4916 = vpack.c.bf16 %v4912, %v4912
    %v4917 = vpack.c.bf16 %v4913, %v4913
    %v4918 = vld [vmem:[%s3669] sm:$0xff]
    %v4919 = vld [vmem:[%s3669 + $0x8] sm:$0xff]
    %v4920 = vld [vmem:[%s3669 + $0x10] sm:$0xff]
    %v4921 = vld [vmem:[%s3669 + $0x18] sm:$0xff]
    %v4922 = vld [vmem:[%s3669 + $0x20] sm:$0xff]
    %v4923 = vld [vmem:[%s3669 + $0x28] sm:$0xff]
    %v4924 = vld [vmem:[%s3669 + $0x30] sm:$0xff]
    %v4925 = vld [vmem:[%s3669 + $0x38] sm:$0xff]
    %v4926 = vld [vmem:[%s3669 + $0x40] sm:$0xff]
    %v4927 = vld [vmem:[%s3669 + $0x48] sm:$0xff]
    %v4928 = vld [vmem:[%s3669 + $0x50] sm:$0xff]
    %v4929 = vld [vmem:[%s3669 + $0x58] sm:$0xff]
    %v4930 = vld [vmem:[%s3669 + $0x60] sm:$0xff]
    %v4931 = vld [vmem:[%s3669 + $0x68] sm:$0xff]
    %v4932 = vld [vmem:[%s3669 + $0x70] sm:$0xff]
    %v4933 = vld [vmem:[%s3669 + $0x78] sm:$0xff]
    %v4934 = vld [vmem:[%s3669 + $0x80] sm:$0xff]
    %v4935 = vld [vmem:[%s3669 + $0x88] sm:$0xff]
    %v4936 = vld [vmem:[%s3669 + $0x90] sm:$0xff]
    %v4937 = vld [vmem:[%s3669 + $0x98] sm:$0xff]
    %v4938 = vld [vmem:[%s3669 + $0xa0] sm:$0xff]
    %v4939 = vld [vmem:[%s3669 + $0xa8] sm:$0xff]
    %v4940 = vld [vmem:[%s3669 + $0xb0] sm:$0xff]
    %v4941 = vld [vmem:[%s3669 + $0xb8] sm:$0xff]
    %v4942 = vld [vmem:[%s3669 + $0xc0] sm:$0xff]
    %v4943 = vld [vmem:[%s3669 + $0xc8] sm:$0xff]
    %v4944 = vld [vmem:[%s3669 + $0xd0] sm:$0xff]
    %v4945 = vld [vmem:[%s3669 + $0xd8] sm:$0xff]
    %v4946 = vld [vmem:[%s3669 + $0xe0] sm:$0xff]
    %v4947 = vld [vmem:[%s3669 + $0xe8] sm:$0xff]
    %v4948 = vld [vmem:[%s3669 + $0xf0] sm:$0xff]
    %v4949 = vld [vmem:[%s3669 + $0xf8] sm:$0xff]
    %v4952 = vunpack.c.l.b16 %v4916
    %v4953 = vunpack.c.l.b16 %v4917
    %v4954 = vrot.slane %v4952, 6
    %v4955 = vrot.slane %v4953, 5
    %v4956 = vsel %vm398, %v4955, %v4954
    %v4957 = vpack.c.b16 %v4956, %v4956
    %4959 = vmatprep.subr.bf16.mxu0 %v4919
    %4960 = vmatpush1.bf16.msra.mxu0 %v4918
    %4961 = vmatprep.subr.bf16.mxu0 %v4923
    %4962 = vmatpush1.bf16.msra.mxu0 %v4922
    %4963 = vmatprep.subr.bf16.mxu0 %v4927
    %4964 = vmatpush1.bf16.msra.mxu0 %v4926
    %4965 = vmatprep.subr.bf16.mxu0 %v4931
    %4966 = vmatpush1.bf16.msra.mxu0 %v4930
    %4967 = vmatprep.subr.bf16.mxu0 %v4935
    %4968 = vmatpush1.bf16.msra.mxu0 %v4934
    %4969 = vmatprep.subr.bf16.mxu0 %v4939
    %4970 = vmatpush1.bf16.msra.mxu0 %v4938
    %4971 = vmatprep.subr.bf16.mxu0 %v4943
    %4972 = vmatpush1.bf16.msra.mxu0 %v4942
    %4973 = vmatprep.subr.bf16.mxu0 %v4947
    %4974 = vmatpush1.bf16.msra.mxu0 %v4946
    %4975 = vmatprep.subr.bf16.mxu0 0
    %4976 = vmatpush1.bf16.msra.mxu0 0
    %4977 = vmatprep.subr.bf16.mxu0 0
    %4978 = vmatpush1.bf16.msra.mxu0 0
    %4979 = vmatprep.subr.bf16.mxu0 0
    %4980 = vmatpush1.bf16.msra.mxu0 0
    %4981 = vmatprep.subr.bf16.mxu0 0
    %4982 = vmatpush1.bf16.msra.mxu0 0
    %4983 = vmatprep.subr.bf16.mxu0 0
    %4984 = vmatpush1.bf16.msra.mxu0 0
    %4985 = vmatprep.subr.bf16.mxu0 0
    %4986 = vmatpush1.bf16.msra.mxu0 0
    %4987 = vmatprep.subr.bf16.mxu0 0
    %4988 = vmatpush1.bf16.msra.mxu0 0
    %4989 = vmatprep.subr.bf16.mxu0 0
    %4990 = vmatpush1.bf16.msra.mxu0 0
    %4991 = vmatprep.mubr.bf16.mxu0 0
    %4992 = vmatmul.mubr.bf16.gmra.mrb[0].mxu0 %v4957
    %v4993 = vpop.f32.mrb[0].mxu0
    %v4994 = vadd.f32 0.0, %v4993
    %v4995 = vpop.f32.mrb[0].mxu0
    %v4996 = vadd.f32 0.0, %v4995
    %v4997 = vpop.f32.mrb[0].mxu0
    %v4998 = vpop.f32.mrb[0].mxu0
    %4999 = vdwg.mxu0
    %5000 = vmatprep.subr.bf16.mxu0 %v4921
    %5001 = vmatpush1.bf16.msra.mxu0 %v4920
    %5002 = vmatprep.subr.bf16.mxu0 %v4925
    %5003 = vmatpush1.bf16.msra.mxu0 %v4924
    %5004 = vmatprep.subr.bf16.mxu0 %v4929
    %5005 = vmatpush1.bf16.msra.mxu0 %v4928
    %5006 = vmatprep.subr.bf16.mxu0 %v4933
    %5007 = vmatpush1.bf16.msra.mxu0 %v4932
    %5008 = vmatprep.subr.bf16.mxu0 %v4937
    %5009 = vmatpush1.bf16.msra.mxu0 %v4936
    %5010 = vmatprep.subr.bf16.mxu0 %v4941
    %5011 = vmatpush1.bf16.msra.mxu0 %v4940
    %5012 = vmatprep.subr.bf16.mxu0 %v4945
    %5013 = vmatpush1.bf16.msra.mxu0 %v4944
    %5014 = vmatprep.subr.bf16.mxu0 %v4949
    %5015 = vmatpush1.bf16.msra.mxu0 %v4948
    %5016 = vmatprep.subr.bf16.mxu0 0
    %5017 = vmatpush1.bf16.msra.mxu0 0
    %5018 = vmatprep.subr.bf16.mxu0 0
    %5019 = vmatpush1.bf16.msra.mxu0 0
    %5020 = vmatprep.subr.bf16.mxu0 0
    %5021 = vmatpush1.bf16.msra.mxu0 0
    %5022 = vmatprep.subr.bf16.mxu0 0
    %5023 = vmatpush1.bf16.msra.mxu0 0
    %5024 = vmatprep.subr.bf16.mxu0 0
    %5025 = vmatpush1.bf16.msra.mxu0 0
    %5026 = vmatprep.subr.bf16.mxu0 0
    %5027 = vmatpush1.bf16.msra.mxu0 0
    %5028 = vmatprep.subr.bf16.mxu0 0
    %5029 = vmatpush1.bf16.msra.mxu0 0
    %5030 = vmatprep.subr.bf16.mxu0 0
    %5031 = vmatpush1.bf16.msra.mxu0 0
    %5032 = vmatprep.mubr.bf16.mxu0 0
    %5033 = vmatmul.mubr.bf16.gmra.mrb[0].mxu0 %v4957
    %v5034 = vpop.f32.mrb[0].mxu0
    %v5035 = vadd.f32 0.0, %v5034
    %v5036 = vpop.f32.mrb[0].mxu0
    %v5037 = vadd.f32 0.0, %v5036
    %v5038 = vpop.f32.mrb[0].mxu0
    %v5039 = vpop.f32.mrb[0].mxu0
    %5040 = vdwg.mxu0
    %v5045 = vrot.slane %v4994, 1
    %v5046 = vrot.slane %v4996, 1
    %v5047 = vrot.slane %v5035, 1
    %v5048 = vrot.slane %v5037, 1
    %v5049 = vrot.slane %v4994, 2
    %v5050 = vrot.slane %v4996, 2
    %v5051 = vrot.slane %v5035, 2
    %v5052 = vrot.slane %v5037, 2
    %v5061 = vadd.f32 %v3566, %v5045
    %v5062 = vadd.f32 %v3568, %v5046
    %v5063 = vadd.f32 %v3609, %v5047
    %v5064 = vadd.f32 %v3611, %v5048
    %v5065 = vadd.f32 %v3570, %v5049
    %v5066 = vadd.f32 %v3572, %v5050
    %v5067 = vadd.f32 %v3613, %v5051
    %v5068 = vadd.f32 %v3615, %v5052
    %v5069 = vxor.u32 %v5061, 2147483648
    %v5070 = vxor.u32 %v5065, 2147483648
    %v5071 = vmul.f32 %v5069, 1.442695
    %v5072 = vpow.pop %v5071
    %v5073 = vmul.f32 %v5070, 1.442695
    %v5074 = vpow.pop %v5073
    %v5075 = vadd.f32 %v5072, 1.0
    %v5076 = vadd.f32 %v5074, 1.0
    %v5077 = vrcp.pop %v5075
    %v5078 = vmul.f32 1.0, %v5077
    %v5079 = vrcp.pop %v5076
    %v5080 = vmul.f32 1.0, %v5079
    %v5081 = vxor.u32 %v5062, 2147483648
    %v5082 = vxor.u32 %v5066, 2147483648
    %v5083 = vmul.f32 %v5081, 1.442695
    %v5084 = vpow.pop %v5083
    %v5085 = vmul.f32 %v5082, 1.442695
    %v5086 = vpow.pop %v5085
    %v5087 = vadd.f32 %v5084, 1.0
    %v5088 = vadd.f32 %v5086, 1.0
    %v5089 = vrcp.pop %v5087
    %v5090 = vmul.f32 1.0, %v5089
    %v5091 = vrcp.pop %v5088
    %v5092 = vmul.f32 1.0, %v5091
    %v5093 = vtanh.pop %v5063
    %v5094 = vtanh.pop %v5067
    %v5095 = vxor.u32 %v5064, 2147483648
    %v5096 = vxor.u32 %v5068, 2147483648
    %v5097 = vmul.f32 %v5095, 1.442695
    %v5098 = vpow.pop %v5097
    %v5099 = vmul.f32 %v5096, 1.442695
    %v5100 = vpow.pop %v5099
    %v5101 = vadd.f32 %v5098, 1.0
    %v5102 = vadd.f32 %v5100, 1.0
    %v5103 = vrcp.pop %v5101
    %v5104 = vmul.f32 1.0, %v5103
    %v5105 = vrcp.pop %v5102
    %v5106 = vmul.f32 1.0, %v5105
    %v5109 = vrot.slane %v4908, 7
    %v5110 = vrot.slane %v4909, 7
    %v5113 = vmul.f32 %v5090, %v5109
    %v5114 = vmul.f32 %v5092, %v5110
    %v5115 = vmul.f32 %v5078, %v5093
    %v5116 = vmul.f32 %v5080, %v5094
    %v5117 = vadd.f32 %v5113, %v5115
    %v5118 = vadd.f32 %v5114, %v5116
    %v5119 = vtanh.pop %v5117
    %v5120 = vtanh.pop %v5118
    %v5121 = vmul.f32 %v5104, %v5119
    %v5122 = vmul.f32 %v5106, %v5120
    %5123 = vst [vmem:[#allocation3] sm:$0x80] %v5121
    %5124 = vst [vmem:[#allocation3 + $0x8] sm:$0x80] %v5122
    %v5125 = vld [vmem:[#allocation3] sm:$0xff]
    %v5126 = vld [vmem:[#allocation3 + $0x8] sm:$0xff]
    %s5127 = sshll.u32 %s164, 4
    %5128 = dma.done %s125, %s5127
    %s5129 = scalar_lea.vmem %s1, 12
    %v5130 = vld [vmem:[%s5129] sm:$0xf]
    %v5131 = vpack.c.bf16 %v5126, %v5125
    %v5132 = vld [vmem:[%s124] sm:$0xff]
    %v5133 = vld [vmem:[%s124 + $0x8] sm:$0xff]
    %v5134 = vld [vmem:[%s124 + $0x10] sm:$0xff]
    %v5135 = vld [vmem:[%s124 + $0x18] sm:$0xff]
    %v5136 = vld [vmem:[%s124 + $0x20] sm:$0xff]
    %v5137 = vld [vmem:[%s124 + $0x28] sm:$0xff]
    %v5138 = vld [vmem:[%s124 + $0x30] sm:$0xff]
    %v5139 = vld [vmem:[%s124 + $0x38] sm:$0xff]
    %v5140 = vld [vmem:[%s124 + $0x40] sm:$0xff]
    %v5141 = vld [vmem:[%s124 + $0x48] sm:$0xff]
    %v5142 = vld [vmem:[%s124 + $0x50] sm:$0xff]
    %v5143 = vld [vmem:[%s124 + $0x58] sm:$0xff]
    %v5144 = vld [vmem:[%s124 + $0x60] sm:$0xff]
    %v5145 = vld [vmem:[%s124 + $0x68] sm:$0xff]
    %v5146 = vld [vmem:[%s124 + $0x70] sm:$0xff]
    %v5147 = vld [vmem:[%s124 + $0x78] sm:$0xff]
    %v5148 = vld [vmem:[%s124 + $0x80] sm:$0xff]
    %v5149 = vld [vmem:[%s124 + $0x88] sm:$0xff]
    %v5150 = vld [vmem:[%s124 + $0x90] sm:$0xff]
    %v5151 = vld [vmem:[%s124 + $0x98] sm:$0xff]
    %v5152 = vld [vmem:[%s124 + $0xa0] sm:$0xff]
    %v5153 = vld [vmem:[%s124 + $0xa8] sm:$0xff]
    %v5154 = vld [vmem:[%s124 + $0xb0] sm:$0xff]
    %v5155 = vld [vmem:[%s124 + $0xb8] sm:$0xff]
    %v5156 = vld [vmem:[%s124 + $0xc0] sm:$0xff]
    %v5157 = vld [vmem:[%s124 + $0xc8] sm:$0xff]
    %v5158 = vld [vmem:[%s124 + $0xd0] sm:$0xff]
    %v5159 = vld [vmem:[%s124 + $0xd8] sm:$0xff]
    %v5160 = vld [vmem:[%s124 + $0xe0] sm:$0xff]
    %v5161 = vld [vmem:[%s124 + $0xe8] sm:$0xff]
    %v5162 = vld [vmem:[%s124 + $0xf0] sm:$0xff]
    %v5163 = vld [vmem:[%s124 + $0xf8] sm:$0xff]
    %v5165 = vlaneseq
    %v5166 = vshrl.u32 %v5165, 7
    %v5167 = vsub.s32 0, %v5166
    %v5168 = vrot.slane %v5130, %v5167
    %v5169 = vlaneseq
    %v5170 = vshrl.u32 %v5169, 7
    %v5171 = vsub.s32 1, %v5170
    %v5172 = vrot.slane %v5130, %v5171
    %v5173 = vlaneseq
    %v5174 = vshrl.u32 %v5173, 7
    %v5175 = vsub.s32 2, %v5174
    %v5176 = vrot.slane %v5130, %v5175
    %v5177 = vlaneseq
    %v5178 = vshrl.u32 %v5177, 7
    %v5179 = vsub.s32 3, %v5178
    %v5180 = vrot.slane %v5130, %v5179
    %5185 = vmatprep.subr.bf16.mxu0 %v5133
    %5186 = vmatpush1.bf16.msra.mxu0 %v5132
    %5187 = vmatprep.subr.bf16.mxu0 %v5137
    %5188 = vmatpush1.bf16.msra.mxu0 %v5136
    %5189 = vmatprep.subr.bf16.mxu0 %v5141
    %5190 = vmatpush1.bf16.msra.mxu0 %v5140
    %5191 = vmatprep.subr.bf16.mxu0 %v5145
    %5192 = vmatpush1.bf16.msra.mxu0 %v5144
    %5193 = vmatprep.subr.bf16.mxu0 %v5149
    %5194 = vmatpush1.bf16.msra.mxu0 %v5148
    %5195 = vmatprep.subr.bf16.mxu0 %v5153
    %5196 = vmatpush1.bf16.msra.mxu0 %v5152
    %5197 = vmatprep.subr.bf16.mxu0 %v5157
    %5198 = vmatpush1.bf16.msra.mxu0 %v5156
    %5199 = vmatprep.subr.bf16.mxu0 %v5161
    %5200 = vmatpush1.bf16.msra.mxu0 %v5160
    %5201 = vmatprep.subr.bf16.mxu0 0
    %5202 = vmatpush1.bf16.msra.mxu0 0
    %5203 = vmatprep.subr.bf16.mxu0 0
    %5204 = vmatpush1.bf16.msra.mxu0 0
    %5205 = vmatprep.subr.bf16.mxu0 0
    %5206 = vmatpush1.bf16.msra.mxu0 0
    %5207 = vmatprep.subr.bf16.mxu0 0
    %5208 = vmatpush1.bf16.msra.mxu0 0
    %5209 = vmatprep.subr.bf16.mxu0 0
    %5210 = vmatpush1.bf16.msra.mxu0 0
    %5211 = vmatprep.subr.bf16.mxu0 0
    %5212 = vmatpush1.bf16.msra.mxu0 0
    %5213 = vmatprep.subr.bf16.mxu0 0
    %5214 = vmatpush1.bf16.msra.mxu0 0
    %5215 = vmatprep.subr.bf16.mxu0 0
    %5216 = vmatpush1.bf16.msra.mxu0 0
    %5217 = vmatprep.mubr.bf16.mxu0 0
    %5218 = vmatmul.mubr.bf16.gmra.mrb[0].mxu0 %v5131
    %v5219 = vpop.f32.mrb[0].mxu0
    %v5220 = vadd.f32 %v5168, %v5219
    %v5221 = vpop.f32.mrb[0].mxu0
    %v5222 = vadd.f32 %v5172, %v5221
    %v5223 = vpop.f32.mrb[0].mxu0
    %v5224 = vadd.f32 %v5168, %v5223
    %v5225 = vpop.f32.mrb[0].mxu0
    %v5226 = vadd.f32 %v5172, %v5225
    %5227 = vdwg.mxu0
    %5228 = vmatprep.subr.bf16.mxu0 %v5135
    %5229 = vmatpush1.bf16.msra.mxu0 %v5134
    %5230 = vmatprep.subr.bf16.mxu0 %v5139
    %5231 = vmatpush1.bf16.msra.mxu0 %v5138
    %5232 = vmatprep.subr.bf16.mxu0 %v5143
    %5233 = vmatpush1.bf16.msra.mxu0 %v5142
    %5234 = vmatprep.subr.bf16.mxu0 %v5147
    %5235 = vmatpush1.bf16.msra.mxu0 %v5146
    %5236 = vmatprep.subr.bf16.mxu0 %v5151
    %5237 = vmatpush1.bf16.msra.mxu0 %v5150
    %5238 = vmatprep.subr.bf16.mxu0 %v5155
    %5239 = vmatpush1.bf16.msra.mxu0 %v5154
    %5240 = vmatprep.subr.bf16.mxu0 %v5159
    %5241 = vmatpush1.bf16.msra.mxu0 %v5158
    %5242 = vmatprep.subr.bf16.mxu0 %v5163
    %5243 = vmatpush1.bf16.msra.mxu0 %v5162
    %5244 = vmatprep.subr.bf16.mxu0 0
    %5245 = vmatpush1.bf16.msra.mxu0 0
    %5246 = vmatprep.subr.bf16.mxu0 0
    %5247 = vmatpush1.bf16.msra.mxu0 0
    %5248 = vmatprep.subr.bf16.mxu0 0
    %5249 = vmatpush1.bf16.msra.mxu0 0
    %5250 = vmatprep.subr.bf16.mxu0 0
    %5251 = vmatpush1.bf16.msra.mxu0 0
    %5252 = vmatprep.subr.bf16.mxu0 0
    %5253 = vmatpush1.bf16.msra.mxu0 0
    %5254 = vmatprep.subr.bf16.mxu0 0
    %5255 = vmatpush1.bf16.msra.mxu0 0
    %5256 = vmatprep.subr.bf16.mxu0 0
    %5257 = vmatpush1.bf16.msra.mxu0 0
    %5258 = vmatprep.subr.bf16.mxu0 0
    %5259 = vmatpush1.bf16.msra.mxu0 0
    %5260 = vmatprep.mubr.bf16.mxu0 0
    %5261 = vmatmul.mubr.bf16.gmra.mrb[0].mxu0 %v5131
    %v5262 = vpop.f32.mrb[0].mxu0
    %v5263 = vadd.f32 %v5176, %v5262
    %v5264 = vpop.f32.mrb[0].mxu0
    %v5265 = vadd.f32 %v5180, %v5264
    %v5266 = vpop.f32.mrb[0].mxu0
    %v5267 = vadd.f32 %v5176, %v5266
    %v5268 = vpop.f32.mrb[0].mxu0
    %v5269 = vadd.f32 %v5180, %v5268
    %5270 = vdwg.mxu0
    %v5271 = vxor.u32 %v5220, 2147483648
    %v5272 = vxor.u32 %v5224, 2147483648
    %v5273 = vmul.f32 %v5271, 1.442695
    %v5274 = vpow.pop %v5273
    %v5275 = vmul.f32 %v5272, 1.442695
    %v5276 = vpow.pop %v5275
    %v5277 = vadd.f32 %v5274, 1.0
    %v5278 = vadd.f32 %v5276, 1.0
    %v5279 = vrcp.pop %v5277
    %v5280 = vmul.f32 1.0, %v5279
    %v5281 = vrcp.pop %v5278
    %v5282 = vmul.f32 1.0, %v5281
    %v5283 = vxor.u32 %v5222, 2147483648
    %v5284 = vxor.u32 %v5226, 2147483648
    %v5285 = vmul.f32 %v5283, 1.442695
    %v5286 = vpow.pop %v5285
    %v5287 = vmul.f32 %v5284, 1.442695
    %v5288 = vpow.pop %v5287
    %v5289 = vadd.f32 %v5286, 1.0
    %v5290 = vadd.f32 %v5288, 1.0
    %v5291 = vrcp.pop %v5289
    %v5292 = vmul.f32 1.0, %v5291
    %v5293 = vrcp.pop %v5290
    %v5294 = vmul.f32 1.0, %v5293
    %v5295 = vtanh.pop %v5263
    %v5296 = vtanh.pop %v5267
    %v5297 = vxor.u32 %v5265, 2147483648
    %v5298 = vxor.u32 %v5269, 2147483648
    %v5299 = vmul.f32 %v5297, 1.442695
    %v5300 = vpow.pop %v5299
    %v5301 = vmul.f32 %v5298, 1.442695
    %v5302 = vpow.pop %v5301
    %v5303 = vadd.f32 %v5300, 1.0
    %v5304 = vadd.f32 %v5302, 1.0
    %v5305 = vrcp.pop %v5303
    %v5306 = vmul.f32 1.0, %v5305
    %v5307 = vrcp.pop %v5304
    %v5308 = vmul.f32 1.0, %v5307
    %v5309 = vmul.f32 %v5292, 0.0
    %v5310 = vmul.f32 %v5294, 0.0
    %v5311 = vmul.f32 %v5280, %v5295
    %v5312 = vmul.f32 %v5282, %v5296
    %v5313 = vadd.f32 %v5309, %v5311
    %v5314 = vadd.f32 %v5310, %v5312
    %v5315 = vtanh.pop %v5313
    %v5316 = vtanh.pop %v5314
    %v5317 = vmul.f32 %v5306, %v5315
    %v5318 = vmul.f32 %v5308, %v5316
    %v5319 = vpack.c.bf16 %v5317, %v5317
    %v5320 = vpack.c.bf16 %v5318, %v5318
    %s5321 = scalar_lea.vmem [#allocation2], 1792
    %v5322 = vld [vmem:[%s5321] sm:$0xff]
    %v5323 = vld [vmem:[%s5321 + $0x8] sm:$0xff]
    %v5324 = vld [vmem:[%s5321 + $0x10] sm:$0xff]
    %v5325 = vld [vmem:[%s5321 + $0x18] sm:$0xff]
    %v5326 = vld [vmem:[%s5321 + $0x20] sm:$0xff]
    %v5327 = vld [vmem:[%s5321 + $0x28] sm:$0xff]
    %v5328 = vld [vmem:[%s5321 + $0x30] sm:$0xff]
    %v5329 = vld [vmem:[%s5321 + $0x38] sm:$0xff]
    %v5330 = vld [vmem:[%s5321 + $0x40] sm:$0xff]
    %v5331 = vld [vmem:[%s5321 + $0x48] sm:$0xff]
    %v5332 = vld [vmem:[%s5321 + $0x50] sm:$0xff]
    %v5333 = vld [vmem:[%s5321 + $0x58] sm:$0xff]
    %v5334 = vld [vmem:[%s5321 + $0x60] sm:$0xff]
    %v5335 = vld [vmem:[%s5321 + $0x68] sm:$0xff]
    %v5336 = vld [vmem:[%s5321 + $0x70] sm:$0xff]
    %v5337 = vld [vmem:[%s5321 + $0x78] sm:$0xff]
    %v5338 = vld [vmem:[%s5321 + $0x80] sm:$0xff]
    %v5339 = vld [vmem:[%s5321 + $0x88] sm:$0xff]
    %v5340 = vld [vmem:[%s5321 + $0x90] sm:$0xff]
    %v5341 = vld [vmem:[%s5321 + $0x98] sm:$0xff]
    %v5342 = vld [vmem:[%s5321 + $0xa0] sm:$0xff]
    %v5343 = vld [vmem:[%s5321 + $0xa8] sm:$0xff]
    %v5344 = vld [vmem:[%s5321 + $0xb0] sm:$0xff]
    %v5345 = vld [vmem:[%s5321 + $0xb8] sm:$0xff]
    %v5346 = vld [vmem:[%s5321 + $0xc0] sm:$0xff]
    %v5347 = vld [vmem:[%s5321 + $0xc8] sm:$0xff]
    %v5348 = vld [vmem:[%s5321 + $0xd0] sm:$0xff]
    %v5349 = vld [vmem:[%s5321 + $0xd8] sm:$0xff]
    %v5350 = vld [vmem:[%s5321 + $0xe0] sm:$0xff]
    %v5351 = vld [vmem:[%s5321 + $0xe8] sm:$0xff]
    %v5352 = vld [vmem:[%s5321 + $0xf0] sm:$0xff]
    %v5353 = vld [vmem:[%s5321 + $0xf8] sm:$0xff]
    %v5356 = vunpack.c.l.b16 %v5319
    %v5357 = vunpack.c.l.b16 %v5320
    %v5358 = vrot.slane %v5357, 7
    %v5359 = vsel %vm398, %v5358, %v5356
    %v5360 = vpack.c.b16 %v5359, %v5359
    %5362 = vmatprep.subr.bf16.mxu0 %v5323
    %5363 = vmatpush1.bf16.msra.mxu0 %v5322
    %5364 = vmatprep.subr.bf16.mxu0 %v5327
    %5365 = vmatpush1.bf16.msra.mxu0 %v5326
    %5366 = vmatprep.subr.bf16.mxu0 %v5331
    %5367 = vmatpush1.bf16.msra.mxu0 %v5330
    %5368 = vmatprep.subr.bf16.mxu0 %v5335
    %5369 = vmatpush1.bf16.msra.mxu0 %v5334
    %5370 = vmatprep.subr.bf16.mxu0 %v5339
    %5371 = vmatpush1.bf16.msra.mxu0 %v5338
    %5372 = vmatprep.subr.bf16.mxu0 %v5343
    %5373 = vmatpush1.bf16.msra.mxu0 %v5342
    %5374 = vmatprep.subr.bf16.mxu0 %v5347
    %5375 = vmatpush1.bf16.msra.mxu0 %v5346
    %5376 = vmatprep.subr.bf16.mxu0 %v5351
    %5377 = vmatpush1.bf16.msra.mxu0 %v5350
    %5378 = vmatprep.subr.bf16.mxu0 0
    %5379 = vmatpush1.bf16.msra.mxu0 0
    %5380 = vmatprep.subr.bf16.mxu0 0
    %5381 = vmatpush1.bf16.msra.mxu0 0
    %5382 = vmatprep.subr.bf16.mxu0 0
    %5383 = vmatpush1.bf16.msra.mxu0 0
    %5384 = vmatprep.subr.bf16.mxu0 0
    %5385 = vmatpush1.bf16.msra.mxu0 0
    %5386 = vmatprep.subr.bf16.mxu0 0
    %5387 = vmatpush1.bf16.msra.mxu0 0
    %5388 = vmatprep.subr.bf16.mxu0 0
    %5389 = vmatpush1.bf16.msra.mxu0 0
    %5390 = vmatprep.subr.bf16.mxu0 0
    %5391 = vmatpush1.bf16.msra.mxu0 0
    %5392 = vmatprep.subr.bf16.mxu0 0
    %5393 = vmatpush1.bf16.msra.mxu0 0
    %5394 = vmatprep.mubr.bf16.mxu0 0
    %5395 = vmatmul.mubr.bf16.gmra.mrb[0].mxu0 %v5360
    %v5396 = vpop.f32.mrb[0].mxu0
    %v5397 = vadd.f32 0.0, %v5396
    %v5398 = vpop.f32.mrb[0].mxu0
    %v5399 = vadd.f32 0.0, %v5398
    %v5400 = vpop.f32.mrb[0].mxu0
    %v5401 = vpop.f32.mrb[0].mxu0
    %5402 = vdwg.mxu0
    %5403 = vmatprep.subr.bf16.mxu0 %v5325
    %5404 = vmatpush1.bf16.msra.mxu0 %v5324
    %5405 = vmatprep.subr.bf16.mxu0 %v5329
    %5406 = vmatpush1.bf16.msra.mxu0 %v5328
    %5407 = vmatprep.subr.bf16.mxu0 %v5333
    %5408 = vmatpush1.bf16.msra.mxu0 %v5332
    %5409 = vmatprep.subr.bf16.mxu0 %v5337
    %5410 = vmatpush1.bf16.msra.mxu0 %v5336
    %5411 = vmatprep.subr.bf16.mxu0 %v5341
    %5412 = vmatpush1.bf16.msra.mxu0 %v5340
    %5413 = vmatprep.subr.bf16.mxu0 %v5345
    %5414 = vmatpush1.bf16.msra.mxu0 %v5344
    %5415 = vmatprep.subr.bf16.mxu0 %v5349
    %5416 = vmatpush1.bf16.msra.mxu0 %v5348
    %5417 = vmatprep.subr.bf16.mxu0 %v5353
    %5418 = vmatpush1.bf16.msra.mxu0 %v5352
    %5419 = vmatprep.subr.bf16.mxu0 0
    %5420 = vmatpush1.bf16.msra.mxu0 0
    %5421 = vmatprep.subr.bf16.mxu0 0
    %5422 = vmatpush1.bf16.msra.mxu0 0
    %5423 = vmatprep.subr.bf16.mxu0 0
    %5424 = vmatpush1.bf16.msra.mxu0 0
    %5425 = vmatprep.subr.bf16.mxu0 0
    %5426 = vmatpush1.bf16.msra.mxu0 0
    %5427 = vmatprep.subr.bf16.mxu0 0
    %5428 = vmatpush1.bf16.msra.mxu0 0
    %5429 = vmatprep.subr.bf16.mxu0 0
    %5430 = vmatpush1.bf16.msra.mxu0 0
    %5431 = vmatprep.subr.bf16.mxu0 0
    %5432 = vmatpush1.bf16.msra.mxu0 0
    %5433 = vmatprep.subr.bf16.mxu0 0
    %5434 = vmatpush1.bf16.msra.mxu0 0
    %5435 = vmatprep.mubr.bf16.mxu0 0
    %5436 = vmatmul.mubr.bf16.gmra.mrb[0].mxu0 %v5360
    %v5437 = vpop.f32.mrb[0].mxu0
    %v5438 = vadd.f32 0.0, %v5437
    %v5439 = vpop.f32.mrb[0].mxu0
    %v5440 = vadd.f32 0.0, %v5439
    %v5441 = vpop.f32.mrb[0].mxu0
    %v5442 = vpop.f32.mrb[0].mxu0
    %5443 = vdwg.mxu0
    %v5448 = vrot.slane %v5397, 7
    %v5449 = vrot.slane %v5399, 7
    %v5450 = vrot.slane %v5438, 7
    %v5451 = vrot.slane %v5440, 7
    %v5460 = vadd.f32 %v5220, %v5448
    %v5461 = vadd.f32 %v5222, %v5449
    %v5462 = vadd.f32 %v5263, %v5450
    %v5463 = vadd.f32 %v5265, %v5451
    %v5464 = vadd.f32 %v5224, %v5397
    %v5465 = vadd.f32 %v5226, %v5399
    %v5466 = vadd.f32 %v5267, %v5438
    %v5467 = vadd.f32 %v5269, %v5440
    %v5468 = vxor.u32 %v5460, 2147483648
    %v5469 = vxor.u32 %v5464, 2147483648
    %v5470 = vmul.f32 %v5468, 1.442695
    %v5471 = vpow.pop %v5470
    %v5472 = vmul.f32 %v5469, 1.442695
    %v5473 = vpow.pop %v5472
    %v5474 = vadd.f32 %v5471, 1.0
    %v5475 = vadd.f32 %v5473, 1.0
    %v5476 = vrcp.pop %v5474
    %v5477 = vmul.f32 1.0, %v5476
    %v5478 = vrcp.pop %v5475
    %v5479 = vmul.f32 1.0, %v5478
    %v5480 = vxor.u32 %v5461, 2147483648
    %v5481 = vxor.u32 %v5465, 2147483648
    %v5482 = vmul.f32 %v5480, 1.442695
    %v5483 = vpow.pop %v5482
    %v5484 = vmul.f32 %v5481, 1.442695
    %v5485 = vpow.pop %v5484
    %v5486 = vadd.f32 %v5483, 1.0
    %v5487 = vadd.f32 %v5485, 1.0
    %v5488 = vrcp.pop %v5486
    %v5489 = vmul.f32 1.0, %v5488
    %v5490 = vrcp.pop %v5487
    %v5491 = vmul.f32 1.0, %v5490
    %v5492 = vtanh.pop %v5462
    %v5493 = vtanh.pop %v5466
    %v5494 = vxor.u32 %v5463, 2147483648
    %v5495 = vxor.u32 %v5467, 2147483648
    %v5496 = vmul.f32 %v5494, 1.442695
    %v5497 = vpow.pop %v5496
    %v5498 = vmul.f32 %v5495, 1.442695
    %v5499 = vpow.pop %v5498
    %v5500 = vadd.f32 %v5497, 1.0
    %v5501 = vadd.f32 %v5499, 1.0
    %v5502 = vrcp.pop %v5500
    %v5503 = vmul.f32 1.0, %v5502
    %v5504 = vrcp.pop %v5501
    %v5505 = vmul.f32 1.0, %v5504
    %v5508 = vrot.slane %v5313, 7
    %v5509 = vrot.slane %v5314, 7
    %v5512 = vmul.f32 %v5489, %v5508
    %v5513 = vmul.f32 %v5491, %v5509
    %v5514 = vmul.f32 %v5477, %v5492
    %v5515 = vmul.f32 %v5479, %v5493
    %v5516 = vadd.f32 %v5512, %v5514
    %v5517 = vadd.f32 %v5513, %v5515
    %v5518 = vtanh.pop %v5516
    %v5519 = vtanh.pop %v5517
    %v5520 = vmul.f32 %v5503, %v5518
    %v5521 = vmul.f32 %v5505, %v5519
    %v5522 = vpack.c.bf16 %v5520, %v5520
    %v5523 = vpack.c.bf16 %v5521, %v5521
    %v5526 = vunpack.c.l.b16 %v5522
    %v5527 = vunpack.c.l.b16 %v5523
    %v5528 = vrot.slane %v5526, 1
    %v5529 = vsel %vm398, %v5527, %v5528
    %v5530 = vpack.c.b16 %v5529, %v5529
    %5532 = vmatprep.subr.bf16.mxu0 %v5323
    %5533 = vmatpush1.bf16.msra.mxu0 %v5322
    %5534 = vmatprep.subr.bf16.mxu0 %v5327
    %5535 = vmatpush1.bf16.msra.mxu0 %v5326
    %5536 = vmatprep.subr.bf16.mxu0 %v5331
    %5537 = vmatpush1.bf16.msra.mxu0 %v5330
    %5538 = vmatprep.subr.bf16.mxu0 %v5335
    %5539 = vmatpush1.bf16.msra.mxu0 %v5334
    %5540 = vmatprep.subr.bf16.mxu0 %v5339
    %5541 = vmatpush1.bf16.msra.mxu0 %v5338
    %5542 = vmatprep.subr.bf16.mxu0 %v5343
    %5543 = vmatpush1.bf16.msra.mxu0 %v5342
    %5544 = vmatprep.subr.bf16.mxu0 %v5347
    %5545 = vmatpush1.bf16.msra.mxu0 %v5346
    %5546 = vmatprep.subr.bf16.mxu0 %v5351
    %5547 = vmatpush1.bf16.msra.mxu0 %v5350
    %5548 = vmatprep.subr.bf16.mxu0 0
    %5549 = vmatpush1.bf16.msra.mxu0 0
    %5550 = vmatprep.subr.bf16.mxu0 0
    %5551 = vmatpush1.bf16.msra.mxu0 0
    %5552 = vmatprep.subr.bf16.mxu0 0
    %5553 = vmatpush1.bf16.msra.mxu0 0
    %5554 = vmatprep.subr.bf16.mxu0 0
    %5555 = vmatpush1.bf16.msra.mxu0 0
    %5556 = vmatprep.subr.bf16.mxu0 0
    %5557 = vmatpush1.bf16.msra.mxu0 0
    %5558 = vmatprep.subr.bf16.mxu0 0
    %5559 = vmatpush1.bf16.msra.mxu0 0
    %5560 = vmatprep.subr.bf16.mxu0 0
    %5561 = vmatpush1.bf16.msra.mxu0 0
    %5562 = vmatprep.subr.bf16.mxu0 0
    %5563 = vmatpush1.bf16.msra.mxu0 0
    %5564 = vmatprep.mubr.bf16.mxu0 0
    %5565 = vmatmul.mubr.bf16.gmra.mrb[0].mxu0 %v5530
    %v5566 = vpop.f32.mrb[0].mxu0
    %v5567 = vadd.f32 0.0, %v5566
    %v5568 = vpop.f32.mrb[0].mxu0
    %v5569 = vadd.f32 0.0, %v5568
    %v5570 = vpop.f32.mrb[0].mxu0
    %v5571 = vpop.f32.mrb[0].mxu0
    %5572 = vdwg.mxu0
    %5573 = vmatprep.subr.bf16.mxu0 %v5325
    %5574 = vmatpush1.bf16.msra.mxu0 %v5324
    %5575 = vmatprep.subr.bf16.mxu0 %v5329
    %5576 = vmatpush1.bf16.msra.mxu0 %v5328
    %5577 = vmatprep.subr.bf16.mxu0 %v5333
    %5578 = vmatpush1.bf16.msra.mxu0 %v5332
    %5579 = vmatprep.subr.bf16.mxu0 %v5337
    %5580 = vmatpush1.bf16.msra.mxu0 %v5336
    %5581 = vmatprep.subr.bf16.mxu0 %v5341
    %5582 = vmatpush1.bf16.msra.mxu0 %v5340
    %5583 = vmatprep.subr.bf16.mxu0 %v5345
    %5584 = vmatpush1.bf16.msra.mxu0 %v5344
    %5585 = vmatprep.subr.bf16.mxu0 %v5349
    %5586 = vmatpush1.bf16.msra.mxu0 %v5348
    %5587 = vmatprep.subr.bf16.mxu0 %v5353
    %5588 = vmatpush1.bf16.msra.mxu0 %v5352
    %5589 = vmatprep.subr.bf16.mxu0 0
    %5590 = vmatpush1.bf16.msra.mxu0 0
    %5591 = vmatprep.subr.bf16.mxu0 0
    %5592 = vmatpush1.bf16.msra.mxu0 0
    %5593 = vmatprep.subr.bf16.mxu0 0
    %5594 = vmatpush1.bf16.msra.mxu0 0
    %5595 = vmatprep.subr.bf16.mxu0 0
    %5596 = vmatpush1.bf16.msra.mxu0 0
    %5597 = vmatprep.subr.bf16.mxu0 0
    %5598 = vmatpush1.bf16.msra.mxu0 0
    %5599 = vmatprep.subr.bf16.mxu0 0
    %5600 = vmatpush1.bf16.msra.mxu0 0
    %5601 = vmatprep.subr.bf16.mxu0 0
    %5602 = vmatpush1.bf16.msra.mxu0 0
    %5603 = vmatprep.subr.bf16.mxu0 0
    %5604 = vmatpush1.bf16.msra.mxu0 0
    %5605 = vmatprep.mubr.bf16.mxu0 0
    %5606 = vmatmul.mubr.bf16.gmra.mrb[0].mxu0 %v5530
    %v5607 = vpop.f32.mrb[0].mxu0
    %v5608 = vadd.f32 0.0, %v5607
    %v5609 = vpop.f32.mrb[0].mxu0
    %v5610 = vadd.f32 0.0, %v5609
    %v5611 = vpop.f32.mrb[0].mxu0
    %v5612 = vpop.f32.mrb[0].mxu0
    %5613 = vdwg.mxu0
    %v5618 = vrot.slane %v5567, 6
    %v5619 = vrot.slane %v5569, 6
    %v5620 = vrot.slane %v5608, 6
    %v5621 = vrot.slane %v5610, 6
    %v5622 = vrot.slane %v5567, 7
    %v5623 = vrot.slane %v5569, 7
    %v5624 = vrot.slane %v5608, 7
    %v5625 = vrot.slane %v5610, 7
    %v5634 = vadd.f32 %v5220, %v5618
    %v5635 = vadd.f32 %v5222, %v5619
    %v5636 = vadd.f32 %v5263, %v5620
    %v5637 = vadd.f32 %v5265, %v5621
    %v5638 = vadd.f32 %v5224, %v5622
    %v5639 = vadd.f32 %v5226, %v5623
    %v5640 = vadd.f32 %v5267, %v5624
    %v5641 = vadd.f32 %v5269, %v5625
    %v5642 = vxor.u32 %v5634, 2147483648
    %v5643 = vxor.u32 %v5638, 2147483648
    %v5644 = vmul.f32 %v5642, 1.442695
    %v5645 = vpow.pop %v5644
    %v5646 = vmul.f32 %v5643, 1.442695
    %v5647 = vpow.pop %v5646
    %v5648 = vadd.f32 %v5645, 1.0
    %v5649 = vadd.f32 %v5647, 1.0
    %v5650 = vrcp.pop %v5648
    %v5651 = vmul.f32 1.0, %v5650
    %v5652 = vrcp.pop %v5649
    %v5653 = vmul.f32 1.0, %v5652
    %v5654 = vxor.u32 %v5635, 2147483648
    %v5655 = vxor.u32 %v5639, 2147483648
    %v5656 = vmul.f32 %v5654, 1.442695
    %v5657 = vpow.pop %v5656
    %v5658 = vmul.f32 %v5655, 1.442695
    %v5659 = vpow.pop %v5658
    %v5660 = vadd.f32 %v5657, 1.0
    %v5661 = vadd.f32 %v5659, 1.0
    %v5662 = vrcp.pop %v5660
    %v5663 = vmul.f32 1.0, %v5662
    %v5664 = vrcp.pop %v5661
    %v5665 = vmul.f32 1.0, %v5664
    %v5666 = vtanh.pop %v5636
    %v5667 = vtanh.pop %v5640
    %v5668 = vxor.u32 %v5637, 2147483648
    %v5669 = vxor.u32 %v5641, 2147483648
    %v5670 = vmul.f32 %v5668, 1.442695
    %v5671 = vpow.pop %v5670
    %v5672 = vmul.f32 %v5669, 1.442695
    %v5673 = vpow.pop %v5672
    %v5674 = vadd.f32 %v5671, 1.0
    %v5675 = vadd.f32 %v5673, 1.0
    %v5676 = vrcp.pop %v5674
    %v5677 = vmul.f32 1.0, %v5676
    %v5678 = vrcp.pop %v5675
    %v5679 = vmul.f32 1.0, %v5678
    %v5682 = vrot.slane %v5516, 7
    %v5683 = vrot.slane %v5517, 7
    %v5686 = vmul.f32 %v5663, %v5682
    %v5687 = vmul.f32 %v5665, %v5683
    %v5688 = vmul.f32 %v5651, %v5666
    %v5689 = vmul.f32 %v5653, %v5667
    %v5690 = vadd.f32 %v5686, %v5688
    %v5691 = vadd.f32 %v5687, %v5689
    %v5692 = vtanh.pop %v5690
    %v5693 = vtanh.pop %v5691
    %v5694 = vmul.f32 %v5677, %v5692
    %v5695 = vmul.f32 %v5679, %v5693
    %v5696 = vpack.c.bf16 %v5694, %v5694
    %v5697 = vpack.c.bf16 %v5695, %v5695
    %v5700 = vunpack.c.l.b16 %v5696
    %v5701 = vunpack.c.l.b16 %v5697
    %v5702 = vrot.slane %v5700, 2
    %v5703 = vrot.slane %v5701, 1
    %v5704 = vsel %vm398, %v5703, %v5702
    %v5705 = vpack.c.b16 %v5704, %v5704
    %5707 = vmatprep.subr.bf16.mxu0 %v5323
    %5708 = vmatpush1.bf16.msra.mxu0 %v5322
    %5709 = vmatprep.subr.bf16.mxu0 %v5327
    %5710 = vmatpush1.bf16.msra.mxu0 %v5326
    %5711 = vmatprep.subr.bf16.mxu0 %v5331
    %5712 = vmatpush1.bf16.msra.mxu0 %v5330
    %5713 = vmatprep.subr.bf16.mxu0 %v5335
    %5714 = vmatpush1.bf16.msra.mxu0 %v5334
    %5715 = vmatprep.subr.bf16.mxu0 %v5339
    %5716 = vmatpush1.bf16.msra.mxu0 %v5338
    %5717 = vmatprep.subr.bf16.mxu0 %v5343
    %5718 = vmatpush1.bf16.msra.mxu0 %v5342
    %5719 = vmatprep.subr.bf16.mxu0 %v5347
    %5720 = vmatpush1.bf16.msra.mxu0 %v5346
    %5721 = vmatprep.subr.bf16.mxu0 %v5351
    %5722 = vmatpush1.bf16.msra.mxu0 %v5350
    %5723 = vmatprep.subr.bf16.mxu0 0
    %5724 = vmatpush1.bf16.msra.mxu0 0
    %5725 = vmatprep.subr.bf16.mxu0 0
    %5726 = vmatpush1.bf16.msra.mxu0 0
    %5727 = vmatprep.subr.bf16.mxu0 0
    %5728 = vmatpush1.bf16.msra.mxu0 0
    %5729 = vmatprep.subr.bf16.mxu0 0
    %5730 = vmatpush1.bf16.msra.mxu0 0
    %5731 = vmatprep.subr.bf16.mxu0 0
    %5732 = vmatpush1.bf16.msra.mxu0 0
    %5733 = vmatprep.subr.bf16.mxu0 0
    %5734 = vmatpush1.bf16.msra.mxu0 0
    %5735 = vmatprep.subr.bf16.mxu0 0
    %5736 = vmatpush1.bf16.msra.mxu0 0
    %5737 = vmatprep.subr.bf16.mxu0 0
    %5738 = vmatpush1.bf16.msra.mxu0 0
    %5739 = vmatprep.mubr.bf16.mxu0 0
    %5740 = vmatmul.mubr.bf16.gmra.mrb[0].mxu0 %v5705
    %v5741 = vpop.f32.mrb[0].mxu0
    %v5742 = vadd.f32 0.0, %v5741
    %v5743 = vpop.f32.mrb[0].mxu0
    %v5744 = vadd.f32 0.0, %v5743
    %v5745 = vpop.f32.mrb[0].mxu0
    %v5746 = vpop.f32.mrb[0].mxu0
    %5747 = vdwg.mxu0
    %5748 = vmatprep.subr.bf16.mxu0 %v5325
    %5749 = vmatpush1.bf16.msra.mxu0 %v5324
    %5750 = vmatprep.subr.bf16.mxu0 %v5329
    %5751 = vmatpush1.bf16.msra.mxu0 %v5328
    %5752 = vmatprep.subr.bf16.mxu0 %v5333
    %5753 = vmatpush1.bf16.msra.mxu0 %v5332
    %5754 = vmatprep.subr.bf16.mxu0 %v5337
    %5755 = vmatpush1.bf16.msra.mxu0 %v5336
    %5756 = vmatprep.subr.bf16.mxu0 %v5341
    %5757 = vmatpush1.bf16.msra.mxu0 %v5340
    %5758 = vmatprep.subr.bf16.mxu0 %v5345
    %5759 = vmatpush1.bf16.msra.mxu0 %v5344
    %5760 = vmatprep.subr.bf16.mxu0 %v5349
    %5761 = vmatpush1.bf16.msra.mxu0 %v5348
    %5762 = vmatprep.subr.bf16.mxu0 %v5353
    %5763 = vmatpush1.bf16.msra.mxu0 %v5352
    %5764 = vmatprep.subr.bf16.mxu0 0
    %5765 = vmatpush1.bf16.msra.mxu0 0
    %5766 = vmatprep.subr.bf16.mxu0 0
    %5767 = vmatpush1.bf16.msra.mxu0 0
    %5768 = vmatprep.subr.bf16.mxu0 0
    %5769 = vmatpush1.bf16.msra.mxu0 0
    %5770 = vmatprep.subr.bf16.mxu0 0
    %5771 = vmatpush1.bf16.msra.mxu0 0
    %5772 = vmatprep.subr.bf16.mxu0 0
    %5773 = vmatpush1.bf16.msra.mxu0 0
    %5774 = vmatprep.subr.bf16.mxu0 0
    %5775 = vmatpush1.bf16.msra.mxu0 0
    %5776 = vmatprep.subr.bf16.mxu0 0
    %5777 = vmatpush1.bf16.msra.mxu0 0
    %5778 = vmatprep.subr.bf16.mxu0 0
    %5779 = vmatpush1.bf16.msra.mxu0 0
    %5780 = vmatprep.mubr.bf16.mxu0 0
    %5781 = vmatmul.mubr.bf16.gmra.mrb[0].mxu0 %v5705
    %v5782 = vpop.f32.mrb[0].mxu0
    %v5783 = vadd.f32 0.0, %v5782
    %v5784 = vpop.f32.mrb[0].mxu0
    %v5785 = vadd.f32 0.0, %v5784
    %v5786 = vpop.f32.mrb[0].mxu0
    %v5787 = vpop.f32.mrb[0].mxu0
    %5788 = vdwg.mxu0
    %v5793 = vrot.slane %v5742, 5
    %v5794 = vrot.slane %v5744, 5
    %v5795 = vrot.slane %v5783, 5
    %v5796 = vrot.slane %v5785, 5
    %v5797 = vrot.slane %v5742, 6
    %v5798 = vrot.slane %v5744, 6
    %v5799 = vrot.slane %v5783, 6
    %v5800 = vrot.slane %v5785, 6
    %v5809 = vadd.f32 %v5220, %v5793
    %v5810 = vadd.f32 %v5222, %v5794
    %v5811 = vadd.f32 %v5263, %v5795
    %v5812 = vadd.f32 %v5265, %v5796
    %v5813 = vadd.f32 %v5224, %v5797
    %v5814 = vadd.f32 %v5226, %v5798
    %v5815 = vadd.f32 %v5267, %v5799
    %v5816 = vadd.f32 %v5269, %v5800
    %v5817 = vxor.u32 %v5809, 2147483648
    %v5818 = vxor.u32 %v5813, 2147483648
    %v5819 = vmul.f32 %v5817, 1.442695
    %v5820 = vpow.pop %v5819
    %v5821 = vmul.f32 %v5818, 1.442695
    %v5822 = vpow.pop %v5821
    %v5823 = vadd.f32 %v5820, 1.0
    %v5824 = vadd.f32 %v5822, 1.0
    %v5825 = vrcp.pop %v5823
    %v5826 = vmul.f32 1.0, %v5825
    %v5827 = vrcp.pop %v5824
    %v5828 = vmul.f32 1.0, %v5827
    %v5829 = vxor.u32 %v5810, 2147483648
    %v5830 = vxor.u32 %v5814, 2147483648
    %v5831 = vmul.f32 %v5829, 1.442695
    %v5832 = vpow.pop %v5831
    %v5833 = vmul.f32 %v5830, 1.442695
    %v5834 = vpow.pop %v5833
    %v5835 = vadd.f32 %v5832, 1.0
    %v5836 = vadd.f32 %v5834, 1.0
    %v5837 = vrcp.pop %v5835
    %v5838 = vmul.f32 1.0, %v5837
    %v5839 = vrcp.pop %v5836
    %v5840 = vmul.f32 1.0, %v5839
    %v5841 = vtanh.pop %v5811
    %v5842 = vtanh.pop %v5815
    %v5843 = vxor.u32 %v5812, 2147483648
    %v5844 = vxor.u32 %v5816, 2147483648
    %v5845 = vmul.f32 %v5843, 1.442695
    %v5846 = vpow.pop %v5845
    %v5847 = vmul.f32 %v5844, 1.442695
    %v5848 = vpow.pop %v5847
    %v5849 = vadd.f32 %v5846, 1.0
    %v5850 = vadd.f32 %v5848, 1.0
    %v5851 = vrcp.pop %v5849
    %v5852 = vmul.f32 1.0, %v5851
    %v5853 = vrcp.pop %v5850
    %v5854 = vmul.f32 1.0, %v5853
    %v5857 = vrot.slane %v5690, 7
    %v5858 = vrot.slane %v5691, 7
    %v5861 = vmul.f32 %v5838, %v5857
    %v5862 = vmul.f32 %v5840, %v5858
    %v5863 = vmul.f32 %v5826, %v5841
    %v5864 = vmul.f32 %v5828, %v5842
    %v5865 = vadd.f32 %v5861, %v5863
    %v5866 = vadd.f32 %v5862, %v5864
    %v5867 = vtanh.pop %v5865
    %v5868 = vtanh.pop %v5866
    %v5869 = vmul.f32 %v5852, %v5867
    %v5870 = vmul.f32 %v5854, %v5868
    %v5871 = vpack.c.bf16 %v5869, %v5869
    %v5872 = vpack.c.bf16 %v5870, %v5870
    %v5875 = vunpack.c.l.b16 %v5871
    %v5876 = vunpack.c.l.b16 %v5872
    %v5877 = vrot.slane %v5875, 3
    %v5878 = vrot.slane %v5876, 2
    %v5879 = vsel %vm398, %v5878, %v5877
    %v5880 = vpack.c.b16 %v5879, %v5879
    %5882 = vmatprep.subr.bf16.mxu0 %v5323
    %5883 = vmatpush1.bf16.msra.mxu0 %v5322
    %5884 = vmatprep.subr.bf16.mxu0 %v5327
    %5885 = vmatpush1.bf16.msra.mxu0 %v5326
    %5886 = vmatprep.subr.bf16.mxu0 %v5331
    %5887 = vmatpush1.bf16.msra.mxu0 %v5330
    %5888 = vmatprep.subr.bf16.mxu0 %v5335
    %5889 = vmatpush1.bf16.msra.mxu0 %v5334
    %5890 = vmatprep.subr.bf16.mxu0 %v5339
    %5891 = vmatpush1.bf16.msra.mxu0 %v5338
    %5892 = vmatprep.subr.bf16.mxu0 %v5343
    %5893 = vmatpush1.bf16.msra.mxu0 %v5342
    %5894 = vmatprep.subr.bf16.mxu0 %v5347
    %5895 = vmatpush1.bf16.msra.mxu0 %v5346
    %5896 = vmatprep.subr.bf16.mxu0 %v5351
    %5897 = vmatpush1.bf16.msra.mxu0 %v5350
    %5898 = vmatprep.subr.bf16.mxu0 0
    %5899 = vmatpush1.bf16.msra.mxu0 0
    %5900 = vmatprep.subr.bf16.mxu0 0
    %5901 = vmatpush1.bf16.msra.mxu0 0
    %5902 = vmatprep.subr.bf16.mxu0 0
    %5903 = vmatpush1.bf16.msra.mxu0 0
    %5904 = vmatprep.subr.bf16.mxu0 0
    %5905 = vmatpush1.bf16.msra.mxu0 0
    %5906 = vmatprep.subr.bf16.mxu0 0
    %5907 = vmatpush1.bf16.msra.mxu0 0
    %5908 = vmatprep.subr.bf16.mxu0 0
    %5909 = vmatpush1.bf16.msra.mxu0 0
    %5910 = vmatprep.subr.bf16.mxu0 0
    %5911 = vmatpush1.bf16.msra.mxu0 0
    %5912 = vmatprep.subr.bf16.mxu0 0
    %5913 = vmatpush1.bf16.msra.mxu0 0
    %5914 = vmatprep.mubr.bf16.mxu0 0
    %5915 = vmatmul.mubr.bf16.gmra.mrb[0].mxu0 %v5880
    %v5916 = vpop.f32.mrb[0].mxu0
    %v5917 = vadd.f32 0.0, %v5916
    %v5918 = vpop.f32.mrb[0].mxu0
    %v5919 = vadd.f32 0.0, %v5918
    %v5920 = vpop.f32.mrb[0].mxu0
    %v5921 = vpop.f32.mrb[0].mxu0
    %5922 = vdwg.mxu0
    %5923 = vmatprep.subr.bf16.mxu0 %v5325
    %5924 = vmatpush1.bf16.msra.mxu0 %v5324
    %5925 = vmatprep.subr.bf16.mxu0 %v5329
    %5926 = vmatpush1.bf16.msra.mxu0 %v5328
    %5927 = vmatprep.subr.bf16.mxu0 %v5333
    %5928 = vmatpush1.bf16.msra.mxu0 %v5332
    %5929 = vmatprep.subr.bf16.mxu0 %v5337
    %5930 = vmatpush1.bf16.msra.mxu0 %v5336
    %5931 = vmatprep.subr.bf16.mxu0 %v5341
    %5932 = vmatpush1.bf16.msra.mxu0 %v5340
    %5933 = vmatprep.subr.bf16.mxu0 %v5345
    %5934 = vmatpush1.bf16.msra.mxu0 %v5344
    %5935 = vmatprep.subr.bf16.mxu0 %v5349
    %5936 = vmatpush1.bf16.msra.mxu0 %v5348
    %5937 = vmatprep.subr.bf16.mxu0 %v5353
    %5938 = vmatpush1.bf16.msra.mxu0 %v5352
    %5939 = vmatprep.subr.bf16.mxu0 0
    %5940 = vmatpush1.bf16.msra.mxu0 0
    %5941 = vmatprep.subr.bf16.mxu0 0
    %5942 = vmatpush1.bf16.msra.mxu0 0
    %5943 = vmatprep.subr.bf16.mxu0 0
    %5944 = vmatpush1.bf16.msra.mxu0 0
    %5945 = vmatprep.subr.bf16.mxu0 0
    %5946 = vmatpush1.bf16.msra.mxu0 0
    %5947 = vmatprep.subr.bf16.mxu0 0
    %5948 = vmatpush1.bf16.msra.mxu0 0
    %5949 = vmatprep.subr.bf16.mxu0 0
    %5950 = vmatpush1.bf16.msra.mxu0 0
    %5951 = vmatprep.subr.bf16.mxu0 0
    %5952 = vmatpush1.bf16.msra.mxu0 0
    %5953 = vmatprep.subr.bf16.mxu0 0
    %5954 = vmatpush1.bf16.msra.mxu0 0
    %5955 = vmatprep.mubr.bf16.mxu0 0
    %5956 = vmatmul.mubr.bf16.gmra.mrb[0].mxu0 %v5880
    %v5957 = vpop.f32.mrb[0].mxu0
    %v5958 = vadd.f32 0.0, %v5957
    %v5959 = vpop.f32.mrb[0].mxu0
    %v5960 = vadd.f32 0.0, %v5959
    %v5961 = vpop.f32.mrb[0].mxu0
    %v5962 = vpop.f32.mrb[0].mxu0
    %5963 = vdwg.mxu0
    %v5968 = vrot.slane %v5917, 4
    %v5969 = vrot.slane %v5919, 4
    %v5970 = vrot.slane %v5958, 4
    %v5971 = vrot.slane %v5960, 4
    %v5972 = vrot.slane %v5917, 5
    %v5973 = vrot.slane %v5919, 5
    %v5974 = vrot.slane %v5958, 5
    %v5975 = vrot.slane %v5960, 5
    %v5984 = vadd.f32 %v5220, %v5968
    %v5985 = vadd.f32 %v5222, %v5969
    %v5986 = vadd.f32 %v5263, %v5970
    %v5987 = vadd.f32 %v5265, %v5971
    %v5988 = vadd.f32 %v5224, %v5972
    %v5989 = vadd.f32 %v5226, %v5973
    %v5990 = vadd.f32 %v5267, %v5974
    %v5991 = vadd.f32 %v5269, %v5975
    %v5992 = vxor.u32 %v5984, 2147483648
    %v5993 = vxor.u32 %v5988, 2147483648
    %v5994 = vmul.f32 %v5992, 1.442695
    %v5995 = vpow.pop %v5994
    %v5996 = vmul.f32 %v5993, 1.442695
    %v5997 = vpow.pop %v5996
    %v5998 = vadd.f32 %v5995, 1.0
    %v5999 = vadd.f32 %v5997, 1.0
    %v6000 = vrcp.pop %v5998
    %v6001 = vmul.f32 1.0, %v6000
    %v6002 = vrcp.pop %v5999
    %v6003 = vmul.f32 1.0, %v6002
    %v6004 = vxor.u32 %v5985, 2147483648
    %v6005 = vxor.u32 %v5989, 2147483648
    %v6006 = vmul.f32 %v6004, 1.442695
    %v6007 = vpow.pop %v6006
    %v6008 = vmul.f32 %v6005, 1.442695
    %v6009 = vpow.pop %v6008
    %v6010 = vadd.f32 %v6007, 1.0
    %v6011 = vadd.f32 %v6009, 1.0
    %v6012 = vrcp.pop %v6010
    %v6013 = vmul.f32 1.0, %v6012
    %v6014 = vrcp.pop %v6011
    %v6015 = vmul.f32 1.0, %v6014
    %v6016 = vtanh.pop %v5986
    %v6017 = vtanh.pop %v5990
    %v6018 = vxor.u32 %v5987, 2147483648
    %v6019 = vxor.u32 %v5991, 2147483648
    %v6020 = vmul.f32 %v6018, 1.442695
    %v6021 = vpow.pop %v6020
    %v6022 = vmul.f32 %v6019, 1.442695
    %v6023 = vpow.pop %v6022
    %v6024 = vadd.f32 %v6021, 1.0
    %v6025 = vadd.f32 %v6023, 1.0
    %v6026 = vrcp.pop %v6024
    %v6027 = vmul.f32 1.0, %v6026
    %v6028 = vrcp.pop %v6025
    %v6029 = vmul.f32 1.0, %v6028
    %v6032 = vrot.slane %v5865, 7
    %v6033 = vrot.slane %v5866, 7
    %v6036 = vmul.f32 %v6013, %v6032
    %v6037 = vmul.f32 %v6015, %v6033
    %v6038 = vmul.f32 %v6001, %v6016
    %v6039 = vmul.f32 %v6003, %v6017
    %v6040 = vadd.f32 %v6036, %v6038
    %v6041 = vadd.f32 %v6037, %v6039
    %v6042 = vtanh.pop %v6040
    %v6043 = vtanh.pop %v6041
    %v6044 = vmul.f32 %v6027, %v6042
    %v6045 = vmul.f32 %v6029, %v6043
    %6046 = vst [vmem:[#allocation6 - $0x4] sm:$0x10] %v6044
    %6047 = vst [vmem:[#allocation6] sm:$0x10] %v6045
    %v6048 = vpack.c.bf16 %v6044, %v6044
    %v6049 = vpack.c.bf16 %v6045, %v6045
    %v6050 = vld [vmem:[%s5321] sm:$0xff]
    %v6051 = vld [vmem:[%s5321 + $0x8] sm:$0xff]
    %v6052 = vld [vmem:[%s5321 + $0x10] sm:$0xff]
    %v6053 = vld [vmem:[%s5321 + $0x18] sm:$0xff]
    %v6054 = vld [vmem:[%s5321 + $0x20] sm:$0xff]
    %v6055 = vld [vmem:[%s5321 + $0x28] sm:$0xff]
    %v6056 = vld [vmem:[%s5321 + $0x30] sm:$0xff]
    %v6057 = vld [vmem:[%s5321 + $0x38] sm:$0xff]
    %v6058 = vld [vmem:[%s5321 + $0x40] sm:$0xff]
    %v6059 = vld [vmem:[%s5321 + $0x48] sm:$0xff]
    %v6060 = vld [vmem:[%s5321 + $0x50] sm:$0xff]
    %v6061 = vld [vmem:[%s5321 + $0x58] sm:$0xff]
    %v6062 = vld [vmem:[%s5321 + $0x60] sm:$0xff]
    %v6063 = vld [vmem:[%s5321 + $0x68] sm:$0xff]
    %v6064 = vld [vmem:[%s5321 + $0x70] sm:$0xff]
    %v6065 = vld [vmem:[%s5321 + $0x78] sm:$0xff]
    %v6066 = vld [vmem:[%s5321 + $0x80] sm:$0xff]
    %v6067 = vld [vmem:[%s5321 + $0x88] sm:$0xff]
    %v6068 = vld [vmem:[%s5321 + $0x90] sm:$0xff]
    %v6069 = vld [vmem:[%s5321 + $0x98] sm:$0xff]
    %v6070 = vld [vmem:[%s5321 + $0xa0] sm:$0xff]
    %v6071 = vld [vmem:[%s5321 + $0xa8] sm:$0xff]
    %v6072 = vld [vmem:[%s5321 + $0xb0] sm:$0xff]
    %v6073 = vld [vmem:[%s5321 + $0xb8] sm:$0xff]
    %v6074 = vld [vmem:[%s5321 + $0xc0] sm:$0xff]
    %v6075 = vld [vmem:[%s5321 + $0xc8] sm:$0xff]
    %v6076 = vld [vmem:[%s5321 + $0xd0] sm:$0xff]
    %v6077 = vld [vmem:[%s5321 + $0xd8] sm:$0xff]
    %v6078 = vld [vmem:[%s5321 + $0xe0] sm:$0xff]
    %v6079 = vld [vmem:[%s5321 + $0xe8] sm:$0xff]
    %v6080 = vld [vmem:[%s5321 + $0xf0] sm:$0xff]
    %v6081 = vld [vmem:[%s5321 + $0xf8] sm:$0xff]
    %v6084 = vunpack.c.l.b16 %v6048
    %v6085 = vunpack.c.l.b16 %v6049
    %v6086 = vrot.slane %v6084, 4
    %v6087 = vrot.slane %v6085, 3
    %v6088 = vsel %vm398, %v6087, %v6086
    %v6089 = vpack.c.b16 %v6088, %v6088
    %6091 = vmatprep.subr.bf16.mxu0 %v6051
    %6092 = vmatpush1.bf16.msra.mxu0 %v6050
    %6093 = vmatprep.subr.bf16.mxu0 %v6055
    %6094 = vmatpush1.bf16.msra.mxu0 %v6054
    %6095 = vmatprep.subr.bf16.mxu0 %v6059
    %6096 = vmatpush1.bf16.msra.mxu0 %v6058
    %6097 = vmatprep.subr.bf16.mxu0 %v6063
    %6098 = vmatpush1.bf16.msra.mxu0 %v6062
    %6099 = vmatprep.subr.bf16.mxu0 %v6067
    %6100 = vmatpush1.bf16.msra.mxu0 %v6066
    %6101 = vmatprep.subr.bf16.mxu0 %v6071
    %6102 = vmatpush1.bf16.msra.mxu0 %v6070
    %6103 = vmatprep.subr.bf16.mxu0 %v6075
    %6104 = vmatpush1.bf16.msra.mxu0 %v6074
    %6105 = vmatprep.subr.bf16.mxu0 %v6079
    %6106 = vmatpush1.bf16.msra.mxu0 %v6078
    %6107 = vmatprep.subr.bf16.mxu0 0
    %6108 = vmatpush1.bf16.msra.mxu0 0
    %6109 = vmatprep.subr.bf16.mxu0 0
    %6110 = vmatpush1.bf16.msra.mxu0 0
    %6111 = vmatprep.subr.bf16.mxu0 0
    %6112 = vmatpush1.bf16.msra.mxu0 0
    %6113 = vmatprep.subr.bf16.mxu0 0
    %6114 = vmatpush1.bf16.msra.mxu0 0
    %6115 = vmatprep.subr.bf16.mxu0 0
    %6116 = vmatpush1.bf16.msra.mxu0 0
    %6117 = vmatprep.subr.bf16.mxu0 0
    %6118 = vmatpush1.bf16.msra.mxu0 0
    %6119 = vmatprep.subr.bf16.mxu0 0
    %6120 = vmatpush1.bf16.msra.mxu0 0
    %6121 = vmatprep.subr.bf16.mxu0 0
    %6122 = vmatpush1.bf16.msra.mxu0 0
    %6123 = vmatprep.mubr.bf16.mxu0 0
    %6124 = vmatmul.mubr.bf16.gmra.mrb[0].mxu0 %v6089
    %v6125 = vpop.f32.mrb[0].mxu0
    %v6126 = vadd.f32 0.0, %v6125
    %v6127 = vpop.f32.mrb[0].mxu0
    %v6128 = vadd.f32 0.0, %v6127
    %v6129 = vpop.f32.mrb[0].mxu0
    %v6130 = vpop.f32.mrb[0].mxu0
    %6131 = vdwg.mxu0
    %6132 = vmatprep.subr.bf16.mxu0 %v6053
    %6133 = vmatpush1.bf16.msra.mxu0 %v6052
    %6134 = vmatprep.subr.bf16.mxu0 %v6057
    %6135 = vmatpush1.bf16.msra.mxu0 %v6056
    %6136 = vmatprep.subr.bf16.mxu0 %v6061
    %6137 = vmatpush1.bf16.msra.mxu0 %v6060
    %6138 = vmatprep.subr.bf16.mxu0 %v6065
    %6139 = vmatpush1.bf16.msra.mxu0 %v6064
    %6140 = vmatprep.subr.bf16.mxu0 %v6069
    %6141 = vmatpush1.bf16.msra.mxu0 %v6068
    %6142 = vmatprep.subr.bf16.mxu0 %v6073
    %6143 = vmatpush1.bf16.msra.mxu0 %v6072
    %6144 = vmatprep.subr.bf16.mxu0 %v6077
    %6145 = vmatpush1.bf16.msra.mxu0 %v6076
    %6146 = vmatprep.subr.bf16.mxu0 %v6081
    %6147 = vmatpush1.bf16.msra.mxu0 %v6080
    %6148 = vmatprep.subr.bf16.mxu0 0
    %6149 = vmatpush1.bf16.msra.mxu0 0
    %6150 = vmatprep.subr.bf16.mxu0 0
    %6151 = vmatpush1.bf16.msra.mxu0 0
    %6152 = vmatprep.subr.bf16.mxu0 0
    %6153 = vmatpush1.bf16.msra.mxu0 0
    %6154 = vmatprep.subr.bf16.mxu0 0
    %6155 = vmatpush1.bf16.msra.mxu0 0
    %6156 = vmatprep.subr.bf16.mxu0 0
    %6157 = vmatpush1.bf16.msra.mxu0 0
    %6158 = vmatprep.subr.bf16.mxu0 0
    %6159 = vmatpush1.bf16.msra.mxu0 0
    %6160 = vmatprep.subr.bf16.mxu0 0
    %6161 = vmatpush1.bf16.msra.mxu0 0
    %6162 = vmatprep.subr.bf16.mxu0 0
    %6163 = vmatpush1.bf16.msra.mxu0 0
    %6164 = vmatprep.mubr.bf16.mxu0 0
    %6165 = vmatmul.mubr.bf16.gmra.mrb[0].mxu0 %v6089
    %v6166 = vpop.f32.mrb[0].mxu0
    %v6167 = vadd.f32 0.0, %v6166
    %v6168 = vpop.f32.mrb[0].mxu0
    %v6169 = vadd.f32 0.0, %v6168
    %v6170 = vpop.f32.mrb[0].mxu0
    %v6171 = vpop.f32.mrb[0].mxu0
    %6172 = vdwg.mxu0
    %v6177 = vrot.slane %v6126, 3
    %v6178 = vrot.slane %v6128, 3
    %v6179 = vrot.slane %v6167, 3
    %v6180 = vrot.slane %v6169, 3
    %v6181 = vrot.slane %v6126, 4
    %v6182 = vrot.slane %v6128, 4
    %v6183 = vrot.slane %v6167, 4
    %v6184 = vrot.slane %v6169, 4
    %v6193 = vadd.f32 %v5220, %v6177
    %v6194 = vadd.f32 %v5222, %v6178
    %v6195 = vadd.f32 %v5263, %v6179
    %v6196 = vadd.f32 %v5265, %v6180
    %v6197 = vadd.f32 %v5224, %v6181
    %v6198 = vadd.f32 %v5226, %v6182
    %v6199 = vadd.f32 %v5267, %v6183
    %v6200 = vadd.f32 %v5269, %v6184
    %v6201 = vxor.u32 %v6193, 2147483648
    %v6202 = vxor.u32 %v6197, 2147483648
    %v6203 = vmul.f32 %v6201, 1.442695
    %v6204 = vpow.pop %v6203
    %v6205 = vmul.f32 %v6202, 1.442695
    %v6206 = vpow.pop %v6205
    %v6207 = vadd.f32 %v6204, 1.0
    %v6208 = vadd.f32 %v6206, 1.0
    %v6209 = vrcp.pop %v6207
    %v6210 = vmul.f32 1.0, %v6209
    %v6211 = vrcp.pop %v6208
    %v6212 = vmul.f32 1.0, %v6211
    %v6213 = vxor.u32 %v6194, 2147483648
    %v6214 = vxor.u32 %v6198, 2147483648
    %v6215 = vmul.f32 %v6213, 1.442695
    %v6216 = vpow.pop %v6215
    %v6217 = vmul.f32 %v6214, 1.442695
    %v6218 = vpow.pop %v6217
    %v6219 = vadd.f32 %v6216, 1.0
    %v6220 = vadd.f32 %v6218, 1.0
    %v6221 = vrcp.pop %v6219
    %v6222 = vmul.f32 1.0, %v6221
    %v6223 = vrcp.pop %v6220
    %v6224 = vmul.f32 1.0, %v6223
    %v6225 = vtanh.pop %v6195
    %v6226 = vtanh.pop %v6199
    %v6227 = vxor.u32 %v6196, 2147483648
    %v6228 = vxor.u32 %v6200, 2147483648
    %v6229 = vmul.f32 %v6227, 1.442695
    %v6230 = vpow.pop %v6229
    %v6231 = vmul.f32 %v6228, 1.442695
    %v6232 = vpow.pop %v6231
    %v6233 = vadd.f32 %v6230, 1.0
    %v6234 = vadd.f32 %v6232, 1.0
    %v6235 = vrcp.pop %v6233
    %v6236 = vmul.f32 1.0, %v6235
    %v6237 = vrcp.pop %v6234
    %v6238 = vmul.f32 1.0, %v6237
    %v6241 = vrot.slane %v6040, 7
    %v6242 = vrot.slane %v6041, 7
    %v6245 = vmul.f32 %v6222, %v6241
    %v6246 = vmul.f32 %v6224, %v6242
    %v6247 = vmul.f32 %v6210, %v6225
    %v6248 = vmul.f32 %v6212, %v6226
    %v6249 = vadd.f32 %v6245, %v6247
    %v6250 = vadd.f32 %v6246, %v6248
    %v6251 = vtanh.pop %v6249
    %v6252 = vtanh.pop %v6250
    %v6253 = vmul.f32 %v6236, %v6251
    %v6254 = vmul.f32 %v6238, %v6252
    %6255 = vst [vmem:[#allocation6 - $0x4] sm:$0x20] %v6253
    %6256 = vst [vmem:[#allocation6] sm:$0x20] %v6254
    %v6257 = vpack.c.bf16 %v6253, %v6253
    %v6258 = vpack.c.bf16 %v6254, %v6254
    %v6259 = vld [vmem:[%s5321] sm:$0xff]
    %v6260 = vld [vmem:[%s5321 + $0x8] sm:$0xff]
    %v6261 = vld [vmem:[%s5321 + $0x10] sm:$0xff]
    %v6262 = vld [vmem:[%s5321 + $0x18] sm:$0xff]
    %v6263 = vld [vmem:[%s5321 + $0x20] sm:$0xff]
    %v6264 = vld [vmem:[%s5321 + $0x28] sm:$0xff]
    %v6265 = vld [vmem:[%s5321 + $0x30] sm:$0xff]
    %v6266 = vld [vmem:[%s5321 + $0x38] sm:$0xff]
    %v6267 = vld [vmem:[%s5321 + $0x40] sm:$0xff]
    %v6268 = vld [vmem:[%s5321 + $0x48] sm:$0xff]
    %v6269 = vld [vmem:[%s5321 + $0x50] sm:$0xff]
    %v6270 = vld [vmem:[%s5321 + $0x58] sm:$0xff]
    %v6271 = vld [vmem:[%s5321 + $0x60] sm:$0xff]
    %v6272 = vld [vmem:[%s5321 + $0x68] sm:$0xff]
    %v6273 = vld [vmem:[%s5321 + $0x70] sm:$0xff]
    %v6274 = vld [vmem:[%s5321 + $0x78] sm:$0xff]
    %v6275 = vld [vmem:[%s5321 + $0x80] sm:$0xff]
    %v6276 = vld [vmem:[%s5321 + $0x88] sm:$0xff]
    %v6277 = vld [vmem:[%s5321 + $0x90] sm:$0xff]
    %v6278 = vld [vmem:[%s5321 + $0x98] sm:$0xff]
    %v6279 = vld [vmem:[%s5321 + $0xa0] sm:$0xff]
    %v6280 = vld [vmem:[%s5321 + $0xa8] sm:$0xff]
    %v6281 = vld [vmem:[%s5321 + $0xb0] sm:$0xff]
    %v6282 = vld [vmem:[%s5321 + $0xb8] sm:$0xff]
    %v6283 = vld [vmem:[%s5321 + $0xc0] sm:$0xff]
    %v6284 = vld [vmem:[%s5321 + $0xc8] sm:$0xff]
    %v6285 = vld [vmem:[%s5321 + $0xd0] sm:$0xff]
    %v6286 = vld [vmem:[%s5321 + $0xd8] sm:$0xff]
    %v6287 = vld [vmem:[%s5321 + $0xe0] sm:$0xff]
    %v6288 = vld [vmem:[%s5321 + $0xe8] sm:$0xff]
    %v6289 = vld [vmem:[%s5321 + $0xf0] sm:$0xff]
    %v6290 = vld [vmem:[%s5321 + $0xf8] sm:$0xff]
    %v6293 = vunpack.c.l.b16 %v6257
    %v6294 = vunpack.c.l.b16 %v6258
    %v6295 = vrot.slane %v6293, 5
    %v6296 = vrot.slane %v6294, 4
    %v6297 = vsel %vm398, %v6296, %v6295
    %v6298 = vpack.c.b16 %v6297, %v6297
    %6300 = vmatprep.subr.bf16.mxu0 %v6260
    %6301 = vmatpush1.bf16.msra.mxu0 %v6259
    %6302 = vmatprep.subr.bf16.mxu0 %v6264
    %6303 = vmatpush1.bf16.msra.mxu0 %v6263
    %6304 = vmatprep.subr.bf16.mxu0 %v6268
    %6305 = vmatpush1.bf16.msra.mxu0 %v6267
    %6306 = vmatprep.subr.bf16.mxu0 %v6272
    %6307 = vmatpush1.bf16.msra.mxu0 %v6271
    %6308 = vmatprep.subr.bf16.mxu0 %v6276
    %6309 = vmatpush1.bf16.msra.mxu0 %v6275
    %6310 = vmatprep.subr.bf16.mxu0 %v6280
    %6311 = vmatpush1.bf16.msra.mxu0 %v6279
    %6312 = vmatprep.subr.bf16.mxu0 %v6284
    %6313 = vmatpush1.bf16.msra.mxu0 %v6283
    %6314 = vmatprep.subr.bf16.mxu0 %v6288
    %6315 = vmatpush1.bf16.msra.mxu0 %v6287
    %6316 = vmatprep.subr.bf16.mxu0 0
    %6317 = vmatpush1.bf16.msra.mxu0 0
    %6318 = vmatprep.subr.bf16.mxu0 0
    %6319 = vmatpush1.bf16.msra.mxu0 0
    %6320 = vmatprep.subr.bf16.mxu0 0
    %6321 = vmatpush1.bf16.msra.mxu0 0
    %6322 = vmatprep.subr.bf16.mxu0 0
    %6323 = vmatpush1.bf16.msra.mxu0 0
    %6324 = vmatprep.subr.bf16.mxu0 0
    %6325 = vmatpush1.bf16.msra.mxu0 0
    %6326 = vmatprep.subr.bf16.mxu0 0
    %6327 = vmatpush1.bf16.msra.mxu0 0
    %6328 = vmatprep.subr.bf16.mxu0 0
    %6329 = vmatpush1.bf16.msra.mxu0 0
    %6330 = vmatprep.subr.bf16.mxu0 0
    %6331 = vmatpush1.bf16.msra.mxu0 0
    %6332 = vmatprep.mubr.bf16.mxu0 0
    %6333 = vmatmul.mubr.bf16.gmra.mrb[0].mxu0 %v6298
    %v6334 = vpop.f32.mrb[0].mxu0
    %v6335 = vadd.f32 0.0, %v6334
    %v6336 = vpop.f32.mrb[0].mxu0
    %v6337 = vadd.f32 0.0, %v6336
    %v6338 = vpop.f32.mrb[0].mxu0
    %v6339 = vpop.f32.mrb[0].mxu0
    %6340 = vdwg.mxu0
    %6341 = vmatprep.subr.bf16.mxu0 %v6262
    %6342 = vmatpush1.bf16.msra.mxu0 %v6261
    %6343 = vmatprep.subr.bf16.mxu0 %v6266
    %6344 = vmatpush1.bf16.msra.mxu0 %v6265
    %6345 = vmatprep.subr.bf16.mxu0 %v6270
    %6346 = vmatpush1.bf16.msra.mxu0 %v6269
    %6347 = vmatprep.subr.bf16.mxu0 %v6274
    %6348 = vmatpush1.bf16.msra.mxu0 %v6273
    %6349 = vmatprep.subr.bf16.mxu0 %v6278
    %6350 = vmatpush1.bf16.msra.mxu0 %v6277
    %6351 = vmatprep.subr.bf16.mxu0 %v6282
    %6352 = vmatpush1.bf16.msra.mxu0 %v6281
    %6353 = vmatprep.subr.bf16.mxu0 %v6286
    %6354 = vmatpush1.bf16.msra.mxu0 %v6285
    %6355 = vmatprep.subr.bf16.mxu0 %v6290
    %6356 = vmatpush1.bf16.msra.mxu0 %v6289
    %6357 = vmatprep.subr.bf16.mxu0 0
    %6358 = vmatpush1.bf16.msra.mxu0 0
    %6359 = vmatprep.subr.bf16.mxu0 0
    %6360 = vmatpush1.bf16.msra.mxu0 0
    %6361 = vmatprep.subr.bf16.mxu0 0
    %6362 = vmatpush1.bf16.msra.mxu0 0
    %6363 = vmatprep.subr.bf16.mxu0 0
    %6364 = vmatpush1.bf16.msra.mxu0 0
    %6365 = vmatprep.subr.bf16.mxu0 0
    %6366 = vmatpush1.bf16.msra.mxu0 0
    %6367 = vmatprep.subr.bf16.mxu0 0
    %6368 = vmatpush1.bf16.msra.mxu0 0
    %6369 = vmatprep.subr.bf16.mxu0 0
    %6370 = vmatpush1.bf16.msra.mxu0 0
    %6371 = vmatprep.subr.bf16.mxu0 0
    %6372 = vmatpush1.bf16.msra.mxu0 0
    %6373 = vmatprep.mubr.bf16.mxu0 0
    %6374 = vmatmul.mubr.bf16.gmra.mrb[0].mxu0 %v6298
    %v6375 = vpop.f32.mrb[0].mxu0
    %v6376 = vadd.f32 0.0, %v6375
    %v6377 = vpop.f32.mrb[0].mxu0
    %v6378 = vadd.f32 0.0, %v6377
    %v6379 = vpop.f32.mrb[0].mxu0
    %v6380 = vpop.f32.mrb[0].mxu0
    %6381 = vdwg.mxu0
    %v6386 = vrot.slane %v6335, 2
    %v6387 = vrot.slane %v6337, 2
    %v6388 = vrot.slane %v6376, 2
    %v6389 = vrot.slane %v6378, 2
    %v6390 = vrot.slane %v6335, 3
    %v6391 = vrot.slane %v6337, 3
    %v6392 = vrot.slane %v6376, 3
    %v6393 = vrot.slane %v6378, 3
    %v6402 = vadd.f32 %v5220, %v6386
    %v6403 = vadd.f32 %v5222, %v6387
    %v6404 = vadd.f32 %v5263, %v6388
    %v6405 = vadd.f32 %v5265, %v6389
    %v6406 = vadd.f32 %v5224, %v6390
    %v6407 = vadd.f32 %v5226, %v6391
    %v6408 = vadd.f32 %v5267, %v6392
    %v6409 = vadd.f32 %v5269, %v6393
    %v6410 = vxor.u32 %v6402, 2147483648
    %v6411 = vxor.u32 %v6406, 2147483648
    %v6412 = vmul.f32 %v6410, 1.442695
    %v6413 = vpow.pop %v6412
    %v6414 = vmul.f32 %v6411, 1.442695
    %v6415 = vpow.pop %v6414
    %v6416 = vadd.f32 %v6413, 1.0
    %v6417 = vadd.f32 %v6415, 1.0
    %v6418 = vrcp.pop %v6416
    %v6419 = vmul.f32 1.0, %v6418
    %v6420 = vrcp.pop %v6417
    %v6421 = vmul.f32 1.0, %v6420
    %v6422 = vxor.u32 %v6403, 2147483648
    %v6423 = vxor.u32 %v6407, 2147483648
    %v6424 = vmul.f32 %v6422, 1.442695
    %v6425 = vpow.pop %v6424
    %v6426 = vmul.f32 %v6423, 1.442695
    %v6427 = vpow.pop %v6426
    %v6428 = vadd.f32 %v6425, 1.0
    %v6429 = vadd.f32 %v6427, 1.0
    %v6430 = vrcp.pop %v6428
    %v6431 = vmul.f32 1.0, %v6430
    %v6432 = vrcp.pop %v6429
    %v6433 = vmul.f32 1.0, %v6432
    %v6434 = vtanh.pop %v6404
    %v6435 = vtanh.pop %v6408
    %v6436 = vxor.u32 %v6405, 2147483648
    %v6437 = vxor.u32 %v6409, 2147483648
    %v6438 = vmul.f32 %v6436, 1.442695
    %v6439 = vpow.pop %v6438
    %v6440 = vmul.f32 %v6437, 1.442695
    %v6441 = vpow.pop %v6440
    %v6442 = vadd.f32 %v6439, 1.0
    %v6443 = vadd.f32 %v6441, 1.0
    %v6444 = vrcp.pop %v6442
    %v6445 = vmul.f32 1.0, %v6444
    %v6446 = vrcp.pop %v6443
    %v6447 = vmul.f32 1.0, %v6446
    %v6450 = vrot.slane %v6249, 7
    %v6451 = vrot.slane %v6250, 7
    %v6454 = vmul.f32 %v6431, %v6450
    %v6455 = vmul.f32 %v6433, %v6451
    %v6456 = vmul.f32 %v6419, %v6434
    %v6457 = vmul.f32 %v6421, %v6435
    %v6458 = vadd.f32 %v6454, %v6456
    %v6459 = vadd.f32 %v6455, %v6457
    %v6460 = vtanh.pop %v6458
    %v6461 = vtanh.pop %v6459
    %v6462 = vmul.f32 %v6445, %v6460
    %v6463 = vmul.f32 %v6447, %v6461
    %6464 = vst [vmem:[#allocation6 - $0x4] sm:$0x40] %v6462
    %6465 = vst [vmem:[#allocation6] sm:$0x40] %v6463
    %v6466 = vpack.c.bf16 %v6462, %v6462
    %v6467 = vpack.c.bf16 %v6463, %v6463
    %v6468 = vld [vmem:[%s5321] sm:$0xff]
    %v6469 = vld [vmem:[%s5321 + $0x8] sm:$0xff]
    %v6470 = vld [vmem:[%s5321 + $0x10] sm:$0xff]
    %v6471 = vld [vmem:[%s5321 + $0x18] sm:$0xff]
    %v6472 = vld [vmem:[%s5321 + $0x20] sm:$0xff]
    %v6473 = vld [vmem:[%s5321 + $0x28] sm:$0xff]
    %v6474 = vld [vmem:[%s5321 + $0x30] sm:$0xff]
    %v6475 = vld [vmem:[%s5321 + $0x38] sm:$0xff]
    %v6476 = vld [vmem:[%s5321 + $0x40] sm:$0xff]
    %v6477 = vld [vmem:[%s5321 + $0x48] sm:$0xff]
    %v6478 = vld [vmem:[%s5321 + $0x50] sm:$0xff]
    %v6479 = vld [vmem:[%s5321 + $0x58] sm:$0xff]
    %v6480 = vld [vmem:[%s5321 + $0x60] sm:$0xff]
    %v6481 = vld [vmem:[%s5321 + $0x68] sm:$0xff]
    %v6482 = vld [vmem:[%s5321 + $0x70] sm:$0xff]
    %v6483 = vld [vmem:[%s5321 + $0x78] sm:$0xff]
    %v6484 = vld [vmem:[%s5321 + $0x80] sm:$0xff]
    %v6485 = vld [vmem:[%s5321 + $0x88] sm:$0xff]
    %v6486 = vld [vmem:[%s5321 + $0x90] sm:$0xff]
    %v6487 = vld [vmem:[%s5321 + $0x98] sm:$0xff]
    %v6488 = vld [vmem:[%s5321 + $0xa0] sm:$0xff]
    %v6489 = vld [vmem:[%s5321 + $0xa8] sm:$0xff]
    %v6490 = vld [vmem:[%s5321 + $0xb0] sm:$0xff]
    %v6491 = vld [vmem:[%s5321 + $0xb8] sm:$0xff]
    %v6492 = vld [vmem:[%s5321 + $0xc0] sm:$0xff]
    %v6493 = vld [vmem:[%s5321 + $0xc8] sm:$0xff]
    %v6494 = vld [vmem:[%s5321 + $0xd0] sm:$0xff]
    %v6495 = vld [vmem:[%s5321 + $0xd8] sm:$0xff]
    %v6496 = vld [vmem:[%s5321 + $0xe0] sm:$0xff]
    %v6497 = vld [vmem:[%s5321 + $0xe8] sm:$0xff]
    %v6498 = vld [vmem:[%s5321 + $0xf0] sm:$0xff]
    %v6499 = vld [vmem:[%s5321 + $0xf8] sm:$0xff]
    %v6502 = vunpack.c.l.b16 %v6466
    %v6503 = vunpack.c.l.b16 %v6467
    %v6504 = vrot.slane %v6502, 6
    %v6505 = vrot.slane %v6503, 5
    %v6506 = vsel %vm398, %v6505, %v6504
    %v6507 = vpack.c.b16 %v6506, %v6506
    %6509 = vmatprep.subr.bf16.mxu0 %v6469
    %6510 = vmatpush1.bf16.msra.mxu0 %v6468
    %6511 = vmatprep.subr.bf16.mxu0 %v6473
    %6512 = vmatpush1.bf16.msra.mxu0 %v6472
    %6513 = vmatprep.subr.bf16.mxu0 %v6477
    %6514 = vmatpush1.bf16.msra.mxu0 %v6476
    %6515 = vmatprep.subr.bf16.mxu0 %v6481
    %6516 = vmatpush1.bf16.msra.mxu0 %v6480
    %6517 = vmatprep.subr.bf16.mxu0 %v6485
    %6518 = vmatpush1.bf16.msra.mxu0 %v6484
    %6519 = vmatprep.subr.bf16.mxu0 %v6489
    %6520 = vmatpush1.bf16.msra.mxu0 %v6488
    %6521 = vmatprep.subr.bf16.mxu0 %v6493
    %6522 = vmatpush1.bf16.msra.mxu0 %v6492
    %6523 = vmatprep.subr.bf16.mxu0 %v6497
    %6524 = vmatpush1.bf16.msra.mxu0 %v6496
    %6525 = vmatprep.subr.bf16.mxu0 0
    %6526 = vmatpush1.bf16.msra.mxu0 0
    %6527 = vmatprep.subr.bf16.mxu0 0
    %6528 = vmatpush1.bf16.msra.mxu0 0
    %6529 = vmatprep.subr.bf16.mxu0 0
    %6530 = vmatpush1.bf16.msra.mxu0 0
    %6531 = vmatprep.subr.bf16.mxu0 0
    %6532 = vmatpush1.bf16.msra.mxu0 0
    %6533 = vmatprep.subr.bf16.mxu0 0
    %6534 = vmatpush1.bf16.msra.mxu0 0
    %6535 = vmatprep.subr.bf16.mxu0 0
    %6536 = vmatpush1.bf16.msra.mxu0 0
    %6537 = vmatprep.subr.bf16.mxu0 0
    %6538 = vmatpush1.bf16.msra.mxu0 0
    %6539 = vmatprep.subr.bf16.mxu0 0
    %6540 = vmatpush1.bf16.msra.mxu0 0
    %6541 = vmatprep.mubr.bf16.mxu0 0
    %6542 = vmatmul.mubr.bf16.gmra.mrb[0].mxu0 %v6507
    %v6543 = vpop.f32.mrb[0].mxu0
    %v6544 = vadd.f32 0.0, %v6543
    %v6545 = vpop.f32.mrb[0].mxu0
    %v6546 = vadd.f32 0.0, %v6545
    %v6547 = vpop.f32.mrb[0].mxu0
    %v6548 = vpop.f32.mrb[0].mxu0
    %6549 = vdwg.mxu0
    %6550 = vmatprep.subr.bf16.mxu0 %v6471
    %6551 = vmatpush1.bf16.msra.mxu0 %v6470
    %6552 = vmatprep.subr.bf16.mxu0 %v6475
    %6553 = vmatpush1.bf16.msra.mxu0 %v6474
    %6554 = vmatprep.subr.bf16.mxu0 %v6479
    %6555 = vmatpush1.bf16.msra.mxu0 %v6478
    %6556 = vmatprep.subr.bf16.mxu0 %v6483
    %6557 = vmatpush1.bf16.msra.mxu0 %v6482
    %6558 = vmatprep.subr.bf16.mxu0 %v6487
    %6559 = vmatpush1.bf16.msra.mxu0 %v6486
    %6560 = vmatprep.subr.bf16.mxu0 %v6491
    %6561 = vmatpush1.bf16.msra.mxu0 %v6490
    %6562 = vmatprep.subr.bf16.mxu0 %v6495
    %6563 = vmatpush1.bf16.msra.mxu0 %v6494
    %6564 = vmatprep.subr.bf16.mxu0 %v6499
    %6565 = vmatpush1.bf16.msra.mxu0 %v6498
    %6566 = vmatprep.subr.bf16.mxu0 0
    %6567 = vmatpush1.bf16.msra.mxu0 0
    %6568 = vmatprep.subr.bf16.mxu0 0
    %6569 = vmatpush1.bf16.msra.mxu0 0
    %6570 = vmatprep.subr.bf16.mxu0 0
    %6571 = vmatpush1.bf16.msra.mxu0 0
    %6572 = vmatprep.subr.bf16.mxu0 0
    %6573 = vmatpush1.bf16.msra.mxu0 0
    %6574 = vmatprep.subr.bf16.mxu0 0
    %6575 = vmatpush1.bf16.msra.mxu0 0
    %6576 = vmatprep.subr.bf16.mxu0 0
    %6577 = vmatpush1.bf16.msra.mxu0 0
    %6578 = vmatprep.subr.bf16.mxu0 0
    %6579 = vmatpush1.bf16.msra.mxu0 0
    %6580 = vmatprep.subr.bf16.mxu0 0
    %6581 = vmatpush1.bf16.msra.mxu0 0
    %6582 = vmatprep.mubr.bf16.mxu0 0
    %6583 = vmatmul.mubr.bf16.gmra.mrb[0].mxu0 %v6507
    %v6584 = vpop.f32.mrb[0].mxu0
    %v6585 = vadd.f32 0.0, %v6584
    %v6586 = vpop.f32.mrb[0].mxu0
    %v6587 = vadd.f32 0.0, %v6586
    %v6588 = vpop.f32.mrb[0].mxu0
    %v6589 = vpop.f32.mrb[0].mxu0
    %6590 = vdwg.mxu0
    %v6595 = vrot.slane %v6544, 1
    %v6596 = vrot.slane %v6546, 1
    %v6597 = vrot.slane %v6585, 1
    %v6598 = vrot.slane %v6587, 1
    %v6599 = vrot.slane %v6544, 2
    %v6600 = vrot.slane %v6546, 2
    %v6601 = vrot.slane %v6585, 2
    %v6602 = vrot.slane %v6587, 2
    %v6611 = vadd.f32 %v5220, %v6595
    %v6612 = vadd.f32 %v5222, %v6596
    %v6613 = vadd.f32 %v5263, %v6597
    %v6614 = vadd.f32 %v5265, %v6598
    %v6615 = vadd.f32 %v5224, %v6599
    %v6616 = vadd.f32 %v5226, %v6600
    %v6617 = vadd.f32 %v5267, %v6601
    %v6618 = vadd.f32 %v5269, %v6602
    %v6619 = vxor.u32 %v6611, 2147483648
    %v6620 = vxor.u32 %v6615, 2147483648
    %v6621 = vmul.f32 %v6619, 1.442695
    %v6622 = vpow.pop %v6621
    %v6623 = vmul.f32 %v6620, 1.442695
    %v6624 = vpow.pop %v6623
    %v6625 = vadd.f32 %v6622, 1.0
    %v6626 = vadd.f32 %v6624, 1.0
    %v6627 = vrcp.pop %v6625
    %v6628 = vmul.f32 1.0, %v6627
    %v6629 = vrcp.pop %v6626
    %v6630 = vmul.f32 1.0, %v6629
    %v6631 = vxor.u32 %v6612, 2147483648
    %v6632 = vxor.u32 %v6616, 2147483648
    %v6633 = vmul.f32 %v6631, 1.442695
    %v6634 = vpow.pop %v6633
    %v6635 = vmul.f32 %v6632, 1.442695
    %v6636 = vpow.pop %v6635
    %v6637 = vadd.f32 %v6634, 1.0
    %v6638 = vadd.f32 %v6636, 1.0
    %v6639 = vrcp.pop %v6637
    %v6640 = vmul.f32 1.0, %v6639
    %v6641 = vrcp.pop %v6638
    %v6642 = vmul.f32 1.0, %v6641
    %v6643 = vtanh.pop %v6613
    %v6644 = vtanh.pop %v6617
    %v6645 = vxor.u32 %v6614, 2147483648
    %v6646 = vxor.u32 %v6618, 2147483648
    %v6647 = vmul.f32 %v6645, 1.442695
    %v6648 = vpow.pop %v6647
    %v6649 = vmul.f32 %v6646, 1.442695
    %v6650 = vpow.pop %v6649
    %v6651 = vadd.f32 %v6648, 1.0
    %v6652 = vadd.f32 %v6650, 1.0
    %v6653 = vrcp.pop %v6651
    %v6654 = vmul.f32 1.0, %v6653
    %v6655 = vrcp.pop %v6652
    %v6656 = vmul.f32 1.0, %v6655
    %v6659 = vrot.slane %v6458, 7
    %v6660 = vrot.slane %v6459, 7
    %v6663 = vmul.f32 %v6640, %v6659
    %v6664 = vmul.f32 %v6642, %v6660
    %v6665 = vmul.f32 %v6628, %v6643
    %v6666 = vmul.f32 %v6630, %v6644
    %v6667 = vadd.f32 %v6663, %v6665
    %v6668 = vadd.f32 %v6664, %v6666
    %v6669 = vtanh.pop %v6667
    %v6670 = vtanh.pop %v6668
    %v6671 = vmul.f32 %v6654, %v6669
    %v6672 = vmul.f32 %v6656, %v6670
    %6673 = vst [vmem:[#allocation6 - $0x4] sm:$0x80] %v6671
    %6674 = vst [vmem:[#allocation6] sm:$0x80] %v6672
    // Predicated region
    $region10: #{lstm_autoencoder_forward.1} parent=1 // pred_check
      _
    $region11: #{lstm_autoencoder_forward.1} parent=1 // pred_check_branch
      %6676 = sbr.rel (0) target = $region13
    $region12: #{lstm_autoencoder_forward.1} parent=1 // pred_region
      %s6678 = ssub.s32 128, 128
      %6679 = vsyncadd [#allocation7], %s6678
      %s6680 = sshll.u32 [#allocation6], 4
      %s6681 = int_to_ptr.vmem [resolvable:$true] %s6680
      %6686 = dma.vmem_to_hbm [thread:$0]  %s6681, 128, %s3, [#allocation7], 64, 64, 4
    $region13: #{lstm_autoencoder_forward.1} parent=1 // pred_fallthru
      _
    // Predicated region
    $region14: #{lstm_autoencoder_forward.1} parent=1 // pred_check
      _
    $region15: #{lstm_autoencoder_forward.1} parent=1 // pred_check_branch
      %6688 = sbr.rel (0) target = $region17
    $region16: #{lstm_autoencoder_forward.1} parent=1 // pred_region
      %6689 = dma.done [#allocation7], 128
    $region17: #{lstm_autoencoder_forward.1} parent=1 // pred_fallthru
      _
    %6690 = vsyncpa [#allocation7], 1
  %6691 = vsyncmov [#allocation5]
  %s6692 = vpop.sfrf %6691
  %p6693 = scmp.eq.s32.totalorder %s6692, 0
  %p6694 = pneg %p6693
  %6696 = shalt.err (%p6694)
  %s6697 = scalar_lea.sflag [#allocation5], 1
  %6698 = vsyncmov %s6697
  %s6699 = vpop.sfrf %6698
  %p6700 = scmp.eq.s32.totalorder %s6699, 0
  %p6701 = pneg %p6700
  %6703 = shalt.err (%p6701)
  %s6704 = scalar_lea.sflag [#allocation5], 2
  %6705 = vsyncmov %s6704
  %s6706 = vpop.sfrf %6705
  %p6707 = scmp.eq.s32.totalorder %s6706, 0
  %p6708 = pneg %p6707
  %6710 = shalt.err (%p6708)
  %s6711 = scalar_lea.sflag [#allocation5], 3
  %6712 = vsyncmov %s6711
  %s6713 = vpop.sfrf %6712
  %p6714 = scmp.eq.s32.totalorder %s6713, 0
  %p6715 = pneg %p6714
  %6717 = shalt.err (%p6715)

</llo_original>
